<compile_context>
chip_gen: v7x
topology: tpu7x:2x2x1
jax: 0.10.0
libtpu: 0.0.40
codegen_flags: <defaults>
</compile_context>

<pallas_src>
import jax
import jax.numpy as jnp
from jax.experimental import pallas as pl
from jax.experimental.pallas import tpu as pltpu

NEG_SLOPE = 0.01   # torch.nn.LeakyReLU default
BN_EPS = 1e-5      # torch.nn.BatchNorm1d default

BASE, OUT, START = 1, 16, 32
BATCH = 8
D_PAD = 128        # pad every feature dim to one full lane group

VMEM_SPEC = pl.BlockSpec(memory_space=pltpu.MemorySpace.VMEM)


# --------------------------- shared graph description ------------------------

def unet_graph(x, lin, cat, base, out_dim, start_dim):
    """UNet forward described once; `lin` / `cat` callbacks supply the math.

    lin(h, din, dout, act, bn): Linear(din,dout) [+ LeakyReLU] [+ BatchNorm1d].
    cat(a, b, d): feature-concat of two width-d activations -> width 2*d.
    The layer order is identical for param building, the fused kernel and the
    pure-JAX reference, so a simple running index matches them up.
    """
    # TODO(synk): conditional path (cdim != 0, extra `c` concat) not exercised here.
    def linskip(h, d):
        r = h
        for _ in range(3):
            r = lin(r, d, d, act=True, bn=True)
        return r + h                                   # residual

    def block(h, din, dout):                           # Linear+LReLU, LinSkip x2
        h = lin(h, din, dout, act=True, bn=False)
        h = linskip(h, dout)
        h = linskip(h, dout)
        return h

    def ulayer(h, udim, ddim, level):
        xc = block(h, udim, ddim)                      # down
        if level == 0:
            h2 = block(xc, ddim, udim)                 # inner=Identity, cdim=0 -> no concat
        else:
            h2 = ulayer(xc, ddim, ddim // 2, level - 1)
            h2 = cat(h2, xc, ddim)                     # torch.cat((x, xc), dim=1)
            h2 = block(h2, udim, udim)                 # up
        return h2

    h = block(x, out_dim, start_dim)                   # UNet.start
    h = ulayer(h, start_dim, start_dim // 2, base)     # UNet.net
    h = lin(h, start_dim, out_dim, act=False, bn=False)  # UNet.out head
    h = linskip(h, out_dim)
    h = linskip(h, out_dim)
    h = lin(h, out_dim, out_dim, act=False, bn=False)
    return h


def build_layer_list(base, out_dim, start_dim):
    layers = []

    def lin(h, din, dout, act, bn):
        layers.append((din, dout, act, bn))
        return 0.0

    unet_graph(0.0, lin, lambda a, b, d: 0.0, base, out_dim, start_dim)
    return layers


LAYERS = build_layer_list(BASE, OUT, START)   # 43 linear layers for base=1
NUM_LAYERS = len(LAYERS)


# ----------------------------- parameter init --------------------------------

def init_params(key, layers, d_pad=D_PAD):
    """torch-default Linear init, zero-padded to d_pad and stacked.

    Returns W:[L,d_pad,d_pad] (pre-transposed so y = x @ W), and
    bias/gamma/beta each [L,1,d_pad]. Padded entries are 0 (gamma too), which
    keeps padded activation columns exactly 0 through the whole network.
    """
    Ws, Bs, Gs, BEs = [], [], [], []
    for (din, dout, _act, _bn), k in zip(layers, jax.random.split(key, len(layers))):
        kw, kb = jax.random.split(k)
        bound = 1.0 / (din ** 0.5)
        w = jax.random.uniform(kw, (din, dout), jnp.float32, -bound, bound)
        b = jax.random.uniform(kb, (dout,), jnp.float32, -bound, bound)
        Ws.append(jnp.zeros((d_pad, d_pad), jnp.float32).at[:din, :dout].set(w))
        Bs.append(jnp.zeros((1, d_pad), jnp.float32).at[0, :dout].set(b))
        Gs.append(jnp.zeros((1, d_pad), jnp.float32).at[0, :dout].set(1.0))
        BEs.append(jnp.zeros((1, d_pad), jnp.float32))
    return jnp.stack(Ws), jnp.stack(Bs), jnp.stack(Gs), jnp.stack(BEs)


# ------------------------------ fused kernel ----------------------------------

def unet_kernel(x_ref, w_ref, b_ref, g_ref, be_ref, o_ref):
    """Whole UNet forward in one invocation.

    All activations are single [B,128] f32 vreg-slabs; params are read from
    VMEM-resident stacked refs with static first-axis indices (zero-cost views).
    The only HBM traffic is the initial input/param DMA and one [B,128] store.
    """
    li = [0]   # static layer cursor (Python-level unroll, same order as LAYERS)

    def lin(h, din, dout, act, bn):
        i = li[0]
        li[0] += 1
        y = jnp.dot(h, w_ref[i], preferred_element_type=jnp.float32) + b_ref[i]
        if act:                                        # LeakyReLU(0.01)
            y = jnp.where(y >= 0, y, NEG_SLOPE * y)
        if bn:                                         # BatchNorm1d, training mode
            mean = jnp.mean(y, axis=0, keepdims=True)
            cen = y - mean
            var = jnp.mean(cen * cen, axis=0, keepdims=True)   # biased variance
            y = cen * jax.lax.rsqrt(var + BN_EPS) * g_ref[i] + be_ref[i]  # EUP rsqrt
        return y

    def cat(a, b, d):
        # In-kernel feature concat in the padded 128-lane layout: move columns
        # [0,d) of `b` to [d,2d) with a static shift matrix on the MXU and add
        # to `a` (whose columns >= d are exactly zero).
        row = jax.lax.broadcasted_iota(jnp.int32, (D_PAD, D_PAD), 0)
        col = jax.lax.broadcasted_iota(jnp.int32, (D_PAD, D_PAD), 1)
        shift = jnp.where((col == row + d) & (row < d), 1.0, 0.0)
        return a + jnp.dot(b, shift, preferred_element_type=jnp.float32)

    o_ref[...] = unet_graph(x_ref[...], lin, cat, BASE, OUT, START)


@jax.jit
def unet_forward(x, params):
    w, b, g, be = params
    bsz, feat = x.shape
    x_pad = jnp.zeros((bsz, D_PAD), jnp.float32).at[:, :feat].set(x)
    y_pad = pl.pallas_call(
        unet_kernel,
        out_shape=jax.ShapeDtypeStruct((bsz, D_PAD), jnp.float32),
        in_specs=[VMEM_SPEC] * 5,
        out_specs=VMEM_SPEC,
    )(x_pad, w, b, g, be)
    return y_pad[:, :OUT]


# --------------------------- pure-JAX reference -------------------------------

@jax.jit
def reference_forward(x, params):
    """Unpadded pure-JAX forward with the same packed params (numerical check)."""
    w_s, b_s, g_s, be_s = params
    li = [0]

    def lin(h, din, dout, act, bn):
        i = li[0]
        li[0] += 1
        y = h @ w_s[i, :din, :dout] + b_s[i, 0, :dout]
        if act:
            y = jnp.where(y >= 0, y, NEG_SLOPE * y)
        if bn:
            m = jnp.mean(y, axis=0, keepdims=True)
            v = jnp.mean((y - m) ** 2, axis=0, keepdims=True)
            y = (y - m) / jnp.sqrt(v + BN_EPS) * g_s[i, 0, :dout] + be_s[i, 0, :dout]
        return y

    def cat(a, b, d):
        return jnp.concatenate([a, b], axis=1)

    return unet_graph(x, lin, cat, BASE, OUT, START)


# ----------------------------------- main --------------------------------------

if __name__ == "__main__":
    key = jax.random.PRNGKey(0)
    k_params, k_x = jax.random.split(key)

    params = init_params(k_params, LAYERS)
    x = jax.random.normal(k_x, (BATCH, OUT), jnp.float32)

    y = jax.block_until_ready(unet_forward(x, params))

    assert y.shape == (BATCH, OUT), y.shape
    assert bool(jnp.all(jnp.isfinite(y)))

    y_ref = jax.block_until_ready(reference_forward(x, params))
    max_err = float(jnp.max(jnp.abs(y - y_ref)))
    assert jnp.allclose(y, y_ref, atol=1e-3, rtol=1e-3), max_err

    print("KERNEL_OK")
</pallas_src>

<mosaic_0001>
module attributes {stable_mosaic.version = 11 : i64} {
  func.func @unet_kernel(%arg0: memref<8x128xf32, #tpu.memory_space<vmem>>, %arg1: memref<43x128x128xf32, #tpu.memory_space<vmem>>, %arg2: memref<43x1x128xf32, #tpu.memory_space<vmem>>, %arg3: memref<43x1x128xf32, #tpu.memory_space<vmem>>, %arg4: memref<43x1x128xf32, #tpu.memory_space<vmem>>, %arg5: memref<8x128xf32, #tpu.memory_space<vmem>>) attributes {dimension_semantics = [], scalar_prefetch = 0 : i64, scratch_operands = 0 : i64, tpu.core_type = #tpu.core_type<tc>} {
    %c0 = arith.constant 0 : index
    %c0_0 = arith.constant 0 : index
    %0 = vector.load %arg0[%c0, %c0_0] : memref<8x128xf32, #tpu.memory_space<vmem>>, vector<8x128xf32>
    %c0_1 = arith.constant 0 : index
    %c0_2 = arith.constant 0 : index
    %c0_3 = arith.constant 0 : index
    %1 = vector.load %arg1[%c0_1, %c0_2, %c0_3] : memref<43x128x128xf32, #tpu.memory_space<vmem>>, vector<1x128x128xf32>
    %2 = vector.shape_cast %1 : vector<1x128x128xf32> to vector<128x128xf32>
    %cst = arith.constant dense<0.000000e+00> : vector<8x128xf32>
    %3 = tpu.matmul %0, %2, %cst {dimension_numbers = #tpu.dot_dimension_numbers<[1], [0], [0], [1], [0, 0, 1, 1], [], []>} : vector<8x128xf32>, vector<128x128xf32>, vector<8x128xf32> -> vector<8x128xf32>
    %c0_4 = arith.constant 0 : index
    %c0_5 = arith.constant 0 : index
    %c0_6 = arith.constant 0 : index
    %4 = vector.load %arg2[%c0_4, %c0_5, %c0_6] : memref<43x1x128xf32, #tpu.memory_space<vmem>>, vector<1x1x128xf32>
    %5 = vector.shape_cast %4 : vector<1x1x128xf32> to vector<1x128xf32>
    %6 = vector.broadcast %5 : vector<1x128xf32> to vector<8x128xf32>
    %7 = arith.addf %3, %6 : vector<8x128xf32>
    %cst_7 = arith.constant 0.000000e+00 : f32
    %8 = vector.broadcast %cst_7 : f32 to vector<8x128xf32>
    %9 = arith.cmpf oge, %7, %8 : vector<8x128xf32>
    %cst_8 = arith.constant 0.00999999977 : f32
    %10 = vector.broadcast %cst_8 : f32 to vector<8x128xf32>
    %11 = arith.mulf %10, %7 : vector<8x128xf32>
    %12 = arith.select %9, %7, %11 : vector<8x128xi1>, vector<8x128xf32>
    %c1 = arith.constant 1 : index
    %c0_9 = arith.constant 0 : index
    %c0_10 = arith.constant 0 : index
    %13 = vector.load %arg1[%c1, %c0_9, %c0_10] : memref<43x128x128xf32, #tpu.memory_space<vmem>>, vector<1x128x128xf32>
    %14 = vector.shape_cast %13 : vector<1x128x128xf32> to vector<128x128xf32>
    %cst_11 = arith.constant dense<0.000000e+00> : vector<8x128xf32>
    %15 = tpu.matmul %12, %14, %cst_11 {dimension_numbers = #tpu.dot_dimension_numbers<[1], [0], [0], [1], [0, 0, 1, 1], [], []>} : vector<8x128xf32>, vector<128x128xf32>, vector<8x128xf32> -> vector<8x128xf32>
    %c1_12 = arith.constant 1 : index
    %c0_13 = arith.constant 0 : index
    %c0_14 = arith.constant 0 : index
    %16 = vector.load %arg2[%c1_12, %c0_13, %c0_14] : memref<43x1x128xf32, #tpu.memory_space<vmem>>, vector<1x1x128xf32>
    %17 = vector.shape_cast %16 : vector<1x1x128xf32> to vector<1x128xf32>
    %18 = vector.broadcast %17 : vector<1x128xf32> to vector<8x128xf32>
    %19 = arith.addf %15, %18 : vector<8x128xf32>
    %cst_15 = arith.constant 0.000000e+00 : f32
    %20 = vector.broadcast %cst_15 : f32 to vector<8x128xf32>
    %21 = arith.cmpf oge, %19, %20 : vector<8x128xf32>
    %cst_16 = arith.constant 0.00999999977 : f32
    %22 = vector.broadcast %cst_16 : f32 to vector<8x128xf32>
    %23 = arith.mulf %22, %19 : vector<8x128xf32>
    %24 = arith.select %21, %19, %23 : vector<8x128xi1>, vector<8x128xf32>
    %cst_17 = arith.constant dense<0.000000e+00> : vector<128xf32>
    %25 = vector.multi_reduction <add>, %24, %cst_17 [0] : vector<8x128xf32> to vector<128xf32>
    %26 = vector.shape_cast %25 : vector<128xf32> to vector<1x128xf32>
    %cst_18 = arith.constant 8.000000e+00 : f32
    %27 = vector.broadcast %cst_18 : f32 to vector<1x128xf32>
    %28 = arith.divf %26, %27 : vector<1x128xf32>
    %29 = vector.broadcast %28 : vector<1x128xf32> to vector<8x128xf32>
    %30 = arith.subf %24, %29 : vector<8x128xf32>
    %31 = arith.mulf %30, %30 : vector<8x128xf32>
    %cst_19 = arith.constant dense<0.000000e+00> : vector<128xf32>
    %32 = vector.multi_reduction <add>, %31, %cst_19 [0] : vector<8x128xf32> to vector<128xf32>
    %33 = vector.shape_cast %32 : vector<128xf32> to vector<1x128xf32>
    %cst_20 = arith.constant 8.000000e+00 : f32
    %34 = vector.broadcast %cst_20 : f32 to vector<1x128xf32>
    %35 = arith.divf %33, %34 : vector<1x128xf32>
    %cst_21 = arith.constant 9.99999974E-6 : f32
    %36 = vector.broadcast %cst_21 : f32 to vector<1x128xf32>
    %37 = arith.addf %35, %36 : vector<1x128xf32>
    %38 = math.rsqrt %37 : vector<1x128xf32>
    %39 = vector.broadcast %38 : vector<1x128xf32> to vector<8x128xf32>
    %40 = arith.mulf %30, %39 : vector<8x128xf32>
    %c1_22 = arith.constant 1 : index
    %c0_23 = arith.constant 0 : index
    %c0_24 = arith.constant 0 : index
    %41 = vector.load %arg3[%c1_22, %c0_23, %c0_24] : memref<43x1x128xf32, #tpu.memory_space<vmem>>, vector<1x1x128xf32>
    %42 = vector.shape_cast %41 : vector<1x1x128xf32> to vector<1x128xf32>
    %43 = vector.broadcast %42 : vector<1x128xf32> to vector<8x128xf32>
    %44 = arith.mulf %40, %43 : vector<8x128xf32>
    %c1_25 = arith.constant 1 : index
    %c0_26 = arith.constant 0 : index
    %c0_27 = arith.constant 0 : index
    %45 = vector.load %arg4[%c1_25, %c0_26, %c0_27] : memref<43x1x128xf32, #tpu.memory_space<vmem>>, vector<1x1x128xf32>
    %46 = vector.shape_cast %45 : vector<1x1x128xf32> to vector<1x128xf32>
    %47 = vector.broadcast %46 : vector<1x128xf32> to vector<8x128xf32>
    %48 = arith.addf %44, %47 : vector<8x128xf32>
    %c2 = arith.constant 2 : index
    %c0_28 = arith.constant 0 : index
    %c0_29 = arith.constant 0 : index
    %49 = vector.load %arg1[%c2, %c0_28, %c0_29] : memref<43x128x128xf32, #tpu.memory_space<vmem>>, vector<1x128x128xf32>
    %50 = vector.shape_cast %49 : vector<1x128x128xf32> to vector<128x128xf32>
    %cst_30 = arith.constant dense<0.000000e+00> : vector<8x128xf32>
    %51 = tpu.matmul %48, %50, %cst_30 {dimension_numbers = #tpu.dot_dimension_numbers<[1], [0], [0], [1], [0, 0, 1, 1], [], []>} : vector<8x128xf32>, vector<128x128xf32>, vector<8x128xf32> -> vector<8x128xf32>
    %c2_31 = arith.constant 2 : index
    %c0_32 = arith.constant 0 : index
    %c0_33 = arith.constant 0 : index
    %52 = vector.load %arg2[%c2_31, %c0_32, %c0_33] : memref<43x1x128xf32, #tpu.memory_space<vmem>>, vector<1x1x128xf32>
    %53 = vector.shape_cast %52 : vector<1x1x128xf32> to vector<1x128xf32>
    %54 = vector.broadcast %53 : vector<1x128xf32> to vector<8x128xf32>
    %55 = arith.addf %51, %54 : vector<8x128xf32>
    %cst_34 = arith.constant 0.000000e+00 : f32
    %56 = vector.broadcast %cst_34 : f32 to vector<8x128xf32>
    %57 = arith.cmpf oge, %55, %56 : vector<8x128xf32>
    %cst_35 = arith.constant 0.00999999977 : f32
    %58 = vector.broadcast %cst_35 : f32 to vector<8x128xf32>
    %59 = arith.mulf %58, %55 : vector<8x128xf32>
    %60 = arith.select %57, %55, %59 : vector<8x128xi1>, vector<8x128xf32>
    %cst_36 = arith.constant dense<0.000000e+00> : vector<128xf32>
    %61 = vector.multi_reduction <add>, %60, %cst_36 [0] : vector<8x128xf32> to vector<128xf32>
    %62 = vector.shape_cast %61 : vector<128xf32> to vector<1x128xf32>
    %cst_37 = arith.constant 8.000000e+00 : f32
    %63 = vector.broadcast %cst_37 : f32 to vector<1x128xf32>
    %64 = arith.divf %62, %63 : vector<1x128xf32>
    %65 = vector.broadcast %64 : vector<1x128xf32> to vector<8x128xf32>
    %66 = arith.subf %60, %65 : vector<8x128xf32>
    %67 = arith.mulf %66, %66 : vector<8x128xf32>
    %cst_38 = arith.constant dense<0.000000e+00> : vector<128xf32>
    %68 = vector.multi_reduction <add>, %67, %cst_38 [0] : vector<8x128xf32> to vector<128xf32>
    %69 = vector.shape_cast %68 : vector<128xf32> to vector<1x128xf32>
    %cst_39 = arith.constant 8.000000e+00 : f32
    %70 = vector.broadcast %cst_39 : f32 to vector<1x128xf32>
    %71 = arith.divf %69, %70 : vector<1x128xf32>
    %cst_40 = arith.constant 9.99999974E-6 : f32
    %72 = vector.broadcast %cst_40 : f32 to vector<1x128xf32>
    %73 = arith.addf %71, %72 : vector<1x128xf32>
    %74 = math.rsqrt %73 : vector<1x128xf32>
    %75 = vector.broadcast %74 : vector<1x128xf32> to vector<8x128xf32>
    %76 = arith.mulf %66, %75 : vector<8x128xf32>
    %c2_41 = arith.constant 2 : index
    %c0_42 = arith.constant 0 : index
    %c0_43 = arith.constant 0 : index
    %77 = vector.load %arg3[%c2_41, %c0_42, %c0_43] : memref<43x1x128xf32, #tpu.memory_space<vmem>>, vector<1x1x128xf32>
    %78 = vector.shape_cast %77 : vector<1x1x128xf32> to vector<1x128xf32>
    %79 = vector.broadcast %78 : vector<1x128xf32> to vector<8x128xf32>
    %80 = arith.mulf %76, %79 : vector<8x128xf32>
    %c2_44 = arith.constant 2 : index
    %c0_45 = arith.constant 0 : index
    %c0_46 = arith.constant 0 : index
    %81 = vector.load %arg4[%c2_44, %c0_45, %c0_46] : memref<43x1x128xf32, #tpu.memory_space<vmem>>, vector<1x1x128xf32>
    %82 = vector.shape_cast %81 : vector<1x1x128xf32> to vector<1x128xf32>
    %83 = vector.broadcast %82 : vector<1x128xf32> to vector<8x128xf32>
    %84 = arith.addf %80, %83 : vector<8x128xf32>
    %c3 = arith.constant 3 : index
    %c0_47 = arith.constant 0 : index
    %c0_48 = arith.constant 0 : index
    %85 = vector.load %arg1[%c3, %c0_47, %c0_48] : memref<43x128x128xf32, #tpu.memory_space<vmem>>, vector<1x128x128xf32>
    %86 = vector.shape_cast %85 : vector<1x128x128xf32> to vector<128x128xf32>
    %cst_49 = arith.constant dense<0.000000e+00> : vector<8x128xf32>
    %87 = tpu.matmul %84, %86, %cst_49 {dimension_numbers = #tpu.dot_dimension_numbers<[1], [0], [0], [1], [0, 0, 1, 1], [], []>} : vector<8x128xf32>, vector<128x128xf32>, vector<8x128xf32> -> vector<8x128xf32>
    %c3_50 = arith.constant 3 : index
    %c0_51 = arith.constant 0 : index
    %c0_52 = arith.constant 0 : index
    %88 = vector.load %arg2[%c3_50, %c0_51, %c0_52] : memref<43x1x128xf32, #tpu.memory_space<vmem>>, vector<1x1x128xf32>
    %89 = vector.shape_cast %88 : vector<1x1x128xf32> to vector<1x128xf32>
    %90 = vector.broadcast %89 : vector<1x128xf32> to vector<8x128xf32>
    %91 = arith.addf %87, %90 : vector<8x128xf32>
    %cst_53 = arith.constant 0.000000e+00 : f32
    %92 = vector.broadcast %cst_53 : f32 to vector<8x128xf32>
    %93 = arith.cmpf oge, %91, %92 : vector<8x128xf32>
    %cst_54 = arith.constant 0.00999999977 : f32
    %94 = vector.broadcast %cst_54 : f32 to vector<8x128xf32>
    %95 = arith.mulf %94, %91 : vector<8x128xf32>
    %96 = arith.select %93, %91, %95 : vector<8x128xi1>, vector<8x128xf32>
    %cst_55 = arith.constant dense<0.000000e+00> : vector<128xf32>
    %97 = vector.multi_reduction <add>, %96, %cst_55 [0] : vector<8x128xf32> to vector<128xf32>
    %98 = vector.shape_cast %97 : vector<128xf32> to vector<1x128xf32>
    %cst_56 = arith.constant 8.000000e+00 : f32
    %99 = vector.broadcast %cst_56 : f32 to vector<1x128xf32>
    %100 = arith.divf %98, %99 : vector<1x128xf32>
    %101 = vector.broadcast %100 : vector<1x128xf32> to vector<8x128xf32>
    %102 = arith.subf %96, %101 : vector<8x128xf32>
    %103 = arith.mulf %102, %102 : vector<8x128xf32>
    %cst_57 = arith.constant dense<0.000000e+00> : vector<128xf32>
    %104 = vector.multi_reduction <add>, %103, %cst_57 [0] : vector<8x128xf32> to vector<128xf32>
    %105 = vector.shape_cast %104 : vector<128xf32> to vector<1x128xf32>
    %cst_58 = arith.constant 8.000000e+00 : f32
    %106 = vector.broadcast %cst_58 : f32 to vector<1x128xf32>
    %107 = arith.divf %105, %106 : vector<1x128xf32>
    %cst_59 = arith.constant 9.99999974E-6 : f32
    %108 = vector.broadcast %cst_59 : f32 to vector<1x128xf32>
    %109 = arith.addf %107, %108 : vector<1x128xf32>
    %110 = math.rsqrt %109 : vector<1x128xf32>
    %111 = vector.broadcast %110 : vector<1x128xf32> to vector<8x128xf32>
    %112 = arith.mulf %102, %111 : vector<8x128xf32>
    %c3_60 = arith.constant 3 : index
    %c0_61 = arith.constant 0 : index
    %c0_62 = arith.constant 0 : index
    %113 = vector.load %arg3[%c3_60, %c0_61, %c0_62] : memref<43x1x128xf32, #tpu.memory_space<vmem>>, vector<1x1x128xf32>
    %114 = vector.shape_cast %113 : vector<1x1x128xf32> to vector<1x128xf32>
    %115 = vector.broadcast %114 : vector<1x128xf32> to vector<8x128xf32>
    %116 = arith.mulf %112, %115 : vector<8x128xf32>
    %c3_63 = arith.constant 3 : index
    %c0_64 = arith.constant 0 : index
    %c0_65 = arith.constant 0 : index
    %117 = vector.load %arg4[%c3_63, %c0_64, %c0_65] : memref<43x1x128xf32, #tpu.memory_space<vmem>>, vector<1x1x128xf32>
    %118 = vector.shape_cast %117 : vector<1x1x128xf32> to vector<1x128xf32>
    %119 = vector.broadcast %118 : vector<1x128xf32> to vector<8x128xf32>
    %120 = arith.addf %116, %119 : vector<8x128xf32>
    %121 = arith.addf %120, %12 : vector<8x128xf32>
    %c4 = arith.constant 4 : index
    %c0_66 = arith.constant 0 : index
    %c0_67 = arith.constant 0 : index
    %122 = vector.load %arg1[%c4, %c0_66, %c0_67] : memref<43x128x128xf32, #tpu.memory_space<vmem>>, vector<1x128x128xf32>
    %123 = vector.shape_cast %122 : vector<1x128x128xf32> to vector<128x128xf32>
    %cst_68 = arith.constant dense<0.000000e+00> : vector<8x128xf32>
    %124 = tpu.matmul %121, %123, %cst_68 {dimension_numbers = #tpu.dot_dimension_numbers<[1], [0], [0], [1], [0, 0, 1, 1], [], []>} : vector<8x128xf32>, vector<128x128xf32>, vector<8x128xf32> -> vector<8x128xf32>
    %c4_69 = arith.constant 4 : index
    %c0_70 = arith.constant 0 : index
    %c0_71 = arith.constant 0 : index
    %125 = vector.load %arg2[%c4_69, %c0_70, %c0_71] : memref<43x1x128xf32, #tpu.memory_space<vmem>>, vector<1x1x128xf32>
    %126 = vector.shape_cast %125 : vector<1x1x128xf32> to vector<1x128xf32>
    %127 = vector.broadcast %126 : vector<1x128xf32> to vector<8x128xf32>
    %128 = arith.addf %124, %127 : vector<8x128xf32>
    %cst_72 = arith.constant 0.000000e+00 : f32
    %129 = vector.broadcast %cst_72 : f32 to vector<8x128xf32>
    %130 = arith.cmpf oge, %128, %129 : vector<8x128xf32>
    %cst_73 = arith.constant 0.00999999977 : f32
    %131 = vector.broadcast %cst_73 : f32 to vector<8x128xf32>
    %132 = arith.mulf %131, %128 : vector<8x128xf32>
    %133 = arith.select %130, %128, %132 : vector<8x128xi1>, vector<8x128xf32>
    %cst_74 = arith.constant dense<0.000000e+00> : vector<128xf32>
    %134 = vector.multi_reduction <add>, %133, %cst_74 [0] : vector<8x128xf32> to vector<128xf32>
    %135 = vector.shape_cast %134 : vector<128xf32> to vector<1x128xf32>
    %cst_75 = arith.constant 8.000000e+00 : f32
    %136 = vector.broadcast %cst_75 : f32 to vector<1x128xf32>
    %137 = arith.divf %135, %136 : vector<1x128xf32>
    %138 = vector.broadcast %137 : vector<1x128xf32> to vector<8x128xf32>
    %139 = arith.subf %133, %138 : vector<8x128xf32>
    %140 = arith.mulf %139, %139 : vector<8x128xf32>
    %cst_76 = arith.constant dense<0.000000e+00> : vector<128xf32>
    %141 = vector.multi_reduction <add>, %140, %cst_76 [0] : vector<8x128xf32> to vector<128xf32>
    %142 = vector.shape_cast %141 : vector<128xf32> to vector<1x128xf32>
    %cst_77 = arith.constant 8.000000e+00 : f32
    %143 = vector.broadcast %cst_77 : f32 to vector<1x128xf32>
    %144 = arith.divf %142, %143 : vector<1x128xf32>
    %cst_78 = arith.constant 9.99999974E-6 : f32
    %145 = vector.broadcast %cst_78 : f32 to vector<1x128xf32>
    %146 = arith.addf %144, %145 : vector<1x128xf32>
    %147 = math.rsqrt %146 : vector<1x128xf32>
    %148 = vector.broadcast %147 : vector<1x128xf32> to vector<8x128xf32>
    %149 = arith.mulf %139, %148 : vector<8x128xf32>
    %c4_79 = arith.constant 4 : index
    %c0_80 = arith.constant 0 : index
    %c0_81 = arith.constant 0 : index
    %150 = vector.load %arg3[%c4_79, %c0_80, %c0_81] : memref<43x1x128xf32, #tpu.memory_space<vmem>>, vector<1x1x128xf32>
    %151 = vector.shape_cast %150 : vector<1x1x128xf32> to vector<1x128xf32>
    %152 = vector.broadcast %151 : vector<1x128xf32> to vector<8x128xf32>
    %153 = arith.mulf %149, %152 : vector<8x128xf32>
    %c4_82 = arith.constant 4 : index
    %c0_83 = arith.constant 0 : index
    %c0_84 = arith.constant 0 : index
    %154 = vector.load %arg4[%c4_82, %c0_83, %c0_84] : memref<43x1x128xf32, #tpu.memory_space<vmem>>, vector<1x1x128xf32>
    %155 = vector.shape_cast %154 : vector<1x1x128xf32> to vector<1x128xf32>
    %156 = vector.broadcast %155 : vector<1x128xf32> to vector<8x128xf32>
    %157 = arith.addf %153, %156 : vector<8x128xf32>
    %c5 = arith.constant 5 : index
    %c0_85 = arith.constant 0 : index
    %c0_86 = arith.constant 0 : index
    %158 = vector.load %arg1[%c5, %c0_85, %c0_86] : memref<43x128x128xf32, #tpu.memory_space<vmem>>, vector<1x128x128xf32>
    %159 = vector.shape_cast %158 : vector<1x128x128xf32> to vector<128x128xf32>
    %cst_87 = arith.constant dense<0.000000e+00> : vector<8x128xf32>
    %160 = tpu.matmul %157, %159, %cst_87 {dimension_numbers = #tpu.dot_dimension_numbers<[1], [0], [0], [1], [0, 0, 1, 1], [], []>} : vector<8x128xf32>, vector<128x128xf32>, vector<8x128xf32> -> vector<8x128xf32>
    %c5_88 = arith.constant 5 : index
    %c0_89 = arith.constant 0 : index
    %c0_90 = arith.constant 0 : index
    %161 = vector.load %arg2[%c5_88, %c0_89, %c0_90] : memref<43x1x128xf32, #tpu.memory_space<vmem>>, vector<1x1x128xf32>
    %162 = vector.shape_cast %161 : vector<1x1x128xf32> to vector<1x128xf32>
    %163 = vector.broadcast %162 : vector<1x128xf32> to vector<8x128xf32>
    %164 = arith.addf %160, %163 : vector<8x128xf32>
    %cst_91 = arith.constant 0.000000e+00 : f32
    %165 = vector.broadcast %cst_91 : f32 to vector<8x128xf32>
    %166 = arith.cmpf oge, %164, %165 : vector<8x128xf32>
    %cst_92 = arith.constant 0.00999999977 : f32
    %167 = vector.broadcast %cst_92 : f32 to vector<8x128xf32>
    %168 = arith.mulf %167, %164 : vector<8x128xf32>
    %169 = arith.select %166, %164, %168 : vector<8x128xi1>, vector<8x128xf32>
    %cst_93 = arith.constant dense<0.000000e+00> : vector<128xf32>
    %170 = vector.multi_reduction <add>, %169, %cst_93 [0] : vector<8x128xf32> to vector<128xf32>
    %171 = vector.shape_cast %170 : vector<128xf32> to vector<1x128xf32>
    %cst_94 = arith.constant 8.000000e+00 : f32
    %172 = vector.broadcast %cst_94 : f32 to vector<1x128xf32>
    %173 = arith.divf %171, %172 : vector<1x128xf32>
    %174 = vector.broadcast %173 : vector<1x128xf32> to vector<8x128xf32>
    %175 = arith.subf %169, %174 : vector<8x128xf32>
    %176 = arith.mulf %175, %175 : vector<8x128xf32>
    %cst_95 = arith.constant dense<0.000000e+00> : vector<128xf32>
    %177 = vector.multi_reduction <add>, %176, %cst_95 [0] : vector<8x128xf32> to vector<128xf32>
    %178 = vector.shape_cast %177 : vector<128xf32> to vector<1x128xf32>
    %cst_96 = arith.constant 8.000000e+00 : f32
    %179 = vector.broadcast %cst_96 : f32 to vector<1x128xf32>
    %180 = arith.divf %178, %179 : vector<1x128xf32>
    %cst_97 = arith.constant 9.99999974E-6 : f32
    %181 = vector.broadcast %cst_97 : f32 to vector<1x128xf32>
    %182 = arith.addf %180, %181 : vector<1x128xf32>
    %183 = math.rsqrt %182 : vector<1x128xf32>
    %184 = vector.broadcast %183 : vector<1x128xf32> to vector<8x128xf32>
    %185 = arith.mulf %175, %184 : vector<8x128xf32>
    %c5_98 = arith.constant 5 : index
    %c0_99 = arith.constant 0 : index
    %c0_100 = arith.constant 0 : index
    %186 = vector.load %arg3[%c5_98, %c0_99, %c0_100] : memref<43x1x128xf32, #tpu.memory_space<vmem>>, vector<1x1x128xf32>
    %187 = vector.shape_cast %186 : vector<1x1x128xf32> to vector<1x128xf32>
    %188 = vector.broadcast %187 : vector<1x128xf32> to vector<8x128xf32>
    %189 = arith.mulf %185, %188 : vector<8x128xf32>
    %c5_101 = arith.constant 5 : index
    %c0_102 = arith.constant 0 : index
    %c0_103 = arith.constant 0 : index
    %190 = vector.load %arg4[%c5_101, %c0_102, %c0_103] : memref<43x1x128xf32, #tpu.memory_space<vmem>>, vector<1x1x128xf32>
    %191 = vector.shape_cast %190 : vector<1x1x128xf32> to vector<1x128xf32>
    %192 = vector.broadcast %191 : vector<1x128xf32> to vector<8x128xf32>
    %193 = arith.addf %189, %192 : vector<8x128xf32>
    %c6 = arith.constant 6 : index
    %c0_104 = arith.constant 0 : index
    %c0_105 = arith.constant 0 : index
    %194 = vector.load %arg1[%c6, %c0_104, %c0_105] : memref<43x128x128xf32, #tpu.memory_space<vmem>>, vector<1x128x128xf32>
    %195 = vector.shape_cast %194 : vector<1x128x128xf32> to vector<128x128xf32>
    %cst_106 = arith.constant dense<0.000000e+00> : vector<8x128xf32>
    %196 = tpu.matmul %193, %195, %cst_106 {dimension_numbers = #tpu.dot_dimension_numbers<[1], [0], [0], [1], [0, 0, 1, 1], [], []>} : vector<8x128xf32>, vector<128x128xf32>, vector<8x128xf32> -> vector<8x128xf32>
    %c6_107 = arith.constant 6 : index
    %c0_108 = arith.constant 0 : index
    %c0_109 = arith.constant 0 : index
    %197 = vector.load %arg2[%c6_107, %c0_108, %c0_109] : memref<43x1x128xf32, #tpu.memory_space<vmem>>, vector<1x1x128xf32>
    %198 = vector.shape_cast %197 : vector<1x1x128xf32> to vector<1x128xf32>
    %199 = vector.broadcast %198 : vector<1x128xf32> to vector<8x128xf32>
    %200 = arith.addf %196, %199 : vector<8x128xf32>
    %cst_110 = arith.constant 0.000000e+00 : f32
    %201 = vector.broadcast %cst_110 : f32 to vector<8x128xf32>
    %202 = arith.cmpf oge, %200, %201 : vector<8x128xf32>
    %cst_111 = arith.constant 0.00999999977 : f32
    %203 = vector.broadcast %cst_111 : f32 to vector<8x128xf32>
    %204 = arith.mulf %203, %200 : vector<8x128xf32>
    %205 = arith.select %202, %200, %204 : vector<8x128xi1>, vector<8x128xf32>
    %cst_112 = arith.constant dense<0.000000e+00> : vector<128xf32>
    %206 = vector.multi_reduction <add>, %205, %cst_112 [0] : vector<8x128xf32> to vector<128xf32>
    %207 = vector.shape_cast %206 : vector<128xf32> to vector<1x128xf32>
    %cst_113 = arith.constant 8.000000e+00 : f32
    %208 = vector.broadcast %cst_113 : f32 to vector<1x128xf32>
    %209 = arith.divf %207, %208 : vector<1x128xf32>
    %210 = vector.broadcast %209 : vector<1x128xf32> to vector<8x128xf32>
    %211 = arith.subf %205, %210 : vector<8x128xf32>
    %212 = arith.mulf %211, %211 : vector<8x128xf32>
    %cst_114 = arith.constant dense<0.000000e+00> : vector<128xf32>
    %213 = vector.multi_reduction <add>, %212, %cst_114 [0] : vector<8x128xf32> to vector<128xf32>
    %214 = vector.shape_cast %213 : vector<128xf32> to vector<1x128xf32>
    %cst_115 = arith.constant 8.000000e+00 : f32
    %215 = vector.broadcast %cst_115 : f32 to vector<1x128xf32>
    %216 = arith.divf %214, %215 : vector<1x128xf32>
    %cst_116 = arith.constant 9.99999974E-6 : f32
    %217 = vector.broadcast %cst_116 : f32 to vector<1x128xf32>
    %218 = arith.addf %216, %217 : vector<1x128xf32>
    %219 = math.rsqrt %218 : vector<1x128xf32>
    %220 = vector.broadcast %219 : vector<1x128xf32> to vector<8x128xf32>
    %221 = arith.mulf %211, %220 : vector<8x128xf32>
    %c6_117 = arith.constant 6 : index
    %c0_118 = arith.constant 0 : index
    %c0_119 = arith.constant 0 : index
    %222 = vector.load %arg3[%c6_117, %c0_118, %c0_119] : memref<43x1x128xf32, #tpu.memory_space<vmem>>, vector<1x1x128xf32>
    %223 = vector.shape_cast %222 : vector<1x1x128xf32> to vector<1x128xf32>
    %224 = vector.broadcast %223 : vector<1x128xf32> to vector<8x128xf32>
    %225 = arith.mulf %221, %224 : vector<8x128xf32>
    %c6_120 = arith.constant 6 : index
    %c0_121 = arith.constant 0 : index
    %c0_122 = arith.constant 0 : index
    %226 = vector.load %arg4[%c6_120, %c0_121, %c0_122] : memref<43x1x128xf32, #tpu.memory_space<vmem>>, vector<1x1x128xf32>
    %227 = vector.shape_cast %226 : vector<1x1x128xf32> to vector<1x128xf32>
    %228 = vector.broadcast %227 : vector<1x128xf32> to vector<8x128xf32>
    %229 = arith.addf %225, %228 : vector<8x128xf32>
    %230 = arith.addf %229, %121 : vector<8x128xf32>
    %c7 = arith.constant 7 : index
    %c0_123 = arith.constant 0 : index
    %c0_124 = arith.constant 0 : index
    %231 = vector.load %arg1[%c7, %c0_123, %c0_124] : memref<43x128x128xf32, #tpu.memory_space<vmem>>, vector<1x128x128xf32>
    %232 = vector.shape_cast %231 : vector<1x128x128xf32> to vector<128x128xf32>
    %cst_125 = arith.constant dense<0.000000e+00> : vector<8x128xf32>
    %233 = tpu.matmul %230, %232, %cst_125 {dimension_numbers = #tpu.dot_dimension_numbers<[1], [0], [0], [1], [0, 0, 1, 1], [], []>} : vector<8x128xf32>, vector<128x128xf32>, vector<8x128xf32> -> vector<8x128xf32>
    %c7_126 = arith.constant 7 : index
    %c0_127 = arith.constant 0 : index
    %c0_128 = arith.constant 0 : index
    %234 = vector.load %arg2[%c7_126, %c0_127, %c0_128] : memref<43x1x128xf32, #tpu.memory_space<vmem>>, vector<1x1x128xf32>
    %235 = vector.shape_cast %234 : vector<1x1x128xf32> to vector<1x128xf32>
    %236 = vector.broadcast %235 : vector<1x128xf32> to vector<8x128xf32>
    %237 = arith.addf %233, %236 : vector<8x128xf32>
    %cst_129 = arith.constant 0.000000e+00 : f32
    %238 = vector.broadcast %cst_129 : f32 to vector<8x128xf32>
    %239 = arith.cmpf oge, %237, %238 : vector<8x128xf32>
    %cst_130 = arith.constant 0.00999999977 : f32
    %240 = vector.broadcast %cst_130 : f32 to vector<8x128xf32>
    %241 = arith.mulf %240, %237 : vector<8x128xf32>
    %242 = arith.select %239, %237, %241 : vector<8x128xi1>, vector<8x128xf32>
    %c8 = arith.constant 8 : index
    %c0_131 = arith.constant 0 : index
    %c0_132 = arith.constant 0 : index
    %243 = vector.load %arg1[%c8, %c0_131, %c0_132] : memref<43x128x128xf32, #tpu.memory_space<vmem>>, vector<1x128x128xf32>
    %244 = vector.shape_cast %243 : vector<1x128x128xf32> to vector<128x128xf32>
    %cst_133 = arith.constant dense<0.000000e+00> : vector<8x128xf32>
    %245 = tpu.matmul %242, %244, %cst_133 {dimension_numbers = #tpu.dot_dimension_numbers<[1], [0], [0], [1], [0, 0, 1, 1], [], []>} : vector<8x128xf32>, vector<128x128xf32>, vector<8x128xf32> -> vector<8x128xf32>
    %c8_134 = arith.constant 8 : index
    %c0_135 = arith.constant 0 : index
    %c0_136 = arith.constant 0 : index
    %246 = vector.load %arg2[%c8_134, %c0_135, %c0_136] : memref<43x1x128xf32, #tpu.memory_space<vmem>>, vector<1x1x128xf32>
    %247 = vector.shape_cast %246 : vector<1x1x128xf32> to vector<1x128xf32>
    %248 = vector.broadcast %247 : vector<1x128xf32> to vector<8x128xf32>
    %249 = arith.addf %245, %248 : vector<8x128xf32>
    %cst_137 = arith.constant 0.000000e+00 : f32
    %250 = vector.broadcast %cst_137 : f32 to vector<8x128xf32>
    %251 = arith.cmpf oge, %249, %250 : vector<8x128xf32>
    %cst_138 = arith.constant 0.00999999977 : f32
    %252 = vector.broadcast %cst_138 : f32 to vector<8x128xf32>
    %253 = arith.mulf %252, %249 : vector<8x128xf32>
    %254 = arith.select %251, %249, %253 : vector<8x128xi1>, vector<8x128xf32>
    %cst_139 = arith.constant dense<0.000000e+00> : vector<128xf32>
    %255 = vector.multi_reduction <add>, %254, %cst_139 [0] : vector<8x128xf32> to vector<128xf32>
    %256 = vector.shape_cast %255 : vector<128xf32> to vector<1x128xf32>
    %cst_140 = arith.constant 8.000000e+00 : f32
    %257 = vector.broadcast %cst_140 : f32 to vector<1x128xf32>
    %258 = arith.divf %256, %257 : vector<1x128xf32>
    %259 = vector.broadcast %258 : vector<1x128xf32> to vector<8x128xf32>
    %260 = arith.subf %254, %259 : vector<8x128xf32>
    %261 = arith.mulf %260, %260 : vector<8x128xf32>
    %cst_141 = arith.constant dense<0.000000e+00> : vector<128xf32>
    %262 = vector.multi_reduction <add>, %261, %cst_141 [0] : vector<8x128xf32> to vector<128xf32>
    %263 = vector.shape_cast %262 : vector<128xf32> to vector<1x128xf32>
    %cst_142 = arith.constant 8.000000e+00 : f32
    %264 = vector.broadcast %cst_142 : f32 to vector<1x128xf32>
    %265 = arith.divf %263, %264 : vector<1x128xf32>
    %cst_143 = arith.constant 9.99999974E-6 : f32
    %266 = vector.broadcast %cst_143 : f32 to vector<1x128xf32>
    %267 = arith.addf %265, %266 : vector<1x128xf32>
    %268 = math.rsqrt %267 : vector<1x128xf32>
    %269 = vector.broadcast %268 : vector<1x128xf32> to vector<8x128xf32>
    %270 = arith.mulf %260, %269 : vector<8x128xf32>
    %c8_144 = arith.constant 8 : index
    %c0_145 = arith.constant 0 : index
    %c0_146 = arith.constant 0 : index
    %271 = vector.load %arg3[%c8_144, %c0_145, %c0_146] : memref<43x1x128xf32, #tpu.memory_space<vmem>>, vector<1x1x128xf32>
    %272 = vector.shape_cast %271 : vector<1x1x128xf32> to vector<1x128xf32>
    %273 = vector.broadcast %272 : vector<1x128xf32> to vector<8x128xf32>
    %274 = arith.mulf %270, %273 : vector<8x128xf32>
    %c8_147 = arith.constant 8 : index
    %c0_148 = arith.constant 0 : index
    %c0_149 = arith.constant 0 : index
    %275 = vector.load %arg4[%c8_147, %c0_148, %c0_149] : memref<43x1x128xf32, #tpu.memory_space<vmem>>, vector<1x1x128xf32>
    %276 = vector.shape_cast %275 : vector<1x1x128xf32> to vector<1x128xf32>
    %277 = vector.broadcast %276 : vector<1x128xf32> to vector<8x128xf32>
    %278 = arith.addf %274, %277 : vector<8x128xf32>
    %c9 = arith.constant 9 : index
    %c0_150 = arith.constant 0 : index
    %c0_151 = arith.constant 0 : index
    %279 = vector.load %arg1[%c9, %c0_150, %c0_151] : memref<43x128x128xf32, #tpu.memory_space<vmem>>, vector<1x128x128xf32>
    %280 = vector.shape_cast %279 : vector<1x128x128xf32> to vector<128x128xf32>
    %cst_152 = arith.constant dense<0.000000e+00> : vector<8x128xf32>
    %281 = tpu.matmul %278, %280, %cst_152 {dimension_numbers = #tpu.dot_dimension_numbers<[1], [0], [0], [1], [0, 0, 1, 1], [], []>} : vector<8x128xf32>, vector<128x128xf32>, vector<8x128xf32> -> vector<8x128xf32>
    %c9_153 = arith.constant 9 : index
    %c0_154 = arith.constant 0 : index
    %c0_155 = arith.constant 0 : index
    %282 = vector.load %arg2[%c9_153, %c0_154, %c0_155] : memref<43x1x128xf32, #tpu.memory_space<vmem>>, vector<1x1x128xf32>
    %283 = vector.shape_cast %282 : vector<1x1x128xf32> to vector<1x128xf32>
    %284 = vector.broadcast %283 : vector<1x128xf32> to vector<8x128xf32>
    %285 = arith.addf %281, %284 : vector<8x128xf32>
    %cst_156 = arith.constant 0.000000e+00 : f32
    %286 = vector.broadcast %cst_156 : f32 to vector<8x128xf32>
    %287 = arith.cmpf oge, %285, %286 : vector<8x128xf32>
    %cst_157 = arith.constant 0.00999999977 : f32
    %288 = vector.broadcast %cst_157 : f32 to vector<8x128xf32>
    %289 = arith.mulf %288, %285 : vector<8x128xf32>
    %290 = arith.select %287, %285, %289 : vector<8x128xi1>, vector<8x128xf32>
    %cst_158 = arith.constant dense<0.000000e+00> : vector<128xf32>
    %291 = vector.multi_reduction <add>, %290, %cst_158 [0] : vector<8x128xf32> to vector<128xf32>
    %292 = vector.shape_cast %291 : vector<128xf32> to vector<1x128xf32>
    %cst_159 = arith.constant 8.000000e+00 : f32
    %293 = vector.broadcast %cst_159 : f32 to vector<1x128xf32>
    %294 = arith.divf %292, %293 : vector<1x128xf32>
    %295 = vector.broadcast %294 : vector<1x128xf32> to vector<8x128xf32>
    %296 = arith.subf %290, %295 : vector<8x128xf32>
    %297 = arith.mulf %296, %296 : vector<8x128xf32>
    %cst_160 = arith.constant dense<0.000000e+00> : vector<128xf32>
    %298 = vector.multi_reduction <add>, %297, %cst_160 [0] : vector<8x128xf32> to vector<128xf32>
    %299 = vector.shape_cast %298 : vector<128xf32> to vector<1x128xf32>
    %cst_161 = arith.constant 8.000000e+00 : f32
    %300 = vector.broadcast %cst_161 : f32 to vector<1x128xf32>
    %301 = arith.divf %299, %300 : vector<1x128xf32>
    %cst_162 = arith.constant 9.99999974E-6 : f32
    %302 = vector.broadcast %cst_162 : f32 to vector<1x128xf32>
    %303 = arith.addf %301, %302 : vector<1x128xf32>
    %304 = math.rsqrt %303 : vector<1x128xf32>
    %305 = vector.broadcast %304 : vector<1x128xf32> to vector<8x128xf32>
    %306 = arith.mulf %296, %305 : vector<8x128xf32>
    %c9_163 = arith.constant 9 : index
    %c0_164 = arith.constant 0 : index
    %c0_165 = arith.constant 0 : index
    %307 = vector.load %arg3[%c9_163, %c0_164, %c0_165] : memref<43x1x128xf32, #tpu.memory_space<vmem>>, vector<1x1x128xf32>
    %308 = vector.shape_cast %307 : vector<1x1x128xf32> to vector<1x128xf32>
    %309 = vector.broadcast %308 : vector<1x128xf32> to vector<8x128xf32>
    %310 = arith.mulf %306, %309 : vector<8x128xf32>
    %c9_166 = arith.constant 9 : index
    %c0_167 = arith.constant 0 : index
    %c0_168 = arith.constant 0 : index
    %311 = vector.load %arg4[%c9_166, %c0_167, %c0_168] : memref<43x1x128xf32, #tpu.memory_space<vmem>>, vector<1x1x128xf32>
    %312 = vector.shape_cast %311 : vector<1x1x128xf32> to vector<1x128xf32>
    %313 = vector.broadcast %312 : vector<1x128xf32> to vector<8x128xf32>
    %314 = arith.addf %310, %313 : vector<8x128xf32>
    %c10 = arith.constant 10 : index
    %c0_169 = arith.constant 0 : index
    %c0_170 = arith.constant 0 : index
    %315 = vector.load %arg1[%c10, %c0_169, %c0_170] : memref<43x128x128xf32, #tpu.memory_space<vmem>>, vector<1x128x128xf32>
    %316 = vector.shape_cast %315 : vector<1x128x128xf32> to vector<128x128xf32>
    %cst_171 = arith.constant dense<0.000000e+00> : vector<8x128xf32>
    %317 = tpu.matmul %314, %316, %cst_171 {dimension_numbers = #tpu.dot_dimension_numbers<[1], [0], [0], [1], [0, 0, 1, 1], [], []>} : vector<8x128xf32>, vector<128x128xf32>, vector<8x128xf32> -> vector<8x128xf32>
    %c10_172 = arith.constant 10 : index
    %c0_173 = arith.constant 0 : index
    %c0_174 = arith.constant 0 : index
    %318 = vector.load %arg2[%c10_172, %c0_173, %c0_174] : memref<43x1x128xf32, #tpu.memory_space<vmem>>, vector<1x1x128xf32>
    %319 = vector.shape_cast %318 : vector<1x1x128xf32> to vector<1x128xf32>
    %320 = vector.broadcast %319 : vector<1x128xf32> to vector<8x128xf32>
    %321 = arith.addf %317, %320 : vector<8x128xf32>
    %cst_175 = arith.constant 0.000000e+00 : f32
    %322 = vector.broadcast %cst_175 : f32 to vector<8x128xf32>
    %323 = arith.cmpf oge, %321, %322 : vector<8x128xf32>
    %cst_176 = arith.constant 0.00999999977 : f32
    %324 = vector.broadcast %cst_176 : f32 to vector<8x128xf32>
    %325 = arith.mulf %324, %321 : vector<8x128xf32>
    %326 = arith.select %323, %321, %325 : vector<8x128xi1>, vector<8x128xf32>
    %cst_177 = arith.constant dense<0.000000e+00> : vector<128xf32>
    %327 = vector.multi_reduction <add>, %326, %cst_177 [0] : vector<8x128xf32> to vector<128xf32>
    %328 = vector.shape_cast %327 : vector<128xf32> to vector<1x128xf32>
    %cst_178 = arith.constant 8.000000e+00 : f32
    %329 = vector.broadcast %cst_178 : f32 to vector<1x128xf32>
    %330 = arith.divf %328, %329 : vector<1x128xf32>
    %331 = vector.broadcast %330 : vector<1x128xf32> to vector<8x128xf32>
    %332 = arith.subf %326, %331 : vector<8x128xf32>
    %333 = arith.mulf %332, %332 : vector<8x128xf32>
    %cst_179 = arith.constant dense<0.000000e+00> : vector<128xf32>
    %334 = vector.multi_reduction <add>, %333, %cst_179 [0] : vector<8x128xf32> to vector<128xf32>
    %335 = vector.shape_cast %334 : vector<128xf32> to vector<1x128xf32>
    %cst_180 = arith.constant 8.000000e+00 : f32
    %336 = vector.broadcast %cst_180 : f32 to vector<1x128xf32>
    %337 = arith.divf %335, %336 : vector<1x128xf32>
    %cst_181 = arith.constant 9.99999974E-6 : f32
    %338 = vector.broadcast %cst_181 : f32 to vector<1x128xf32>
    %339 = arith.addf %337, %338 : vector<1x128xf32>
    %340 = math.rsqrt %339 : vector<1x128xf32>
    %341 = vector.broadcast %340 : vector<1x128xf32> to vector<8x128xf32>
    %342 = arith.mulf %332, %341 : vector<8x128xf32>
    %c10_182 = arith.constant 10 : index
    %c0_183 = arith.constant 0 : index
    %c0_184 = arith.constant 0 : index
    %343 = vector.load %arg3[%c10_182, %c0_183, %c0_184] : memref<43x1x128xf32, #tpu.memory_space<vmem>>, vector<1x1x128xf32>
    %344 = vector.shape_cast %343 : vector<1x1x128xf32> to vector<1x128xf32>
    %345 = vector.broadcast %344 : vector<1x128xf32> to vector<8x128xf32>
    %346 = arith.mulf %342, %345 : vector<8x128xf32>
    %c10_185 = arith.constant 10 : index
    %c0_186 = arith.constant 0 : index
    %c0_187 = arith.constant 0 : index
    %347 = vector.load %arg4[%c10_185, %c0_186, %c0_187] : memref<43x1x128xf32, #tpu.memory_space<vmem>>, vector<1x1x128xf32>
    %348 = vector.shape_cast %347 : vector<1x1x128xf32> to vector<1x128xf32>
    %349 = vector.broadcast %348 : vector<1x128xf32> to vector<8x128xf32>
    %350 = arith.addf %346, %349 : vector<8x128xf32>
    %351 = arith.addf %350, %242 : vector<8x128xf32>
    %c11 = arith.constant 11 : index
    %c0_188 = arith.constant 0 : index
    %c0_189 = arith.constant 0 : index
    %352 = vector.load %arg1[%c11, %c0_188, %c0_189] : memref<43x128x128xf32, #tpu.memory_space<vmem>>, vector<1x128x128xf32>
    %353 = vector.shape_cast %352 : vector<1x128x128xf32> to vector<128x128xf32>
    %cst_190 = arith.constant dense<0.000000e+00> : vector<8x128xf32>
    %354 = tpu.matmul %351, %353, %cst_190 {dimension_numbers = #tpu.dot_dimension_numbers<[1], [0], [0], [1], [0, 0, 1, 1], [], []>} : vector<8x128xf32>, vector<128x128xf32>, vector<8x128xf32> -> vector<8x128xf32>
    %c11_191 = arith.constant 11 : index
    %c0_192 = arith.constant 0 : index
    %c0_193 = arith.constant 0 : index
    %355 = vector.load %arg2[%c11_191, %c0_192, %c0_193] : memref<43x1x128xf32, #tpu.memory_space<vmem>>, vector<1x1x128xf32>
    %356 = vector.shape_cast %355 : vector<1x1x128xf32> to vector<1x128xf32>
    %357 = vector.broadcast %356 : vector<1x128xf32> to vector<8x128xf32>
    %358 = arith.addf %354, %357 : vector<8x128xf32>
    %cst_194 = arith.constant 0.000000e+00 : f32
    %359 = vector.broadcast %cst_194 : f32 to vector<8x128xf32>
    %360 = arith.cmpf oge, %358, %359 : vector<8x128xf32>
    %cst_195 = arith.constant 0.00999999977 : f32
    %361 = vector.broadcast %cst_195 : f32 to vector<8x128xf32>
    %362 = arith.mulf %361, %358 : vector<8x128xf32>
    %363 = arith.select %360, %358, %362 : vector<8x128xi1>, vector<8x128xf32>
    %cst_196 = arith.constant dense<0.000000e+00> : vector<128xf32>
    %364 = vector.multi_reduction <add>, %363, %cst_196 [0] : vector<8x128xf32> to vector<128xf32>
    %365 = vector.shape_cast %364 : vector<128xf32> to vector<1x128xf32>
    %cst_197 = arith.constant 8.000000e+00 : f32
    %366 = vector.broadcast %cst_197 : f32 to vector<1x128xf32>
    %367 = arith.divf %365, %366 : vector<1x128xf32>
    %368 = vector.broadcast %367 : vector<1x128xf32> to vector<8x128xf32>
    %369 = arith.subf %363, %368 : vector<8x128xf32>
    %370 = arith.mulf %369, %369 : vector<8x128xf32>
    %cst_198 = arith.constant dense<0.000000e+00> : vector<128xf32>
    %371 = vector.multi_reduction <add>, %370, %cst_198 [0] : vector<8x128xf32> to vector<128xf32>
    %372 = vector.shape_cast %371 : vector<128xf32> to vector<1x128xf32>
    %cst_199 = arith.constant 8.000000e+00 : f32
    %373 = vector.broadcast %cst_199 : f32 to vector<1x128xf32>
    %374 = arith.divf %372, %373 : vector<1x128xf32>
    %cst_200 = arith.constant 9.99999974E-6 : f32
    %375 = vector.broadcast %cst_200 : f32 to vector<1x128xf32>
    %376 = arith.addf %374, %375 : vector<1x128xf32>
    %377 = math.rsqrt %376 : vector<1x128xf32>
    %378 = vector.broadcast %377 : vector<1x128xf32> to vector<8x128xf32>
    %379 = arith.mulf %369, %378 : vector<8x128xf32>
    %c11_201 = arith.constant 11 : index
    %c0_202 = arith.constant 0 : index
    %c0_203 = arith.constant 0 : index
    %380 = vector.load %arg3[%c11_201, %c0_202, %c0_203] : memref<43x1x128xf32, #tpu.memory_space<vmem>>, vector<1x1x128xf32>
    %381 = vector.shape_cast %380 : vector<1x1x128xf32> to vector<1x128xf32>
    %382 = vector.broadcast %381 : vector<1x128xf32> to vector<8x128xf32>
    %383 = arith.mulf %379, %382 : vector<8x128xf32>
    %c11_204 = arith.constant 11 : index
    %c0_205 = arith.constant 0 : index
    %c0_206 = arith.constant 0 : index
    %384 = vector.load %arg4[%c11_204, %c0_205, %c0_206] : memref<43x1x128xf32, #tpu.memory_space<vmem>>, vector<1x1x128xf32>
    %385 = vector.shape_cast %384 : vector<1x1x128xf32> to vector<1x128xf32>
    %386 = vector.broadcast %385 : vector<1x128xf32> to vector<8x128xf32>
    %387 = arith.addf %383, %386 : vector<8x128xf32>
    %c12 = arith.constant 12 : index
    %c0_207 = arith.constant 0 : index
    %c0_208 = arith.constant 0 : index
    %388 = vector.load %arg1[%c12, %c0_207, %c0_208] : memref<43x128x128xf32, #tpu.memory_space<vmem>>, vector<1x128x128xf32>
    %389 = vector.shape_cast %388 : vector<1x128x128xf32> to vector<128x128xf32>
    %cst_209 = arith.constant dense<0.000000e+00> : vector<8x128xf32>
    %390 = tpu.matmul %387, %389, %cst_209 {dimension_numbers = #tpu.dot_dimension_numbers<[1], [0], [0], [1], [0, 0, 1, 1], [], []>} : vector<8x128xf32>, vector<128x128xf32>, vector<8x128xf32> -> vector<8x128xf32>
    %c12_210 = arith.constant 12 : index
    %c0_211 = arith.constant 0 : index
    %c0_212 = arith.constant 0 : index
    %391 = vector.load %arg2[%c12_210, %c0_211, %c0_212] : memref<43x1x128xf32, #tpu.memory_space<vmem>>, vector<1x1x128xf32>
    %392 = vector.shape_cast %391 : vector<1x1x128xf32> to vector<1x128xf32>
    %393 = vector.broadcast %392 : vector<1x128xf32> to vector<8x128xf32>
    %394 = arith.addf %390, %393 : vector<8x128xf32>
    %cst_213 = arith.constant 0.000000e+00 : f32
    %395 = vector.broadcast %cst_213 : f32 to vector<8x128xf32>
    %396 = arith.cmpf oge, %394, %395 : vector<8x128xf32>
    %cst_214 = arith.constant 0.00999999977 : f32
    %397 = vector.broadcast %cst_214 : f32 to vector<8x128xf32>
    %398 = arith.mulf %397, %394 : vector<8x128xf32>
    %399 = arith.select %396, %394, %398 : vector<8x128xi1>, vector<8x128xf32>
    %cst_215 = arith.constant dense<0.000000e+00> : vector<128xf32>
    %400 = vector.multi_reduction <add>, %399, %cst_215 [0] : vector<8x128xf32> to vector<128xf32>
    %401 = vector.shape_cast %400 : vector<128xf32> to vector<1x128xf32>
    %cst_216 = arith.constant 8.000000e+00 : f32
    %402 = vector.broadcast %cst_216 : f32 to vector<1x128xf32>
    %403 = arith.divf %401, %402 : vector<1x128xf32>
    %404 = vector.broadcast %403 : vector<1x128xf32> to vector<8x128xf32>
    %405 = arith.subf %399, %404 : vector<8x128xf32>
    %406 = arith.mulf %405, %405 : vector<8x128xf32>
    %cst_217 = arith.constant dense<0.000000e+00> : vector<128xf32>
    %407 = vector.multi_reduction <add>, %406, %cst_217 [0] : vector<8x128xf32> to vector<128xf32>
    %408 = vector.shape_cast %407 : vector<128xf32> to vector<1x128xf32>
    %cst_218 = arith.constant 8.000000e+00 : f32
    %409 = vector.broadcast %cst_218 : f32 to vector<1x128xf32>
    %410 = arith.divf %408, %409 : vector<1x128xf32>
    %cst_219 = arith.constant 9.99999974E-6 : f32
    %411 = vector.broadcast %cst_219 : f32 to vector<1x128xf32>
    %412 = arith.addf %410, %411 : vector<1x128xf32>
    %413 = math.rsqrt %412 : vector<1x128xf32>
    %414 = vector.broadcast %413 : vector<1x128xf32> to vector<8x128xf32>
    %415 = arith.mulf %405, %414 : vector<8x128xf32>
    %c12_220 = arith.constant 12 : index
    %c0_221 = arith.constant 0 : index
    %c0_222 = arith.constant 0 : index
    %416 = vector.load %arg3[%c12_220, %c0_221, %c0_222] : memref<43x1x128xf32, #tpu.memory_space<vmem>>, vector<1x1x128xf32>
    %417 = vector.shape_cast %416 : vector<1x1x128xf32> to vector<1x128xf32>
    %418 = vector.broadcast %417 : vector<1x128xf32> to vector<8x128xf32>
    %419 = arith.mulf %415, %418 : vector<8x128xf32>
    %c12_223 = arith.constant 12 : index
    %c0_224 = arith.constant 0 : index
    %c0_225 = arith.constant 0 : index
    %420 = vector.load %arg4[%c12_223, %c0_224, %c0_225] : memref<43x1x128xf32, #tpu.memory_space<vmem>>, vector<1x1x128xf32>
    %421 = vector.shape_cast %420 : vector<1x1x128xf32> to vector<1x128xf32>
    %422 = vector.broadcast %421 : vector<1x128xf32> to vector<8x128xf32>
    %423 = arith.addf %419, %422 : vector<8x128xf32>
    %c13 = arith.constant 13 : index
    %c0_226 = arith.constant 0 : index
    %c0_227 = arith.constant 0 : index
    %424 = vector.load %arg1[%c13, %c0_226, %c0_227] : memref<43x128x128xf32, #tpu.memory_space<vmem>>, vector<1x128x128xf32>
    %425 = vector.shape_cast %424 : vector<1x128x128xf32> to vector<128x128xf32>
    %cst_228 = arith.constant dense<0.000000e+00> : vector<8x128xf32>
    %426 = tpu.matmul %423, %425, %cst_228 {dimension_numbers = #tpu.dot_dimension_numbers<[1], [0], [0], [1], [0, 0, 1, 1], [], []>} : vector<8x128xf32>, vector<128x128xf32>, vector<8x128xf32> -> vector<8x128xf32>
    %c13_229 = arith.constant 13 : index
    %c0_230 = arith.constant 0 : index
    %c0_231 = arith.constant 0 : index
    %427 = vector.load %arg2[%c13_229, %c0_230, %c0_231] : memref<43x1x128xf32, #tpu.memory_space<vmem>>, vector<1x1x128xf32>
    %428 = vector.shape_cast %427 : vector<1x1x128xf32> to vector<1x128xf32>
    %429 = vector.broadcast %428 : vector<1x128xf32> to vector<8x128xf32>
    %430 = arith.addf %426, %429 : vector<8x128xf32>
    %cst_232 = arith.constant 0.000000e+00 : f32
    %431 = vector.broadcast %cst_232 : f32 to vector<8x128xf32>
    %432 = arith.cmpf oge, %430, %431 : vector<8x128xf32>
    %cst_233 = arith.constant 0.00999999977 : f32
    %433 = vector.broadcast %cst_233 : f32 to vector<8x128xf32>
    %434 = arith.mulf %433, %430 : vector<8x128xf32>
    %435 = arith.select %432, %430, %434 : vector<8x128xi1>, vector<8x128xf32>
    %cst_234 = arith.constant dense<0.000000e+00> : vector<128xf32>
    %436 = vector.multi_reduction <add>, %435, %cst_234 [0] : vector<8x128xf32> to vector<128xf32>
    %437 = vector.shape_cast %436 : vector<128xf32> to vector<1x128xf32>
    %cst_235 = arith.constant 8.000000e+00 : f32
    %438 = vector.broadcast %cst_235 : f32 to vector<1x128xf32>
    %439 = arith.divf %437, %438 : vector<1x128xf32>
    %440 = vector.broadcast %439 : vector<1x128xf32> to vector<8x128xf32>
    %441 = arith.subf %435, %440 : vector<8x128xf32>
    %442 = arith.mulf %441, %441 : vector<8x128xf32>
    %cst_236 = arith.constant dense<0.000000e+00> : vector<128xf32>
    %443 = vector.multi_reduction <add>, %442, %cst_236 [0] : vector<8x128xf32> to vector<128xf32>
    %444 = vector.shape_cast %443 : vector<128xf32> to vector<1x128xf32>
    %cst_237 = arith.constant 8.000000e+00 : f32
    %445 = vector.broadcast %cst_237 : f32 to vector<1x128xf32>
    %446 = arith.divf %444, %445 : vector<1x128xf32>
    %cst_238 = arith.constant 9.99999974E-6 : f32
    %447 = vector.broadcast %cst_238 : f32 to vector<1x128xf32>
    %448 = arith.addf %446, %447 : vector<1x128xf32>
    %449 = math.rsqrt %448 : vector<1x128xf32>
    %450 = vector.broadcast %449 : vector<1x128xf32> to vector<8x128xf32>
    %451 = arith.mulf %441, %450 : vector<8x128xf32>
    %c13_239 = arith.constant 13 : index
    %c0_240 = arith.constant 0 : index
    %c0_241 = arith.constant 0 : index
    %452 = vector.load %arg3[%c13_239, %c0_240, %c0_241] : memref<43x1x128xf32, #tpu.memory_space<vmem>>, vector<1x1x128xf32>
    %453 = vector.shape_cast %452 : vector<1x1x128xf32> to vector<1x128xf32>
    %454 = vector.broadcast %453 : vector<1x128xf32> to vector<8x128xf32>
    %455 = arith.mulf %451, %454 : vector<8x128xf32>
    %c13_242 = arith.constant 13 : index
    %c0_243 = arith.constant 0 : index
    %c0_244 = arith.constant 0 : index
    %456 = vector.load %arg4[%c13_242, %c0_243, %c0_244] : memref<43x1x128xf32, #tpu.memory_space<vmem>>, vector<1x1x128xf32>
    %457 = vector.shape_cast %456 : vector<1x1x128xf32> to vector<1x128xf32>
    %458 = vector.broadcast %457 : vector<1x128xf32> to vector<8x128xf32>
    %459 = arith.addf %455, %458 : vector<8x128xf32>
    %460 = arith.addf %459, %351 : vector<8x128xf32>
    %c14 = arith.constant 14 : index
    %c0_245 = arith.constant 0 : index
    %c0_246 = arith.constant 0 : index
    %461 = vector.load %arg1[%c14, %c0_245, %c0_246] : memref<43x128x128xf32, #tpu.memory_space<vmem>>, vector<1x128x128xf32>
    %462 = vector.shape_cast %461 : vector<1x128x128xf32> to vector<128x128xf32>
    %cst_247 = arith.constant dense<0.000000e+00> : vector<8x128xf32>
    %463 = tpu.matmul %460, %462, %cst_247 {dimension_numbers = #tpu.dot_dimension_numbers<[1], [0], [0], [1], [0, 0, 1, 1], [], []>} : vector<8x128xf32>, vector<128x128xf32>, vector<8x128xf32> -> vector<8x128xf32>
    %c14_248 = arith.constant 14 : index
    %c0_249 = arith.constant 0 : index
    %c0_250 = arith.constant 0 : index
    %464 = vector.load %arg2[%c14_248, %c0_249, %c0_250] : memref<43x1x128xf32, #tpu.memory_space<vmem>>, vector<1x1x128xf32>
    %465 = vector.shape_cast %464 : vector<1x1x128xf32> to vector<1x128xf32>
    %466 = vector.broadcast %465 : vector<1x128xf32> to vector<8x128xf32>
    %467 = arith.addf %463, %466 : vector<8x128xf32>
    %cst_251 = arith.constant 0.000000e+00 : f32
    %468 = vector.broadcast %cst_251 : f32 to vector<8x128xf32>
    %469 = arith.cmpf oge, %467, %468 : vector<8x128xf32>
    %cst_252 = arith.constant 0.00999999977 : f32
    %470 = vector.broadcast %cst_252 : f32 to vector<8x128xf32>
    %471 = arith.mulf %470, %467 : vector<8x128xf32>
    %472 = arith.select %469, %467, %471 : vector<8x128xi1>, vector<8x128xf32>
    %c15 = arith.constant 15 : index
    %c0_253 = arith.constant 0 : index
    %c0_254 = arith.constant 0 : index
    %473 = vector.load %arg1[%c15, %c0_253, %c0_254] : memref<43x128x128xf32, #tpu.memory_space<vmem>>, vector<1x128x128xf32>
    %474 = vector.shape_cast %473 : vector<1x128x128xf32> to vector<128x128xf32>
    %cst_255 = arith.constant dense<0.000000e+00> : vector<8x128xf32>
    %475 = tpu.matmul %472, %474, %cst_255 {dimension_numbers = #tpu.dot_dimension_numbers<[1], [0], [0], [1], [0, 0, 1, 1], [], []>} : vector<8x128xf32>, vector<128x128xf32>, vector<8x128xf32> -> vector<8x128xf32>
    %c15_256 = arith.constant 15 : index
    %c0_257 = arith.constant 0 : index
    %c0_258 = arith.constant 0 : index
    %476 = vector.load %arg2[%c15_256, %c0_257, %c0_258] : memref<43x1x128xf32, #tpu.memory_space<vmem>>, vector<1x1x128xf32>
    %477 = vector.shape_cast %476 : vector<1x1x128xf32> to vector<1x128xf32>
    %478 = vector.broadcast %477 : vector<1x128xf32> to vector<8x128xf32>
    %479 = arith.addf %475, %478 : vector<8x128xf32>
    %cst_259 = arith.constant 0.000000e+00 : f32
    %480 = vector.broadcast %cst_259 : f32 to vector<8x128xf32>
    %481 = arith.cmpf oge, %479, %480 : vector<8x128xf32>
    %cst_260 = arith.constant 0.00999999977 : f32
    %482 = vector.broadcast %cst_260 : f32 to vector<8x128xf32>
    %483 = arith.mulf %482, %479 : vector<8x128xf32>
    %484 = arith.select %481, %479, %483 : vector<8x128xi1>, vector<8x128xf32>
    %cst_261 = arith.constant dense<0.000000e+00> : vector<128xf32>
    %485 = vector.multi_reduction <add>, %484, %cst_261 [0] : vector<8x128xf32> to vector<128xf32>
    %486 = vector.shape_cast %485 : vector<128xf32> to vector<1x128xf32>
    %cst_262 = arith.constant 8.000000e+00 : f32
    %487 = vector.broadcast %cst_262 : f32 to vector<1x128xf32>
    %488 = arith.divf %486, %487 : vector<1x128xf32>
    %489 = vector.broadcast %488 : vector<1x128xf32> to vector<8x128xf32>
    %490 = arith.subf %484, %489 : vector<8x128xf32>
    %491 = arith.mulf %490, %490 : vector<8x128xf32>
    %cst_263 = arith.constant dense<0.000000e+00> : vector<128xf32>
    %492 = vector.multi_reduction <add>, %491, %cst_263 [0] : vector<8x128xf32> to vector<128xf32>
    %493 = vector.shape_cast %492 : vector<128xf32> to vector<1x128xf32>
    %cst_264 = arith.constant 8.000000e+00 : f32
    %494 = vector.broadcast %cst_264 : f32 to vector<1x128xf32>
    %495 = arith.divf %493, %494 : vector<1x128xf32>
    %cst_265 = arith.constant 9.99999974E-6 : f32
    %496 = vector.broadcast %cst_265 : f32 to vector<1x128xf32>
    %497 = arith.addf %495, %496 : vector<1x128xf32>
    %498 = math.rsqrt %497 : vector<1x128xf32>
    %499 = vector.broadcast %498 : vector<1x128xf32> to vector<8x128xf32>
    %500 = arith.mulf %490, %499 : vector<8x128xf32>
    %c15_266 = arith.constant 15 : index
    %c0_267 = arith.constant 0 : index
    %c0_268 = arith.constant 0 : index
    %501 = vector.load %arg3[%c15_266, %c0_267, %c0_268] : memref<43x1x128xf32, #tpu.memory_space<vmem>>, vector<1x1x128xf32>
    %502 = vector.shape_cast %501 : vector<1x1x128xf32> to vector<1x128xf32>
    %503 = vector.broadcast %502 : vector<1x128xf32> to vector<8x128xf32>
    %504 = arith.mulf %500, %503 : vector<8x128xf32>
    %c15_269 = arith.constant 15 : index
    %c0_270 = arith.constant 0 : index
    %c0_271 = arith.constant 0 : index
    %505 = vector.load %arg4[%c15_269, %c0_270, %c0_271] : memref<43x1x128xf32, #tpu.memory_space<vmem>>, vector<1x1x128xf32>
    %506 = vector.shape_cast %505 : vector<1x1x128xf32> to vector<1x128xf32>
    %507 = vector.broadcast %506 : vector<1x128xf32> to vector<8x128xf32>
    %508 = arith.addf %504, %507 : vector<8x128xf32>
    %c16 = arith.constant 16 : index
    %c0_272 = arith.constant 0 : index
    %c0_273 = arith.constant 0 : index
    %509 = vector.load %arg1[%c16, %c0_272, %c0_273] : memref<43x128x128xf32, #tpu.memory_space<vmem>>, vector<1x128x128xf32>
    %510 = vector.shape_cast %509 : vector<1x128x128xf32> to vector<128x128xf32>
    %cst_274 = arith.constant dense<0.000000e+00> : vector<8x128xf32>
    %511 = tpu.matmul %508, %510, %cst_274 {dimension_numbers = #tpu.dot_dimension_numbers<[1], [0], [0], [1], [0, 0, 1, 1], [], []>} : vector<8x128xf32>, vector<128x128xf32>, vector<8x128xf32> -> vector<8x128xf32>
    %c16_275 = arith.constant 16 : index
    %c0_276 = arith.constant 0 : index
    %c0_277 = arith.constant 0 : index
    %512 = vector.load %arg2[%c16_275, %c0_276, %c0_277] : memref<43x1x128xf32, #tpu.memory_space<vmem>>, vector<1x1x128xf32>
    %513 = vector.shape_cast %512 : vector<1x1x128xf32> to vector<1x128xf32>
    %514 = vector.broadcast %513 : vector<1x128xf32> to vector<8x128xf32>
    %515 = arith.addf %511, %514 : vector<8x128xf32>
    %cst_278 = arith.constant 0.000000e+00 : f32
    %516 = vector.broadcast %cst_278 : f32 to vector<8x128xf32>
    %517 = arith.cmpf oge, %515, %516 : vector<8x128xf32>
    %cst_279 = arith.constant 0.00999999977 : f32
    %518 = vector.broadcast %cst_279 : f32 to vector<8x128xf32>
    %519 = arith.mulf %518, %515 : vector<8x128xf32>
    %520 = arith.select %517, %515, %519 : vector<8x128xi1>, vector<8x128xf32>
    %cst_280 = arith.constant dense<0.000000e+00> : vector<128xf32>
    %521 = vector.multi_reduction <add>, %520, %cst_280 [0] : vector<8x128xf32> to vector<128xf32>
    %522 = vector.shape_cast %521 : vector<128xf32> to vector<1x128xf32>
    %cst_281 = arith.constant 8.000000e+00 : f32
    %523 = vector.broadcast %cst_281 : f32 to vector<1x128xf32>
    %524 = arith.divf %522, %523 : vector<1x128xf32>
    %525 = vector.broadcast %524 : vector<1x128xf32> to vector<8x128xf32>
    %526 = arith.subf %520, %525 : vector<8x128xf32>
    %527 = arith.mulf %526, %526 : vector<8x128xf32>
    %cst_282 = arith.constant dense<0.000000e+00> : vector<128xf32>
    %528 = vector.multi_reduction <add>, %527, %cst_282 [0] : vector<8x128xf32> to vector<128xf32>
    %529 = vector.shape_cast %528 : vector<128xf32> to vector<1x128xf32>
    %cst_283 = arith.constant 8.000000e+00 : f32
    %530 = vector.broadcast %cst_283 : f32 to vector<1x128xf32>
    %531 = arith.divf %529, %530 : vector<1x128xf32>
    %cst_284 = arith.constant 9.99999974E-6 : f32
    %532 = vector.broadcast %cst_284 : f32 to vector<1x128xf32>
    %533 = arith.addf %531, %532 : vector<1x128xf32>
    %534 = math.rsqrt %533 : vector<1x128xf32>
    %535 = vector.broadcast %534 : vector<1x128xf32> to vector<8x128xf32>
    %536 = arith.mulf %526, %535 : vector<8x128xf32>
    %c16_285 = arith.constant 16 : index
    %c0_286 = arith.constant 0 : index
    %c0_287 = arith.constant 0 : index
    %537 = vector.load %arg3[%c16_285, %c0_286, %c0_287] : memref<43x1x128xf32, #tpu.memory_space<vmem>>, vector<1x1x128xf32>
    %538 = vector.shape_cast %537 : vector<1x1x128xf32> to vector<1x128xf32>
    %539 = vector.broadcast %538 : vector<1x128xf32> to vector<8x128xf32>
    %540 = arith.mulf %536, %539 : vector<8x128xf32>
    %c16_288 = arith.constant 16 : index
    %c0_289 = arith.constant 0 : index
    %c0_290 = arith.constant 0 : index
    %541 = vector.load %arg4[%c16_288, %c0_289, %c0_290] : memref<43x1x128xf32, #tpu.memory_space<vmem>>, vector<1x1x128xf32>
    %542 = vector.shape_cast %541 : vector<1x1x128xf32> to vector<1x128xf32>
    %543 = vector.broadcast %542 : vector<1x128xf32> to vector<8x128xf32>
    %544 = arith.addf %540, %543 : vector<8x128xf32>
    %c17 = arith.constant 17 : index
    %c0_291 = arith.constant 0 : index
    %c0_292 = arith.constant 0 : index
    %545 = vector.load %arg1[%c17, %c0_291, %c0_292] : memref<43x128x128xf32, #tpu.memory_space<vmem>>, vector<1x128x128xf32>
    %546 = vector.shape_cast %545 : vector<1x128x128xf32> to vector<128x128xf32>
    %cst_293 = arith.constant dense<0.000000e+00> : vector<8x128xf32>
    %547 = tpu.matmul %544, %546, %cst_293 {dimension_numbers = #tpu.dot_dimension_numbers<[1], [0], [0], [1], [0, 0, 1, 1], [], []>} : vector<8x128xf32>, vector<128x128xf32>, vector<8x128xf32> -> vector<8x128xf32>
    %c17_294 = arith.constant 17 : index
    %c0_295 = arith.constant 0 : index
    %c0_296 = arith.constant 0 : index
    %548 = vector.load %arg2[%c17_294, %c0_295, %c0_296] : memref<43x1x128xf32, #tpu.memory_space<vmem>>, vector<1x1x128xf32>
    %549 = vector.shape_cast %548 : vector<1x1x128xf32> to vector<1x128xf32>
    %550 = vector.broadcast %549 : vector<1x128xf32> to vector<8x128xf32>
    %551 = arith.addf %547, %550 : vector<8x128xf32>
    %cst_297 = arith.constant 0.000000e+00 : f32
    %552 = vector.broadcast %cst_297 : f32 to vector<8x128xf32>
    %553 = arith.cmpf oge, %551, %552 : vector<8x128xf32>
    %cst_298 = arith.constant 0.00999999977 : f32
    %554 = vector.broadcast %cst_298 : f32 to vector<8x128xf32>
    %555 = arith.mulf %554, %551 : vector<8x128xf32>
    %556 = arith.select %553, %551, %555 : vector<8x128xi1>, vector<8x128xf32>
    %cst_299 = arith.constant dense<0.000000e+00> : vector<128xf32>
    %557 = vector.multi_reduction <add>, %556, %cst_299 [0] : vector<8x128xf32> to vector<128xf32>
    %558 = vector.shape_cast %557 : vector<128xf32> to vector<1x128xf32>
    %cst_300 = arith.constant 8.000000e+00 : f32
    %559 = vector.broadcast %cst_300 : f32 to vector<1x128xf32>
    %560 = arith.divf %558, %559 : vector<1x128xf32>
    %561 = vector.broadcast %560 : vector<1x128xf32> to vector<8x128xf32>
    %562 = arith.subf %556, %561 : vector<8x128xf32>
    %563 = arith.mulf %562, %562 : vector<8x128xf32>
    %cst_301 = arith.constant dense<0.000000e+00> : vector<128xf32>
    %564 = vector.multi_reduction <add>, %563, %cst_301 [0] : vector<8x128xf32> to vector<128xf32>
    %565 = vector.shape_cast %564 : vector<128xf32> to vector<1x128xf32>
    %cst_302 = arith.constant 8.000000e+00 : f32
    %566 = vector.broadcast %cst_302 : f32 to vector<1x128xf32>
    %567 = arith.divf %565, %566 : vector<1x128xf32>
    %cst_303 = arith.constant 9.99999974E-6 : f32
    %568 = vector.broadcast %cst_303 : f32 to vector<1x128xf32>
    %569 = arith.addf %567, %568 : vector<1x128xf32>
    %570 = math.rsqrt %569 : vector<1x128xf32>
    %571 = vector.broadcast %570 : vector<1x128xf32> to vector<8x128xf32>
    %572 = arith.mulf %562, %571 : vector<8x128xf32>
    %c17_304 = arith.constant 17 : index
    %c0_305 = arith.constant 0 : index
    %c0_306 = arith.constant 0 : index
    %573 = vector.load %arg3[%c17_304, %c0_305, %c0_306] : memref<43x1x128xf32, #tpu.memory_space<vmem>>, vector<1x1x128xf32>
    %574 = vector.shape_cast %573 : vector<1x1x128xf32> to vector<1x128xf32>
    %575 = vector.broadcast %574 : vector<1x128xf32> to vector<8x128xf32>
    %576 = arith.mulf %572, %575 : vector<8x128xf32>
    %c17_307 = arith.constant 17 : index
    %c0_308 = arith.constant 0 : index
    %c0_309 = arith.constant 0 : index
    %577 = vector.load %arg4[%c17_307, %c0_308, %c0_309] : memref<43x1x128xf32, #tpu.memory_space<vmem>>, vector<1x1x128xf32>
    %578 = vector.shape_cast %577 : vector<1x1x128xf32> to vector<1x128xf32>
    %579 = vector.broadcast %578 : vector<1x128xf32> to vector<8x128xf32>
    %580 = arith.addf %576, %579 : vector<8x128xf32>
    %581 = arith.addf %580, %472 : vector<8x128xf32>
    %c18 = arith.constant 18 : index
    %c0_310 = arith.constant 0 : index
    %c0_311 = arith.constant 0 : index
    %582 = vector.load %arg1[%c18, %c0_310, %c0_311] : memref<43x128x128xf32, #tpu.memory_space<vmem>>, vector<1x128x128xf32>
    %583 = vector.shape_cast %582 : vector<1x128x128xf32> to vector<128x128xf32>
    %cst_312 = arith.constant dense<0.000000e+00> : vector<8x128xf32>
    %584 = tpu.matmul %581, %583, %cst_312 {dimension_numbers = #tpu.dot_dimension_numbers<[1], [0], [0], [1], [0, 0, 1, 1], [], []>} : vector<8x128xf32>, vector<128x128xf32>, vector<8x128xf32> -> vector<8x128xf32>
    %c18_313 = arith.constant 18 : index
    %c0_314 = arith.constant 0 : index
    %c0_315 = arith.constant 0 : index
    %585 = vector.load %arg2[%c18_313, %c0_314, %c0_315] : memref<43x1x128xf32, #tpu.memory_space<vmem>>, vector<1x1x128xf32>
    %586 = vector.shape_cast %585 : vector<1x1x128xf32> to vector<1x128xf32>
    %587 = vector.broadcast %586 : vector<1x128xf32> to vector<8x128xf32>
    %588 = arith.addf %584, %587 : vector<8x128xf32>
    %cst_316 = arith.constant 0.000000e+00 : f32
    %589 = vector.broadcast %cst_316 : f32 to vector<8x128xf32>
    %590 = arith.cmpf oge, %588, %589 : vector<8x128xf32>
    %cst_317 = arith.constant 0.00999999977 : f32
    %591 = vector.broadcast %cst_317 : f32 to vector<8x128xf32>
    %592 = arith.mulf %591, %588 : vector<8x128xf32>
    %593 = arith.select %590, %588, %592 : vector<8x128xi1>, vector<8x128xf32>
    %cst_318 = arith.constant dense<0.000000e+00> : vector<128xf32>
    %594 = vector.multi_reduction <add>, %593, %cst_318 [0] : vector<8x128xf32> to vector<128xf32>
    %595 = vector.shape_cast %594 : vector<128xf32> to vector<1x128xf32>
    %cst_319 = arith.constant 8.000000e+00 : f32
    %596 = vector.broadcast %cst_319 : f32 to vector<1x128xf32>
    %597 = arith.divf %595, %596 : vector<1x128xf32>
    %598 = vector.broadcast %597 : vector<1x128xf32> to vector<8x128xf32>
    %599 = arith.subf %593, %598 : vector<8x128xf32>
    %600 = arith.mulf %599, %599 : vector<8x128xf32>
    %cst_320 = arith.constant dense<0.000000e+00> : vector<128xf32>
    %601 = vector.multi_reduction <add>, %600, %cst_320 [0] : vector<8x128xf32> to vector<128xf32>
    %602 = vector.shape_cast %601 : vector<128xf32> to vector<1x128xf32>
    %cst_321 = arith.constant 8.000000e+00 : f32
    %603 = vector.broadcast %cst_321 : f32 to vector<1x128xf32>
    %604 = arith.divf %602, %603 : vector<1x128xf32>
    %cst_322 = arith.constant 9.99999974E-6 : f32
    %605 = vector.broadcast %cst_322 : f32 to vector<1x128xf32>
    %606 = arith.addf %604, %605 : vector<1x128xf32>
    %607 = math.rsqrt %606 : vector<1x128xf32>
    %608 = vector.broadcast %607 : vector<1x128xf32> to vector<8x128xf32>
    %609 = arith.mulf %599, %608 : vector<8x128xf32>
    %c18_323 = arith.constant 18 : index
    %c0_324 = arith.constant 0 : index
    %c0_325 = arith.constant 0 : index
    %610 = vector.load %arg3[%c18_323, %c0_324, %c0_325] : memref<43x1x128xf32, #tpu.memory_space<vmem>>, vector<1x1x128xf32>
    %611 = vector.shape_cast %610 : vector<1x1x128xf32> to vector<1x128xf32>
    %612 = vector.broadcast %611 : vector<1x128xf32> to vector<8x128xf32>
    %613 = arith.mulf %609, %612 : vector<8x128xf32>
    %c18_326 = arith.constant 18 : index
    %c0_327 = arith.constant 0 : index
    %c0_328 = arith.constant 0 : index
    %614 = vector.load %arg4[%c18_326, %c0_327, %c0_328] : memref<43x1x128xf32, #tpu.memory_space<vmem>>, vector<1x1x128xf32>
    %615 = vector.shape_cast %614 : vector<1x1x128xf32> to vector<1x128xf32>
    %616 = vector.broadcast %615 : vector<1x128xf32> to vector<8x128xf32>
    %617 = arith.addf %613, %616 : vector<8x128xf32>
    %c19 = arith.constant 19 : index
    %c0_329 = arith.constant 0 : index
    %c0_330 = arith.constant 0 : index
    %618 = vector.load %arg1[%c19, %c0_329, %c0_330] : memref<43x128x128xf32, #tpu.memory_space<vmem>>, vector<1x128x128xf32>
    %619 = vector.shape_cast %618 : vector<1x128x128xf32> to vector<128x128xf32>
    %cst_331 = arith.constant dense<0.000000e+00> : vector<8x128xf32>
    %620 = tpu.matmul %617, %619, %cst_331 {dimension_numbers = #tpu.dot_dimension_numbers<[1], [0], [0], [1], [0, 0, 1, 1], [], []>} : vector<8x128xf32>, vector<128x128xf32>, vector<8x128xf32> -> vector<8x128xf32>
    %c19_332 = arith.constant 19 : index
    %c0_333 = arith.constant 0 : index
    %c0_334 = arith.constant 0 : index
    %621 = vector.load %arg2[%c19_332, %c0_333, %c0_334] : memref<43x1x128xf32, #tpu.memory_space<vmem>>, vector<1x1x128xf32>
    %622 = vector.shape_cast %621 : vector<1x1x128xf32> to vector<1x128xf32>
    %623 = vector.broadcast %622 : vector<1x128xf32> to vector<8x128xf32>
    %624 = arith.addf %620, %623 : vector<8x128xf32>
    %cst_335 = arith.constant 0.000000e+00 : f32
    %625 = vector.broadcast %cst_335 : f32 to vector<8x128xf32>
    %626 = arith.cmpf oge, %624, %625 : vector<8x128xf32>
    %cst_336 = arith.constant 0.00999999977 : f32
    %627 = vector.broadcast %cst_336 : f32 to vector<8x128xf32>
    %628 = arith.mulf %627, %624 : vector<8x128xf32>
    %629 = arith.select %626, %624, %628 : vector<8x128xi1>, vector<8x128xf32>
    %cst_337 = arith.constant dense<0.000000e+00> : vector<128xf32>
    %630 = vector.multi_reduction <add>, %629, %cst_337 [0] : vector<8x128xf32> to vector<128xf32>
    %631 = vector.shape_cast %630 : vector<128xf32> to vector<1x128xf32>
    %cst_338 = arith.constant 8.000000e+00 : f32
    %632 = vector.broadcast %cst_338 : f32 to vector<1x128xf32>
    %633 = arith.divf %631, %632 : vector<1x128xf32>
    %634 = vector.broadcast %633 : vector<1x128xf32> to vector<8x128xf32>
    %635 = arith.subf %629, %634 : vector<8x128xf32>
    %636 = arith.mulf %635, %635 : vector<8x128xf32>
    %cst_339 = arith.constant dense<0.000000e+00> : vector<128xf32>
    %637 = vector.multi_reduction <add>, %636, %cst_339 [0] : vector<8x128xf32> to vector<128xf32>
    %638 = vector.shape_cast %637 : vector<128xf32> to vector<1x128xf32>
    %cst_340 = arith.constant 8.000000e+00 : f32
    %639 = vector.broadcast %cst_340 : f32 to vector<1x128xf32>
    %640 = arith.divf %638, %639 : vector<1x128xf32>
    %cst_341 = arith.constant 9.99999974E-6 : f32
    %641 = vector.broadcast %cst_341 : f32 to vector<1x128xf32>
    %642 = arith.addf %640, %641 : vector<1x128xf32>
    %643 = math.rsqrt %642 : vector<1x128xf32>
    %644 = vector.broadcast %643 : vector<1x128xf32> to vector<8x128xf32>
    %645 = arith.mulf %635, %644 : vector<8x128xf32>
    %c19_342 = arith.constant 19 : index
    %c0_343 = arith.constant 0 : index
    %c0_344 = arith.constant 0 : index
    %646 = vector.load %arg3[%c19_342, %c0_343, %c0_344] : memref<43x1x128xf32, #tpu.memory_space<vmem>>, vector<1x1x128xf32>
    %647 = vector.shape_cast %646 : vector<1x1x128xf32> to vector<1x128xf32>
    %648 = vector.broadcast %647 : vector<1x128xf32> to vector<8x128xf32>
    %649 = arith.mulf %645, %648 : vector<8x128xf32>
    %c19_345 = arith.constant 19 : index
    %c0_346 = arith.constant 0 : index
    %c0_347 = arith.constant 0 : index
    %650 = vector.load %arg4[%c19_345, %c0_346, %c0_347] : memref<43x1x128xf32, #tpu.memory_space<vmem>>, vector<1x1x128xf32>
    %651 = vector.shape_cast %650 : vector<1x1x128xf32> to vector<1x128xf32>
    %652 = vector.broadcast %651 : vector<1x128xf32> to vector<8x128xf32>
    %653 = arith.addf %649, %652 : vector<8x128xf32>
    %c20 = arith.constant 20 : index
    %c0_348 = arith.constant 0 : index
    %c0_349 = arith.constant 0 : index
    %654 = vector.load %arg1[%c20, %c0_348, %c0_349] : memref<43x128x128xf32, #tpu.memory_space<vmem>>, vector<1x128x128xf32>
    %655 = vector.shape_cast %654 : vector<1x128x128xf32> to vector<128x128xf32>
    %cst_350 = arith.constant dense<0.000000e+00> : vector<8x128xf32>
    %656 = tpu.matmul %653, %655, %cst_350 {dimension_numbers = #tpu.dot_dimension_numbers<[1], [0], [0], [1], [0, 0, 1, 1], [], []>} : vector<8x128xf32>, vector<128x128xf32>, vector<8x128xf32> -> vector<8x128xf32>
    %c20_351 = arith.constant 20 : index
    %c0_352 = arith.constant 0 : index
    %c0_353 = arith.constant 0 : index
    %657 = vector.load %arg2[%c20_351, %c0_352, %c0_353] : memref<43x1x128xf32, #tpu.memory_space<vmem>>, vector<1x1x128xf32>
    %658 = vector.shape_cast %657 : vector<1x1x128xf32> to vector<1x128xf32>
    %659 = vector.broadcast %658 : vector<1x128xf32> to vector<8x128xf32>
    %660 = arith.addf %656, %659 : vector<8x128xf32>
    %cst_354 = arith.constant 0.000000e+00 : f32
    %661 = vector.broadcast %cst_354 : f32 to vector<8x128xf32>
    %662 = arith.cmpf oge, %660, %661 : vector<8x128xf32>
    %cst_355 = arith.constant 0.00999999977 : f32
    %663 = vector.broadcast %cst_355 : f32 to vector<8x128xf32>
    %664 = arith.mulf %663, %660 : vector<8x128xf32>
    %665 = arith.select %662, %660, %664 : vector<8x128xi1>, vector<8x128xf32>
    %cst_356 = arith.constant dense<0.000000e+00> : vector<128xf32>
    %666 = vector.multi_reduction <add>, %665, %cst_356 [0] : vector<8x128xf32> to vector<128xf32>
    %667 = vector.shape_cast %666 : vector<128xf32> to vector<1x128xf32>
    %cst_357 = arith.constant 8.000000e+00 : f32
    %668 = vector.broadcast %cst_357 : f32 to vector<1x128xf32>
    %669 = arith.divf %667, %668 : vector<1x128xf32>
    %670 = vector.broadcast %669 : vector<1x128xf32> to vector<8x128xf32>
    %671 = arith.subf %665, %670 : vector<8x128xf32>
    %672 = arith.mulf %671, %671 : vector<8x128xf32>
    %cst_358 = arith.constant dense<0.000000e+00> : vector<128xf32>
    %673 = vector.multi_reduction <add>, %672, %cst_358 [0] : vector<8x128xf32> to vector<128xf32>
    %674 = vector.shape_cast %673 : vector<128xf32> to vector<1x128xf32>
    %cst_359 = arith.constant 8.000000e+00 : f32
    %675 = vector.broadcast %cst_359 : f32 to vector<1x128xf32>
    %676 = arith.divf %674, %675 : vector<1x128xf32>
    %cst_360 = arith.constant 9.99999974E-6 : f32
    %677 = vector.broadcast %cst_360 : f32 to vector<1x128xf32>
    %678 = arith.addf %676, %677 : vector<1x128xf32>
    %679 = math.rsqrt %678 : vector<1x128xf32>
    %680 = vector.broadcast %679 : vector<1x128xf32> to vector<8x128xf32>
    %681 = arith.mulf %671, %680 : vector<8x128xf32>
    %c20_361 = arith.constant 20 : index
    %c0_362 = arith.constant 0 : index
    %c0_363 = arith.constant 0 : index
    %682 = vector.load %arg3[%c20_361, %c0_362, %c0_363] : memref<43x1x128xf32, #tpu.memory_space<vmem>>, vector<1x1x128xf32>
    %683 = vector.shape_cast %682 : vector<1x1x128xf32> to vector<1x128xf32>
    %684 = vector.broadcast %683 : vector<1x128xf32> to vector<8x128xf32>
    %685 = arith.mulf %681, %684 : vector<8x128xf32>
    %c20_364 = arith.constant 20 : index
    %c0_365 = arith.constant 0 : index
    %c0_366 = arith.constant 0 : index
    %686 = vector.load %arg4[%c20_364, %c0_365, %c0_366] : memref<43x1x128xf32, #tpu.memory_space<vmem>>, vector<1x1x128xf32>
    %687 = vector.shape_cast %686 : vector<1x1x128xf32> to vector<1x128xf32>
    %688 = vector.broadcast %687 : vector<1x128xf32> to vector<8x128xf32>
    %689 = arith.addf %685, %688 : vector<8x128xf32>
    %690 = arith.addf %689, %581 : vector<8x128xf32>
    %c21 = arith.constant 21 : index
    %c0_367 = arith.constant 0 : index
    %c0_368 = arith.constant 0 : index
    %691 = vector.load %arg1[%c21, %c0_367, %c0_368] : memref<43x128x128xf32, #tpu.memory_space<vmem>>, vector<1x128x128xf32>
    %692 = vector.shape_cast %691 : vector<1x128x128xf32> to vector<128x128xf32>
    %cst_369 = arith.constant dense<0.000000e+00> : vector<8x128xf32>
    %693 = tpu.matmul %690, %692, %cst_369 {dimension_numbers = #tpu.dot_dimension_numbers<[1], [0], [0], [1], [0, 0, 1, 1], [], []>} : vector<8x128xf32>, vector<128x128xf32>, vector<8x128xf32> -> vector<8x128xf32>
    %c21_370 = arith.constant 21 : index
    %c0_371 = arith.constant 0 : index
    %c0_372 = arith.constant 0 : index
    %694 = vector.load %arg2[%c21_370, %c0_371, %c0_372] : memref<43x1x128xf32, #tpu.memory_space<vmem>>, vector<1x1x128xf32>
    %695 = vector.shape_cast %694 : vector<1x1x128xf32> to vector<1x128xf32>
    %696 = vector.broadcast %695 : vector<1x128xf32> to vector<8x128xf32>
    %697 = arith.addf %693, %696 : vector<8x128xf32>
    %cst_373 = arith.constant 0.000000e+00 : f32
    %698 = vector.broadcast %cst_373 : f32 to vector<8x128xf32>
    %699 = arith.cmpf oge, %697, %698 : vector<8x128xf32>
    %cst_374 = arith.constant 0.00999999977 : f32
    %700 = vector.broadcast %cst_374 : f32 to vector<8x128xf32>
    %701 = arith.mulf %700, %697 : vector<8x128xf32>
    %702 = arith.select %699, %697, %701 : vector<8x128xi1>, vector<8x128xf32>
    %c22 = arith.constant 22 : index
    %c0_375 = arith.constant 0 : index
    %c0_376 = arith.constant 0 : index
    %703 = vector.load %arg1[%c22, %c0_375, %c0_376] : memref<43x128x128xf32, #tpu.memory_space<vmem>>, vector<1x128x128xf32>
    %704 = vector.shape_cast %703 : vector<1x128x128xf32> to vector<128x128xf32>
    %cst_377 = arith.constant dense<0.000000e+00> : vector<8x128xf32>
    %705 = tpu.matmul %702, %704, %cst_377 {dimension_numbers = #tpu.dot_dimension_numbers<[1], [0], [0], [1], [0, 0, 1, 1], [], []>} : vector<8x128xf32>, vector<128x128xf32>, vector<8x128xf32> -> vector<8x128xf32>
    %c22_378 = arith.constant 22 : index
    %c0_379 = arith.constant 0 : index
    %c0_380 = arith.constant 0 : index
    %706 = vector.load %arg2[%c22_378, %c0_379, %c0_380] : memref<43x1x128xf32, #tpu.memory_space<vmem>>, vector<1x1x128xf32>
    %707 = vector.shape_cast %706 : vector<1x1x128xf32> to vector<1x128xf32>
    %708 = vector.broadcast %707 : vector<1x128xf32> to vector<8x128xf32>
    %709 = arith.addf %705, %708 : vector<8x128xf32>
    %cst_381 = arith.constant 0.000000e+00 : f32
    %710 = vector.broadcast %cst_381 : f32 to vector<8x128xf32>
    %711 = arith.cmpf oge, %709, %710 : vector<8x128xf32>
    %cst_382 = arith.constant 0.00999999977 : f32
    %712 = vector.broadcast %cst_382 : f32 to vector<8x128xf32>
    %713 = arith.mulf %712, %709 : vector<8x128xf32>
    %714 = arith.select %711, %709, %713 : vector<8x128xi1>, vector<8x128xf32>
    %cst_383 = arith.constant dense<0.000000e+00> : vector<128xf32>
    %715 = vector.multi_reduction <add>, %714, %cst_383 [0] : vector<8x128xf32> to vector<128xf32>
    %716 = vector.shape_cast %715 : vector<128xf32> to vector<1x128xf32>
    %cst_384 = arith.constant 8.000000e+00 : f32
    %717 = vector.broadcast %cst_384 : f32 to vector<1x128xf32>
    %718 = arith.divf %716, %717 : vector<1x128xf32>
    %719 = vector.broadcast %718 : vector<1x128xf32> to vector<8x128xf32>
    %720 = arith.subf %714, %719 : vector<8x128xf32>
    %721 = arith.mulf %720, %720 : vector<8x128xf32>
    %cst_385 = arith.constant dense<0.000000e+00> : vector<128xf32>
    %722 = vector.multi_reduction <add>, %721, %cst_385 [0] : vector<8x128xf32> to vector<128xf32>
    %723 = vector.shape_cast %722 : vector<128xf32> to vector<1x128xf32>
    %cst_386 = arith.constant 8.000000e+00 : f32
    %724 = vector.broadcast %cst_386 : f32 to vector<1x128xf32>
    %725 = arith.divf %723, %724 : vector<1x128xf32>
    %cst_387 = arith.constant 9.99999974E-6 : f32
    %726 = vector.broadcast %cst_387 : f32 to vector<1x128xf32>
    %727 = arith.addf %725, %726 : vector<1x128xf32>
    %728 = math.rsqrt %727 : vector<1x128xf32>
    %729 = vector.broadcast %728 : vector<1x128xf32> to vector<8x128xf32>
    %730 = arith.mulf %720, %729 : vector<8x128xf32>
    %c22_388 = arith.constant 22 : index
    %c0_389 = arith.constant 0 : index
    %c0_390 = arith.constant 0 : index
    %731 = vector.load %arg3[%c22_388, %c0_389, %c0_390] : memref<43x1x128xf32, #tpu.memory_space<vmem>>, vector<1x1x128xf32>
    %732 = vector.shape_cast %731 : vector<1x1x128xf32> to vector<1x128xf32>
    %733 = vector.broadcast %732 : vector<1x128xf32> to vector<8x128xf32>
    %734 = arith.mulf %730, %733 : vector<8x128xf32>
    %c22_391 = arith.constant 22 : index
    %c0_392 = arith.constant 0 : index
    %c0_393 = arith.constant 0 : index
    %735 = vector.load %arg4[%c22_391, %c0_392, %c0_393] : memref<43x1x128xf32, #tpu.memory_space<vmem>>, vector<1x1x128xf32>
    %736 = vector.shape_cast %735 : vector<1x1x128xf32> to vector<1x128xf32>
    %737 = vector.broadcast %736 : vector<1x128xf32> to vector<8x128xf32>
    %738 = arith.addf %734, %737 : vector<8x128xf32>
    %c23 = arith.constant 23 : index
    %c0_394 = arith.constant 0 : index
    %c0_395 = arith.constant 0 : index
    %739 = vector.load %arg1[%c23, %c0_394, %c0_395] : memref<43x128x128xf32, #tpu.memory_space<vmem>>, vector<1x128x128xf32>
    %740 = vector.shape_cast %739 : vector<1x128x128xf32> to vector<128x128xf32>
    %cst_396 = arith.constant dense<0.000000e+00> : vector<8x128xf32>
    %741 = tpu.matmul %738, %740, %cst_396 {dimension_numbers = #tpu.dot_dimension_numbers<[1], [0], [0], [1], [0, 0, 1, 1], [], []>} : vector<8x128xf32>, vector<128x128xf32>, vector<8x128xf32> -> vector<8x128xf32>
    %c23_397 = arith.constant 23 : index
    %c0_398 = arith.constant 0 : index
    %c0_399 = arith.constant 0 : index
    %742 = vector.load %arg2[%c23_397, %c0_398, %c0_399] : memref<43x1x128xf32, #tpu.memory_space<vmem>>, vector<1x1x128xf32>
    %743 = vector.shape_cast %742 : vector<1x1x128xf32> to vector<1x128xf32>
    %744 = vector.broadcast %743 : vector<1x128xf32> to vector<8x128xf32>
    %745 = arith.addf %741, %744 : vector<8x128xf32>
    %cst_400 = arith.constant 0.000000e+00 : f32
    %746 = vector.broadcast %cst_400 : f32 to vector<8x128xf32>
    %747 = arith.cmpf oge, %745, %746 : vector<8x128xf32>
    %cst_401 = arith.constant 0.00999999977 : f32
    %748 = vector.broadcast %cst_401 : f32 to vector<8x128xf32>
    %749 = arith.mulf %748, %745 : vector<8x128xf32>
    %750 = arith.select %747, %745, %749 : vector<8x128xi1>, vector<8x128xf32>
    %cst_402 = arith.constant dense<0.000000e+00> : vector<128xf32>
    %751 = vector.multi_reduction <add>, %750, %cst_402 [0] : vector<8x128xf32> to vector<128xf32>
    %752 = vector.shape_cast %751 : vector<128xf32> to vector<1x128xf32>
    %cst_403 = arith.constant 8.000000e+00 : f32
    %753 = vector.broadcast %cst_403 : f32 to vector<1x128xf32>
    %754 = arith.divf %752, %753 : vector<1x128xf32>
    %755 = vector.broadcast %754 : vector<1x128xf32> to vector<8x128xf32>
    %756 = arith.subf %750, %755 : vector<8x128xf32>
    %757 = arith.mulf %756, %756 : vector<8x128xf32>
    %cst_404 = arith.constant dense<0.000000e+00> : vector<128xf32>
    %758 = vector.multi_reduction <add>, %757, %cst_404 [0] : vector<8x128xf32> to vector<128xf32>
    %759 = vector.shape_cast %758 : vector<128xf32> to vector<1x128xf32>
    %cst_405 = arith.constant 8.000000e+00 : f32
    %760 = vector.broadcast %cst_405 : f32 to vector<1x128xf32>
    %761 = arith.divf %759, %760 : vector<1x128xf32>
    %cst_406 = arith.constant 9.99999974E-6 : f32
    %762 = vector.broadcast %cst_406 : f32 to vector<1x128xf32>
    %763 = arith.addf %761, %762 : vector<1x128xf32>
    %764 = math.rsqrt %763 : vector<1x128xf32>
    %765 = vector.broadcast %764 : vector<1x128xf32> to vector<8x128xf32>
    %766 = arith.mulf %756, %765 : vector<8x128xf32>
    %c23_407 = arith.constant 23 : index
    %c0_408 = arith.constant 0 : index
    %c0_409 = arith.constant 0 : index
    %767 = vector.load %arg3[%c23_407, %c0_408, %c0_409] : memref<43x1x128xf32, #tpu.memory_space<vmem>>, vector<1x1x128xf32>
    %768 = vector.shape_cast %767 : vector<1x1x128xf32> to vector<1x128xf32>
    %769 = vector.broadcast %768 : vector<1x128xf32> to vector<8x128xf32>
    %770 = arith.mulf %766, %769 : vector<8x128xf32>
    %c23_410 = arith.constant 23 : index
    %c0_411 = arith.constant 0 : index
    %c0_412 = arith.constant 0 : index
    %771 = vector.load %arg4[%c23_410, %c0_411, %c0_412] : memref<43x1x128xf32, #tpu.memory_space<vmem>>, vector<1x1x128xf32>
    %772 = vector.shape_cast %771 : vector<1x1x128xf32> to vector<1x128xf32>
    %773 = vector.broadcast %772 : vector<1x128xf32> to vector<8x128xf32>
    %774 = arith.addf %770, %773 : vector<8x128xf32>
    %c24 = arith.constant 24 : index
    %c0_413 = arith.constant 0 : index
    %c0_414 = arith.constant 0 : index
    %775 = vector.load %arg1[%c24, %c0_413, %c0_414] : memref<43x128x128xf32, #tpu.memory_space<vmem>>, vector<1x128x128xf32>
    %776 = vector.shape_cast %775 : vector<1x128x128xf32> to vector<128x128xf32>
    %cst_415 = arith.constant dense<0.000000e+00> : vector<8x128xf32>
    %777 = tpu.matmul %774, %776, %cst_415 {dimension_numbers = #tpu.dot_dimension_numbers<[1], [0], [0], [1], [0, 0, 1, 1], [], []>} : vector<8x128xf32>, vector<128x128xf32>, vector<8x128xf32> -> vector<8x128xf32>
    %c24_416 = arith.constant 24 : index
    %c0_417 = arith.constant 0 : index
    %c0_418 = arith.constant 0 : index
    %778 = vector.load %arg2[%c24_416, %c0_417, %c0_418] : memref<43x1x128xf32, #tpu.memory_space<vmem>>, vector<1x1x128xf32>
    %779 = vector.shape_cast %778 : vector<1x1x128xf32> to vector<1x128xf32>
    %780 = vector.broadcast %779 : vector<1x128xf32> to vector<8x128xf32>
    %781 = arith.addf %777, %780 : vector<8x128xf32>
    %cst_419 = arith.constant 0.000000e+00 : f32
    %782 = vector.broadcast %cst_419 : f32 to vector<8x128xf32>
    %783 = arith.cmpf oge, %781, %782 : vector<8x128xf32>
    %cst_420 = arith.constant 0.00999999977 : f32
    %784 = vector.broadcast %cst_420 : f32 to vector<8x128xf32>
    %785 = arith.mulf %784, %781 : vector<8x128xf32>
    %786 = arith.select %783, %781, %785 : vector<8x128xi1>, vector<8x128xf32>
    %cst_421 = arith.constant dense<0.000000e+00> : vector<128xf32>
    %787 = vector.multi_reduction <add>, %786, %cst_421 [0] : vector<8x128xf32> to vector<128xf32>
    %788 = vector.shape_cast %787 : vector<128xf32> to vector<1x128xf32>
    %cst_422 = arith.constant 8.000000e+00 : f32
    %789 = vector.broadcast %cst_422 : f32 to vector<1x128xf32>
    %790 = arith.divf %788, %789 : vector<1x128xf32>
    %791 = vector.broadcast %790 : vector<1x128xf32> to vector<8x128xf32>
    %792 = arith.subf %786, %791 : vector<8x128xf32>
    %793 = arith.mulf %792, %792 : vector<8x128xf32>
    %cst_423 = arith.constant dense<0.000000e+00> : vector<128xf32>
    %794 = vector.multi_reduction <add>, %793, %cst_423 [0] : vector<8x128xf32> to vector<128xf32>
    %795 = vector.shape_cast %794 : vector<128xf32> to vector<1x128xf32>
    %cst_424 = arith.constant 8.000000e+00 : f32
    %796 = vector.broadcast %cst_424 : f32 to vector<1x128xf32>
    %797 = arith.divf %795, %796 : vector<1x128xf32>
    %cst_425 = arith.constant 9.99999974E-6 : f32
    %798 = vector.broadcast %cst_425 : f32 to vector<1x128xf32>
    %799 = arith.addf %797, %798 : vector<1x128xf32>
    %800 = math.rsqrt %799 : vector<1x128xf32>
    %801 = vector.broadcast %800 : vector<1x128xf32> to vector<8x128xf32>
    %802 = arith.mulf %792, %801 : vector<8x128xf32>
    %c24_426 = arith.constant 24 : index
    %c0_427 = arith.constant 0 : index
    %c0_428 = arith.constant 0 : index
    %803 = vector.load %arg3[%c24_426, %c0_427, %c0_428] : memref<43x1x128xf32, #tpu.memory_space<vmem>>, vector<1x1x128xf32>
    %804 = vector.shape_cast %803 : vector<1x1x128xf32> to vector<1x128xf32>
    %805 = vector.broadcast %804 : vector<1x128xf32> to vector<8x128xf32>
    %806 = arith.mulf %802, %805 : vector<8x128xf32>
    %c24_429 = arith.constant 24 : index
    %c0_430 = arith.constant 0 : index
    %c0_431 = arith.constant 0 : index
    %807 = vector.load %arg4[%c24_429, %c0_430, %c0_431] : memref<43x1x128xf32, #tpu.memory_space<vmem>>, vector<1x1x128xf32>
    %808 = vector.shape_cast %807 : vector<1x1x128xf32> to vector<1x128xf32>
    %809 = vector.broadcast %808 : vector<1x128xf32> to vector<8x128xf32>
    %810 = arith.addf %806, %809 : vector<8x128xf32>
    %811 = arith.addf %810, %702 : vector<8x128xf32>
    %c25 = arith.constant 25 : index
    %c0_432 = arith.constant 0 : index
    %c0_433 = arith.constant 0 : index
    %812 = vector.load %arg1[%c25, %c0_432, %c0_433] : memref<43x128x128xf32, #tpu.memory_space<vmem>>, vector<1x128x128xf32>
    %813 = vector.shape_cast %812 : vector<1x128x128xf32> to vector<128x128xf32>
    %cst_434 = arith.constant dense<0.000000e+00> : vector<8x128xf32>
    %814 = tpu.matmul %811, %813, %cst_434 {dimension_numbers = #tpu.dot_dimension_numbers<[1], [0], [0], [1], [0, 0, 1, 1], [], []>} : vector<8x128xf32>, vector<128x128xf32>, vector<8x128xf32> -> vector<8x128xf32>
    %c25_435 = arith.constant 25 : index
    %c0_436 = arith.constant 0 : index
    %c0_437 = arith.constant 0 : index
    %815 = vector.load %arg2[%c25_435, %c0_436, %c0_437] : memref<43x1x128xf32, #tpu.memory_space<vmem>>, vector<1x1x128xf32>
    %816 = vector.shape_cast %815 : vector<1x1x128xf32> to vector<1x128xf32>
    %817 = vector.broadcast %816 : vector<1x128xf32> to vector<8x128xf32>
    %818 = arith.addf %814, %817 : vector<8x128xf32>
    %cst_438 = arith.constant 0.000000e+00 : f32
    %819 = vector.broadcast %cst_438 : f32 to vector<8x128xf32>
    %820 = arith.cmpf oge, %818, %819 : vector<8x128xf32>
    %cst_439 = arith.constant 0.00999999977 : f32
    %821 = vector.broadcast %cst_439 : f32 to vector<8x128xf32>
    %822 = arith.mulf %821, %818 : vector<8x128xf32>
    %823 = arith.select %820, %818, %822 : vector<8x128xi1>, vector<8x128xf32>
    %cst_440 = arith.constant dense<0.000000e+00> : vector<128xf32>
    %824 = vector.multi_reduction <add>, %823, %cst_440 [0] : vector<8x128xf32> to vector<128xf32>
    %825 = vector.shape_cast %824 : vector<128xf32> to vector<1x128xf32>
    %cst_441 = arith.constant 8.000000e+00 : f32
    %826 = vector.broadcast %cst_441 : f32 to vector<1x128xf32>
    %827 = arith.divf %825, %826 : vector<1x128xf32>
    %828 = vector.broadcast %827 : vector<1x128xf32> to vector<8x128xf32>
    %829 = arith.subf %823, %828 : vector<8x128xf32>
    %830 = arith.mulf %829, %829 : vector<8x128xf32>
    %cst_442 = arith.constant dense<0.000000e+00> : vector<128xf32>
    %831 = vector.multi_reduction <add>, %830, %cst_442 [0] : vector<8x128xf32> to vector<128xf32>
    %832 = vector.shape_cast %831 : vector<128xf32> to vector<1x128xf32>
    %cst_443 = arith.constant 8.000000e+00 : f32
    %833 = vector.broadcast %cst_443 : f32 to vector<1x128xf32>
    %834 = arith.divf %832, %833 : vector<1x128xf32>
    %cst_444 = arith.constant 9.99999974E-6 : f32
    %835 = vector.broadcast %cst_444 : f32 to vector<1x128xf32>
    %836 = arith.addf %834, %835 : vector<1x128xf32>
    %837 = math.rsqrt %836 : vector<1x128xf32>
    %838 = vector.broadcast %837 : vector<1x128xf32> to vector<8x128xf32>
    %839 = arith.mulf %829, %838 : vector<8x128xf32>
    %c25_445 = arith.constant 25 : index
    %c0_446 = arith.constant 0 : index
    %c0_447 = arith.constant 0 : index
    %840 = vector.load %arg3[%c25_445, %c0_446, %c0_447] : memref<43x1x128xf32, #tpu.memory_space<vmem>>, vector<1x1x128xf32>
    %841 = vector.shape_cast %840 : vector<1x1x128xf32> to vector<1x128xf32>
    %842 = vector.broadcast %841 : vector<1x128xf32> to vector<8x128xf32>
    %843 = arith.mulf %839, %842 : vector<8x128xf32>
    %c25_448 = arith.constant 25 : index
    %c0_449 = arith.constant 0 : index
    %c0_450 = arith.constant 0 : index
    %844 = vector.load %arg4[%c25_448, %c0_449, %c0_450] : memref<43x1x128xf32, #tpu.memory_space<vmem>>, vector<1x1x128xf32>
    %845 = vector.shape_cast %844 : vector<1x1x128xf32> to vector<1x128xf32>
    %846 = vector.broadcast %845 : vector<1x128xf32> to vector<8x128xf32>
    %847 = arith.addf %843, %846 : vector<8x128xf32>
    %c26 = arith.constant 26 : index
    %c0_451 = arith.constant 0 : index
    %c0_452 = arith.constant 0 : index
    %848 = vector.load %arg1[%c26, %c0_451, %c0_452] : memref<43x128x128xf32, #tpu.memory_space<vmem>>, vector<1x128x128xf32>
    %849 = vector.shape_cast %848 : vector<1x128x128xf32> to vector<128x128xf32>
    %cst_453 = arith.constant dense<0.000000e+00> : vector<8x128xf32>
    %850 = tpu.matmul %847, %849, %cst_453 {dimension_numbers = #tpu.dot_dimension_numbers<[1], [0], [0], [1], [0, 0, 1, 1], [], []>} : vector<8x128xf32>, vector<128x128xf32>, vector<8x128xf32> -> vector<8x128xf32>
    %c26_454 = arith.constant 26 : index
    %c0_455 = arith.constant 0 : index
    %c0_456 = arith.constant 0 : index
    %851 = vector.load %arg2[%c26_454, %c0_455, %c0_456] : memref<43x1x128xf32, #tpu.memory_space<vmem>>, vector<1x1x128xf32>
    %852 = vector.shape_cast %851 : vector<1x1x128xf32> to vector<1x128xf32>
    %853 = vector.broadcast %852 : vector<1x128xf32> to vector<8x128xf32>
    %854 = arith.addf %850, %853 : vector<8x128xf32>
    %cst_457 = arith.constant 0.000000e+00 : f32
    %855 = vector.broadcast %cst_457 : f32 to vector<8x128xf32>
    %856 = arith.cmpf oge, %854, %855 : vector<8x128xf32>
    %cst_458 = arith.constant 0.00999999977 : f32
    %857 = vector.broadcast %cst_458 : f32 to vector<8x128xf32>
    %858 = arith.mulf %857, %854 : vector<8x128xf32>
    %859 = arith.select %856, %854, %858 : vector<8x128xi1>, vector<8x128xf32>
    %cst_459 = arith.constant dense<0.000000e+00> : vector<128xf32>
    %860 = vector.multi_reduction <add>, %859, %cst_459 [0] : vector<8x128xf32> to vector<128xf32>
    %861 = vector.shape_cast %860 : vector<128xf32> to vector<1x128xf32>
    %cst_460 = arith.constant 8.000000e+00 : f32
    %862 = vector.broadcast %cst_460 : f32 to vector<1x128xf32>
    %863 = arith.divf %861, %862 : vector<1x128xf32>
    %864 = vector.broadcast %863 : vector<1x128xf32> to vector<8x128xf32>
    %865 = arith.subf %859, %864 : vector<8x128xf32>
    %866 = arith.mulf %865, %865 : vector<8x128xf32>
    %cst_461 = arith.constant dense<0.000000e+00> : vector<128xf32>
    %867 = vector.multi_reduction <add>, %866, %cst_461 [0] : vector<8x128xf32> to vector<128xf32>
    %868 = vector.shape_cast %867 : vector<128xf32> to vector<1x128xf32>
    %cst_462 = arith.constant 8.000000e+00 : f32
    %869 = vector.broadcast %cst_462 : f32 to vector<1x128xf32>
    %870 = arith.divf %868, %869 : vector<1x128xf32>
    %cst_463 = arith.constant 9.99999974E-6 : f32
    %871 = vector.broadcast %cst_463 : f32 to vector<1x128xf32>
    %872 = arith.addf %870, %871 : vector<1x128xf32>
    %873 = math.rsqrt %872 : vector<1x128xf32>
    %874 = vector.broadcast %873 : vector<1x128xf32> to vector<8x128xf32>
    %875 = arith.mulf %865, %874 : vector<8x128xf32>
    %c26_464 = arith.constant 26 : index
    %c0_465 = arith.constant 0 : index
    %c0_466 = arith.constant 0 : index
    %876 = vector.load %arg3[%c26_464, %c0_465, %c0_466] : memref<43x1x128xf32, #tpu.memory_space<vmem>>, vector<1x1x128xf32>
    %877 = vector.shape_cast %876 : vector<1x1x128xf32> to vector<1x128xf32>
    %878 = vector.broadcast %877 : vector<1x128xf32> to vector<8x128xf32>
    %879 = arith.mulf %875, %878 : vector<8x128xf32>
    %c26_467 = arith.constant 26 : index
    %c0_468 = arith.constant 0 : index
    %c0_469 = arith.constant 0 : index
    %880 = vector.load %arg4[%c26_467, %c0_468, %c0_469] : memref<43x1x128xf32, #tpu.memory_space<vmem>>, vector<1x1x128xf32>
    %881 = vector.shape_cast %880 : vector<1x1x128xf32> to vector<1x128xf32>
    %882 = vector.broadcast %881 : vector<1x128xf32> to vector<8x128xf32>
    %883 = arith.addf %879, %882 : vector<8x128xf32>
    %c27 = arith.constant 27 : index
    %c0_470 = arith.constant 0 : index
    %c0_471 = arith.constant 0 : index
    %884 = vector.load %arg1[%c27, %c0_470, %c0_471] : memref<43x128x128xf32, #tpu.memory_space<vmem>>, vector<1x128x128xf32>
    %885 = vector.shape_cast %884 : vector<1x128x128xf32> to vector<128x128xf32>
    %cst_472 = arith.constant dense<0.000000e+00> : vector<8x128xf32>
    %886 = tpu.matmul %883, %885, %cst_472 {dimension_numbers = #tpu.dot_dimension_numbers<[1], [0], [0], [1], [0, 0, 1, 1], [], []>} : vector<8x128xf32>, vector<128x128xf32>, vector<8x128xf32> -> vector<8x128xf32>
    %c27_473 = arith.constant 27 : index
    %c0_474 = arith.constant 0 : index
    %c0_475 = arith.constant 0 : index
    %887 = vector.load %arg2[%c27_473, %c0_474, %c0_475] : memref<43x1x128xf32, #tpu.memory_space<vmem>>, vector<1x1x128xf32>
    %888 = vector.shape_cast %887 : vector<1x1x128xf32> to vector<1x128xf32>
    %889 = vector.broadcast %888 : vector<1x128xf32> to vector<8x128xf32>
    %890 = arith.addf %886, %889 : vector<8x128xf32>
    %cst_476 = arith.constant 0.000000e+00 : f32
    %891 = vector.broadcast %cst_476 : f32 to vector<8x128xf32>
    %892 = arith.cmpf oge, %890, %891 : vector<8x128xf32>
    %cst_477 = arith.constant 0.00999999977 : f32
    %893 = vector.broadcast %cst_477 : f32 to vector<8x128xf32>
    %894 = arith.mulf %893, %890 : vector<8x128xf32>
    %895 = arith.select %892, %890, %894 : vector<8x128xi1>, vector<8x128xf32>
    %cst_478 = arith.constant dense<0.000000e+00> : vector<128xf32>
    %896 = vector.multi_reduction <add>, %895, %cst_478 [0] : vector<8x128xf32> to vector<128xf32>
    %897 = vector.shape_cast %896 : vector<128xf32> to vector<1x128xf32>
    %cst_479 = arith.constant 8.000000e+00 : f32
    %898 = vector.broadcast %cst_479 : f32 to vector<1x128xf32>
    %899 = arith.divf %897, %898 : vector<1x128xf32>
    %900 = vector.broadcast %899 : vector<1x128xf32> to vector<8x128xf32>
    %901 = arith.subf %895, %900 : vector<8x128xf32>
    %902 = arith.mulf %901, %901 : vector<8x128xf32>
    %cst_480 = arith.constant dense<0.000000e+00> : vector<128xf32>
    %903 = vector.multi_reduction <add>, %902, %cst_480 [0] : vector<8x128xf32> to vector<128xf32>
    %904 = vector.shape_cast %903 : vector<128xf32> to vector<1x128xf32>
    %cst_481 = arith.constant 8.000000e+00 : f32
    %905 = vector.broadcast %cst_481 : f32 to vector<1x128xf32>
    %906 = arith.divf %904, %905 : vector<1x128xf32>
    %cst_482 = arith.constant 9.99999974E-6 : f32
    %907 = vector.broadcast %cst_482 : f32 to vector<1x128xf32>
    %908 = arith.addf %906, %907 : vector<1x128xf32>
    %909 = math.rsqrt %908 : vector<1x128xf32>
    %910 = vector.broadcast %909 : vector<1x128xf32> to vector<8x128xf32>
    %911 = arith.mulf %901, %910 : vector<8x128xf32>
    %c27_483 = arith.constant 27 : index
    %c0_484 = arith.constant 0 : index
    %c0_485 = arith.constant 0 : index
    %912 = vector.load %arg3[%c27_483, %c0_484, %c0_485] : memref<43x1x128xf32, #tpu.memory_space<vmem>>, vector<1x1x128xf32>
    %913 = vector.shape_cast %912 : vector<1x1x128xf32> to vector<1x128xf32>
    %914 = vector.broadcast %913 : vector<1x128xf32> to vector<8x128xf32>
    %915 = arith.mulf %911, %914 : vector<8x128xf32>
    %c27_486 = arith.constant 27 : index
    %c0_487 = arith.constant 0 : index
    %c0_488 = arith.constant 0 : index
    %916 = vector.load %arg4[%c27_486, %c0_487, %c0_488] : memref<43x1x128xf32, #tpu.memory_space<vmem>>, vector<1x1x128xf32>
    %917 = vector.shape_cast %916 : vector<1x1x128xf32> to vector<1x128xf32>
    %918 = vector.broadcast %917 : vector<1x128xf32> to vector<8x128xf32>
    %919 = arith.addf %915, %918 : vector<8x128xf32>
    %920 = arith.addf %919, %811 : vector<8x128xf32>
    %921 = tpu.iota {dimensions = array<i32: 0>} : vector<128x128xi32>
    %922 = tpu.iota {dimensions = array<i32: 1>} : vector<128x128xi32>
    %c16_i32 = arith.constant 16 : i32
    %923 = vector.broadcast %c16_i32 : i32 to vector<128x128xi32>
    %924 = arith.addi %921, %923 : vector<128x128xi32>
    %925 = arith.cmpi eq, %922, %924 : vector<128x128xi32>
    %c16_i32_489 = arith.constant 16 : i32
    %926 = vector.broadcast %c16_i32_489 : i32 to vector<128x128xi32>
    %927 = arith.cmpi slt, %921, %926 : vector<128x128xi32>
    %928 = arith.andi %925, %927 : vector<128x128xi1>
    %cst_490 = arith.constant 1.000000e+00 : f32
    %cst_491 = arith.constant 0.000000e+00 : f32
    %929 = vector.broadcast %cst_490 : f32 to vector<128x128xf32>
    %930 = vector.broadcast %cst_491 : f32 to vector<128x128xf32>
    %931 = arith.select %928, %929, %930 : vector<128x128xi1>, vector<128x128xf32>
    %cst_492 = arith.constant dense<0.000000e+00> : vector<8x128xf32>
    %932 = tpu.matmul %460, %931, %cst_492 {dimension_numbers = #tpu.dot_dimension_numbers<[1], [0], [0], [1], [0, 0, 1, 1], [], []>} : vector<8x128xf32>, vector<128x128xf32>, vector<8x128xf32> -> vector<8x128xf32>
    %933 = arith.addf %920, %932 : vector<8x128xf32>
    %c28 = arith.constant 28 : index
    %c0_493 = arith.constant 0 : index
    %c0_494 = arith.constant 0 : index
    %934 = vector.load %arg1[%c28, %c0_493, %c0_494] : memref<43x128x128xf32, #tpu.memory_space<vmem>>, vector<1x128x128xf32>
    %935 = vector.shape_cast %934 : vector<1x128x128xf32> to vector<128x128xf32>
    %cst_495 = arith.constant dense<0.000000e+00> : vector<8x128xf32>
    %936 = tpu.matmul %933, %935, %cst_495 {dimension_numbers = #tpu.dot_dimension_numbers<[1], [0], [0], [1], [0, 0, 1, 1], [], []>} : vector<8x128xf32>, vector<128x128xf32>, vector<8x128xf32> -> vector<8x128xf32>
    %c28_496 = arith.constant 28 : index
    %c0_497 = arith.constant 0 : index
    %c0_498 = arith.constant 0 : index
    %937 = vector.load %arg2[%c28_496, %c0_497, %c0_498] : memref<43x1x128xf32, #tpu.memory_space<vmem>>, vector<1x1x128xf32>
    %938 = vector.shape_cast %937 : vector<1x1x128xf32> to vector<1x128xf32>
    %939 = vector.broadcast %938 : vector<1x128xf32> to vector<8x128xf32>
    %940 = arith.addf %936, %939 : vector<8x128xf32>
    %cst_499 = arith.constant 0.000000e+00 : f32
    %941 = vector.broadcast %cst_499 : f32 to vector<8x128xf32>
    %942 = arith.cmpf oge, %940, %941 : vector<8x128xf32>
    %cst_500 = arith.constant 0.00999999977 : f32
    %943 = vector.broadcast %cst_500 : f32 to vector<8x128xf32>
    %944 = arith.mulf %943, %940 : vector<8x128xf32>
    %945 = arith.select %942, %940, %944 : vector<8x128xi1>, vector<8x128xf32>
    %c29 = arith.constant 29 : index
    %c0_501 = arith.constant 0 : index
    %c0_502 = arith.constant 0 : index
    %946 = vector.load %arg1[%c29, %c0_501, %c0_502] : memref<43x128x128xf32, #tpu.memory_space<vmem>>, vector<1x128x128xf32>
    %947 = vector.shape_cast %946 : vector<1x128x128xf32> to vector<128x128xf32>
    %cst_503 = arith.constant dense<0.000000e+00> : vector<8x128xf32>
    %948 = tpu.matmul %945, %947, %cst_503 {dimension_numbers = #tpu.dot_dimension_numbers<[1], [0], [0], [1], [0, 0, 1, 1], [], []>} : vector<8x128xf32>, vector<128x128xf32>, vector<8x128xf32> -> vector<8x128xf32>
    %c29_504 = arith.constant 29 : index
    %c0_505 = arith.constant 0 : index
    %c0_506 = arith.constant 0 : index
    %949 = vector.load %arg2[%c29_504, %c0_505, %c0_506] : memref<43x1x128xf32, #tpu.memory_space<vmem>>, vector<1x1x128xf32>
    %950 = vector.shape_cast %949 : vector<1x1x128xf32> to vector<1x128xf32>
    %951 = vector.broadcast %950 : vector<1x128xf32> to vector<8x128xf32>
    %952 = arith.addf %948, %951 : vector<8x128xf32>
    %cst_507 = arith.constant 0.000000e+00 : f32
    %953 = vector.broadcast %cst_507 : f32 to vector<8x128xf32>
    %954 = arith.cmpf oge, %952, %953 : vector<8x128xf32>
    %cst_508 = arith.constant 0.00999999977 : f32
    %955 = vector.broadcast %cst_508 : f32 to vector<8x128xf32>
    %956 = arith.mulf %955, %952 : vector<8x128xf32>
    %957 = arith.select %954, %952, %956 : vector<8x128xi1>, vector<8x128xf32>
    %cst_509 = arith.constant dense<0.000000e+00> : vector<128xf32>
    %958 = vector.multi_reduction <add>, %957, %cst_509 [0] : vector<8x128xf32> to vector<128xf32>
    %959 = vector.shape_cast %958 : vector<128xf32> to vector<1x128xf32>
    %cst_510 = arith.constant 8.000000e+00 : f32
    %960 = vector.broadcast %cst_510 : f32 to vector<1x128xf32>
    %961 = arith.divf %959, %960 : vector<1x128xf32>
    %962 = vector.broadcast %961 : vector<1x128xf32> to vector<8x128xf32>
    %963 = arith.subf %957, %962 : vector<8x128xf32>
    %964 = arith.mulf %963, %963 : vector<8x128xf32>
    %cst_511 = arith.constant dense<0.000000e+00> : vector<128xf32>
    %965 = vector.multi_reduction <add>, %964, %cst_511 [0] : vector<8x128xf32> to vector<128xf32>
    %966 = vector.shape_cast %965 : vector<128xf32> to vector<1x128xf32>
    %cst_512 = arith.constant 8.000000e+00 : f32
    %967 = vector.broadcast %cst_512 : f32 to vector<1x128xf32>
    %968 = arith.divf %966, %967 : vector<1x128xf32>
    %cst_513 = arith.constant 9.99999974E-6 : f32
    %969 = vector.broadcast %cst_513 : f32 to vector<1x128xf32>
    %970 = arith.addf %968, %969 : vector<1x128xf32>
    %971 = math.rsqrt %970 : vector<1x128xf32>
    %972 = vector.broadcast %971 : vector<1x128xf32> to vector<8x128xf32>
    %973 = arith.mulf %963, %972 : vector<8x128xf32>
    %c29_514 = arith.constant 29 : index
    %c0_515 = arith.constant 0 : index
    %c0_516 = arith.constant 0 : index
    %974 = vector.load %arg3[%c29_514, %c0_515, %c0_516] : memref<43x1x128xf32, #tpu.memory_space<vmem>>, vector<1x1x128xf32>
    %975 = vector.shape_cast %974 : vector<1x1x128xf32> to vector<1x128xf32>
    %976 = vector.broadcast %975 : vector<1x128xf32> to vector<8x128xf32>
    %977 = arith.mulf %973, %976 : vector<8x128xf32>
    %c29_517 = arith.constant 29 : index
    %c0_518 = arith.constant 0 : index
    %c0_519 = arith.constant 0 : index
    %978 = vector.load %arg4[%c29_517, %c0_518, %c0_519] : memref<43x1x128xf32, #tpu.memory_space<vmem>>, vector<1x1x128xf32>
    %979 = vector.shape_cast %978 : vector<1x1x128xf32> to vector<1x128xf32>
    %980 = vector.broadcast %979 : vector<1x128xf32> to vector<8x128xf32>
    %981 = arith.addf %977, %980 : vector<8x128xf32>
    %c30 = arith.constant 30 : index
    %c0_520 = arith.constant 0 : index
    %c0_521 = arith.constant 0 : index
    %982 = vector.load %arg1[%c30, %c0_520, %c0_521] : memref<43x128x128xf32, #tpu.memory_space<vmem>>, vector<1x128x128xf32>
    %983 = vector.shape_cast %982 : vector<1x128x128xf32> to vector<128x128xf32>
    %cst_522 = arith.constant dense<0.000000e+00> : vector<8x128xf32>
    %984 = tpu.matmul %981, %983, %cst_522 {dimension_numbers = #tpu.dot_dimension_numbers<[1], [0], [0], [1], [0, 0, 1, 1], [], []>} : vector<8x128xf32>, vector<128x128xf32>, vector<8x128xf32> -> vector<8x128xf32>
    %c30_523 = arith.constant 30 : index
    %c0_524 = arith.constant 0 : index
    %c0_525 = arith.constant 0 : index
    %985 = vector.load %arg2[%c30_523, %c0_524, %c0_525] : memref<43x1x128xf32, #tpu.memory_space<vmem>>, vector<1x1x128xf32>
    %986 = vector.shape_cast %985 : vector<1x1x128xf32> to vector<1x128xf32>
    %987 = vector.broadcast %986 : vector<1x128xf32> to vector<8x128xf32>
    %988 = arith.addf %984, %987 : vector<8x128xf32>
    %cst_526 = arith.constant 0.000000e+00 : f32
    %989 = vector.broadcast %cst_526 : f32 to vector<8x128xf32>
    %990 = arith.cmpf oge, %988, %989 : vector<8x128xf32>
    %cst_527 = arith.constant 0.00999999977 : f32
    %991 = vector.broadcast %cst_527 : f32 to vector<8x128xf32>
    %992 = arith.mulf %991, %988 : vector<8x128xf32>
    %993 = arith.select %990, %988, %992 : vector<8x128xi1>, vector<8x128xf32>
    %cst_528 = arith.constant dense<0.000000e+00> : vector<128xf32>
    %994 = vector.multi_reduction <add>, %993, %cst_528 [0] : vector<8x128xf32> to vector<128xf32>
    %995 = vector.shape_cast %994 : vector<128xf32> to vector<1x128xf32>
    %cst_529 = arith.constant 8.000000e+00 : f32
    %996 = vector.broadcast %cst_529 : f32 to vector<1x128xf32>
    %997 = arith.divf %995, %996 : vector<1x128xf32>
    %998 = vector.broadcast %997 : vector<1x128xf32> to vector<8x128xf32>
    %999 = arith.subf %993, %998 : vector<8x128xf32>
    %1000 = arith.mulf %999, %999 : vector<8x128xf32>
    %cst_530 = arith.constant dense<0.000000e+00> : vector<128xf32>
    %1001 = vector.multi_reduction <add>, %1000, %cst_530 [0] : vector<8x128xf32> to vector<128xf32>
    %1002 = vector.shape_cast %1001 : vector<128xf32> to vector<1x128xf32>
    %cst_531 = arith.constant 8.000000e+00 : f32
    %1003 = vector.broadcast %cst_531 : f32 to vector<1x128xf32>
    %1004 = arith.divf %1002, %1003 : vector<1x128xf32>
    %cst_532 = arith.constant 9.99999974E-6 : f32
    %1005 = vector.broadcast %cst_532 : f32 to vector<1x128xf32>
    %1006 = arith.addf %1004, %1005 : vector<1x128xf32>
    %1007 = math.rsqrt %1006 : vector<1x128xf32>
    %1008 = vector.broadcast %1007 : vector<1x128xf32> to vector<8x128xf32>
    %1009 = arith.mulf %999, %1008 : vector<8x128xf32>
    %c30_533 = arith.constant 30 : index
    %c0_534 = arith.constant 0 : index
    %c0_535 = arith.constant 0 : index
    %1010 = vector.load %arg3[%c30_533, %c0_534, %c0_535] : memref<43x1x128xf32, #tpu.memory_space<vmem>>, vector<1x1x128xf32>
    %1011 = vector.shape_cast %1010 : vector<1x1x128xf32> to vector<1x128xf32>
    %1012 = vector.broadcast %1011 : vector<1x128xf32> to vector<8x128xf32>
    %1013 = arith.mulf %1009, %1012 : vector<8x128xf32>
    %c30_536 = arith.constant 30 : index
    %c0_537 = arith.constant 0 : index
    %c0_538 = arith.constant 0 : index
    %1014 = vector.load %arg4[%c30_536, %c0_537, %c0_538] : memref<43x1x128xf32, #tpu.memory_space<vmem>>, vector<1x1x128xf32>
    %1015 = vector.shape_cast %1014 : vector<1x1x128xf32> to vector<1x128xf32>
    %1016 = vector.broadcast %1015 : vector<1x128xf32> to vector<8x128xf32>
    %1017 = arith.addf %1013, %1016 : vector<8x128xf32>
    %c31 = arith.constant 31 : index
    %c0_539 = arith.constant 0 : index
    %c0_540 = arith.constant 0 : index
    %1018 = vector.load %arg1[%c31, %c0_539, %c0_540] : memref<43x128x128xf32, #tpu.memory_space<vmem>>, vector<1x128x128xf32>
    %1019 = vector.shape_cast %1018 : vector<1x128x128xf32> to vector<128x128xf32>
    %cst_541 = arith.constant dense<0.000000e+00> : vector<8x128xf32>
    %1020 = tpu.matmul %1017, %1019, %cst_541 {dimension_numbers = #tpu.dot_dimension_numbers<[1], [0], [0], [1], [0, 0, 1, 1], [], []>} : vector<8x128xf32>, vector<128x128xf32>, vector<8x128xf32> -> vector<8x128xf32>
    %c31_542 = arith.constant 31 : index
    %c0_543 = arith.constant 0 : index
    %c0_544 = arith.constant 0 : index
    %1021 = vector.load %arg2[%c31_542, %c0_543, %c0_544] : memref<43x1x128xf32, #tpu.memory_space<vmem>>, vector<1x1x128xf32>
    %1022 = vector.shape_cast %1021 : vector<1x1x128xf32> to vector<1x128xf32>
    %1023 = vector.broadcast %1022 : vector<1x128xf32> to vector<8x128xf32>
    %1024 = arith.addf %1020, %1023 : vector<8x128xf32>
    %cst_545 = arith.constant 0.000000e+00 : f32
    %1025 = vector.broadcast %cst_545 : f32 to vector<8x128xf32>
    %1026 = arith.cmpf oge, %1024, %1025 : vector<8x128xf32>
    %cst_546 = arith.constant 0.00999999977 : f32
    %1027 = vector.broadcast %cst_546 : f32 to vector<8x128xf32>
    %1028 = arith.mulf %1027, %1024 : vector<8x128xf32>
    %1029 = arith.select %1026, %1024, %1028 : vector<8x128xi1>, vector<8x128xf32>
    %cst_547 = arith.constant dense<0.000000e+00> : vector<128xf32>
    %1030 = vector.multi_reduction <add>, %1029, %cst_547 [0] : vector<8x128xf32> to vector<128xf32>
    %1031 = vector.shape_cast %1030 : vector<128xf32> to vector<1x128xf32>
    %cst_548 = arith.constant 8.000000e+00 : f32
    %1032 = vector.broadcast %cst_548 : f32 to vector<1x128xf32>
    %1033 = arith.divf %1031, %1032 : vector<1x128xf32>
    %1034 = vector.broadcast %1033 : vector<1x128xf32> to vector<8x128xf32>
    %1035 = arith.subf %1029, %1034 : vector<8x128xf32>
    %1036 = arith.mulf %1035, %1035 : vector<8x128xf32>
    %cst_549 = arith.constant dense<0.000000e+00> : vector<128xf32>
    %1037 = vector.multi_reduction <add>, %1036, %cst_549 [0] : vector<8x128xf32> to vector<128xf32>
    %1038 = vector.shape_cast %1037 : vector<128xf32> to vector<1x128xf32>
    %cst_550 = arith.constant 8.000000e+00 : f32
    %1039 = vector.broadcast %cst_550 : f32 to vector<1x128xf32>
    %1040 = arith.divf %1038, %1039 : vector<1x128xf32>
    %cst_551 = arith.constant 9.99999974E-6 : f32
    %1041 = vector.broadcast %cst_551 : f32 to vector<1x128xf32>
    %1042 = arith.addf %1040, %1041 : vector<1x128xf32>
    %1043 = math.rsqrt %1042 : vector<1x128xf32>
    %1044 = vector.broadcast %1043 : vector<1x128xf32> to vector<8x128xf32>
    %1045 = arith.mulf %1035, %1044 : vector<8x128xf32>
    %c31_552 = arith.constant 31 : index
    %c0_553 = arith.constant 0 : index
    %c0_554 = arith.constant 0 : index
    %1046 = vector.load %arg3[%c31_552, %c0_553, %c0_554] : memref<43x1x128xf32, #tpu.memory_space<vmem>>, vector<1x1x128xf32>
    %1047 = vector.shape_cast %1046 : vector<1x1x128xf32> to vector<1x128xf32>
    %1048 = vector.broadcast %1047 : vector<1x128xf32> to vector<8x128xf32>
    %1049 = arith.mulf %1045, %1048 : vector<8x128xf32>
    %c31_555 = arith.constant 31 : index
    %c0_556 = arith.constant 0 : index
    %c0_557 = arith.constant 0 : index
    %1050 = vector.load %arg4[%c31_555, %c0_556, %c0_557] : memref<43x1x128xf32, #tpu.memory_space<vmem>>, vector<1x1x128xf32>
    %1051 = vector.shape_cast %1050 : vector<1x1x128xf32> to vector<1x128xf32>
    %1052 = vector.broadcast %1051 : vector<1x128xf32> to vector<8x128xf32>
    %1053 = arith.addf %1049, %1052 : vector<8x128xf32>
    %1054 = arith.addf %1053, %945 : vector<8x128xf32>
    %c32 = arith.constant 32 : index
    %c0_558 = arith.constant 0 : index
    %c0_559 = arith.constant 0 : index
    %1055 = vector.load %arg1[%c32, %c0_558, %c0_559] : memref<43x128x128xf32, #tpu.memory_space<vmem>>, vector<1x128x128xf32>
    %1056 = vector.shape_cast %1055 : vector<1x128x128xf32> to vector<128x128xf32>
    %cst_560 = arith.constant dense<0.000000e+00> : vector<8x128xf32>
    %1057 = tpu.matmul %1054, %1056, %cst_560 {dimension_numbers = #tpu.dot_dimension_numbers<[1], [0], [0], [1], [0, 0, 1, 1], [], []>} : vector<8x128xf32>, vector<128x128xf32>, vector<8x128xf32> -> vector<8x128xf32>
    %c32_561 = arith.constant 32 : index
    %c0_562 = arith.constant 0 : index
    %c0_563 = arith.constant 0 : index
    %1058 = vector.load %arg2[%c32_561, %c0_562, %c0_563] : memref<43x1x128xf32, #tpu.memory_space<vmem>>, vector<1x1x128xf32>
    %1059 = vector.shape_cast %1058 : vector<1x1x128xf32> to vector<1x128xf32>
    %1060 = vector.broadcast %1059 : vector<1x128xf32> to vector<8x128xf32>
    %1061 = arith.addf %1057, %1060 : vector<8x128xf32>
    %cst_564 = arith.constant 0.000000e+00 : f32
    %1062 = vector.broadcast %cst_564 : f32 to vector<8x128xf32>
    %1063 = arith.cmpf oge, %1061, %1062 : vector<8x128xf32>
    %cst_565 = arith.constant 0.00999999977 : f32
    %1064 = vector.broadcast %cst_565 : f32 to vector<8x128xf32>
    %1065 = arith.mulf %1064, %1061 : vector<8x128xf32>
    %1066 = arith.select %1063, %1061, %1065 : vector<8x128xi1>, vector<8x128xf32>
    %cst_566 = arith.constant dense<0.000000e+00> : vector<128xf32>
    %1067 = vector.multi_reduction <add>, %1066, %cst_566 [0] : vector<8x128xf32> to vector<128xf32>
    %1068 = vector.shape_cast %1067 : vector<128xf32> to vector<1x128xf32>
    %cst_567 = arith.constant 8.000000e+00 : f32
    %1069 = vector.broadcast %cst_567 : f32 to vector<1x128xf32>
    %1070 = arith.divf %1068, %1069 : vector<1x128xf32>
    %1071 = vector.broadcast %1070 : vector<1x128xf32> to vector<8x128xf32>
    %1072 = arith.subf %1066, %1071 : vector<8x128xf32>
    %1073 = arith.mulf %1072, %1072 : vector<8x128xf32>
    %cst_568 = arith.constant dense<0.000000e+00> : vector<128xf32>
    %1074 = vector.multi_reduction <add>, %1073, %cst_568 [0] : vector<8x128xf32> to vector<128xf32>
    %1075 = vector.shape_cast %1074 : vector<128xf32> to vector<1x128xf32>
    %cst_569 = arith.constant 8.000000e+00 : f32
    %1076 = vector.broadcast %cst_569 : f32 to vector<1x128xf32>
    %1077 = arith.divf %1075, %1076 : vector<1x128xf32>
    %cst_570 = arith.constant 9.99999974E-6 : f32
    %1078 = vector.broadcast %cst_570 : f32 to vector<1x128xf32>
    %1079 = arith.addf %1077, %1078 : vector<1x128xf32>
    %1080 = math.rsqrt %1079 : vector<1x128xf32>
    %1081 = vector.broadcast %1080 : vector<1x128xf32> to vector<8x128xf32>
    %1082 = arith.mulf %1072, %1081 : vector<8x128xf32>
    %c32_571 = arith.constant 32 : index
    %c0_572 = arith.constant 0 : index
    %c0_573 = arith.constant 0 : index
    %1083 = vector.load %arg3[%c32_571, %c0_572, %c0_573] : memref<43x1x128xf32, #tpu.memory_space<vmem>>, vector<1x1x128xf32>
    %1084 = vector.shape_cast %1083 : vector<1x1x128xf32> to vector<1x128xf32>
    %1085 = vector.broadcast %1084 : vector<1x128xf32> to vector<8x128xf32>
    %1086 = arith.mulf %1082, %1085 : vector<8x128xf32>
    %c32_574 = arith.constant 32 : index
    %c0_575 = arith.constant 0 : index
    %c0_576 = arith.constant 0 : index
    %1087 = vector.load %arg4[%c32_574, %c0_575, %c0_576] : memref<43x1x128xf32, #tpu.memory_space<vmem>>, vector<1x1x128xf32>
    %1088 = vector.shape_cast %1087 : vector<1x1x128xf32> to vector<1x128xf32>
    %1089 = vector.broadcast %1088 : vector<1x128xf32> to vector<8x128xf32>
    %1090 = arith.addf %1086, %1089 : vector<8x128xf32>
    %c33 = arith.constant 33 : index
    %c0_577 = arith.constant 0 : index
    %c0_578 = arith.constant 0 : index
    %1091 = vector.load %arg1[%c33, %c0_577, %c0_578] : memref<43x128x128xf32, #tpu.memory_space<vmem>>, vector<1x128x128xf32>
    %1092 = vector.shape_cast %1091 : vector<1x128x128xf32> to vector<128x128xf32>
    %cst_579 = arith.constant dense<0.000000e+00> : vector<8x128xf32>
    %1093 = tpu.matmul %1090, %1092, %cst_579 {dimension_numbers = #tpu.dot_dimension_numbers<[1], [0], [0], [1], [0, 0, 1, 1], [], []>} : vector<8x128xf32>, vector<128x128xf32>, vector<8x128xf32> -> vector<8x128xf32>
    %c33_580 = arith.constant 33 : index
    %c0_581 = arith.constant 0 : index
    %c0_582 = arith.constant 0 : index
    %1094 = vector.load %arg2[%c33_580, %c0_581, %c0_582] : memref<43x1x128xf32, #tpu.memory_space<vmem>>, vector<1x1x128xf32>
    %1095 = vector.shape_cast %1094 : vector<1x1x128xf32> to vector<1x128xf32>
    %1096 = vector.broadcast %1095 : vector<1x128xf32> to vector<8x128xf32>
    %1097 = arith.addf %1093, %1096 : vector<8x128xf32>
    %cst_583 = arith.constant 0.000000e+00 : f32
    %1098 = vector.broadcast %cst_583 : f32 to vector<8x128xf32>
    %1099 = arith.cmpf oge, %1097, %1098 : vector<8x128xf32>
    %cst_584 = arith.constant 0.00999999977 : f32
    %1100 = vector.broadcast %cst_584 : f32 to vector<8x128xf32>
    %1101 = arith.mulf %1100, %1097 : vector<8x128xf32>
    %1102 = arith.select %1099, %1097, %1101 : vector<8x128xi1>, vector<8x128xf32>
    %cst_585 = arith.constant dense<0.000000e+00> : vector<128xf32>
    %1103 = vector.multi_reduction <add>, %1102, %cst_585 [0] : vector<8x128xf32> to vector<128xf32>
    %1104 = vector.shape_cast %1103 : vector<128xf32> to vector<1x128xf32>
    %cst_586 = arith.constant 8.000000e+00 : f32
    %1105 = vector.broadcast %cst_586 : f32 to vector<1x128xf32>
    %1106 = arith.divf %1104, %1105 : vector<1x128xf32>
    %1107 = vector.broadcast %1106 : vector<1x128xf32> to vector<8x128xf32>
    %1108 = arith.subf %1102, %1107 : vector<8x128xf32>
    %1109 = arith.mulf %1108, %1108 : vector<8x128xf32>
    %cst_587 = arith.constant dense<0.000000e+00> : vector<128xf32>
    %1110 = vector.multi_reduction <add>, %1109, %cst_587 [0] : vector<8x128xf32> to vector<128xf32>
    %1111 = vector.shape_cast %1110 : vector<128xf32> to vector<1x128xf32>
    %cst_588 = arith.constant 8.000000e+00 : f32
    %1112 = vector.broadcast %cst_588 : f32 to vector<1x128xf32>
    %1113 = arith.divf %1111, %1112 : vector<1x128xf32>
    %cst_589 = arith.constant 9.99999974E-6 : f32
    %1114 = vector.broadcast %cst_589 : f32 to vector<1x128xf32>
    %1115 = arith.addf %1113, %1114 : vector<1x128xf32>
    %1116 = math.rsqrt %1115 : vector<1x128xf32>
    %1117 = vector.broadcast %1116 : vector<1x128xf32> to vector<8x128xf32>
    %1118 = arith.mulf %1108, %1117 : vector<8x128xf32>
    %c33_590 = arith.constant 33 : index
    %c0_591 = arith.constant 0 : index
    %c0_592 = arith.constant 0 : index
    %1119 = vector.load %arg3[%c33_590, %c0_591, %c0_592] : memref<43x1x128xf32, #tpu.memory_space<vmem>>, vector<1x1x128xf32>
    %1120 = vector.shape_cast %1119 : vector<1x1x128xf32> to vector<1x128xf32>
    %1121 = vector.broadcast %1120 : vector<1x128xf32> to vector<8x128xf32>
    %1122 = arith.mulf %1118, %1121 : vector<8x128xf32>
    %c33_593 = arith.constant 33 : index
    %c0_594 = arith.constant 0 : index
    %c0_595 = arith.constant 0 : index
    %1123 = vector.load %arg4[%c33_593, %c0_594, %c0_595] : memref<43x1x128xf32, #tpu.memory_space<vmem>>, vector<1x1x128xf32>
    %1124 = vector.shape_cast %1123 : vector<1x1x128xf32> to vector<1x128xf32>
    %1125 = vector.broadcast %1124 : vector<1x128xf32> to vector<8x128xf32>
    %1126 = arith.addf %1122, %1125 : vector<8x128xf32>
    %c34 = arith.constant 34 : index
    %c0_596 = arith.constant 0 : index
    %c0_597 = arith.constant 0 : index
    %1127 = vector.load %arg1[%c34, %c0_596, %c0_597] : memref<43x128x128xf32, #tpu.memory_space<vmem>>, vector<1x128x128xf32>
    %1128 = vector.shape_cast %1127 : vector<1x128x128xf32> to vector<128x128xf32>
    %cst_598 = arith.constant dense<0.000000e+00> : vector<8x128xf32>
    %1129 = tpu.matmul %1126, %1128, %cst_598 {dimension_numbers = #tpu.dot_dimension_numbers<[1], [0], [0], [1], [0, 0, 1, 1], [], []>} : vector<8x128xf32>, vector<128x128xf32>, vector<8x128xf32> -> vector<8x128xf32>
    %c34_599 = arith.constant 34 : index
    %c0_600 = arith.constant 0 : index
    %c0_601 = arith.constant 0 : index
    %1130 = vector.load %arg2[%c34_599, %c0_600, %c0_601] : memref<43x1x128xf32, #tpu.memory_space<vmem>>, vector<1x1x128xf32>
    %1131 = vector.shape_cast %1130 : vector<1x1x128xf32> to vector<1x128xf32>
    %1132 = vector.broadcast %1131 : vector<1x128xf32> to vector<8x128xf32>
    %1133 = arith.addf %1129, %1132 : vector<8x128xf32>
    %cst_602 = arith.constant 0.000000e+00 : f32
    %1134 = vector.broadcast %cst_602 : f32 to vector<8x128xf32>
    %1135 = arith.cmpf oge, %1133, %1134 : vector<8x128xf32>
    %cst_603 = arith.constant 0.00999999977 : f32
    %1136 = vector.broadcast %cst_603 : f32 to vector<8x128xf32>
    %1137 = arith.mulf %1136, %1133 : vector<8x128xf32>
    %1138 = arith.select %1135, %1133, %1137 : vector<8x128xi1>, vector<8x128xf32>
    %cst_604 = arith.constant dense<0.000000e+00> : vector<128xf32>
    %1139 = vector.multi_reduction <add>, %1138, %cst_604 [0] : vector<8x128xf32> to vector<128xf32>
    %1140 = vector.shape_cast %1139 : vector<128xf32> to vector<1x128xf32>
    %cst_605 = arith.constant 8.000000e+00 : f32
    %1141 = vector.broadcast %cst_605 : f32 to vector<1x128xf32>
    %1142 = arith.divf %1140, %1141 : vector<1x128xf32>
    %1143 = vector.broadcast %1142 : vector<1x128xf32> to vector<8x128xf32>
    %1144 = arith.subf %1138, %1143 : vector<8x128xf32>
    %1145 = arith.mulf %1144, %1144 : vector<8x128xf32>
    %cst_606 = arith.constant dense<0.000000e+00> : vector<128xf32>
    %1146 = vector.multi_reduction <add>, %1145, %cst_606 [0] : vector<8x128xf32> to vector<128xf32>
    %1147 = vector.shape_cast %1146 : vector<128xf32> to vector<1x128xf32>
    %cst_607 = arith.constant 8.000000e+00 : f32
    %1148 = vector.broadcast %cst_607 : f32 to vector<1x128xf32>
    %1149 = arith.divf %1147, %1148 : vector<1x128xf32>
    %cst_608 = arith.constant 9.99999974E-6 : f32
    %1150 = vector.broadcast %cst_608 : f32 to vector<1x128xf32>
    %1151 = arith.addf %1149, %1150 : vector<1x128xf32>
    %1152 = math.rsqrt %1151 : vector<1x128xf32>
    %1153 = vector.broadcast %1152 : vector<1x128xf32> to vector<8x128xf32>
    %1154 = arith.mulf %1144, %1153 : vector<8x128xf32>
    %c34_609 = arith.constant 34 : index
    %c0_610 = arith.constant 0 : index
    %c0_611 = arith.constant 0 : index
    %1155 = vector.load %arg3[%c34_609, %c0_610, %c0_611] : memref<43x1x128xf32, #tpu.memory_space<vmem>>, vector<1x1x128xf32>
    %1156 = vector.shape_cast %1155 : vector<1x1x128xf32> to vector<1x128xf32>
    %1157 = vector.broadcast %1156 : vector<1x128xf32> to vector<8x128xf32>
    %1158 = arith.mulf %1154, %1157 : vector<8x128xf32>
    %c34_612 = arith.constant 34 : index
    %c0_613 = arith.constant 0 : index
    %c0_614 = arith.constant 0 : index
    %1159 = vector.load %arg4[%c34_612, %c0_613, %c0_614] : memref<43x1x128xf32, #tpu.memory_space<vmem>>, vector<1x1x128xf32>
    %1160 = vector.shape_cast %1159 : vector<1x1x128xf32> to vector<1x128xf32>
    %1161 = vector.broadcast %1160 : vector<1x128xf32> to vector<8x128xf32>
    %1162 = arith.addf %1158, %1161 : vector<8x128xf32>
    %1163 = arith.addf %1162, %1054 : vector<8x128xf32>
    %c35 = arith.constant 35 : index
    %c0_615 = arith.constant 0 : index
    %c0_616 = arith.constant 0 : index
    %1164 = vector.load %arg1[%c35, %c0_615, %c0_616] : memref<43x128x128xf32, #tpu.memory_space<vmem>>, vector<1x128x128xf32>
    %1165 = vector.shape_cast %1164 : vector<1x128x128xf32> to vector<128x128xf32>
    %cst_617 = arith.constant dense<0.000000e+00> : vector<8x128xf32>
    %1166 = tpu.matmul %1163, %1165, %cst_617 {dimension_numbers = #tpu.dot_dimension_numbers<[1], [0], [0], [1], [0, 0, 1, 1], [], []>} : vector<8x128xf32>, vector<128x128xf32>, vector<8x128xf32> -> vector<8x128xf32>
    %c35_618 = arith.constant 35 : index
    %c0_619 = arith.constant 0 : index
    %c0_620 = arith.constant 0 : index
    %1167 = vector.load %arg2[%c35_618, %c0_619, %c0_620] : memref<43x1x128xf32, #tpu.memory_space<vmem>>, vector<1x1x128xf32>
    %1168 = vector.shape_cast %1167 : vector<1x1x128xf32> to vector<1x128xf32>
    %1169 = vector.broadcast %1168 : vector<1x128xf32> to vector<8x128xf32>
    %1170 = arith.addf %1166, %1169 : vector<8x128xf32>
    %c36 = arith.constant 36 : index
    %c0_621 = arith.constant 0 : index
    %c0_622 = arith.constant 0 : index
    %1171 = vector.load %arg1[%c36, %c0_621, %c0_622] : memref<43x128x128xf32, #tpu.memory_space<vmem>>, vector<1x128x128xf32>
    %1172 = vector.shape_cast %1171 : vector<1x128x128xf32> to vector<128x128xf32>
    %cst_623 = arith.constant dense<0.000000e+00> : vector<8x128xf32>
    %1173 = tpu.matmul %1170, %1172, %cst_623 {dimension_numbers = #tpu.dot_dimension_numbers<[1], [0], [0], [1], [0, 0, 1, 1], [], []>} : vector<8x128xf32>, vector<128x128xf32>, vector<8x128xf32> -> vector<8x128xf32>
    %c36_624 = arith.constant 36 : index
    %c0_625 = arith.constant 0 : index
    %c0_626 = arith.constant 0 : index
    %1174 = vector.load %arg2[%c36_624, %c0_625, %c0_626] : memref<43x1x128xf32, #tpu.memory_space<vmem>>, vector<1x1x128xf32>
    %1175 = vector.shape_cast %1174 : vector<1x1x128xf32> to vector<1x128xf32>
    %1176 = vector.broadcast %1175 : vector<1x128xf32> to vector<8x128xf32>
    %1177 = arith.addf %1173, %1176 : vector<8x128xf32>
    %cst_627 = arith.constant 0.000000e+00 : f32
    %1178 = vector.broadcast %cst_627 : f32 to vector<8x128xf32>
    %1179 = arith.cmpf oge, %1177, %1178 : vector<8x128xf32>
    %cst_628 = arith.constant 0.00999999977 : f32
    %1180 = vector.broadcast %cst_628 : f32 to vector<8x128xf32>
    %1181 = arith.mulf %1180, %1177 : vector<8x128xf32>
    %1182 = arith.select %1179, %1177, %1181 : vector<8x128xi1>, vector<8x128xf32>
    %cst_629 = arith.constant dense<0.000000e+00> : vector<128xf32>
    %1183 = vector.multi_reduction <add>, %1182, %cst_629 [0] : vector<8x128xf32> to vector<128xf32>
    %1184 = vector.shape_cast %1183 : vector<128xf32> to vector<1x128xf32>
    %cst_630 = arith.constant 8.000000e+00 : f32
    %1185 = vector.broadcast %cst_630 : f32 to vector<1x128xf32>
    %1186 = arith.divf %1184, %1185 : vector<1x128xf32>
    %1187 = vector.broadcast %1186 : vector<1x128xf32> to vector<8x128xf32>
    %1188 = arith.subf %1182, %1187 : vector<8x128xf32>
    %1189 = arith.mulf %1188, %1188 : vector<8x128xf32>
    %cst_631 = arith.constant dense<0.000000e+00> : vector<128xf32>
    %1190 = vector.multi_reduction <add>, %1189, %cst_631 [0] : vector<8x128xf32> to vector<128xf32>
    %1191 = vector.shape_cast %1190 : vector<128xf32> to vector<1x128xf32>
    %cst_632 = arith.constant 8.000000e+00 : f32
    %1192 = vector.broadcast %cst_632 : f32 to vector<1x128xf32>
    %1193 = arith.divf %1191, %1192 : vector<1x128xf32>
    %cst_633 = arith.constant 9.99999974E-6 : f32
    %1194 = vector.broadcast %cst_633 : f32 to vector<1x128xf32>
    %1195 = arith.addf %1193, %1194 : vector<1x128xf32>
    %1196 = math.rsqrt %1195 : vector<1x128xf32>
    %1197 = vector.broadcast %1196 : vector<1x128xf32> to vector<8x128xf32>
    %1198 = arith.mulf %1188, %1197 : vector<8x128xf32>
    %c36_634 = arith.constant 36 : index
    %c0_635 = arith.constant 0 : index
    %c0_636 = arith.constant 0 : index
    %1199 = vector.load %arg3[%c36_634, %c0_635, %c0_636] : memref<43x1x128xf32, #tpu.memory_space<vmem>>, vector<1x1x128xf32>
    %1200 = vector.shape_cast %1199 : vector<1x1x128xf32> to vector<1x128xf32>
    %1201 = vector.broadcast %1200 : vector<1x128xf32> to vector<8x128xf32>
    %1202 = arith.mulf %1198, %1201 : vector<8x128xf32>
    %c36_637 = arith.constant 36 : index
    %c0_638 = arith.constant 0 : index
    %c0_639 = arith.constant 0 : index
    %1203 = vector.load %arg4[%c36_637, %c0_638, %c0_639] : memref<43x1x128xf32, #tpu.memory_space<vmem>>, vector<1x1x128xf32>
    %1204 = vector.shape_cast %1203 : vector<1x1x128xf32> to vector<1x128xf32>
    %1205 = vector.broadcast %1204 : vector<1x128xf32> to vector<8x128xf32>
    %1206 = arith.addf %1202, %1205 : vector<8x128xf32>
    %c37 = arith.constant 37 : index
    %c0_640 = arith.constant 0 : index
    %c0_641 = arith.constant 0 : index
    %1207 = vector.load %arg1[%c37, %c0_640, %c0_641] : memref<43x128x128xf32, #tpu.memory_space<vmem>>, vector<1x128x128xf32>
    %1208 = vector.shape_cast %1207 : vector<1x128x128xf32> to vector<128x128xf32>
    %cst_642 = arith.constant dense<0.000000e+00> : vector<8x128xf32>
    %1209 = tpu.matmul %1206, %1208, %cst_642 {dimension_numbers = #tpu.dot_dimension_numbers<[1], [0], [0], [1], [0, 0, 1, 1], [], []>} : vector<8x128xf32>, vector<128x128xf32>, vector<8x128xf32> -> vector<8x128xf32>
    %c37_643 = arith.constant 37 : index
    %c0_644 = arith.constant 0 : index
    %c0_645 = arith.constant 0 : index
    %1210 = vector.load %arg2[%c37_643, %c0_644, %c0_645] : memref<43x1x128xf32, #tpu.memory_space<vmem>>, vector<1x1x128xf32>
    %1211 = vector.shape_cast %1210 : vector<1x1x128xf32> to vector<1x128xf32>
    %1212 = vector.broadcast %1211 : vector<1x128xf32> to vector<8x128xf32>
    %1213 = arith.addf %1209, %1212 : vector<8x128xf32>
    %cst_646 = arith.constant 0.000000e+00 : f32
    %1214 = vector.broadcast %cst_646 : f32 to vector<8x128xf32>
    %1215 = arith.cmpf oge, %1213, %1214 : vector<8x128xf32>
    %cst_647 = arith.constant 0.00999999977 : f32
    %1216 = vector.broadcast %cst_647 : f32 to vector<8x128xf32>
    %1217 = arith.mulf %1216, %1213 : vector<8x128xf32>
    %1218 = arith.select %1215, %1213, %1217 : vector<8x128xi1>, vector<8x128xf32>
    %cst_648 = arith.constant dense<0.000000e+00> : vector<128xf32>
    %1219 = vector.multi_reduction <add>, %1218, %cst_648 [0] : vector<8x128xf32> to vector<128xf32>
    %1220 = vector.shape_cast %1219 : vector<128xf32> to vector<1x128xf32>
    %cst_649 = arith.constant 8.000000e+00 : f32
    %1221 = vector.broadcast %cst_649 : f32 to vector<1x128xf32>
    %1222 = arith.divf %1220, %1221 : vector<1x128xf32>
    %1223 = vector.broadcast %1222 : vector<1x128xf32> to vector<8x128xf32>
    %1224 = arith.subf %1218, %1223 : vector<8x128xf32>
    %1225 = arith.mulf %1224, %1224 : vector<8x128xf32>
    %cst_650 = arith.constant dense<0.000000e+00> : vector<128xf32>
    %1226 = vector.multi_reduction <add>, %1225, %cst_650 [0] : vector<8x128xf32> to vector<128xf32>
    %1227 = vector.shape_cast %1226 : vector<128xf32> to vector<1x128xf32>
    %cst_651 = arith.constant 8.000000e+00 : f32
    %1228 = vector.broadcast %cst_651 : f32 to vector<1x128xf32>
    %1229 = arith.divf %1227, %1228 : vector<1x128xf32>
    %cst_652 = arith.constant 9.99999974E-6 : f32
    %1230 = vector.broadcast %cst_652 : f32 to vector<1x128xf32>
    %1231 = arith.addf %1229, %1230 : vector<1x128xf32>
    %1232 = math.rsqrt %1231 : vector<1x128xf32>
    %1233 = vector.broadcast %1232 : vector<1x128xf32> to vector<8x128xf32>
    %1234 = arith.mulf %1224, %1233 : vector<8x128xf32>
    %c37_653 = arith.constant 37 : index
    %c0_654 = arith.constant 0 : index
    %c0_655 = arith.constant 0 : index
    %1235 = vector.load %arg3[%c37_653, %c0_654, %c0_655] : memref<43x1x128xf32, #tpu.memory_space<vmem>>, vector<1x1x128xf32>
    %1236 = vector.shape_cast %1235 : vector<1x1x128xf32> to vector<1x128xf32>
    %1237 = vector.broadcast %1236 : vector<1x128xf32> to vector<8x128xf32>
    %1238 = arith.mulf %1234, %1237 : vector<8x128xf32>
    %c37_656 = arith.constant 37 : index
    %c0_657 = arith.constant 0 : index
    %c0_658 = arith.constant 0 : index
    %1239 = vector.load %arg4[%c37_656, %c0_657, %c0_658] : memref<43x1x128xf32, #tpu.memory_space<vmem>>, vector<1x1x128xf32>
    %1240 = vector.shape_cast %1239 : vector<1x1x128xf32> to vector<1x128xf32>
    %1241 = vector.broadcast %1240 : vector<1x128xf32> to vector<8x128xf32>
    %1242 = arith.addf %1238, %1241 : vector<8x128xf32>
    %c38 = arith.constant 38 : index
    %c0_659 = arith.constant 0 : index
    %c0_660 = arith.constant 0 : index
    %1243 = vector.load %arg1[%c38, %c0_659, %c0_660] : memref<43x128x128xf32, #tpu.memory_space<vmem>>, vector<1x128x128xf32>
    %1244 = vector.shape_cast %1243 : vector<1x128x128xf32> to vector<128x128xf32>
    %cst_661 = arith.constant dense<0.000000e+00> : vector<8x128xf32>
    %1245 = tpu.matmul %1242, %1244, %cst_661 {dimension_numbers = #tpu.dot_dimension_numbers<[1], [0], [0], [1], [0, 0, 1, 1], [], []>} : vector<8x128xf32>, vector<128x128xf32>, vector<8x128xf32> -> vector<8x128xf32>
    %c38_662 = arith.constant 38 : index
    %c0_663 = arith.constant 0 : index
    %c0_664 = arith.constant 0 : index
    %1246 = vector.load %arg2[%c38_662, %c0_663, %c0_664] : memref<43x1x128xf32, #tpu.memory_space<vmem>>, vector<1x1x128xf32>
    %1247 = vector.shape_cast %1246 : vector<1x1x128xf32> to vector<1x128xf32>
    %1248 = vector.broadcast %1247 : vector<1x128xf32> to vector<8x128xf32>
    %1249 = arith.addf %1245, %1248 : vector<8x128xf32>
    %cst_665 = arith.constant 0.000000e+00 : f32
    %1250 = vector.broadcast %cst_665 : f32 to vector<8x128xf32>
    %1251 = arith.cmpf oge, %1249, %1250 : vector<8x128xf32>
    %cst_666 = arith.constant 0.00999999977 : f32
    %1252 = vector.broadcast %cst_666 : f32 to vector<8x128xf32>
    %1253 = arith.mulf %1252, %1249 : vector<8x128xf32>
    %1254 = arith.select %1251, %1249, %1253 : vector<8x128xi1>, vector<8x128xf32>
    %cst_667 = arith.constant dense<0.000000e+00> : vector<128xf32>
    %1255 = vector.multi_reduction <add>, %1254, %cst_667 [0] : vector<8x128xf32> to vector<128xf32>
    %1256 = vector.shape_cast %1255 : vector<128xf32> to vector<1x128xf32>
    %cst_668 = arith.constant 8.000000e+00 : f32
    %1257 = vector.broadcast %cst_668 : f32 to vector<1x128xf32>
    %1258 = arith.divf %1256, %1257 : vector<1x128xf32>
    %1259 = vector.broadcast %1258 : vector<1x128xf32> to vector<8x128xf32>
    %1260 = arith.subf %1254, %1259 : vector<8x128xf32>
    %1261 = arith.mulf %1260, %1260 : vector<8x128xf32>
    %cst_669 = arith.constant dense<0.000000e+00> : vector<128xf32>
    %1262 = vector.multi_reduction <add>, %1261, %cst_669 [0] : vector<8x128xf32> to vector<128xf32>
    %1263 = vector.shape_cast %1262 : vector<128xf32> to vector<1x128xf32>
    %cst_670 = arith.constant 8.000000e+00 : f32
    %1264 = vector.broadcast %cst_670 : f32 to vector<1x128xf32>
    %1265 = arith.divf %1263, %1264 : vector<1x128xf32>
    %cst_671 = arith.constant 9.99999974E-6 : f32
    %1266 = vector.broadcast %cst_671 : f32 to vector<1x128xf32>
    %1267 = arith.addf %1265, %1266 : vector<1x128xf32>
    %1268 = math.rsqrt %1267 : vector<1x128xf32>
    %1269 = vector.broadcast %1268 : vector<1x128xf32> to vector<8x128xf32>
    %1270 = arith.mulf %1260, %1269 : vector<8x128xf32>
    %c38_672 = arith.constant 38 : index
    %c0_673 = arith.constant 0 : index
    %c0_674 = arith.constant 0 : index
    %1271 = vector.load %arg3[%c38_672, %c0_673, %c0_674] : memref<43x1x128xf32, #tpu.memory_space<vmem>>, vector<1x1x128xf32>
    %1272 = vector.shape_cast %1271 : vector<1x1x128xf32> to vector<1x128xf32>
    %1273 = vector.broadcast %1272 : vector<1x128xf32> to vector<8x128xf32>
    %1274 = arith.mulf %1270, %1273 : vector<8x128xf32>
    %c38_675 = arith.constant 38 : index
    %c0_676 = arith.constant 0 : index
    %c0_677 = arith.constant 0 : index
    %1275 = vector.load %arg4[%c38_675, %c0_676, %c0_677] : memref<43x1x128xf32, #tpu.memory_space<vmem>>, vector<1x1x128xf32>
    %1276 = vector.shape_cast %1275 : vector<1x1x128xf32> to vector<1x128xf32>
    %1277 = vector.broadcast %1276 : vector<1x128xf32> to vector<8x128xf32>
    %1278 = arith.addf %1274, %1277 : vector<8x128xf32>
    %1279 = arith.addf %1278, %1170 : vector<8x128xf32>
    %c39 = arith.constant 39 : index
    %c0_678 = arith.constant 0 : index
    %c0_679 = arith.constant 0 : index
    %1280 = vector.load %arg1[%c39, %c0_678, %c0_679] : memref<43x128x128xf32, #tpu.memory_space<vmem>>, vector<1x128x128xf32>
    %1281 = vector.shape_cast %1280 : vector<1x128x128xf32> to vector<128x128xf32>
    %cst_680 = arith.constant dense<0.000000e+00> : vector<8x128xf32>
    %1282 = tpu.matmul %1279, %1281, %cst_680 {dimension_numbers = #tpu.dot_dimension_numbers<[1], [0], [0], [1], [0, 0, 1, 1], [], []>} : vector<8x128xf32>, vector<128x128xf32>, vector<8x128xf32> -> vector<8x128xf32>
    %c39_681 = arith.constant 39 : index
    %c0_682 = arith.constant 0 : index
    %c0_683 = arith.constant 0 : index
    %1283 = vector.load %arg2[%c39_681, %c0_682, %c0_683] : memref<43x1x128xf32, #tpu.memory_space<vmem>>, vector<1x1x128xf32>
    %1284 = vector.shape_cast %1283 : vector<1x1x128xf32> to vector<1x128xf32>
    %1285 = vector.broadcast %1284 : vector<1x128xf32> to vector<8x128xf32>
    %1286 = arith.addf %1282, %1285 : vector<8x128xf32>
    %cst_684 = arith.constant 0.000000e+00 : f32
    %1287 = vector.broadcast %cst_684 : f32 to vector<8x128xf32>
    %1288 = arith.cmpf oge, %1286, %1287 : vector<8x128xf32>
    %cst_685 = arith.constant 0.00999999977 : f32
    %1289 = vector.broadcast %cst_685 : f32 to vector<8x128xf32>
    %1290 = arith.mulf %1289, %1286 : vector<8x128xf32>
    %1291 = arith.select %1288, %1286, %1290 : vector<8x128xi1>, vector<8x128xf32>
    %cst_686 = arith.constant dense<0.000000e+00> : vector<128xf32>
    %1292 = vector.multi_reduction <add>, %1291, %cst_686 [0] : vector<8x128xf32> to vector<128xf32>
    %1293 = vector.shape_cast %1292 : vector<128xf32> to vector<1x128xf32>
    %cst_687 = arith.constant 8.000000e+00 : f32
    %1294 = vector.broadcast %cst_687 : f32 to vector<1x128xf32>
    %1295 = arith.divf %1293, %1294 : vector<1x128xf32>
    %1296 = vector.broadcast %1295 : vector<1x128xf32> to vector<8x128xf32>
    %1297 = arith.subf %1291, %1296 : vector<8x128xf32>
    %1298 = arith.mulf %1297, %1297 : vector<8x128xf32>
    %cst_688 = arith.constant dense<0.000000e+00> : vector<128xf32>
    %1299 = vector.multi_reduction <add>, %1298, %cst_688 [0] : vector<8x128xf32> to vector<128xf32>
    %1300 = vector.shape_cast %1299 : vector<128xf32> to vector<1x128xf32>
    %cst_689 = arith.constant 8.000000e+00 : f32
    %1301 = vector.broadcast %cst_689 : f32 to vector<1x128xf32>
    %1302 = arith.divf %1300, %1301 : vector<1x128xf32>
    %cst_690 = arith.constant 9.99999974E-6 : f32
    %1303 = vector.broadcast %cst_690 : f32 to vector<1x128xf32>
    %1304 = arith.addf %1302, %1303 : vector<1x128xf32>
    %1305 = math.rsqrt %1304 : vector<1x128xf32>
    %1306 = vector.broadcast %1305 : vector<1x128xf32> to vector<8x128xf32>
    %1307 = arith.mulf %1297, %1306 : vector<8x128xf32>
    %c39_691 = arith.constant 39 : index
    %c0_692 = arith.constant 0 : index
    %c0_693 = arith.constant 0 : index
    %1308 = vector.load %arg3[%c39_691, %c0_692, %c0_693] : memref<43x1x128xf32, #tpu.memory_space<vmem>>, vector<1x1x128xf32>
    %1309 = vector.shape_cast %1308 : vector<1x1x128xf32> to vector<1x128xf32>
    %1310 = vector.broadcast %1309 : vector<1x128xf32> to vector<8x128xf32>
    %1311 = arith.mulf %1307, %1310 : vector<8x128xf32>
    %c39_694 = arith.constant 39 : index
    %c0_695 = arith.constant 0 : index
    %c0_696 = arith.constant 0 : index
    %1312 = vector.load %arg4[%c39_694, %c0_695, %c0_696] : memref<43x1x128xf32, #tpu.memory_space<vmem>>, vector<1x1x128xf32>
    %1313 = vector.shape_cast %1312 : vector<1x1x128xf32> to vector<1x128xf32>
    %1314 = vector.broadcast %1313 : vector<1x128xf32> to vector<8x128xf32>
    %1315 = arith.addf %1311, %1314 : vector<8x128xf32>
    %c40 = arith.constant 40 : index
    %c0_697 = arith.constant 0 : index
    %c0_698 = arith.constant 0 : index
    %1316 = vector.load %arg1[%c40, %c0_697, %c0_698] : memref<43x128x128xf32, #tpu.memory_space<vmem>>, vector<1x128x128xf32>
    %1317 = vector.shape_cast %1316 : vector<1x128x128xf32> to vector<128x128xf32>
    %cst_699 = arith.constant dense<0.000000e+00> : vector<8x128xf32>
    %1318 = tpu.matmul %1315, %1317, %cst_699 {dimension_numbers = #tpu.dot_dimension_numbers<[1], [0], [0], [1], [0, 0, 1, 1], [], []>} : vector<8x128xf32>, vector<128x128xf32>, vector<8x128xf32> -> vector<8x128xf32>
    %c40_700 = arith.constant 40 : index
    %c0_701 = arith.constant 0 : index
    %c0_702 = arith.constant 0 : index
    %1319 = vector.load %arg2[%c40_700, %c0_701, %c0_702] : memref<43x1x128xf32, #tpu.memory_space<vmem>>, vector<1x1x128xf32>
    %1320 = vector.shape_cast %1319 : vector<1x1x128xf32> to vector<1x128xf32>
    %1321 = vector.broadcast %1320 : vector<1x128xf32> to vector<8x128xf32>
    %1322 = arith.addf %1318, %1321 : vector<8x128xf32>
    %cst_703 = arith.constant 0.000000e+00 : f32
    %1323 = vector.broadcast %cst_703 : f32 to vector<8x128xf32>
    %1324 = arith.cmpf oge, %1322, %1323 : vector<8x128xf32>
    %cst_704 = arith.constant 0.00999999977 : f32
    %1325 = vector.broadcast %cst_704 : f32 to vector<8x128xf32>
    %1326 = arith.mulf %1325, %1322 : vector<8x128xf32>
    %1327 = arith.select %1324, %1322, %1326 : vector<8x128xi1>, vector<8x128xf32>
    %cst_705 = arith.constant dense<0.000000e+00> : vector<128xf32>
    %1328 = vector.multi_reduction <add>, %1327, %cst_705 [0] : vector<8x128xf32> to vector<128xf32>
    %1329 = vector.shape_cast %1328 : vector<128xf32> to vector<1x128xf32>
    %cst_706 = arith.constant 8.000000e+00 : f32
    %1330 = vector.broadcast %cst_706 : f32 to vector<1x128xf32>
    %1331 = arith.divf %1329, %1330 : vector<1x128xf32>
    %1332 = vector.broadcast %1331 : vector<1x128xf32> to vector<8x128xf32>
    %1333 = arith.subf %1327, %1332 : vector<8x128xf32>
    %1334 = arith.mulf %1333, %1333 : vector<8x128xf32>
    %cst_707 = arith.constant dense<0.000000e+00> : vector<128xf32>
    %1335 = vector.multi_reduction <add>, %1334, %cst_707 [0] : vector<8x128xf32> to vector<128xf32>
    %1336 = vector.shape_cast %1335 : vector<128xf32> to vector<1x128xf32>
    %cst_708 = arith.constant 8.000000e+00 : f32
    %1337 = vector.broadcast %cst_708 : f32 to vector<1x128xf32>
    %1338 = arith.divf %1336, %1337 : vector<1x128xf32>
    %cst_709 = arith.constant 9.99999974E-6 : f32
    %1339 = vector.broadcast %cst_709 : f32 to vector<1x128xf32>
    %1340 = arith.addf %1338, %1339 : vector<1x128xf32>
    %1341 = math.rsqrt %1340 : vector<1x128xf32>
    %1342 = vector.broadcast %1341 : vector<1x128xf32> to vector<8x128xf32>
    %1343 = arith.mulf %1333, %1342 : vector<8x128xf32>
    %c40_710 = arith.constant 40 : index
    %c0_711 = arith.constant 0 : index
    %c0_712 = arith.constant 0 : index
    %1344 = vector.load %arg3[%c40_710, %c0_711, %c0_712] : memref<43x1x128xf32, #tpu.memory_space<vmem>>, vector<1x1x128xf32>
    %1345 = vector.shape_cast %1344 : vector<1x1x128xf32> to vector<1x128xf32>
    %1346 = vector.broadcast %1345 : vector<1x128xf32> to vector<8x128xf32>
    %1347 = arith.mulf %1343, %1346 : vector<8x128xf32>
    %c40_713 = arith.constant 40 : index
    %c0_714 = arith.constant 0 : index
    %c0_715 = arith.constant 0 : index
    %1348 = vector.load %arg4[%c40_713, %c0_714, %c0_715] : memref<43x1x128xf32, #tpu.memory_space<vmem>>, vector<1x1x128xf32>
    %1349 = vector.shape_cast %1348 : vector<1x1x128xf32> to vector<1x128xf32>
    %1350 = vector.broadcast %1349 : vector<1x128xf32> to vector<8x128xf32>
    %1351 = arith.addf %1347, %1350 : vector<8x128xf32>
    %c41 = arith.constant 41 : index
    %c0_716 = arith.constant 0 : index
    %c0_717 = arith.constant 0 : index
    %1352 = vector.load %arg1[%c41, %c0_716, %c0_717] : memref<43x128x128xf32, #tpu.memory_space<vmem>>, vector<1x128x128xf32>
    %1353 = vector.shape_cast %1352 : vector<1x128x128xf32> to vector<128x128xf32>
    %cst_718 = arith.constant dense<0.000000e+00> : vector<8x128xf32>
    %1354 = tpu.matmul %1351, %1353, %cst_718 {dimension_numbers = #tpu.dot_dimension_numbers<[1], [0], [0], [1], [0, 0, 1, 1], [], []>} : vector<8x128xf32>, vector<128x128xf32>, vector<8x128xf32> -> vector<8x128xf32>
    %c41_719 = arith.constant 41 : index
    %c0_720 = arith.constant 0 : index
    %c0_721 = arith.constant 0 : index
    %1355 = vector.load %arg2[%c41_719, %c0_720, %c0_721] : memref<43x1x128xf32, #tpu.memory_space<vmem>>, vector<1x1x128xf32>
    %1356 = vector.shape_cast %1355 : vector<1x1x128xf32> to vector<1x128xf32>
    %1357 = vector.broadcast %1356 : vector<1x128xf32> to vector<8x128xf32>
    %1358 = arith.addf %1354, %1357 : vector<8x128xf32>
    %cst_722 = arith.constant 0.000000e+00 : f32
    %1359 = vector.broadcast %cst_722 : f32 to vector<8x128xf32>
    %1360 = arith.cmpf oge, %1358, %1359 : vector<8x128xf32>
    %cst_723 = arith.constant 0.00999999977 : f32
    %1361 = vector.broadcast %cst_723 : f32 to vector<8x128xf32>
    %1362 = arith.mulf %1361, %1358 : vector<8x128xf32>
    %1363 = arith.select %1360, %1358, %1362 : vector<8x128xi1>, vector<8x128xf32>
    %cst_724 = arith.constant dense<0.000000e+00> : vector<128xf32>
    %1364 = vector.multi_reduction <add>, %1363, %cst_724 [0] : vector<8x128xf32> to vector<128xf32>
    %1365 = vector.shape_cast %1364 : vector<128xf32> to vector<1x128xf32>
    %cst_725 = arith.constant 8.000000e+00 : f32
    %1366 = vector.broadcast %cst_725 : f32 to vector<1x128xf32>
    %1367 = arith.divf %1365, %1366 : vector<1x128xf32>
    %1368 = vector.broadcast %1367 : vector<1x128xf32> to vector<8x128xf32>
    %1369 = arith.subf %1363, %1368 : vector<8x128xf32>
    %1370 = arith.mulf %1369, %1369 : vector<8x128xf32>
    %cst_726 = arith.constant dense<0.000000e+00> : vector<128xf32>
    %1371 = vector.multi_reduction <add>, %1370, %cst_726 [0] : vector<8x128xf32> to vector<128xf32>
    %1372 = vector.shape_cast %1371 : vector<128xf32> to vector<1x128xf32>
    %cst_727 = arith.constant 8.000000e+00 : f32
    %1373 = vector.broadcast %cst_727 : f32 to vector<1x128xf32>
    %1374 = arith.divf %1372, %1373 : vector<1x128xf32>
    %cst_728 = arith.constant 9.99999974E-6 : f32
    %1375 = vector.broadcast %cst_728 : f32 to vector<1x128xf32>
    %1376 = arith.addf %1374, %1375 : vector<1x128xf32>
    %1377 = math.rsqrt %1376 : vector<1x128xf32>
    %1378 = vector.broadcast %1377 : vector<1x128xf32> to vector<8x128xf32>
    %1379 = arith.mulf %1369, %1378 : vector<8x128xf32>
    %c41_729 = arith.constant 41 : index
    %c0_730 = arith.constant 0 : index
    %c0_731 = arith.constant 0 : index
    %1380 = vector.load %arg3[%c41_729, %c0_730, %c0_731] : memref<43x1x128xf32, #tpu.memory_space<vmem>>, vector<1x1x128xf32>
    %1381 = vector.shape_cast %1380 : vector<1x1x128xf32> to vector<1x128xf32>
    %1382 = vector.broadcast %1381 : vector<1x128xf32> to vector<8x128xf32>
    %1383 = arith.mulf %1379, %1382 : vector<8x128xf32>
    %c41_732 = arith.constant 41 : index
    %c0_733 = arith.constant 0 : index
    %c0_734 = arith.constant 0 : index
    %1384 = vector.load %arg4[%c41_732, %c0_733, %c0_734] : memref<43x1x128xf32, #tpu.memory_space<vmem>>, vector<1x1x128xf32>
    %1385 = vector.shape_cast %1384 : vector<1x1x128xf32> to vector<1x128xf32>
    %1386 = vector.broadcast %1385 : vector<1x128xf32> to vector<8x128xf32>
    %1387 = arith.addf %1383, %1386 : vector<8x128xf32>
    %1388 = arith.addf %1387, %1279 : vector<8x128xf32>
    %c42 = arith.constant 42 : index
    %c0_735 = arith.constant 0 : index
    %c0_736 = arith.constant 0 : index
    %1389 = vector.load %arg1[%c42, %c0_735, %c0_736] : memref<43x128x128xf32, #tpu.memory_space<vmem>>, vector<1x128x128xf32>
    %1390 = vector.shape_cast %1389 : vector<1x128x128xf32> to vector<128x128xf32>
    %cst_737 = arith.constant dense<0.000000e+00> : vector<8x128xf32>
    %1391 = tpu.matmul %1388, %1390, %cst_737 {dimension_numbers = #tpu.dot_dimension_numbers<[1], [0], [0], [1], [0, 0, 1, 1], [], []>} : vector<8x128xf32>, vector<128x128xf32>, vector<8x128xf32> -> vector<8x128xf32>
    %c42_738 = arith.constant 42 : index
    %c0_739 = arith.constant 0 : index
    %c0_740 = arith.constant 0 : index
    %1392 = vector.load %arg2[%c42_738, %c0_739, %c0_740] : memref<43x1x128xf32, #tpu.memory_space<vmem>>, vector<1x1x128xf32>
    %1393 = vector.shape_cast %1392 : vector<1x1x128xf32> to vector<1x128xf32>
    %1394 = vector.broadcast %1393 : vector<1x128xf32> to vector<8x128xf32>
    %1395 = arith.addf %1391, %1394 : vector<8x128xf32>
    %c0_741 = arith.constant 0 : index
    %c0_742 = arith.constant 0 : index
    %1396 = vector.load %arg5[%c0_741, %c0_742] : memref<8x128xf32, #tpu.memory_space<vmem>>, vector<8x128xf32>
    tpu.vector_store %arg5[%c0_741, %c0_742], %1395 {strides = array<i32>} : memref<8x128xf32, #tpu.memory_space<vmem>>, vector<8x128xf32>,
    return
  }
}

</mosaic_0001>

<llo_original>
// kernel: unet_forward.1
$region0: #{unet_forward.1}
  #allocation0 [shape = 'u32[]', space=smem, size = 0x4, offset = 0x4, fixed_abs, tag = 'smem constant byte address 0x4 - core index']
  #allocation1 [shape = 'u32[144,128]{1,0:T(1,128)}', space=vmem, size = 0x12000, scoped, tag = 'internal scratch']
  %s0 = inlined_call_operand.vmem [shape: f32[8,128], index: 0, kind: input, shape index: {}]
  %s1 = inlined_call_operand.hbm [shape: f32[43,128,128], index: 1, kind: input, shape index: {}]
  %s2 = inlined_call_operand.hbm [shape: f32[43,1,128], index: 2, kind: input, shape index: {}]
  %s3 = inlined_call_operand.hbm [shape: f32[43,1,128], index: 3, kind: input, shape index: {}]
  %s4 = inlined_call_operand.hbm [shape: f32[43,1,128], index: 4, kind: input, shape index: {}]
  %s5 = inlined_call_operand.hbm [shape: f32[8,128], index: 5, kind: output, shape index: {}]
  %s6 = sld [smem:[#allocation0]]
  $region46: #{unet_forward.1} parent=0
    _
  %s8 = ssub.s32 1, %s6
  %s9 = scalar_select 0, %s8, %s6
  $region1: #{unet_forward.1} parent=0
    #allocation2 [shape = 'u8[2818048]{0}', space=vmem, size = 0x2b0000, scoped, tag = 'input window, operand 1, single buffered']
    #allocation3 [shape = 's32[1]{0}', space=sflag, size = 0x4, scoped, tag = 'scoped memory for unet_forward.1']
    #allocation4 [shape = 's32[1]{0}', space=sflag, size = 0x4, scoped, tag = 'scoped memory for unet_forward.1']
    #allocation5 [shape = 'u8[22016]{0}', space=vmem, size = 0x5800, scoped, tag = 'input window, operand 2, single buffered']
    #allocation6 [shape = 's32[1]{0}', space=sflag, size = 0x4, scoped, tag = 'scoped memory for unet_forward.1']
    #allocation7 [shape = 'u8[22016]{0}', space=vmem, size = 0x5800, scoped, tag = 'input window, operand 3, single buffered']
    #allocation8 [shape = 'u8[22016]{0}', space=vmem, size = 0x5800, scoped, tag = 'input window, operand 4, single buffered']
    #allocation9 [shape = 's32[1]{0}', space=sflag, size = 0x4, scoped, tag = 'scoped memory for unet_forward.1']
    #allocation10 [shape = 'u8[4096]{0}', space=vmem, size = 0x1000, scoped, tag = 'output window, operand 0, single buffered']
    %10 = vsyncpa [#allocation3], 0
    %11 = vsyncpa [#allocation6], 0
    %12 = vsyncpa [#allocation9], 0
    %13 = vsyncpa [#allocation4], 0
    // Predicated region
    $region2: #{unet_forward.1} parent=1 // pred_check
      _
    $region3: #{unet_forward.1} parent=1 // pred_check_branch
      %15 = sbr.rel (0) target = $region5
    $region4: #{unet_forward.1} parent=1 // pred_region
      _
    $region5: #{unet_forward.1} parent=1 // pred_fallthru
      _
    // Predicated region
    $region6: #{unet_forward.1} parent=1 // pred_check
      _
    $region7: #{unet_forward.1} parent=1 // pred_check_branch
      %17 = sbr.rel (0) target = $region9
    $region8: #{unet_forward.1} parent=1 // pred_region
      %s19 = ssub.s32 88064, 88064
      %20 = vsyncadd [#allocation3], %s19
      %s21 = sshll.u32 [#allocation2], 4
      %s22 = int_to_ptr.vmem [resolvable:$true] %s21
      %27 = dma.hbm_to_vmem [thread:$0]  %s1, 88064, %s22, [#allocation3], 128, 128, 8
    $region9: #{unet_forward.1} parent=1 // pred_fallthru
      _
    // Predicated region
    $region10: #{unet_forward.1} parent=1 // pred_check
      _
    $region11: #{unet_forward.1} parent=1 // pred_check_branch
      %29 = sbr.rel (0) target = $region13
    $region12: #{unet_forward.1} parent=1 // pred_region
      %s31 = ssub.s32 688, 688
      %32 = vsyncadd [#allocation6], %s31
      %s33 = sshll.u32 [#allocation5], 4
      %s34 = int_to_ptr.vmem [resolvable:$true] %s33
      %39 = dma.hbm_to_vmem [thread:$0]  %s2, 688, %s34, [#allocation6], 16, 16, 1
    $region13: #{unet_forward.1} parent=1 // pred_fallthru
      _
    // Predicated region
    $region14: #{unet_forward.1} parent=1 // pred_check
      _
    $region15: #{unet_forward.1} parent=1 // pred_check_branch
      %41 = sbr.rel (0) target = $region17
    $region16: #{unet_forward.1} parent=1 // pred_region
      %s43 = ssub.s32 688, 688
      %44 = vsyncadd [#allocation6], %s43
      %s45 = sshll.u32 [#allocation7], 4
      %s46 = int_to_ptr.vmem [resolvable:$true] %s45
      %51 = dma.hbm_to_vmem [thread:$0]  %s3, 688, %s46, [#allocation6], 16, 16, 1
    $region17: #{unet_forward.1} parent=1 // pred_fallthru
      _
    // Predicated region
    $region18: #{unet_forward.1} parent=1 // pred_check
      _
    $region19: #{unet_forward.1} parent=1 // pred_check_branch
      %53 = sbr.rel (0) target = $region21
    $region20: #{unet_forward.1} parent=1 // pred_region
      %s55 = ssub.s32 688, 688
      %56 = vsyncadd [#allocation9], %s55
      %s57 = sshll.u32 [#allocation8], 4
      %s58 = int_to_ptr.vmem [resolvable:$true] %s57
      %63 = dma.hbm_to_vmem [thread:$0]  %s4, 688, %s58, [#allocation9], 16, 16, 1
    $region21: #{unet_forward.1} parent=1 // pred_fallthru
      _
    // Predicated region
    $region22: #{unet_forward.1} parent=1 // pred_check
      _
    $region23: #{unet_forward.1} parent=1 // pred_check_branch
      %65 = sbr.rel (0) target = $region25
    $region24: #{unet_forward.1} parent=1 // pred_region
      %66 = dma.done [#allocation3], 88064
    $region25: #{unet_forward.1} parent=1 // pred_fallthru
      _
    // Predicated region
    $region26: #{unet_forward.1} parent=1 // pred_check
      _
    $region27: #{unet_forward.1} parent=1 // pred_check_branch
      %68 = sbr.rel (0) target = $region29
    $region28: #{unet_forward.1} parent=1 // pred_region
      %69 = dma.done [#allocation6], 688
    $region29: #{unet_forward.1} parent=1 // pred_fallthru
      _
    // Predicated region
    $region30: #{unet_forward.1} parent=1 // pred_check
      _
    $region31: #{unet_forward.1} parent=1 // pred_check_branch
      %71 = sbr.rel (0) target = $region33
    $region32: #{unet_forward.1} parent=1 // pred_region
      %72 = dma.done [#allocation6], 688
    $region33: #{unet_forward.1} parent=1 // pred_fallthru
      _
    // Predicated region
    $region34: #{unet_forward.1} parent=1 // pred_check
      _
    $region35: #{unet_forward.1} parent=1 // pred_check_branch
      %74 = sbr.rel (0) target = $region37
    $region36: #{unet_forward.1} parent=1 // pred_region
      %75 = dma.done [#allocation9], 688
    $region37: #{unet_forward.1} parent=1 // pred_fallthru
      _
    %v76 = vld [vmem:[%s0] sm:$0xff]
    %v77 = vld [vmem:[#allocation2] sm:$0xff]
    %v78 = vld [vmem:[#allocation2 + $0x8] sm:$0xff]
    %v79 = vld [vmem:[#allocation2 + $0x10] sm:$0xff]
    %v80 = vld [vmem:[#allocation2 + $0x18] sm:$0xff]
    %v81 = vld [vmem:[#allocation2 + $0x20] sm:$0xff]
    %v82 = vld [vmem:[#allocation2 + $0x28] sm:$0xff]
    %v83 = vld [vmem:[#allocation2 + $0x30] sm:$0xff]
    %v84 = vld [vmem:[#allocation2 + $0x38] sm:$0xff]
    %v85 = vld [vmem:[#allocation2 + $0x40] sm:$0xff]
    %v86 = vld [vmem:[#allocation2 + $0x48] sm:$0xff]
    %v87 = vld [vmem:[#allocation2 + $0x50] sm:$0xff]
    %v88 = vld [vmem:[#allocation2 + $0x58] sm:$0xff]
    %v89 = vld [vmem:[#allocation2 + $0x60] sm:$0xff]
    %v90 = vld [vmem:[#allocation2 + $0x68] sm:$0xff]
    %v91 = vld [vmem:[#allocation2 + $0x70] sm:$0xff]
    %v92 = vld [vmem:[#allocation2 + $0x78] sm:$0xff]
    %v93 = vld [vmem:[#allocation5] sm:$0x1]
    %v95 = vlaneseq
    %v96 = vshrl.u32 %v95, 7
    %v97 = vsub.s32 0, %v96
    %v98 = vrot.slane %v93, %v97
    %100 = vmatprep.subr.mxu0 0.0
    %101 = vmatpush1.msra.mxu0 %v77
    %102 = vmatprep.subr.mxu0 0.0
    %103 = vmatpush1.msra.mxu0 %v78
    %104 = vmatprep.subr.mxu0 0.0
    %105 = vmatpush1.msra.mxu0 %v79
    %106 = vmatprep.subr.mxu0 0.0
    %107 = vmatpush1.msra.mxu0 %v80
    %108 = vmatprep.subr.mxu0 0.0
    %109 = vmatpush1.msra.mxu0 %v81
    %110 = vmatprep.subr.mxu0 0.0
    %111 = vmatpush1.msra.mxu0 %v82
    %112 = vmatprep.subr.mxu0 0.0
    %113 = vmatpush1.msra.mxu0 %v83
    %114 = vmatprep.subr.mxu0 0.0
    %115 = vmatpush1.msra.mxu0 %v84
    %116 = vmatprep.subr.mxu0 0.0
    %117 = vmatpush1.msra.mxu0 %v85
    %118 = vmatprep.subr.mxu0 0.0
    %119 = vmatpush1.msra.mxu0 %v86
    %120 = vmatprep.subr.mxu0 0.0
    %121 = vmatpush1.msra.mxu0 %v87
    %122 = vmatprep.subr.mxu0 0.0
    %123 = vmatpush1.msra.mxu0 %v88
    %124 = vmatprep.subr.mxu0 0.0
    %125 = vmatpush1.msra.mxu0 %v89
    %126 = vmatprep.subr.mxu0 0.0
    %127 = vmatpush1.msra.mxu0 %v90
    %128 = vmatprep.subr.mxu0 0.0
    %129 = vmatpush1.msra.mxu0 %v91
    %130 = vmatprep.subr.mxu0 0.0
    %131 = vmatpush1.msra.mxu0 %v92
    %132 = vmatprep.subr.mxu0 0.0
    %133 = vmatpush1.msra.mxu0 0.0
    %134 = vmatprep.subr.mxu0 0.0
    %135 = vmatpush1.msra.mxu0 0.0
    %136 = vmatprep.subr.mxu0 0.0
    %137 = vmatpush1.msra.mxu0 0.0
    %138 = vmatprep.subr.mxu0 0.0
    %139 = vmatpush1.msra.mxu0 0.0
    %140 = vmatprep.subr.mxu0 0.0
    %141 = vmatpush1.msra.mxu0 0.0
    %142 = vmatprep.subr.mxu0 0.0
    %143 = vmatpush1.msra.mxu0 0.0
    %144 = vmatprep.subr.mxu0 0.0
    %145 = vmatpush1.msra.mxu0 0.0
    %146 = vmatprep.subr.mxu0 0.0
    %147 = vmatpush1.msra.mxu0 0.0
    %148 = vmatprep.subr.mxu0 0.0
    %149 = vmatpush1.msra.mxu0 0.0
    %150 = vmatprep.subr.mxu0 0.0
    %151 = vmatpush1.msra.mxu0 0.0
    %152 = vmatprep.subr.mxu0 0.0
    %153 = vmatpush1.msra.mxu0 0.0
    %154 = vmatprep.subr.mxu0 0.0
    %155 = vmatpush1.msra.mxu0 0.0
    %156 = vmatprep.subr.mxu0 0.0
    %157 = vmatpush1.msra.mxu0 0.0
    %158 = vmatprep.subr.mxu0 0.0
    %159 = vmatpush1.msra.mxu0 0.0
    %160 = vmatprep.subr.mxu0 0.0
    %161 = vmatpush1.msra.mxu0 0.0
    %162 = vmatprep.subr.mxu0 0.0
    %163 = vmatpush1.msra.mxu0 0.0
    %164 = vmatprep.mubr.f32.mxu0 0.0
    %165 = vmatmul.mubr.f32.gmra.mrb[0].mxu0 %v76
    %v166 = vpop.f32.mrb[0].mxu0
    %v167 = vadd.f32 %v98, %v166
    %v168 = vpop.f32.mrb[0].mxu0
    %169 = vdwg.mxu0
    %vm170 = vcmp.ge.f32.partialorder %v167, 0.0
    %v171 = vmul.f32 %v167, 0.01
    %v172 = vsel %vm170, %v167, %v171
    %s173 = scalar_lea.vmem [#allocation2], 128
    %v174 = vld [vmem:[%s173] sm:$0xff]
    %v175 = vld [vmem:[%s173 + $0x8] sm:$0xff]
    %v176 = vld [vmem:[%s173 + $0x10] sm:$0xff]
    %v177 = vld [vmem:[%s173 + $0x18] sm:$0xff]
    %v178 = vld [vmem:[%s173 + $0x20] sm:$0xff]
    %v179 = vld [vmem:[%s173 + $0x28] sm:$0xff]
    %v180 = vld [vmem:[%s173 + $0x30] sm:$0xff]
    %v181 = vld [vmem:[%s173 + $0x38] sm:$0xff]
    %v182 = vld [vmem:[%s173 + $0x40] sm:$0xff]
    %v183 = vld [vmem:[%s173 + $0x48] sm:$0xff]
    %v184 = vld [vmem:[%s173 + $0x50] sm:$0xff]
    %v185 = vld [vmem:[%s173 + $0x58] sm:$0xff]
    %v186 = vld [vmem:[%s173 + $0x60] sm:$0xff]
    %v187 = vld [vmem:[%s173 + $0x68] sm:$0xff]
    %v188 = vld [vmem:[%s173 + $0x70] sm:$0xff]
    %v189 = vld [vmem:[%s173 + $0x78] sm:$0xff]
    %s190 = scalar_lea.vmem [#allocation5], 1
    %v191 = vld [vmem:[%s190] sm:$0x1]
    %v193 = vlaneseq
    %v194 = vshrl.u32 %v193, 7
    %v195 = vsub.s32 0, %v194
    %v196 = vrot.slane %v191, %v195
    %198 = vmatprep.subr.mxu0 0.0
    %199 = vmatpush1.msra.mxu0 %v174
    %200 = vmatprep.subr.mxu0 0.0
    %201 = vmatpush1.msra.mxu0 %v175
    %202 = vmatprep.subr.mxu0 0.0
    %203 = vmatpush1.msra.mxu0 %v176
    %204 = vmatprep.subr.mxu0 0.0
    %205 = vmatpush1.msra.mxu0 %v177
    %206 = vmatprep.subr.mxu0 0.0
    %207 = vmatpush1.msra.mxu0 %v178
    %208 = vmatprep.subr.mxu0 0.0
    %209 = vmatpush1.msra.mxu0 %v179
    %210 = vmatprep.subr.mxu0 0.0
    %211 = vmatpush1.msra.mxu0 %v180
    %212 = vmatprep.subr.mxu0 0.0
    %213 = vmatpush1.msra.mxu0 %v181
    %214 = vmatprep.subr.mxu0 0.0
    %215 = vmatpush1.msra.mxu0 %v182
    %216 = vmatprep.subr.mxu0 0.0
    %217 = vmatpush1.msra.mxu0 %v183
    %218 = vmatprep.subr.mxu0 0.0
    %219 = vmatpush1.msra.mxu0 %v184
    %220 = vmatprep.subr.mxu0 0.0
    %221 = vmatpush1.msra.mxu0 %v185
    %222 = vmatprep.subr.mxu0 0.0
    %223 = vmatpush1.msra.mxu0 %v186
    %224 = vmatprep.subr.mxu0 0.0
    %225 = vmatpush1.msra.mxu0 %v187
    %226 = vmatprep.subr.mxu0 0.0
    %227 = vmatpush1.msra.mxu0 %v188
    %228 = vmatprep.subr.mxu0 0.0
    %229 = vmatpush1.msra.mxu0 %v189
    %230 = vmatprep.subr.mxu0 0.0
    %231 = vmatpush1.msra.mxu0 0.0
    %232 = vmatprep.subr.mxu0 0.0
    %233 = vmatpush1.msra.mxu0 0.0
    %234 = vmatprep.subr.mxu0 0.0
    %235 = vmatpush1.msra.mxu0 0.0
    %236 = vmatprep.subr.mxu0 0.0
    %237 = vmatpush1.msra.mxu0 0.0
    %238 = vmatprep.subr.mxu0 0.0
    %239 = vmatpush1.msra.mxu0 0.0
    %240 = vmatprep.subr.mxu0 0.0
    %241 = vmatpush1.msra.mxu0 0.0
    %242 = vmatprep.subr.mxu0 0.0
    %243 = vmatpush1.msra.mxu0 0.0
    %244 = vmatprep.subr.mxu0 0.0
    %245 = vmatpush1.msra.mxu0 0.0
    %246 = vmatprep.subr.mxu0 0.0
    %247 = vmatpush1.msra.mxu0 0.0
    %248 = vmatprep.subr.mxu0 0.0
    %249 = vmatpush1.msra.mxu0 0.0
    %250 = vmatprep.subr.mxu0 0.0
    %251 = vmatpush1.msra.mxu0 0.0
    %252 = vmatprep.subr.mxu0 0.0
    %253 = vmatpush1.msra.mxu0 0.0
    %254 = vmatprep.subr.mxu0 0.0
    %255 = vmatpush1.msra.mxu0 0.0
    %256 = vmatprep.subr.mxu0 0.0
    %257 = vmatpush1.msra.mxu0 0.0
    %258 = vmatprep.subr.mxu0 0.0
    %259 = vmatpush1.msra.mxu0 0.0
    %260 = vmatprep.subr.mxu0 0.0
    %261 = vmatpush1.msra.mxu0 0.0
    %262 = vmatprep.mubr.f32.mxu0 0.0
    %263 = vmatmul.mubr.f32.gmra.mrb[0].mxu0 %v172
    %v264 = vpop.f32.mrb[0].mxu0
    %v265 = vadd.f32 %v196, %v264
    %v266 = vpop.f32.mrb[0].mxu0
    %267 = vdwg.mxu0
    %vm268 = vcmp.ge.f32.partialorder %v265, 0.0
    %v269 = vmul.f32 %v265, 0.01
    %v270 = vsel %vm268, %v265, %v269
    %v271 = vrot.slane %v270, 4
    %v272 = vadd.f32 %v270, %v271
    %v273 = vrot.slane %v272, 2
    %v274 = vadd.f32 %v272, %v273
    %v275 = vrot.slane %v274, 1
    %v276 = vadd.f32 %v274, %v275
    %v277 = vrcp.pop 8.0
    %v278 = vmul.f32 %v276, %v277
    %v279 = vsub.f32 %v270, %v278
    %v280 = vmul.f32 %v279, %v279
    %v281 = vrot.slane %v280, 4
    %v282 = vadd.f32 %v280, %v281
    %v283 = vrot.slane %v282, 2
    %v284 = vadd.f32 %v282, %v283
    %v285 = vrot.slane %v284, 1
    %v286 = vadd.f32 %v284, %v285
    %v287 = vmul.f32 %v286, %v277
    %v288 = vadd.f32 %v287, 1e-05
    %v289 = vrsqrt.pop %v288
    %v290 = vmul.f32 %v279, %v289
    %s291 = scalar_lea.vmem [#allocation7], 1
    %v292 = vld [vmem:[%s291] sm:$0x1]
    %v294 = vlaneseq
    %v295 = vshrl.u32 %v294, 7
    %v296 = vsub.s32 0, %v295
    %v297 = vrot.slane %v292, %v296
    %v299 = vmul.f32 %v290, %v297
    %s300 = scalar_lea.vmem [#allocation8], 1
    %v301 = vld [vmem:[%s300] sm:$0x1]
    %v303 = vlaneseq
    %v304 = vshrl.u32 %v303, 7
    %v305 = vsub.s32 0, %v304
    %v306 = vrot.slane %v301, %v305
    %v308 = vadd.f32 %v299, %v306
    %s309 = scalar_lea.vmem [#allocation2], 256
    %v310 = vld [vmem:[%s309] sm:$0xff]
    %v311 = vld [vmem:[%s309 + $0x8] sm:$0xff]
    %v312 = vld [vmem:[%s309 + $0x10] sm:$0xff]
    %v313 = vld [vmem:[%s309 + $0x18] sm:$0xff]
    %v314 = vld [vmem:[%s309 + $0x20] sm:$0xff]
    %v315 = vld [vmem:[%s309 + $0x28] sm:$0xff]
    %v316 = vld [vmem:[%s309 + $0x30] sm:$0xff]
    %v317 = vld [vmem:[%s309 + $0x38] sm:$0xff]
    %v318 = vld [vmem:[%s309 + $0x40] sm:$0xff]
    %v319 = vld [vmem:[%s309 + $0x48] sm:$0xff]
    %v320 = vld [vmem:[%s309 + $0x50] sm:$0xff]
    %v321 = vld [vmem:[%s309 + $0x58] sm:$0xff]
    %v322 = vld [vmem:[%s309 + $0x60] sm:$0xff]
    %v323 = vld [vmem:[%s309 + $0x68] sm:$0xff]
    %v324 = vld [vmem:[%s309 + $0x70] sm:$0xff]
    %v325 = vld [vmem:[%s309 + $0x78] sm:$0xff]
    %s326 = scalar_lea.vmem [#allocation5], 2
    %v327 = vld [vmem:[%s326] sm:$0x1]
    %v329 = vlaneseq
    %v330 = vshrl.u32 %v329, 7
    %v331 = vsub.s32 0, %v330
    %v332 = vrot.slane %v327, %v331
    %334 = vmatprep.subr.mxu0 0.0
    %335 = vmatpush1.msra.mxu0 %v310
    %336 = vmatprep.subr.mxu0 0.0
    %337 = vmatpush1.msra.mxu0 %v311
    %338 = vmatprep.subr.mxu0 0.0
    %339 = vmatpush1.msra.mxu0 %v312
    %340 = vmatprep.subr.mxu0 0.0
    %341 = vmatpush1.msra.mxu0 %v313
    %342 = vmatprep.subr.mxu0 0.0
    %343 = vmatpush1.msra.mxu0 %v314
    %344 = vmatprep.subr.mxu0 0.0
    %345 = vmatpush1.msra.mxu0 %v315
    %346 = vmatprep.subr.mxu0 0.0
    %347 = vmatpush1.msra.mxu0 %v316
    %348 = vmatprep.subr.mxu0 0.0
    %349 = vmatpush1.msra.mxu0 %v317
    %350 = vmatprep.subr.mxu0 0.0
    %351 = vmatpush1.msra.mxu0 %v318
    %352 = vmatprep.subr.mxu0 0.0
    %353 = vmatpush1.msra.mxu0 %v319
    %354 = vmatprep.subr.mxu0 0.0
    %355 = vmatpush1.msra.mxu0 %v320
    %356 = vmatprep.subr.mxu0 0.0
    %357 = vmatpush1.msra.mxu0 %v321
    %358 = vmatprep.subr.mxu0 0.0
    %359 = vmatpush1.msra.mxu0 %v322
    %360 = vmatprep.subr.mxu0 0.0
    %361 = vmatpush1.msra.mxu0 %v323
    %362 = vmatprep.subr.mxu0 0.0
    %363 = vmatpush1.msra.mxu0 %v324
    %364 = vmatprep.subr.mxu0 0.0
    %365 = vmatpush1.msra.mxu0 %v325
    %366 = vmatprep.subr.mxu0 0.0
    %367 = vmatpush1.msra.mxu0 0.0
    %368 = vmatprep.subr.mxu0 0.0
    %369 = vmatpush1.msra.mxu0 0.0
    %370 = vmatprep.subr.mxu0 0.0
    %371 = vmatpush1.msra.mxu0 0.0
    %372 = vmatprep.subr.mxu0 0.0
    %373 = vmatpush1.msra.mxu0 0.0
    %374 = vmatprep.subr.mxu0 0.0
    %375 = vmatpush1.msra.mxu0 0.0
    %376 = vmatprep.subr.mxu0 0.0
    %377 = vmatpush1.msra.mxu0 0.0
    %378 = vmatprep.subr.mxu0 0.0
    %379 = vmatpush1.msra.mxu0 0.0
    %380 = vmatprep.subr.mxu0 0.0
    %381 = vmatpush1.msra.mxu0 0.0
    %382 = vmatprep.subr.mxu0 0.0
    %383 = vmatpush1.msra.mxu0 0.0
    %384 = vmatprep.subr.mxu0 0.0
    %385 = vmatpush1.msra.mxu0 0.0
    %386 = vmatprep.subr.mxu0 0.0
    %387 = vmatpush1.msra.mxu0 0.0
    %388 = vmatprep.subr.mxu0 0.0
    %389 = vmatpush1.msra.mxu0 0.0
    %390 = vmatprep.subr.mxu0 0.0
    %391 = vmatpush1.msra.mxu0 0.0
    %392 = vmatprep.subr.mxu0 0.0
    %393 = vmatpush1.msra.mxu0 0.0
    %394 = vmatprep.subr.mxu0 0.0
    %395 = vmatpush1.msra.mxu0 0.0
    %396 = vmatprep.subr.mxu0 0.0
    %397 = vmatpush1.msra.mxu0 0.0
    %398 = vmatprep.mubr.f32.mxu0 0.0
    %399 = vmatmul.mubr.f32.gmra.mrb[0].mxu0 %v308
    %v400 = vpop.f32.mrb[0].mxu0
    %v401 = vadd.f32 %v332, %v400
    %v402 = vpop.f32.mrb[0].mxu0
    %403 = vdwg.mxu0
    %vm404 = vcmp.ge.f32.partialorder %v401, 0.0
    %v405 = vmul.f32 %v401, 0.01
    %v406 = vsel %vm404, %v401, %v405
    %v407 = vrot.slane %v406, 4
    %v408 = vadd.f32 %v406, %v407
    %v409 = vrot.slane %v408, 2
    %v410 = vadd.f32 %v408, %v409
    %v411 = vrot.slane %v410, 1
    %v412 = vadd.f32 %v410, %v411
    %v413 = vmul.f32 %v412, %v277
    %v414 = vsub.f32 %v406, %v413
    %v415 = vmul.f32 %v414, %v414
    %v416 = vrot.slane %v415, 4
    %v417 = vadd.f32 %v415, %v416
    %v418 = vrot.slane %v417, 2
    %v419 = vadd.f32 %v417, %v418
    %v420 = vrot.slane %v419, 1
    %v421 = vadd.f32 %v419, %v420
    %v422 = vmul.f32 %v421, %v277
    %v423 = vadd.f32 %v422, 1e-05
    %v424 = vrsqrt.pop %v423
    %v425 = vmul.f32 %v414, %v424
    %s426 = scalar_lea.vmem [#allocation7], 2
    %v427 = vld [vmem:[%s426] sm:$0x1]
    %v429 = vlaneseq
    %v430 = vshrl.u32 %v429, 7
    %v431 = vsub.s32 0, %v430
    %v432 = vrot.slane %v427, %v431
    %v434 = vmul.f32 %v425, %v432
    %s435 = scalar_lea.vmem [#allocation8], 2
    %v436 = vld [vmem:[%s435] sm:$0x1]
    %v438 = vlaneseq
    %v439 = vshrl.u32 %v438, 7
    %v440 = vsub.s32 0, %v439
    %v441 = vrot.slane %v436, %v440
    %v443 = vadd.f32 %v434, %v441
    %s444 = scalar_lea.vmem [#allocation2], 384
    %v445 = vld [vmem:[%s444] sm:$0xff]
    %v446 = vld [vmem:[%s444 + $0x8] sm:$0xff]
    %v447 = vld [vmem:[%s444 + $0x10] sm:$0xff]
    %v448 = vld [vmem:[%s444 + $0x18] sm:$0xff]
    %v449 = vld [vmem:[%s444 + $0x20] sm:$0xff]
    %v450 = vld [vmem:[%s444 + $0x28] sm:$0xff]
    %v451 = vld [vmem:[%s444 + $0x30] sm:$0xff]
    %v452 = vld [vmem:[%s444 + $0x38] sm:$0xff]
    %v453 = vld [vmem:[%s444 + $0x40] sm:$0xff]
    %v454 = vld [vmem:[%s444 + $0x48] sm:$0xff]
    %v455 = vld [vmem:[%s444 + $0x50] sm:$0xff]
    %v456 = vld [vmem:[%s444 + $0x58] sm:$0xff]
    %v457 = vld [vmem:[%s444 + $0x60] sm:$0xff]
    %v458 = vld [vmem:[%s444 + $0x68] sm:$0xff]
    %v459 = vld [vmem:[%s444 + $0x70] sm:$0xff]
    %v460 = vld [vmem:[%s444 + $0x78] sm:$0xff]
    %s461 = scalar_lea.vmem [#allocation5], 3
    %v462 = vld [vmem:[%s461] sm:$0x1]
    %v464 = vlaneseq
    %v465 = vshrl.u32 %v464, 7
    %v466 = vsub.s32 0, %v465
    %v467 = vrot.slane %v462, %v466
    %469 = vmatprep.subr.mxu0 0.0
    %470 = vmatpush1.msra.mxu0 %v445
    %471 = vmatprep.subr.mxu0 0.0
    %472 = vmatpush1.msra.mxu0 %v446
    %473 = vmatprep.subr.mxu0 0.0
    %474 = vmatpush1.msra.mxu0 %v447
    %475 = vmatprep.subr.mxu0 0.0
    %476 = vmatpush1.msra.mxu0 %v448
    %477 = vmatprep.subr.mxu0 0.0
    %478 = vmatpush1.msra.mxu0 %v449
    %479 = vmatprep.subr.mxu0 0.0
    %480 = vmatpush1.msra.mxu0 %v450
    %481 = vmatprep.subr.mxu0 0.0
    %482 = vmatpush1.msra.mxu0 %v451
    %483 = vmatprep.subr.mxu0 0.0
    %484 = vmatpush1.msra.mxu0 %v452
    %485 = vmatprep.subr.mxu0 0.0
    %486 = vmatpush1.msra.mxu0 %v453
    %487 = vmatprep.subr.mxu0 0.0
    %488 = vmatpush1.msra.mxu0 %v454
    %489 = vmatprep.subr.mxu0 0.0
    %490 = vmatpush1.msra.mxu0 %v455
    %491 = vmatprep.subr.mxu0 0.0
    %492 = vmatpush1.msra.mxu0 %v456
    %493 = vmatprep.subr.mxu0 0.0
    %494 = vmatpush1.msra.mxu0 %v457
    %495 = vmatprep.subr.mxu0 0.0
    %496 = vmatpush1.msra.mxu0 %v458
    %497 = vmatprep.subr.mxu0 0.0
    %498 = vmatpush1.msra.mxu0 %v459
    %499 = vmatprep.subr.mxu0 0.0
    %500 = vmatpush1.msra.mxu0 %v460
    %501 = vmatprep.subr.mxu0 0.0
    %502 = vmatpush1.msra.mxu0 0.0
    %503 = vmatprep.subr.mxu0 0.0
    %504 = vmatpush1.msra.mxu0 0.0
    %505 = vmatprep.subr.mxu0 0.0
    %506 = vmatpush1.msra.mxu0 0.0
    %507 = vmatprep.subr.mxu0 0.0
    %508 = vmatpush1.msra.mxu0 0.0
    %509 = vmatprep.subr.mxu0 0.0
    %510 = vmatpush1.msra.mxu0 0.0
    %511 = vmatprep.subr.mxu0 0.0
    %512 = vmatpush1.msra.mxu0 0.0
    %513 = vmatprep.subr.mxu0 0.0
    %514 = vmatpush1.msra.mxu0 0.0
    %515 = vmatprep.subr.mxu0 0.0
    %516 = vmatpush1.msra.mxu0 0.0
    %517 = vmatprep.subr.mxu0 0.0
    %518 = vmatpush1.msra.mxu0 0.0
    %519 = vmatprep.subr.mxu0 0.0
    %520 = vmatpush1.msra.mxu0 0.0
    %521 = vmatprep.subr.mxu0 0.0
    %522 = vmatpush1.msra.mxu0 0.0
    %523 = vmatprep.subr.mxu0 0.0
    %524 = vmatpush1.msra.mxu0 0.0
    %525 = vmatprep.subr.mxu0 0.0
    %526 = vmatpush1.msra.mxu0 0.0
    %527 = vmatprep.subr.mxu0 0.0
    %528 = vmatpush1.msra.mxu0 0.0
    %529 = vmatprep.subr.mxu0 0.0
    %530 = vmatpush1.msra.mxu0 0.0
    %531 = vmatprep.subr.mxu0 0.0
    %532 = vmatpush1.msra.mxu0 0.0
    %533 = vmatprep.mubr.f32.mxu0 0.0
    %534 = vmatmul.mubr.f32.gmra.mrb[0].mxu0 %v443
    %v535 = vpop.f32.mrb[0].mxu0
    %v536 = vadd.f32 %v467, %v535
    %v537 = vpop.f32.mrb[0].mxu0
    %538 = vdwg.mxu0
    %vm539 = vcmp.ge.f32.partialorder %v536, 0.0
    %v540 = vmul.f32 %v536, 0.01
    %v541 = vsel %vm539, %v536, %v540
    %v542 = vrot.slane %v541, 4
    %v543 = vadd.f32 %v541, %v542
    %v544 = vrot.slane %v543, 2
    %v545 = vadd.f32 %v543, %v544
    %v546 = vrot.slane %v545, 1
    %v547 = vadd.f32 %v545, %v546
    %v548 = vmul.f32 %v547, %v277
    %v549 = vsub.f32 %v541, %v548
    %v550 = vmul.f32 %v549, %v549
    %v551 = vrot.slane %v550, 4
    %v552 = vadd.f32 %v550, %v551
    %v553 = vrot.slane %v552, 2
    %v554 = vadd.f32 %v552, %v553
    %v555 = vrot.slane %v554, 1
    %v556 = vadd.f32 %v554, %v555
    %v557 = vmul.f32 %v556, %v277
    %v558 = vadd.f32 %v557, 1e-05
    %v559 = vrsqrt.pop %v558
    %v560 = vmul.f32 %v549, %v559
    %s561 = scalar_lea.vmem [#allocation7], 3
    %v562 = vld [vmem:[%s561] sm:$0x1]
    %v564 = vlaneseq
    %v565 = vshrl.u32 %v564, 7
    %v566 = vsub.s32 0, %v565
    %v567 = vrot.slane %v562, %v566
    %v569 = vmul.f32 %v560, %v567
    %s570 = scalar_lea.vmem [#allocation8], 3
    %v571 = vld [vmem:[%s570] sm:$0x1]
    %v573 = vlaneseq
    %v574 = vshrl.u32 %v573, 7
    %v575 = vsub.s32 0, %v574
    %v576 = vrot.slane %v571, %v575
    %v578 = vadd.f32 %v569, %v576
    %v579 = vadd.f32 %v578, %v172
    %s580 = scalar_lea.vmem [#allocation2], 512
    %v581 = vld [vmem:[%s580] sm:$0xff]
    %v582 = vld [vmem:[%s580 + $0x8] sm:$0xff]
    %v583 = vld [vmem:[%s580 + $0x10] sm:$0xff]
    %v584 = vld [vmem:[%s580 + $0x18] sm:$0xff]
    %v585 = vld [vmem:[%s580 + $0x20] sm:$0xff]
    %v586 = vld [vmem:[%s580 + $0x28] sm:$0xff]
    %v587 = vld [vmem:[%s580 + $0x30] sm:$0xff]
    %v588 = vld [vmem:[%s580 + $0x38] sm:$0xff]
    %v589 = vld [vmem:[%s580 + $0x40] sm:$0xff]
    %v590 = vld [vmem:[%s580 + $0x48] sm:$0xff]
    %v591 = vld [vmem:[%s580 + $0x50] sm:$0xff]
    %v592 = vld [vmem:[%s580 + $0x58] sm:$0xff]
    %v593 = vld [vmem:[%s580 + $0x60] sm:$0xff]
    %v594 = vld [vmem:[%s580 + $0x68] sm:$0xff]
    %v595 = vld [vmem:[%s580 + $0x70] sm:$0xff]
    %v596 = vld [vmem:[%s580 + $0x78] sm:$0xff]
    %s597 = scalar_lea.vmem [#allocation5], 4
    %v598 = vld [vmem:[%s597] sm:$0x1]
    %v600 = vlaneseq
    %v601 = vshrl.u32 %v600, 7
    %v602 = vsub.s32 0, %v601
    %v603 = vrot.slane %v598, %v602
    %605 = vmatprep.subr.mxu0 0.0
    %606 = vmatpush1.msra.mxu0 %v581
    %607 = vmatprep.subr.mxu0 0.0
    %608 = vmatpush1.msra.mxu0 %v582
    %609 = vmatprep.subr.mxu0 0.0
    %610 = vmatpush1.msra.mxu0 %v583
    %611 = vmatprep.subr.mxu0 0.0
    %612 = vmatpush1.msra.mxu0 %v584
    %613 = vmatprep.subr.mxu0 0.0
    %614 = vmatpush1.msra.mxu0 %v585
    %615 = vmatprep.subr.mxu0 0.0
    %616 = vmatpush1.msra.mxu0 %v586
    %617 = vmatprep.subr.mxu0 0.0
    %618 = vmatpush1.msra.mxu0 %v587
    %619 = vmatprep.subr.mxu0 0.0
    %620 = vmatpush1.msra.mxu0 %v588
    %621 = vmatprep.subr.mxu0 0.0
    %622 = vmatpush1.msra.mxu0 %v589
    %623 = vmatprep.subr.mxu0 0.0
    %624 = vmatpush1.msra.mxu0 %v590
    %625 = vmatprep.subr.mxu0 0.0
    %626 = vmatpush1.msra.mxu0 %v591
    %627 = vmatprep.subr.mxu0 0.0
    %628 = vmatpush1.msra.mxu0 %v592
    %629 = vmatprep.subr.mxu0 0.0
    %630 = vmatpush1.msra.mxu0 %v593
    %631 = vmatprep.subr.mxu0 0.0
    %632 = vmatpush1.msra.mxu0 %v594
    %633 = vmatprep.subr.mxu0 0.0
    %634 = vmatpush1.msra.mxu0 %v595
    %635 = vmatprep.subr.mxu0 0.0
    %636 = vmatpush1.msra.mxu0 %v596
    %637 = vmatprep.subr.mxu0 0.0
    %638 = vmatpush1.msra.mxu0 0.0
    %639 = vmatprep.subr.mxu0 0.0
    %640 = vmatpush1.msra.mxu0 0.0
    %641 = vmatprep.subr.mxu0 0.0
    %642 = vmatpush1.msra.mxu0 0.0
    %643 = vmatprep.subr.mxu0 0.0
    %644 = vmatpush1.msra.mxu0 0.0
    %645 = vmatprep.subr.mxu0 0.0
    %646 = vmatpush1.msra.mxu0 0.0
    %647 = vmatprep.subr.mxu0 0.0
    %648 = vmatpush1.msra.mxu0 0.0
    %649 = vmatprep.subr.mxu0 0.0
    %650 = vmatpush1.msra.mxu0 0.0
    %651 = vmatprep.subr.mxu0 0.0
    %652 = vmatpush1.msra.mxu0 0.0
    %653 = vmatprep.subr.mxu0 0.0
    %654 = vmatpush1.msra.mxu0 0.0
    %655 = vmatprep.subr.mxu0 0.0
    %656 = vmatpush1.msra.mxu0 0.0
    %657 = vmatprep.subr.mxu0 0.0
    %658 = vmatpush1.msra.mxu0 0.0
    %659 = vmatprep.subr.mxu0 0.0
    %660 = vmatpush1.msra.mxu0 0.0
    %661 = vmatprep.subr.mxu0 0.0
    %662 = vmatpush1.msra.mxu0 0.0
    %663 = vmatprep.subr.mxu0 0.0
    %664 = vmatpush1.msra.mxu0 0.0
    %665 = vmatprep.subr.mxu0 0.0
    %666 = vmatpush1.msra.mxu0 0.0
    %667 = vmatprep.subr.mxu0 0.0
    %668 = vmatpush1.msra.mxu0 0.0
    %669 = vmatprep.mubr.f32.mxu0 0.0
    %670 = vmatmul.mubr.f32.gmra.mrb[0].mxu0 %v579
    %v671 = vpop.f32.mrb[0].mxu0
    %v672 = vadd.f32 %v603, %v671
    %v673 = vpop.f32.mrb[0].mxu0
    %674 = vdwg.mxu0
    %vm675 = vcmp.ge.f32.partialorder %v672, 0.0
    %v676 = vmul.f32 %v672, 0.01
    %v677 = vsel %vm675, %v672, %v676
    %v678 = vrot.slane %v677, 4
    %v679 = vadd.f32 %v677, %v678
    %v680 = vrot.slane %v679, 2
    %v681 = vadd.f32 %v679, %v680
    %v682 = vrot.slane %v681, 1
    %v683 = vadd.f32 %v681, %v682
    %v684 = vmul.f32 %v683, %v277
    %v685 = vsub.f32 %v677, %v684
    %v686 = vmul.f32 %v685, %v685
    %v687 = vrot.slane %v686, 4
    %v688 = vadd.f32 %v686, %v687
    %v689 = vrot.slane %v688, 2
    %v690 = vadd.f32 %v688, %v689
    %v691 = vrot.slane %v690, 1
    %v692 = vadd.f32 %v690, %v691
    %v693 = vmul.f32 %v692, %v277
    %v694 = vadd.f32 %v693, 1e-05
    %v695 = vrsqrt.pop %v694
    %v696 = vmul.f32 %v685, %v695
    %s697 = scalar_lea.vmem [#allocation7], 4
    %v698 = vld [vmem:[%s697] sm:$0x1]
    %v700 = vlaneseq
    %v701 = vshrl.u32 %v700, 7
    %v702 = vsub.s32 0, %v701
    %v703 = vrot.slane %v698, %v702
    %v705 = vmul.f32 %v696, %v703
    %s706 = scalar_lea.vmem [#allocation8], 4
    %v707 = vld [vmem:[%s706] sm:$0x1]
    %v709 = vlaneseq
    %v710 = vshrl.u32 %v709, 7
    %v711 = vsub.s32 0, %v710
    %v712 = vrot.slane %v707, %v711
    %v714 = vadd.f32 %v705, %v712
    %s715 = scalar_lea.vmem [#allocation2], 640
    %v716 = vld [vmem:[%s715] sm:$0xff]
    %v717 = vld [vmem:[%s715 + $0x8] sm:$0xff]
    %v718 = vld [vmem:[%s715 + $0x10] sm:$0xff]
    %v719 = vld [vmem:[%s715 + $0x18] sm:$0xff]
    %v720 = vld [vmem:[%s715 + $0x20] sm:$0xff]
    %v721 = vld [vmem:[%s715 + $0x28] sm:$0xff]
    %v722 = vld [vmem:[%s715 + $0x30] sm:$0xff]
    %v723 = vld [vmem:[%s715 + $0x38] sm:$0xff]
    %v724 = vld [vmem:[%s715 + $0x40] sm:$0xff]
    %v725 = vld [vmem:[%s715 + $0x48] sm:$0xff]
    %v726 = vld [vmem:[%s715 + $0x50] sm:$0xff]
    %v727 = vld [vmem:[%s715 + $0x58] sm:$0xff]
    %v728 = vld [vmem:[%s715 + $0x60] sm:$0xff]
    %v729 = vld [vmem:[%s715 + $0x68] sm:$0xff]
    %v730 = vld [vmem:[%s715 + $0x70] sm:$0xff]
    %v731 = vld [vmem:[%s715 + $0x78] sm:$0xff]
    %s732 = scalar_lea.vmem [#allocation5], 5
    %v733 = vld [vmem:[%s732] sm:$0x1]
    %v735 = vlaneseq
    %v736 = vshrl.u32 %v735, 7
    %v737 = vsub.s32 0, %v736
    %v738 = vrot.slane %v733, %v737
    %740 = vmatprep.subr.mxu0 0.0
    %741 = vmatpush1.msra.mxu0 %v716
    %742 = vmatprep.subr.mxu0 0.0
    %743 = vmatpush1.msra.mxu0 %v717
    %744 = vmatprep.subr.mxu0 0.0
    %745 = vmatpush1.msra.mxu0 %v718
    %746 = vmatprep.subr.mxu0 0.0
    %747 = vmatpush1.msra.mxu0 %v719
    %748 = vmatprep.subr.mxu0 0.0
    %749 = vmatpush1.msra.mxu0 %v720
    %750 = vmatprep.subr.mxu0 0.0
    %751 = vmatpush1.msra.mxu0 %v721
    %752 = vmatprep.subr.mxu0 0.0
    %753 = vmatpush1.msra.mxu0 %v722
    %754 = vmatprep.subr.mxu0 0.0
    %755 = vmatpush1.msra.mxu0 %v723
    %756 = vmatprep.subr.mxu0 0.0
    %757 = vmatpush1.msra.mxu0 %v724
    %758 = vmatprep.subr.mxu0 0.0
    %759 = vmatpush1.msra.mxu0 %v725
    %760 = vmatprep.subr.mxu0 0.0
    %761 = vmatpush1.msra.mxu0 %v726
    %762 = vmatprep.subr.mxu0 0.0
    %763 = vmatpush1.msra.mxu0 %v727
    %764 = vmatprep.subr.mxu0 0.0
    %765 = vmatpush1.msra.mxu0 %v728
    %766 = vmatprep.subr.mxu0 0.0
    %767 = vmatpush1.msra.mxu0 %v729
    %768 = vmatprep.subr.mxu0 0.0
    %769 = vmatpush1.msra.mxu0 %v730
    %770 = vmatprep.subr.mxu0 0.0
    %771 = vmatpush1.msra.mxu0 %v731
    %772 = vmatprep.subr.mxu0 0.0
    %773 = vmatpush1.msra.mxu0 0.0
    %774 = vmatprep.subr.mxu0 0.0
    %775 = vmatpush1.msra.mxu0 0.0
    %776 = vmatprep.subr.mxu0 0.0
    %777 = vmatpush1.msra.mxu0 0.0
    %778 = vmatprep.subr.mxu0 0.0
    %779 = vmatpush1.msra.mxu0 0.0
    %780 = vmatprep.subr.mxu0 0.0
    %781 = vmatpush1.msra.mxu0 0.0
    %782 = vmatprep.subr.mxu0 0.0
    %783 = vmatpush1.msra.mxu0 0.0
    %784 = vmatprep.subr.mxu0 0.0
    %785 = vmatpush1.msra.mxu0 0.0
    %786 = vmatprep.subr.mxu0 0.0
    %787 = vmatpush1.msra.mxu0 0.0
    %788 = vmatprep.subr.mxu0 0.0
    %789 = vmatpush1.msra.mxu0 0.0
    %790 = vmatprep.subr.mxu0 0.0
    %791 = vmatpush1.msra.mxu0 0.0
    %792 = vmatprep.subr.mxu0 0.0
    %793 = vmatpush1.msra.mxu0 0.0
    %794 = vmatprep.subr.mxu0 0.0
    %795 = vmatpush1.msra.mxu0 0.0
    %796 = vmatprep.subr.mxu0 0.0
    %797 = vmatpush1.msra.mxu0 0.0
    %798 = vmatprep.subr.mxu0 0.0
    %799 = vmatpush1.msra.mxu0 0.0
    %800 = vmatprep.subr.mxu0 0.0
    %801 = vmatpush1.msra.mxu0 0.0
    %802 = vmatprep.subr.mxu0 0.0
    %803 = vmatpush1.msra.mxu0 0.0
    %804 = vmatprep.mubr.f32.mxu0 0.0
    %805 = vmatmul.mubr.f32.gmra.mrb[0].mxu0 %v714
    %v806 = vpop.f32.mrb[0].mxu0
    %v807 = vadd.f32 %v738, %v806
    %v808 = vpop.f32.mrb[0].mxu0
    %809 = vdwg.mxu0
    %vm810 = vcmp.ge.f32.partialorder %v807, 0.0
    %v811 = vmul.f32 %v807, 0.01
    %v812 = vsel %vm810, %v807, %v811
    %v813 = vrot.slane %v812, 4
    %v814 = vadd.f32 %v812, %v813
    %v815 = vrot.slane %v814, 2
    %v816 = vadd.f32 %v814, %v815
    %v817 = vrot.slane %v816, 1
    %v818 = vadd.f32 %v816, %v817
    %v819 = vmul.f32 %v818, %v277
    %v820 = vsub.f32 %v812, %v819
    %v821 = vmul.f32 %v820, %v820
    %v822 = vrot.slane %v821, 4
    %v823 = vadd.f32 %v821, %v822
    %v824 = vrot.slane %v823, 2
    %v825 = vadd.f32 %v823, %v824
    %v826 = vrot.slane %v825, 1
    %v827 = vadd.f32 %v825, %v826
    %v828 = vmul.f32 %v827, %v277
    %v829 = vadd.f32 %v828, 1e-05
    %v830 = vrsqrt.pop %v829
    %v831 = vmul.f32 %v820, %v830
    %s832 = scalar_lea.vmem [#allocation7], 5
    %v833 = vld [vmem:[%s832] sm:$0x1]
    %v835 = vlaneseq
    %v836 = vshrl.u32 %v835, 7
    %v837 = vsub.s32 0, %v836
    %v838 = vrot.slane %v833, %v837
    %v840 = vmul.f32 %v831, %v838
    %s841 = scalar_lea.vmem [#allocation8], 5
    %v842 = vld [vmem:[%s841] sm:$0x1]
    %v844 = vlaneseq
    %v845 = vshrl.u32 %v844, 7
    %v846 = vsub.s32 0, %v845
    %v847 = vrot.slane %v842, %v846
    %v849 = vadd.f32 %v840, %v847
    %s850 = scalar_lea.vmem [#allocation2], 768
    %v851 = vld [vmem:[%s850] sm:$0xff]
    %v852 = vld [vmem:[%s850 + $0x8] sm:$0xff]
    %v853 = vld [vmem:[%s850 + $0x10] sm:$0xff]
    %v854 = vld [vmem:[%s850 + $0x18] sm:$0xff]
    %v855 = vld [vmem:[%s850 + $0x20] sm:$0xff]
    %v856 = vld [vmem:[%s850 + $0x28] sm:$0xff]
    %v857 = vld [vmem:[%s850 + $0x30] sm:$0xff]
    %v858 = vld [vmem:[%s850 + $0x38] sm:$0xff]
    %v859 = vld [vmem:[%s850 + $0x40] sm:$0xff]
    %v860 = vld [vmem:[%s850 + $0x48] sm:$0xff]
    %v861 = vld [vmem:[%s850 + $0x50] sm:$0xff]
    %v862 = vld [vmem:[%s850 + $0x58] sm:$0xff]
    %v863 = vld [vmem:[%s850 + $0x60] sm:$0xff]
    %v864 = vld [vmem:[%s850 + $0x68] sm:$0xff]
    %v865 = vld [vmem:[%s850 + $0x70] sm:$0xff]
    %v866 = vld [vmem:[%s850 + $0x78] sm:$0xff]
    %s867 = scalar_lea.vmem [#allocation5], 6
    %v868 = vld [vmem:[%s867] sm:$0x1]
    %v870 = vlaneseq
    %v871 = vshrl.u32 %v870, 7
    %v872 = vsub.s32 0, %v871
    %v873 = vrot.slane %v868, %v872
    %875 = vmatprep.subr.mxu0 0.0
    %876 = vmatpush1.msra.mxu0 %v851
    %877 = vmatprep.subr.mxu0 0.0
    %878 = vmatpush1.msra.mxu0 %v852
    %879 = vmatprep.subr.mxu0 0.0
    %880 = vmatpush1.msra.mxu0 %v853
    %881 = vmatprep.subr.mxu0 0.0
    %882 = vmatpush1.msra.mxu0 %v854
    %883 = vmatprep.subr.mxu0 0.0
    %884 = vmatpush1.msra.mxu0 %v855
    %885 = vmatprep.subr.mxu0 0.0
    %886 = vmatpush1.msra.mxu0 %v856
    %887 = vmatprep.subr.mxu0 0.0
    %888 = vmatpush1.msra.mxu0 %v857
    %889 = vmatprep.subr.mxu0 0.0
    %890 = vmatpush1.msra.mxu0 %v858
    %891 = vmatprep.subr.mxu0 0.0
    %892 = vmatpush1.msra.mxu0 %v859
    %893 = vmatprep.subr.mxu0 0.0
    %894 = vmatpush1.msra.mxu0 %v860
    %895 = vmatprep.subr.mxu0 0.0
    %896 = vmatpush1.msra.mxu0 %v861
    %897 = vmatprep.subr.mxu0 0.0
    %898 = vmatpush1.msra.mxu0 %v862
    %899 = vmatprep.subr.mxu0 0.0
    %900 = vmatpush1.msra.mxu0 %v863
    %901 = vmatprep.subr.mxu0 0.0
    %902 = vmatpush1.msra.mxu0 %v864
    %903 = vmatprep.subr.mxu0 0.0
    %904 = vmatpush1.msra.mxu0 %v865
    %905 = vmatprep.subr.mxu0 0.0
    %906 = vmatpush1.msra.mxu0 %v866
    %907 = vmatprep.subr.mxu0 0.0
    %908 = vmatpush1.msra.mxu0 0.0
    %909 = vmatprep.subr.mxu0 0.0
    %910 = vmatpush1.msra.mxu0 0.0
    %911 = vmatprep.subr.mxu0 0.0
    %912 = vmatpush1.msra.mxu0 0.0
    %913 = vmatprep.subr.mxu0 0.0
    %914 = vmatpush1.msra.mxu0 0.0
    %915 = vmatprep.subr.mxu0 0.0
    %916 = vmatpush1.msra.mxu0 0.0
    %917 = vmatprep.subr.mxu0 0.0
    %918 = vmatpush1.msra.mxu0 0.0
    %919 = vmatprep.subr.mxu0 0.0
    %920 = vmatpush1.msra.mxu0 0.0
    %921 = vmatprep.subr.mxu0 0.0
    %922 = vmatpush1.msra.mxu0 0.0
    %923 = vmatprep.subr.mxu0 0.0
    %924 = vmatpush1.msra.mxu0 0.0
    %925 = vmatprep.subr.mxu0 0.0
    %926 = vmatpush1.msra.mxu0 0.0
    %927 = vmatprep.subr.mxu0 0.0
    %928 = vmatpush1.msra.mxu0 0.0
    %929 = vmatprep.subr.mxu0 0.0
    %930 = vmatpush1.msra.mxu0 0.0
    %931 = vmatprep.subr.mxu0 0.0
    %932 = vmatpush1.msra.mxu0 0.0
    %933 = vmatprep.subr.mxu0 0.0
    %934 = vmatpush1.msra.mxu0 0.0
    %935 = vmatprep.subr.mxu0 0.0
    %936 = vmatpush1.msra.mxu0 0.0
    %937 = vmatprep.subr.mxu0 0.0
    %938 = vmatpush1.msra.mxu0 0.0
    %939 = vmatprep.mubr.f32.mxu0 0.0
    %940 = vmatmul.mubr.f32.gmra.mrb[0].mxu0 %v849
    %v941 = vpop.f32.mrb[0].mxu0
    %v942 = vadd.f32 %v873, %v941
    %v943 = vpop.f32.mrb[0].mxu0
    %944 = vdwg.mxu0
    %vm945 = vcmp.ge.f32.partialorder %v942, 0.0
    %v946 = vmul.f32 %v942, 0.01
    %v947 = vsel %vm945, %v942, %v946
    %v948 = vrot.slane %v947, 4
    %v949 = vadd.f32 %v947, %v948
    %v950 = vrot.slane %v949, 2
    %v951 = vadd.f32 %v949, %v950
    %v952 = vrot.slane %v951, 1
    %v953 = vadd.f32 %v951, %v952
    %v954 = vmul.f32 %v953, %v277
    %v955 = vsub.f32 %v947, %v954
    %v956 = vmul.f32 %v955, %v955
    %v957 = vrot.slane %v956, 4
    %v958 = vadd.f32 %v956, %v957
    %v959 = vrot.slane %v958, 2
    %v960 = vadd.f32 %v958, %v959
    %v961 = vrot.slane %v960, 1
    %v962 = vadd.f32 %v960, %v961
    %v963 = vmul.f32 %v962, %v277
    %v964 = vadd.f32 %v963, 1e-05
    %v965 = vrsqrt.pop %v964
    %v966 = vmul.f32 %v955, %v965
    %s967 = scalar_lea.vmem [#allocation7], 6
    %v968 = vld [vmem:[%s967] sm:$0x1]
    %v970 = vlaneseq
    %v971 = vshrl.u32 %v970, 7
    %v972 = vsub.s32 0, %v971
    %v973 = vrot.slane %v968, %v972
    %v975 = vmul.f32 %v966, %v973
    %s976 = scalar_lea.vmem [#allocation8], 6
    %v977 = vld [vmem:[%s976] sm:$0x1]
    %v979 = vlaneseq
    %v980 = vshrl.u32 %v979, 7
    %v981 = vsub.s32 0, %v980
    %v982 = vrot.slane %v977, %v981
    %v984 = vadd.f32 %v975, %v982
    %v985 = vadd.f32 %v984, %v579
    %s986 = scalar_lea.vmem [#allocation2], 896
    %v987 = vld [vmem:[%s986] sm:$0xff]
    %v988 = vld [vmem:[%s986 + $0x8] sm:$0xff]
    %v989 = vld [vmem:[%s986 + $0x10] sm:$0xff]
    %v990 = vld [vmem:[%s986 + $0x18] sm:$0xff]
    %v991 = vld [vmem:[%s986 + $0x20] sm:$0xff]
    %v992 = vld [vmem:[%s986 + $0x28] sm:$0xff]
    %v993 = vld [vmem:[%s986 + $0x30] sm:$0xff]
    %v994 = vld [vmem:[%s986 + $0x38] sm:$0xff]
    %v995 = vld [vmem:[%s986 + $0x40] sm:$0xff]
    %v996 = vld [vmem:[%s986 + $0x48] sm:$0xff]
    %v997 = vld [vmem:[%s986 + $0x50] sm:$0xff]
    %v998 = vld [vmem:[%s986 + $0x58] sm:$0xff]
    %v999 = vld [vmem:[%s986 + $0x60] sm:$0xff]
    %v1000 = vld [vmem:[%s986 + $0x68] sm:$0xff]
    %v1001 = vld [vmem:[%s986 + $0x70] sm:$0xff]
    %v1002 = vld [vmem:[%s986 + $0x78] sm:$0xff]
    %s1003 = scalar_lea.vmem [#allocation5], 7
    %v1004 = vld [vmem:[%s1003] sm:$0x1]
    %v1006 = vlaneseq
    %v1007 = vshrl.u32 %v1006, 7
    %v1008 = vsub.s32 0, %v1007
    %v1009 = vrot.slane %v1004, %v1008
    %1011 = vmatprep.subr.mxu0 0.0
    %1012 = vmatpush1.msra.mxu0 %v987
    %1013 = vmatprep.subr.mxu0 0.0
    %1014 = vmatpush1.msra.mxu0 %v988
    %1015 = vmatprep.subr.mxu0 0.0
    %1016 = vmatpush1.msra.mxu0 %v989
    %1017 = vmatprep.subr.mxu0 0.0
    %1018 = vmatpush1.msra.mxu0 %v990
    %1019 = vmatprep.subr.mxu0 0.0
    %1020 = vmatpush1.msra.mxu0 %v991
    %1021 = vmatprep.subr.mxu0 0.0
    %1022 = vmatpush1.msra.mxu0 %v992
    %1023 = vmatprep.subr.mxu0 0.0
    %1024 = vmatpush1.msra.mxu0 %v993
    %1025 = vmatprep.subr.mxu0 0.0
    %1026 = vmatpush1.msra.mxu0 %v994
    %1027 = vmatprep.subr.mxu0 0.0
    %1028 = vmatpush1.msra.mxu0 %v995
    %1029 = vmatprep.subr.mxu0 0.0
    %1030 = vmatpush1.msra.mxu0 %v996
    %1031 = vmatprep.subr.mxu0 0.0
    %1032 = vmatpush1.msra.mxu0 %v997
    %1033 = vmatprep.subr.mxu0 0.0
    %1034 = vmatpush1.msra.mxu0 %v998
    %1035 = vmatprep.subr.mxu0 0.0
    %1036 = vmatpush1.msra.mxu0 %v999
    %1037 = vmatprep.subr.mxu0 0.0
    %1038 = vmatpush1.msra.mxu0 %v1000
    %1039 = vmatprep.subr.mxu0 0.0
    %1040 = vmatpush1.msra.mxu0 %v1001
    %1041 = vmatprep.subr.mxu0 0.0
    %1042 = vmatpush1.msra.mxu0 %v1002
    %1043 = vmatprep.subr.mxu0 0.0
    %1044 = vmatpush1.msra.mxu0 0.0
    %1045 = vmatprep.subr.mxu0 0.0
    %1046 = vmatpush1.msra.mxu0 0.0
    %1047 = vmatprep.subr.mxu0 0.0
    %1048 = vmatpush1.msra.mxu0 0.0
    %1049 = vmatprep.subr.mxu0 0.0
    %1050 = vmatpush1.msra.mxu0 0.0
    %1051 = vmatprep.subr.mxu0 0.0
    %1052 = vmatpush1.msra.mxu0 0.0
    %1053 = vmatprep.subr.mxu0 0.0
    %1054 = vmatpush1.msra.mxu0 0.0
    %1055 = vmatprep.subr.mxu0 0.0
    %1056 = vmatpush1.msra.mxu0 0.0
    %1057 = vmatprep.subr.mxu0 0.0
    %1058 = vmatpush1.msra.mxu0 0.0
    %1059 = vmatprep.subr.mxu0 0.0
    %1060 = vmatpush1.msra.mxu0 0.0
    %1061 = vmatprep.subr.mxu0 0.0
    %1062 = vmatpush1.msra.mxu0 0.0
    %1063 = vmatprep.subr.mxu0 0.0
    %1064 = vmatpush1.msra.mxu0 0.0
    %1065 = vmatprep.subr.mxu0 0.0
    %1066 = vmatpush1.msra.mxu0 0.0
    %1067 = vmatprep.subr.mxu0 0.0
    %1068 = vmatpush1.msra.mxu0 0.0
    %1069 = vmatprep.subr.mxu0 0.0
    %1070 = vmatpush1.msra.mxu0 0.0
    %1071 = vmatprep.subr.mxu0 0.0
    %1072 = vmatpush1.msra.mxu0 0.0
    %1073 = vmatprep.subr.mxu0 0.0
    %1074 = vmatpush1.msra.mxu0 0.0
    %1075 = vmatprep.mubr.f32.mxu0 0.0
    %1076 = vmatmul.mubr.f32.gmra.mrb[0].mxu0 %v985
    %v1077 = vpop.f32.mrb[0].mxu0
    %v1078 = vadd.f32 %v1009, %v1077
    %v1079 = vpop.f32.mrb[0].mxu0
    %1080 = vdwg.mxu0
    %vm1081 = vcmp.ge.f32.partialorder %v1078, 0.0
    %v1082 = vmul.f32 %v1078, 0.01
    %v1083 = vsel %vm1081, %v1078, %v1082
    %s1084 = scalar_lea.vmem [#allocation2], 1024
    %v1085 = vld [vmem:[%s1084] sm:$0xff]
    %v1086 = vld [vmem:[%s1084 + $0x8] sm:$0xff]
    %v1087 = vld [vmem:[%s1084 + $0x10] sm:$0xff]
    %v1088 = vld [vmem:[%s1084 + $0x18] sm:$0xff]
    %v1089 = vld [vmem:[%s1084 + $0x20] sm:$0xff]
    %v1090 = vld [vmem:[%s1084 + $0x28] sm:$0xff]
    %v1091 = vld [vmem:[%s1084 + $0x30] sm:$0xff]
    %v1092 = vld [vmem:[%s1084 + $0x38] sm:$0xff]
    %v1093 = vld [vmem:[%s1084 + $0x40] sm:$0xff]
    %v1094 = vld [vmem:[%s1084 + $0x48] sm:$0xff]
    %v1095 = vld [vmem:[%s1084 + $0x50] sm:$0xff]
    %v1096 = vld [vmem:[%s1084 + $0x58] sm:$0xff]
    %v1097 = vld [vmem:[%s1084 + $0x60] sm:$0xff]
    %v1098 = vld [vmem:[%s1084 + $0x68] sm:$0xff]
    %v1099 = vld [vmem:[%s1084 + $0x70] sm:$0xff]
    %v1100 = vld [vmem:[%s1084 + $0x78] sm:$0xff]
    %s1101 = scalar_lea.vmem [#allocation5], 8
    %v1102 = vld [vmem:[%s1101] sm:$0x1]
    %v1104 = vlaneseq
    %v1105 = vshrl.u32 %v1104, 7
    %v1106 = vsub.s32 0, %v1105
    %v1107 = vrot.slane %v1102, %v1106
    %1109 = vmatprep.subr.mxu0 0.0
    %1110 = vmatpush1.msra.mxu0 %v1085
    %1111 = vmatprep.subr.mxu0 0.0
    %1112 = vmatpush1.msra.mxu0 %v1086
    %1113 = vmatprep.subr.mxu0 0.0
    %1114 = vmatpush1.msra.mxu0 %v1087
    %1115 = vmatprep.subr.mxu0 0.0
    %1116 = vmatpush1.msra.mxu0 %v1088
    %1117 = vmatprep.subr.mxu0 0.0
    %1118 = vmatpush1.msra.mxu0 %v1089
    %1119 = vmatprep.subr.mxu0 0.0
    %1120 = vmatpush1.msra.mxu0 %v1090
    %1121 = vmatprep.subr.mxu0 0.0
    %1122 = vmatpush1.msra.mxu0 %v1091
    %1123 = vmatprep.subr.mxu0 0.0
    %1124 = vmatpush1.msra.mxu0 %v1092
    %1125 = vmatprep.subr.mxu0 0.0
    %1126 = vmatpush1.msra.mxu0 %v1093
    %1127 = vmatprep.subr.mxu0 0.0
    %1128 = vmatpush1.msra.mxu0 %v1094
    %1129 = vmatprep.subr.mxu0 0.0
    %1130 = vmatpush1.msra.mxu0 %v1095
    %1131 = vmatprep.subr.mxu0 0.0
    %1132 = vmatpush1.msra.mxu0 %v1096
    %1133 = vmatprep.subr.mxu0 0.0
    %1134 = vmatpush1.msra.mxu0 %v1097
    %1135 = vmatprep.subr.mxu0 0.0
    %1136 = vmatpush1.msra.mxu0 %v1098
    %1137 = vmatprep.subr.mxu0 0.0
    %1138 = vmatpush1.msra.mxu0 %v1099
    %1139 = vmatprep.subr.mxu0 0.0
    %1140 = vmatpush1.msra.mxu0 %v1100
    %1141 = vmatprep.subr.mxu0 0.0
    %1142 = vmatpush1.msra.mxu0 0.0
    %1143 = vmatprep.subr.mxu0 0.0
    %1144 = vmatpush1.msra.mxu0 0.0
    %1145 = vmatprep.subr.mxu0 0.0
    %1146 = vmatpush1.msra.mxu0 0.0
    %1147 = vmatprep.subr.mxu0 0.0
    %1148 = vmatpush1.msra.mxu0 0.0
    %1149 = vmatprep.subr.mxu0 0.0
    %1150 = vmatpush1.msra.mxu0 0.0
    %1151 = vmatprep.subr.mxu0 0.0
    %1152 = vmatpush1.msra.mxu0 0.0
    %1153 = vmatprep.subr.mxu0 0.0
    %1154 = vmatpush1.msra.mxu0 0.0
    %1155 = vmatprep.subr.mxu0 0.0
    %1156 = vmatpush1.msra.mxu0 0.0
    %1157 = vmatprep.subr.mxu0 0.0
    %1158 = vmatpush1.msra.mxu0 0.0
    %1159 = vmatprep.subr.mxu0 0.0
    %1160 = vmatpush1.msra.mxu0 0.0
    %1161 = vmatprep.subr.mxu0 0.0
    %1162 = vmatpush1.msra.mxu0 0.0
    %1163 = vmatprep.subr.mxu0 0.0
    %1164 = vmatpush1.msra.mxu0 0.0
    %1165 = vmatprep.subr.mxu0 0.0
    %1166 = vmatpush1.msra.mxu0 0.0
    %1167 = vmatprep.subr.mxu0 0.0
    %1168 = vmatpush1.msra.mxu0 0.0
    %1169 = vmatprep.subr.mxu0 0.0
    %1170 = vmatpush1.msra.mxu0 0.0
    %1171 = vmatprep.subr.mxu0 0.0
    %1172 = vmatpush1.msra.mxu0 0.0
    %1173 = vmatprep.mubr.f32.mxu0 0.0
    %1174 = vmatmul.mubr.f32.gmra.mrb[0].mxu0 %v1083
    %v1175 = vpop.f32.mrb[0].mxu0
    %v1176 = vadd.f32 %v1107, %v1175
    %v1177 = vpop.f32.mrb[0].mxu0
    %1178 = vdwg.mxu0
    %vm1179 = vcmp.ge.f32.partialorder %v1176, 0.0
    %v1180 = vmul.f32 %v1176, 0.01
    %v1181 = vsel %vm1179, %v1176, %v1180
    %v1182 = vrot.slane %v1181, 4
    %v1183 = vadd.f32 %v1181, %v1182
    %v1184 = vrot.slane %v1183, 2
    %v1185 = vadd.f32 %v1183, %v1184
    %v1186 = vrot.slane %v1185, 1
    %v1187 = vadd.f32 %v1185, %v1186
    %v1188 = vmul.f32 %v1187, %v277
    %v1189 = vsub.f32 %v1181, %v1188
    %v1190 = vmul.f32 %v1189, %v1189
    %v1191 = vrot.slane %v1190, 4
    %v1192 = vadd.f32 %v1190, %v1191
    %v1193 = vrot.slane %v1192, 2
    %v1194 = vadd.f32 %v1192, %v1193
    %v1195 = vrot.slane %v1194, 1
    %v1196 = vadd.f32 %v1194, %v1195
    %v1197 = vmul.f32 %v1196, %v277
    %v1198 = vadd.f32 %v1197, 1e-05
    %v1199 = vrsqrt.pop %v1198
    %v1200 = vmul.f32 %v1189, %v1199
    %s1201 = scalar_lea.vmem [#allocation7], 8
    %v1202 = vld [vmem:[%s1201] sm:$0x1]
    %v1204 = vlaneseq
    %v1205 = vshrl.u32 %v1204, 7
    %v1206 = vsub.s32 0, %v1205
    %v1207 = vrot.slane %v1202, %v1206
    %v1209 = vmul.f32 %v1200, %v1207
    %s1210 = scalar_lea.vmem [#allocation8], 8
    %v1211 = vld [vmem:[%s1210] sm:$0x1]
    %v1213 = vlaneseq
    %v1214 = vshrl.u32 %v1213, 7
    %v1215 = vsub.s32 0, %v1214
    %v1216 = vrot.slane %v1211, %v1215
    %v1218 = vadd.f32 %v1209, %v1216
    %s1219 = scalar_lea.vmem [#allocation2], 1152
    %v1220 = vld [vmem:[%s1219] sm:$0xff]
    %v1221 = vld [vmem:[%s1219 + $0x8] sm:$0xff]
    %v1222 = vld [vmem:[%s1219 + $0x10] sm:$0xff]
    %v1223 = vld [vmem:[%s1219 + $0x18] sm:$0xff]
    %v1224 = vld [vmem:[%s1219 + $0x20] sm:$0xff]
    %v1225 = vld [vmem:[%s1219 + $0x28] sm:$0xff]
    %v1226 = vld [vmem:[%s1219 + $0x30] sm:$0xff]
    %v1227 = vld [vmem:[%s1219 + $0x38] sm:$0xff]
    %v1228 = vld [vmem:[%s1219 + $0x40] sm:$0xff]
    %v1229 = vld [vmem:[%s1219 + $0x48] sm:$0xff]
    %v1230 = vld [vmem:[%s1219 + $0x50] sm:$0xff]
    %v1231 = vld [vmem:[%s1219 + $0x58] sm:$0xff]
    %v1232 = vld [vmem:[%s1219 + $0x60] sm:$0xff]
    %v1233 = vld [vmem:[%s1219 + $0x68] sm:$0xff]
    %v1234 = vld [vmem:[%s1219 + $0x70] sm:$0xff]
    %v1235 = vld [vmem:[%s1219 + $0x78] sm:$0xff]
    %s1236 = scalar_lea.vmem [#allocation5], 9
    %v1237 = vld [vmem:[%s1236] sm:$0x1]
    %v1239 = vlaneseq
    %v1240 = vshrl.u32 %v1239, 7
    %v1241 = vsub.s32 0, %v1240
    %v1242 = vrot.slane %v1237, %v1241
    %1244 = vmatprep.subr.mxu0 0.0
    %1245 = vmatpush1.msra.mxu0 %v1220
    %1246 = vmatprep.subr.mxu0 0.0
    %1247 = vmatpush1.msra.mxu0 %v1221
    %1248 = vmatprep.subr.mxu0 0.0
    %1249 = vmatpush1.msra.mxu0 %v1222
    %1250 = vmatprep.subr.mxu0 0.0
    %1251 = vmatpush1.msra.mxu0 %v1223
    %1252 = vmatprep.subr.mxu0 0.0
    %1253 = vmatpush1.msra.mxu0 %v1224
    %1254 = vmatprep.subr.mxu0 0.0
    %1255 = vmatpush1.msra.mxu0 %v1225
    %1256 = vmatprep.subr.mxu0 0.0
    %1257 = vmatpush1.msra.mxu0 %v1226
    %1258 = vmatprep.subr.mxu0 0.0
    %1259 = vmatpush1.msra.mxu0 %v1227
    %1260 = vmatprep.subr.mxu0 0.0
    %1261 = vmatpush1.msra.mxu0 %v1228
    %1262 = vmatprep.subr.mxu0 0.0
    %1263 = vmatpush1.msra.mxu0 %v1229
    %1264 = vmatprep.subr.mxu0 0.0
    %1265 = vmatpush1.msra.mxu0 %v1230
    %1266 = vmatprep.subr.mxu0 0.0
    %1267 = vmatpush1.msra.mxu0 %v1231
    %1268 = vmatprep.subr.mxu0 0.0
    %1269 = vmatpush1.msra.mxu0 %v1232
    %1270 = vmatprep.subr.mxu0 0.0
    %1271 = vmatpush1.msra.mxu0 %v1233
    %1272 = vmatprep.subr.mxu0 0.0
    %1273 = vmatpush1.msra.mxu0 %v1234
    %1274 = vmatprep.subr.mxu0 0.0
    %1275 = vmatpush1.msra.mxu0 %v1235
    %1276 = vmatprep.subr.mxu0 0.0
    %1277 = vmatpush1.msra.mxu0 0.0
    %1278 = vmatprep.subr.mxu0 0.0
    %1279 = vmatpush1.msra.mxu0 0.0
    %1280 = vmatprep.subr.mxu0 0.0
    %1281 = vmatpush1.msra.mxu0 0.0
    %1282 = vmatprep.subr.mxu0 0.0
    %1283 = vmatpush1.msra.mxu0 0.0
    %1284 = vmatprep.subr.mxu0 0.0
    %1285 = vmatpush1.msra.mxu0 0.0
    %1286 = vmatprep.subr.mxu0 0.0
    %1287 = vmatpush1.msra.mxu0 0.0
    %1288 = vmatprep.subr.mxu0 0.0
    %1289 = vmatpush1.msra.mxu0 0.0
    %1290 = vmatprep.subr.mxu0 0.0
    %1291 = vmatpush1.msra.mxu0 0.0
    %1292 = vmatprep.subr.mxu0 0.0
    %1293 = vmatpush1.msra.mxu0 0.0
    %1294 = vmatprep.subr.mxu0 0.0
    %1295 = vmatpush1.msra.mxu0 0.0
    %1296 = vmatprep.subr.mxu0 0.0
    %1297 = vmatpush1.msra.mxu0 0.0
    %1298 = vmatprep.subr.mxu0 0.0
    %1299 = vmatpush1.msra.mxu0 0.0
    %1300 = vmatprep.subr.mxu0 0.0
    %1301 = vmatpush1.msra.mxu0 0.0
    %1302 = vmatprep.subr.mxu0 0.0
    %1303 = vmatpush1.msra.mxu0 0.0
    %1304 = vmatprep.subr.mxu0 0.0
    %1305 = vmatpush1.msra.mxu0 0.0
    %1306 = vmatprep.subr.mxu0 0.0
    %1307 = vmatpush1.msra.mxu0 0.0
    %1308 = vmatprep.mubr.f32.mxu0 0.0
    %1309 = vmatmul.mubr.f32.gmra.mrb[0].mxu0 %v1218
    %v1310 = vpop.f32.mrb[0].mxu0
    %v1311 = vadd.f32 %v1242, %v1310
    %v1312 = vpop.f32.mrb[0].mxu0
    %1313 = vdwg.mxu0
    %vm1314 = vcmp.ge.f32.partialorder %v1311, 0.0
    %v1315 = vmul.f32 %v1311, 0.01
    %v1316 = vsel %vm1314, %v1311, %v1315
    %v1317 = vrot.slane %v1316, 4
    %v1318 = vadd.f32 %v1316, %v1317
    %v1319 = vrot.slane %v1318, 2
    %v1320 = vadd.f32 %v1318, %v1319
    %v1321 = vrot.slane %v1320, 1
    %v1322 = vadd.f32 %v1320, %v1321
    %v1323 = vmul.f32 %v1322, %v277
    %v1324 = vsub.f32 %v1316, %v1323
    %v1325 = vmul.f32 %v1324, %v1324
    %v1326 = vrot.slane %v1325, 4
    %v1327 = vadd.f32 %v1325, %v1326
    %v1328 = vrot.slane %v1327, 2
    %v1329 = vadd.f32 %v1327, %v1328
    %v1330 = vrot.slane %v1329, 1
    %v1331 = vadd.f32 %v1329, %v1330
    %v1332 = vmul.f32 %v1331, %v277
    %v1333 = vadd.f32 %v1332, 1e-05
    %v1334 = vrsqrt.pop %v1333
    %v1335 = vmul.f32 %v1324, %v1334
    %s1336 = scalar_lea.vmem [#allocation7], 9
    %v1337 = vld [vmem:[%s1336] sm:$0x1]
    %v1339 = vlaneseq
    %v1340 = vshrl.u32 %v1339, 7
    %v1341 = vsub.s32 0, %v1340
    %v1342 = vrot.slane %v1337, %v1341
    %v1344 = vmul.f32 %v1335, %v1342
    %s1345 = scalar_lea.vmem [#allocation8], 9
    %v1346 = vld [vmem:[%s1345] sm:$0x1]
    %v1348 = vlaneseq
    %v1349 = vshrl.u32 %v1348, 7
    %v1350 = vsub.s32 0, %v1349
    %v1351 = vrot.slane %v1346, %v1350
    %v1353 = vadd.f32 %v1344, %v1351
    %s1354 = scalar_lea.vmem [#allocation2], 1280
    %v1355 = vld [vmem:[%s1354] sm:$0xff]
    %v1356 = vld [vmem:[%s1354 + $0x8] sm:$0xff]
    %v1357 = vld [vmem:[%s1354 + $0x10] sm:$0xff]
    %v1358 = vld [vmem:[%s1354 + $0x18] sm:$0xff]
    %v1359 = vld [vmem:[%s1354 + $0x20] sm:$0xff]
    %v1360 = vld [vmem:[%s1354 + $0x28] sm:$0xff]
    %v1361 = vld [vmem:[%s1354 + $0x30] sm:$0xff]
    %v1362 = vld [vmem:[%s1354 + $0x38] sm:$0xff]
    %v1363 = vld [vmem:[%s1354 + $0x40] sm:$0xff]
    %v1364 = vld [vmem:[%s1354 + $0x48] sm:$0xff]
    %v1365 = vld [vmem:[%s1354 + $0x50] sm:$0xff]
    %v1366 = vld [vmem:[%s1354 + $0x58] sm:$0xff]
    %v1367 = vld [vmem:[%s1354 + $0x60] sm:$0xff]
    %v1368 = vld [vmem:[%s1354 + $0x68] sm:$0xff]
    %v1369 = vld [vmem:[%s1354 + $0x70] sm:$0xff]
    %v1370 = vld [vmem:[%s1354 + $0x78] sm:$0xff]
    %s1371 = scalar_lea.vmem [#allocation5], 10
    %v1372 = vld [vmem:[%s1371] sm:$0x1]
    %v1374 = vlaneseq
    %v1375 = vshrl.u32 %v1374, 7
    %v1376 = vsub.s32 0, %v1375
    %v1377 = vrot.slane %v1372, %v1376
    %1379 = vmatprep.subr.mxu0 0.0
    %1380 = vmatpush1.msra.mxu0 %v1355
    %1381 = vmatprep.subr.mxu0 0.0
    %1382 = vmatpush1.msra.mxu0 %v1356
    %1383 = vmatprep.subr.mxu0 0.0
    %1384 = vmatpush1.msra.mxu0 %v1357
    %1385 = vmatprep.subr.mxu0 0.0
    %1386 = vmatpush1.msra.mxu0 %v1358
    %1387 = vmatprep.subr.mxu0 0.0
    %1388 = vmatpush1.msra.mxu0 %v1359
    %1389 = vmatprep.subr.mxu0 0.0
    %1390 = vmatpush1.msra.mxu0 %v1360
    %1391 = vmatprep.subr.mxu0 0.0
    %1392 = vmatpush1.msra.mxu0 %v1361
    %1393 = vmatprep.subr.mxu0 0.0
    %1394 = vmatpush1.msra.mxu0 %v1362
    %1395 = vmatprep.subr.mxu0 0.0
    %1396 = vmatpush1.msra.mxu0 %v1363
    %1397 = vmatprep.subr.mxu0 0.0
    %1398 = vmatpush1.msra.mxu0 %v1364
    %1399 = vmatprep.subr.mxu0 0.0
    %1400 = vmatpush1.msra.mxu0 %v1365
    %1401 = vmatprep.subr.mxu0 0.0
    %1402 = vmatpush1.msra.mxu0 %v1366
    %1403 = vmatprep.subr.mxu0 0.0
    %1404 = vmatpush1.msra.mxu0 %v1367
    %1405 = vmatprep.subr.mxu0 0.0
    %1406 = vmatpush1.msra.mxu0 %v1368
    %1407 = vmatprep.subr.mxu0 0.0
    %1408 = vmatpush1.msra.mxu0 %v1369
    %1409 = vmatprep.subr.mxu0 0.0
    %1410 = vmatpush1.msra.mxu0 %v1370
    %1411 = vmatprep.subr.mxu0 0.0
    %1412 = vmatpush1.msra.mxu0 0.0
    %1413 = vmatprep.subr.mxu0 0.0
    %1414 = vmatpush1.msra.mxu0 0.0
    %1415 = vmatprep.subr.mxu0 0.0
    %1416 = vmatpush1.msra.mxu0 0.0
    %1417 = vmatprep.subr.mxu0 0.0
    %1418 = vmatpush1.msra.mxu0 0.0
    %1419 = vmatprep.subr.mxu0 0.0
    %1420 = vmatpush1.msra.mxu0 0.0
    %1421 = vmatprep.subr.mxu0 0.0
    %1422 = vmatpush1.msra.mxu0 0.0
    %1423 = vmatprep.subr.mxu0 0.0
    %1424 = vmatpush1.msra.mxu0 0.0
    %1425 = vmatprep.subr.mxu0 0.0
    %1426 = vmatpush1.msra.mxu0 0.0
    %1427 = vmatprep.subr.mxu0 0.0
    %1428 = vmatpush1.msra.mxu0 0.0
    %1429 = vmatprep.subr.mxu0 0.0
    %1430 = vmatpush1.msra.mxu0 0.0
    %1431 = vmatprep.subr.mxu0 0.0
    %1432 = vmatpush1.msra.mxu0 0.0
    %1433 = vmatprep.subr.mxu0 0.0
    %1434 = vmatpush1.msra.mxu0 0.0
    %1435 = vmatprep.subr.mxu0 0.0
    %1436 = vmatpush1.msra.mxu0 0.0
    %1437 = vmatprep.subr.mxu0 0.0
    %1438 = vmatpush1.msra.mxu0 0.0
    %1439 = vmatprep.subr.mxu0 0.0
    %1440 = vmatpush1.msra.mxu0 0.0
    %1441 = vmatprep.subr.mxu0 0.0
    %1442 = vmatpush1.msra.mxu0 0.0
    %1443 = vmatprep.mubr.f32.mxu0 0.0
    %1444 = vmatmul.mubr.f32.gmra.mrb[0].mxu0 %v1353
    %v1445 = vpop.f32.mrb[0].mxu0
    %v1446 = vadd.f32 %v1377, %v1445
    %v1447 = vpop.f32.mrb[0].mxu0
    %1448 = vdwg.mxu0
    %vm1449 = vcmp.ge.f32.partialorder %v1446, 0.0
    %v1450 = vmul.f32 %v1446, 0.01
    %v1451 = vsel %vm1449, %v1446, %v1450
    %v1452 = vrot.slane %v1451, 4
    %v1453 = vadd.f32 %v1451, %v1452
    %v1454 = vrot.slane %v1453, 2
    %v1455 = vadd.f32 %v1453, %v1454
    %v1456 = vrot.slane %v1455, 1
    %v1457 = vadd.f32 %v1455, %v1456
    %v1458 = vmul.f32 %v1457, %v277
    %v1459 = vsub.f32 %v1451, %v1458
    %v1460 = vmul.f32 %v1459, %v1459
    %v1461 = vrot.slane %v1460, 4
    %v1462 = vadd.f32 %v1460, %v1461
    %v1463 = vrot.slane %v1462, 2
    %v1464 = vadd.f32 %v1462, %v1463
    %v1465 = vrot.slane %v1464, 1
    %v1466 = vadd.f32 %v1464, %v1465
    %v1467 = vmul.f32 %v1466, %v277
    %v1468 = vadd.f32 %v1467, 1e-05
    %v1469 = vrsqrt.pop %v1468
    %v1470 = vmul.f32 %v1459, %v1469
    %s1471 = scalar_lea.vmem [#allocation7], 10
    %v1472 = vld [vmem:[%s1471] sm:$0x1]
    %v1474 = vlaneseq
    %v1475 = vshrl.u32 %v1474, 7
    %v1476 = vsub.s32 0, %v1475
    %v1477 = vrot.slane %v1472, %v1476
    %v1479 = vmul.f32 %v1470, %v1477
    %s1480 = scalar_lea.vmem [#allocation8], 10
    %v1481 = vld [vmem:[%s1480] sm:$0x1]
    %v1483 = vlaneseq
    %v1484 = vshrl.u32 %v1483, 7
    %v1485 = vsub.s32 0, %v1484
    %v1486 = vrot.slane %v1481, %v1485
    %v1488 = vadd.f32 %v1479, %v1486
    %v1489 = vadd.f32 %v1488, %v1083
    %s1490 = scalar_lea.vmem [#allocation2], 1408
    %v1491 = vld [vmem:[%s1490] sm:$0xff]
    %v1492 = vld [vmem:[%s1490 + $0x8] sm:$0xff]
    %v1493 = vld [vmem:[%s1490 + $0x10] sm:$0xff]
    %v1494 = vld [vmem:[%s1490 + $0x18] sm:$0xff]
    %v1495 = vld [vmem:[%s1490 + $0x20] sm:$0xff]
    %v1496 = vld [vmem:[%s1490 + $0x28] sm:$0xff]
    %v1497 = vld [vmem:[%s1490 + $0x30] sm:$0xff]
    %v1498 = vld [vmem:[%s1490 + $0x38] sm:$0xff]
    %v1499 = vld [vmem:[%s1490 + $0x40] sm:$0xff]
    %v1500 = vld [vmem:[%s1490 + $0x48] sm:$0xff]
    %v1501 = vld [vmem:[%s1490 + $0x50] sm:$0xff]
    %v1502 = vld [vmem:[%s1490 + $0x58] sm:$0xff]
    %v1503 = vld [vmem:[%s1490 + $0x60] sm:$0xff]
    %v1504 = vld [vmem:[%s1490 + $0x68] sm:$0xff]
    %v1505 = vld [vmem:[%s1490 + $0x70] sm:$0xff]
    %v1506 = vld [vmem:[%s1490 + $0x78] sm:$0xff]
    %s1507 = scalar_lea.vmem [#allocation5], 11
    %v1508 = vld [vmem:[%s1507] sm:$0x1]
    %v1510 = vlaneseq
    %v1511 = vshrl.u32 %v1510, 7
    %v1512 = vsub.s32 0, %v1511
    %v1513 = vrot.slane %v1508, %v1512
    %1515 = vmatprep.subr.mxu0 0.0
    %1516 = vmatpush1.msra.mxu0 %v1491
    %1517 = vmatprep.subr.mxu0 0.0
    %1518 = vmatpush1.msra.mxu0 %v1492
    %1519 = vmatprep.subr.mxu0 0.0
    %1520 = vmatpush1.msra.mxu0 %v1493
    %1521 = vmatprep.subr.mxu0 0.0
    %1522 = vmatpush1.msra.mxu0 %v1494
    %1523 = vmatprep.subr.mxu0 0.0
    %1524 = vmatpush1.msra.mxu0 %v1495
    %1525 = vmatprep.subr.mxu0 0.0
    %1526 = vmatpush1.msra.mxu0 %v1496
    %1527 = vmatprep.subr.mxu0 0.0
    %1528 = vmatpush1.msra.mxu0 %v1497
    %1529 = vmatprep.subr.mxu0 0.0
    %1530 = vmatpush1.msra.mxu0 %v1498
    %1531 = vmatprep.subr.mxu0 0.0
    %1532 = vmatpush1.msra.mxu0 %v1499
    %1533 = vmatprep.subr.mxu0 0.0
    %1534 = vmatpush1.msra.mxu0 %v1500
    %1535 = vmatprep.subr.mxu0 0.0
    %1536 = vmatpush1.msra.mxu0 %v1501
    %1537 = vmatprep.subr.mxu0 0.0
    %1538 = vmatpush1.msra.mxu0 %v1502
    %1539 = vmatprep.subr.mxu0 0.0
    %1540 = vmatpush1.msra.mxu0 %v1503
    %1541 = vmatprep.subr.mxu0 0.0
    %1542 = vmatpush1.msra.mxu0 %v1504
    %1543 = vmatprep.subr.mxu0 0.0
    %1544 = vmatpush1.msra.mxu0 %v1505
    %1545 = vmatprep.subr.mxu0 0.0
    %1546 = vmatpush1.msra.mxu0 %v1506
    %1547 = vmatprep.subr.mxu0 0.0
    %1548 = vmatpush1.msra.mxu0 0.0
    %1549 = vmatprep.subr.mxu0 0.0
    %1550 = vmatpush1.msra.mxu0 0.0
    %1551 = vmatprep.subr.mxu0 0.0
    %1552 = vmatpush1.msra.mxu0 0.0
    %1553 = vmatprep.subr.mxu0 0.0
    %1554 = vmatpush1.msra.mxu0 0.0
    %1555 = vmatprep.subr.mxu0 0.0
    %1556 = vmatpush1.msra.mxu0 0.0
    %1557 = vmatprep.subr.mxu0 0.0
    %1558 = vmatpush1.msra.mxu0 0.0
    %1559 = vmatprep.subr.mxu0 0.0
    %1560 = vmatpush1.msra.mxu0 0.0
    %1561 = vmatprep.subr.mxu0 0.0
    %1562 = vmatpush1.msra.mxu0 0.0
    %1563 = vmatprep.subr.mxu0 0.0
    %1564 = vmatpush1.msra.mxu0 0.0
    %1565 = vmatprep.subr.mxu0 0.0
    %1566 = vmatpush1.msra.mxu0 0.0
    %1567 = vmatprep.subr.mxu0 0.0
    %1568 = vmatpush1.msra.mxu0 0.0
    %1569 = vmatprep.subr.mxu0 0.0
    %1570 = vmatpush1.msra.mxu0 0.0
    %1571 = vmatprep.subr.mxu0 0.0
    %1572 = vmatpush1.msra.mxu0 0.0
    %1573 = vmatprep.subr.mxu0 0.0
    %1574 = vmatpush1.msra.mxu0 0.0
    %1575 = vmatprep.subr.mxu0 0.0
    %1576 = vmatpush1.msra.mxu0 0.0
    %1577 = vmatprep.subr.mxu0 0.0
    %1578 = vmatpush1.msra.mxu0 0.0
    %1579 = vmatprep.mubr.f32.mxu0 0.0
    %1580 = vmatmul.mubr.f32.gmra.mrb[0].mxu0 %v1489
    %v1581 = vpop.f32.mrb[0].mxu0
    %v1582 = vadd.f32 %v1513, %v1581
    %v1583 = vpop.f32.mrb[0].mxu0
    %1584 = vdwg.mxu0
    %vm1585 = vcmp.ge.f32.partialorder %v1582, 0.0
    %v1586 = vmul.f32 %v1582, 0.01
    %v1587 = vsel %vm1585, %v1582, %v1586
    %v1588 = vrot.slane %v1587, 4
    %v1589 = vadd.f32 %v1587, %v1588
    %v1590 = vrot.slane %v1589, 2
    %v1591 = vadd.f32 %v1589, %v1590
    %v1592 = vrot.slane %v1591, 1
    %v1593 = vadd.f32 %v1591, %v1592
    %v1594 = vmul.f32 %v1593, %v277
    %v1595 = vsub.f32 %v1587, %v1594
    %v1596 = vmul.f32 %v1595, %v1595
    %v1597 = vrot.slane %v1596, 4
    %v1598 = vadd.f32 %v1596, %v1597
    %v1599 = vrot.slane %v1598, 2
    %v1600 = vadd.f32 %v1598, %v1599
    %v1601 = vrot.slane %v1600, 1
    %v1602 = vadd.f32 %v1600, %v1601
    %v1603 = vmul.f32 %v1602, %v277
    %v1604 = vadd.f32 %v1603, 1e-05
    %v1605 = vrsqrt.pop %v1604
    %v1606 = vmul.f32 %v1595, %v1605
    %s1607 = scalar_lea.vmem [#allocation7], 11
    %v1608 = vld [vmem:[%s1607] sm:$0x1]
    %v1610 = vlaneseq
    %v1611 = vshrl.u32 %v1610, 7
    %v1612 = vsub.s32 0, %v1611
    %v1613 = vrot.slane %v1608, %v1612
    %v1615 = vmul.f32 %v1606, %v1613
    %s1616 = scalar_lea.vmem [#allocation8], 11
    %v1617 = vld [vmem:[%s1616] sm:$0x1]
    %v1619 = vlaneseq
    %v1620 = vshrl.u32 %v1619, 7
    %v1621 = vsub.s32 0, %v1620
    %v1622 = vrot.slane %v1617, %v1621
    %v1624 = vadd.f32 %v1615, %v1622
    %s1625 = scalar_lea.vmem [#allocation2], 1536
    %v1626 = vld [vmem:[%s1625] sm:$0xff]
    %v1627 = vld [vmem:[%s1625 + $0x8] sm:$0xff]
    %v1628 = vld [vmem:[%s1625 + $0x10] sm:$0xff]
    %v1629 = vld [vmem:[%s1625 + $0x18] sm:$0xff]
    %v1630 = vld [vmem:[%s1625 + $0x20] sm:$0xff]
    %v1631 = vld [vmem:[%s1625 + $0x28] sm:$0xff]
    %v1632 = vld [vmem:[%s1625 + $0x30] sm:$0xff]
    %v1633 = vld [vmem:[%s1625 + $0x38] sm:$0xff]
    %v1634 = vld [vmem:[%s1625 + $0x40] sm:$0xff]
    %v1635 = vld [vmem:[%s1625 + $0x48] sm:$0xff]
    %v1636 = vld [vmem:[%s1625 + $0x50] sm:$0xff]
    %v1637 = vld [vmem:[%s1625 + $0x58] sm:$0xff]
    %v1638 = vld [vmem:[%s1625 + $0x60] sm:$0xff]
    %v1639 = vld [vmem:[%s1625 + $0x68] sm:$0xff]
    %v1640 = vld [vmem:[%s1625 + $0x70] sm:$0xff]
    %v1641 = vld [vmem:[%s1625 + $0x78] sm:$0xff]
    %s1642 = scalar_lea.vmem [#allocation5], 12
    %v1643 = vld [vmem:[%s1642] sm:$0x1]
    %v1645 = vlaneseq
    %v1646 = vshrl.u32 %v1645, 7
    %v1647 = vsub.s32 0, %v1646
    %v1648 = vrot.slane %v1643, %v1647
    %1650 = vmatprep.subr.mxu0 0.0
    %1651 = vmatpush1.msra.mxu0 %v1626
    %1652 = vmatprep.subr.mxu0 0.0
    %1653 = vmatpush1.msra.mxu0 %v1627
    %1654 = vmatprep.subr.mxu0 0.0
    %1655 = vmatpush1.msra.mxu0 %v1628
    %1656 = vmatprep.subr.mxu0 0.0
    %1657 = vmatpush1.msra.mxu0 %v1629
    %1658 = vmatprep.subr.mxu0 0.0
    %1659 = vmatpush1.msra.mxu0 %v1630
    %1660 = vmatprep.subr.mxu0 0.0
    %1661 = vmatpush1.msra.mxu0 %v1631
    %1662 = vmatprep.subr.mxu0 0.0
    %1663 = vmatpush1.msra.mxu0 %v1632
    %1664 = vmatprep.subr.mxu0 0.0
    %1665 = vmatpush1.msra.mxu0 %v1633
    %1666 = vmatprep.subr.mxu0 0.0
    %1667 = vmatpush1.msra.mxu0 %v1634
    %1668 = vmatprep.subr.mxu0 0.0
    %1669 = vmatpush1.msra.mxu0 %v1635
    %1670 = vmatprep.subr.mxu0 0.0
    %1671 = vmatpush1.msra.mxu0 %v1636
    %1672 = vmatprep.subr.mxu0 0.0
    %1673 = vmatpush1.msra.mxu0 %v1637
    %1674 = vmatprep.subr.mxu0 0.0
    %1675 = vmatpush1.msra.mxu0 %v1638
    %1676 = vmatprep.subr.mxu0 0.0
    %1677 = vmatpush1.msra.mxu0 %v1639
    %1678 = vmatprep.subr.mxu0 0.0
    %1679 = vmatpush1.msra.mxu0 %v1640
    %1680 = vmatprep.subr.mxu0 0.0
    %1681 = vmatpush1.msra.mxu0 %v1641
    %1682 = vmatprep.subr.mxu0 0.0
    %1683 = vmatpush1.msra.mxu0 0.0
    %1684 = vmatprep.subr.mxu0 0.0
    %1685 = vmatpush1.msra.mxu0 0.0
    %1686 = vmatprep.subr.mxu0 0.0
    %1687 = vmatpush1.msra.mxu0 0.0
    %1688 = vmatprep.subr.mxu0 0.0
    %1689 = vmatpush1.msra.mxu0 0.0
    %1690 = vmatprep.subr.mxu0 0.0
    %1691 = vmatpush1.msra.mxu0 0.0
    %1692 = vmatprep.subr.mxu0 0.0
    %1693 = vmatpush1.msra.mxu0 0.0
    %1694 = vmatprep.subr.mxu0 0.0
    %1695 = vmatpush1.msra.mxu0 0.0
    %1696 = vmatprep.subr.mxu0 0.0
    %1697 = vmatpush1.msra.mxu0 0.0
    %1698 = vmatprep.subr.mxu0 0.0
    %1699 = vmatpush1.msra.mxu0 0.0
    %1700 = vmatprep.subr.mxu0 0.0
    %1701 = vmatpush1.msra.mxu0 0.0
    %1702 = vmatprep.subr.mxu0 0.0
    %1703 = vmatpush1.msra.mxu0 0.0
    %1704 = vmatprep.subr.mxu0 0.0
    %1705 = vmatpush1.msra.mxu0 0.0
    %1706 = vmatprep.subr.mxu0 0.0
    %1707 = vmatpush1.msra.mxu0 0.0
    %1708 = vmatprep.subr.mxu0 0.0
    %1709 = vmatpush1.msra.mxu0 0.0
    %1710 = vmatprep.subr.mxu0 0.0
    %1711 = vmatpush1.msra.mxu0 0.0
    %1712 = vmatprep.subr.mxu0 0.0
    %1713 = vmatpush1.msra.mxu0 0.0
    %1714 = vmatprep.mubr.f32.mxu0 0.0
    %1715 = vmatmul.mubr.f32.gmra.mrb[0].mxu0 %v1624
    %v1716 = vpop.f32.mrb[0].mxu0
    %v1717 = vadd.f32 %v1648, %v1716
    %v1718 = vpop.f32.mrb[0].mxu0
    %1719 = vdwg.mxu0
    %vm1720 = vcmp.ge.f32.partialorder %v1717, 0.0
    %v1721 = vmul.f32 %v1717, 0.01
    %v1722 = vsel %vm1720, %v1717, %v1721
    %v1723 = vrot.slane %v1722, 4
    %v1724 = vadd.f32 %v1722, %v1723
    %v1725 = vrot.slane %v1724, 2
    %v1726 = vadd.f32 %v1724, %v1725
    %v1727 = vrot.slane %v1726, 1
    %v1728 = vadd.f32 %v1726, %v1727
    %v1729 = vmul.f32 %v1728, %v277
    %v1730 = vsub.f32 %v1722, %v1729
    %v1731 = vmul.f32 %v1730, %v1730
    %v1732 = vrot.slane %v1731, 4
    %v1733 = vadd.f32 %v1731, %v1732
    %v1734 = vrot.slane %v1733, 2
    %v1735 = vadd.f32 %v1733, %v1734
    %v1736 = vrot.slane %v1735, 1
    %v1737 = vadd.f32 %v1735, %v1736
    %v1738 = vmul.f32 %v1737, %v277
    %v1739 = vadd.f32 %v1738, 1e-05
    %v1740 = vrsqrt.pop %v1739
    %v1741 = vmul.f32 %v1730, %v1740
    %s1742 = scalar_lea.vmem [#allocation7], 12
    %v1743 = vld [vmem:[%s1742] sm:$0x1]
    %v1745 = vlaneseq
    %v1746 = vshrl.u32 %v1745, 7
    %v1747 = vsub.s32 0, %v1746
    %v1748 = vrot.slane %v1743, %v1747
    %v1750 = vmul.f32 %v1741, %v1748
    %s1751 = scalar_lea.vmem [#allocation8], 12
    %v1752 = vld [vmem:[%s1751] sm:$0x1]
    %v1754 = vlaneseq
    %v1755 = vshrl.u32 %v1754, 7
    %v1756 = vsub.s32 0, %v1755
    %v1757 = vrot.slane %v1752, %v1756
    %v1759 = vadd.f32 %v1750, %v1757
    %s1760 = scalar_lea.vmem [#allocation2], 1664
    %v1761 = vld [vmem:[%s1760] sm:$0xff]
    %v1762 = vld [vmem:[%s1760 + $0x8] sm:$0xff]
    %v1763 = vld [vmem:[%s1760 + $0x10] sm:$0xff]
    %v1764 = vld [vmem:[%s1760 + $0x18] sm:$0xff]
    %v1765 = vld [vmem:[%s1760 + $0x20] sm:$0xff]
    %v1766 = vld [vmem:[%s1760 + $0x28] sm:$0xff]
    %v1767 = vld [vmem:[%s1760 + $0x30] sm:$0xff]
    %v1768 = vld [vmem:[%s1760 + $0x38] sm:$0xff]
    %v1769 = vld [vmem:[%s1760 + $0x40] sm:$0xff]
    %v1770 = vld [vmem:[%s1760 + $0x48] sm:$0xff]
    %v1771 = vld [vmem:[%s1760 + $0x50] sm:$0xff]
    %v1772 = vld [vmem:[%s1760 + $0x58] sm:$0xff]
    %v1773 = vld [vmem:[%s1760 + $0x60] sm:$0xff]
    %v1774 = vld [vmem:[%s1760 + $0x68] sm:$0xff]
    %v1775 = vld [vmem:[%s1760 + $0x70] sm:$0xff]
    %v1776 = vld [vmem:[%s1760 + $0x78] sm:$0xff]
    %s1777 = scalar_lea.vmem [#allocation5], 13
    %v1778 = vld [vmem:[%s1777] sm:$0x1]
    %v1780 = vlaneseq
    %v1781 = vshrl.u32 %v1780, 7
    %v1782 = vsub.s32 0, %v1781
    %v1783 = vrot.slane %v1778, %v1782
    %1785 = vmatprep.subr.mxu0 0.0
    %1786 = vmatpush1.msra.mxu0 %v1761
    %1787 = vmatprep.subr.mxu0 0.0
    %1788 = vmatpush1.msra.mxu0 %v1762
    %1789 = vmatprep.subr.mxu0 0.0
    %1790 = vmatpush1.msra.mxu0 %v1763
    %1791 = vmatprep.subr.mxu0 0.0
    %1792 = vmatpush1.msra.mxu0 %v1764
    %1793 = vmatprep.subr.mxu0 0.0
    %1794 = vmatpush1.msra.mxu0 %v1765
    %1795 = vmatprep.subr.mxu0 0.0
    %1796 = vmatpush1.msra.mxu0 %v1766
    %1797 = vmatprep.subr.mxu0 0.0
    %1798 = vmatpush1.msra.mxu0 %v1767
    %1799 = vmatprep.subr.mxu0 0.0
    %1800 = vmatpush1.msra.mxu0 %v1768
    %1801 = vmatprep.subr.mxu0 0.0
    %1802 = vmatpush1.msra.mxu0 %v1769
    %1803 = vmatprep.subr.mxu0 0.0
    %1804 = vmatpush1.msra.mxu0 %v1770
    %1805 = vmatprep.subr.mxu0 0.0
    %1806 = vmatpush1.msra.mxu0 %v1771
    %1807 = vmatprep.subr.mxu0 0.0
    %1808 = vmatpush1.msra.mxu0 %v1772
    %1809 = vmatprep.subr.mxu0 0.0
    %1810 = vmatpush1.msra.mxu0 %v1773
    %1811 = vmatprep.subr.mxu0 0.0
    %1812 = vmatpush1.msra.mxu0 %v1774
    %1813 = vmatprep.subr.mxu0 0.0
    %1814 = vmatpush1.msra.mxu0 %v1775
    %1815 = vmatprep.subr.mxu0 0.0
    %1816 = vmatpush1.msra.mxu0 %v1776
    %1817 = vmatprep.subr.mxu0 0.0
    %1818 = vmatpush1.msra.mxu0 0.0
    %1819 = vmatprep.subr.mxu0 0.0
    %1820 = vmatpush1.msra.mxu0 0.0
    %1821 = vmatprep.subr.mxu0 0.0
    %1822 = vmatpush1.msra.mxu0 0.0
    %1823 = vmatprep.subr.mxu0 0.0
    %1824 = vmatpush1.msra.mxu0 0.0
    %1825 = vmatprep.subr.mxu0 0.0
    %1826 = vmatpush1.msra.mxu0 0.0
    %1827 = vmatprep.subr.mxu0 0.0
    %1828 = vmatpush1.msra.mxu0 0.0
    %1829 = vmatprep.subr.mxu0 0.0
    %1830 = vmatpush1.msra.mxu0 0.0
    %1831 = vmatprep.subr.mxu0 0.0
    %1832 = vmatpush1.msra.mxu0 0.0
    %1833 = vmatprep.subr.mxu0 0.0
    %1834 = vmatpush1.msra.mxu0 0.0
    %1835 = vmatprep.subr.mxu0 0.0
    %1836 = vmatpush1.msra.mxu0 0.0
    %1837 = vmatprep.subr.mxu0 0.0
    %1838 = vmatpush1.msra.mxu0 0.0
    %1839 = vmatprep.subr.mxu0 0.0
    %1840 = vmatpush1.msra.mxu0 0.0
    %1841 = vmatprep.subr.mxu0 0.0
    %1842 = vmatpush1.msra.mxu0 0.0
    %1843 = vmatprep.subr.mxu0 0.0
    %1844 = vmatpush1.msra.mxu0 0.0
    %1845 = vmatprep.subr.mxu0 0.0
    %1846 = vmatpush1.msra.mxu0 0.0
    %1847 = vmatprep.subr.mxu0 0.0
    %1848 = vmatpush1.msra.mxu0 0.0
    %1849 = vmatprep.mubr.f32.mxu0 0.0
    %1850 = vmatmul.mubr.f32.gmra.mrb[0].mxu0 %v1759
    %v1851 = vpop.f32.mrb[0].mxu0
    %v1852 = vadd.f32 %v1783, %v1851
    %v1853 = vpop.f32.mrb[0].mxu0
    %1854 = vdwg.mxu0
    %vm1855 = vcmp.ge.f32.partialorder %v1852, 0.0
    %v1856 = vmul.f32 %v1852, 0.01
    %v1857 = vsel %vm1855, %v1852, %v1856
    %v1858 = vrot.slane %v1857, 4
    %v1859 = vadd.f32 %v1857, %v1858
    %v1860 = vrot.slane %v1859, 2
    %v1861 = vadd.f32 %v1859, %v1860
    %v1862 = vrot.slane %v1861, 1
    %v1863 = vadd.f32 %v1861, %v1862
    %v1864 = vmul.f32 %v1863, %v277
    %v1865 = vsub.f32 %v1857, %v1864
    %v1866 = vmul.f32 %v1865, %v1865
    %v1867 = vrot.slane %v1866, 4
    %v1868 = vadd.f32 %v1866, %v1867
    %v1869 = vrot.slane %v1868, 2
    %v1870 = vadd.f32 %v1868, %v1869
    %v1871 = vrot.slane %v1870, 1
    %v1872 = vadd.f32 %v1870, %v1871
    %v1873 = vmul.f32 %v1872, %v277
    %v1874 = vadd.f32 %v1873, 1e-05
    %v1875 = vrsqrt.pop %v1874
    %v1876 = vmul.f32 %v1865, %v1875
    %s1877 = scalar_lea.vmem [#allocation7], 13
    %v1878 = vld [vmem:[%s1877] sm:$0x1]
    %v1880 = vlaneseq
    %v1881 = vshrl.u32 %v1880, 7
    %v1882 = vsub.s32 0, %v1881
    %v1883 = vrot.slane %v1878, %v1882
    %v1885 = vmul.f32 %v1876, %v1883
    %s1886 = scalar_lea.vmem [#allocation8], 13
    %v1887 = vld [vmem:[%s1886] sm:$0x1]
    %v1889 = vlaneseq
    %v1890 = vshrl.u32 %v1889, 7
    %v1891 = vsub.s32 0, %v1890
    %v1892 = vrot.slane %v1887, %v1891
    %v1894 = vadd.f32 %v1885, %v1892
    %v1895 = vadd.f32 %v1894, %v1489
    %s1896 = scalar_lea.vmem [#allocation2], 1792
    %v1897 = vld [vmem:[%s1896] sm:$0xff]
    %v1898 = vld [vmem:[%s1896 + $0x8] sm:$0xff]
    %v1899 = vld [vmem:[%s1896 + $0x10] sm:$0xff]
    %v1900 = vld [vmem:[%s1896 + $0x18] sm:$0xff]
    %v1901 = vld [vmem:[%s1896 + $0x20] sm:$0xff]
    %v1902 = vld [vmem:[%s1896 + $0x28] sm:$0xff]
    %v1903 = vld [vmem:[%s1896 + $0x30] sm:$0xff]
    %v1904 = vld [vmem:[%s1896 + $0x38] sm:$0xff]
    %v1905 = vld [vmem:[%s1896 + $0x40] sm:$0xff]
    %v1906 = vld [vmem:[%s1896 + $0x48] sm:$0xff]
    %v1907 = vld [vmem:[%s1896 + $0x50] sm:$0xff]
    %v1908 = vld [vmem:[%s1896 + $0x58] sm:$0xff]
    %v1909 = vld [vmem:[%s1896 + $0x60] sm:$0xff]
    %v1910 = vld [vmem:[%s1896 + $0x68] sm:$0xff]
    %v1911 = vld [vmem:[%s1896 + $0x70] sm:$0xff]
    %v1912 = vld [vmem:[%s1896 + $0x78] sm:$0xff]
    %s1913 = scalar_lea.vmem [#allocation5], 14
    %v1914 = vld [vmem:[%s1913] sm:$0x1]
    %v1916 = vlaneseq
    %v1917 = vshrl.u32 %v1916, 7
    %v1918 = vsub.s32 0, %v1917
    %v1919 = vrot.slane %v1914, %v1918
    %1921 = vmatprep.subr.mxu0 0.0
    %1922 = vmatpush1.msra.mxu0 %v1897
    %1923 = vmatprep.subr.mxu0 0.0
    %1924 = vmatpush1.msra.mxu0 %v1898
    %1925 = vmatprep.subr.mxu0 0.0
    %1926 = vmatpush1.msra.mxu0 %v1899
    %1927 = vmatprep.subr.mxu0 0.0
    %1928 = vmatpush1.msra.mxu0 %v1900
    %1929 = vmatprep.subr.mxu0 0.0
    %1930 = vmatpush1.msra.mxu0 %v1901
    %1931 = vmatprep.subr.mxu0 0.0
    %1932 = vmatpush1.msra.mxu0 %v1902
    %1933 = vmatprep.subr.mxu0 0.0
    %1934 = vmatpush1.msra.mxu0 %v1903
    %1935 = vmatprep.subr.mxu0 0.0
    %1936 = vmatpush1.msra.mxu0 %v1904
    %1937 = vmatprep.subr.mxu0 0.0
    %1938 = vmatpush1.msra.mxu0 %v1905
    %1939 = vmatprep.subr.mxu0 0.0
    %1940 = vmatpush1.msra.mxu0 %v1906
    %1941 = vmatprep.subr.mxu0 0.0
    %1942 = vmatpush1.msra.mxu0 %v1907
    %1943 = vmatprep.subr.mxu0 0.0
    %1944 = vmatpush1.msra.mxu0 %v1908
    %1945 = vmatprep.subr.mxu0 0.0
    %1946 = vmatpush1.msra.mxu0 %v1909
    %1947 = vmatprep.subr.mxu0 0.0
    %1948 = vmatpush1.msra.mxu0 %v1910
    %1949 = vmatprep.subr.mxu0 0.0
    %1950 = vmatpush1.msra.mxu0 %v1911
    %1951 = vmatprep.subr.mxu0 0.0
    %1952 = vmatpush1.msra.mxu0 %v1912
    %1953 = vmatprep.subr.mxu0 0.0
    %1954 = vmatpush1.msra.mxu0 0.0
    %1955 = vmatprep.subr.mxu0 0.0
    %1956 = vmatpush1.msra.mxu0 0.0
    %1957 = vmatprep.subr.mxu0 0.0
    %1958 = vmatpush1.msra.mxu0 0.0
    %1959 = vmatprep.subr.mxu0 0.0
    %1960 = vmatpush1.msra.mxu0 0.0
    %1961 = vmatprep.subr.mxu0 0.0
    %1962 = vmatpush1.msra.mxu0 0.0
    %1963 = vmatprep.subr.mxu0 0.0
    %1964 = vmatpush1.msra.mxu0 0.0
    %1965 = vmatprep.subr.mxu0 0.0
    %1966 = vmatpush1.msra.mxu0 0.0
    %1967 = vmatprep.subr.mxu0 0.0
    %1968 = vmatpush1.msra.mxu0 0.0
    %1969 = vmatprep.subr.mxu0 0.0
    %1970 = vmatpush1.msra.mxu0 0.0
    %1971 = vmatprep.subr.mxu0 0.0
    %1972 = vmatpush1.msra.mxu0 0.0
    %1973 = vmatprep.subr.mxu0 0.0
    %1974 = vmatpush1.msra.mxu0 0.0
    %1975 = vmatprep.subr.mxu0 0.0
    %1976 = vmatpush1.msra.mxu0 0.0
    %1977 = vmatprep.subr.mxu0 0.0
    %1978 = vmatpush1.msra.mxu0 0.0
    %1979 = vmatprep.subr.mxu0 0.0
    %1980 = vmatpush1.msra.mxu0 0.0
    %1981 = vmatprep.subr.mxu0 0.0
    %1982 = vmatpush1.msra.mxu0 0.0
    %1983 = vmatprep.subr.mxu0 0.0
    %1984 = vmatpush1.msra.mxu0 0.0
    %1985 = vmatprep.mubr.f32.mxu0 0.0
    %1986 = vmatmul.mubr.f32.gmra.mrb[0].mxu0 %v1895
    %v1987 = vpop.f32.mrb[0].mxu0
    %v1988 = vadd.f32 %v1919, %v1987
    %v1989 = vpop.f32.mrb[0].mxu0
    %1990 = vdwg.mxu0
    %vm1991 = vcmp.ge.f32.partialorder %v1988, 0.0
    %v1992 = vmul.f32 %v1988, 0.01
    %v1993 = vsel %vm1991, %v1988, %v1992
    %s1994 = scalar_lea.vmem [#allocation2], 1920
    %v1995 = vld [vmem:[%s1994] sm:$0xff]
    %v1996 = vld [vmem:[%s1994 + $0x8] sm:$0xff]
    %v1997 = vld [vmem:[%s1994 + $0x10] sm:$0xff]
    %v1998 = vld [vmem:[%s1994 + $0x18] sm:$0xff]
    %v1999 = vld [vmem:[%s1994 + $0x20] sm:$0xff]
    %v2000 = vld [vmem:[%s1994 + $0x28] sm:$0xff]
    %v2001 = vld [vmem:[%s1994 + $0x30] sm:$0xff]
    %v2002 = vld [vmem:[%s1994 + $0x38] sm:$0xff]
    %v2003 = vld [vmem:[%s1994 + $0x40] sm:$0xff]
    %v2004 = vld [vmem:[%s1994 + $0x48] sm:$0xff]
    %v2005 = vld [vmem:[%s1994 + $0x50] sm:$0xff]
    %v2006 = vld [vmem:[%s1994 + $0x58] sm:$0xff]
    %v2007 = vld [vmem:[%s1994 + $0x60] sm:$0xff]
    %v2008 = vld [vmem:[%s1994 + $0x68] sm:$0xff]
    %v2009 = vld [vmem:[%s1994 + $0x70] sm:$0xff]
    %v2010 = vld [vmem:[%s1994 + $0x78] sm:$0xff]
    %s2011 = scalar_lea.vmem [#allocation5], 15
    %v2012 = vld [vmem:[%s2011] sm:$0x1]
    %v2014 = vlaneseq
    %v2015 = vshrl.u32 %v2014, 7
    %v2016 = vsub.s32 0, %v2015
    %v2017 = vrot.slane %v2012, %v2016
    %2019 = vmatprep.subr.mxu0 0.0
    %2020 = vmatpush1.msra.mxu0 %v1995
    %2021 = vmatprep.subr.mxu0 0.0
    %2022 = vmatpush1.msra.mxu0 %v1996
    %2023 = vmatprep.subr.mxu0 0.0
    %2024 = vmatpush1.msra.mxu0 %v1997
    %2025 = vmatprep.subr.mxu0 0.0
    %2026 = vmatpush1.msra.mxu0 %v1998
    %2027 = vmatprep.subr.mxu0 0.0
    %2028 = vmatpush1.msra.mxu0 %v1999
    %2029 = vmatprep.subr.mxu0 0.0
    %2030 = vmatpush1.msra.mxu0 %v2000
    %2031 = vmatprep.subr.mxu0 0.0
    %2032 = vmatpush1.msra.mxu0 %v2001
    %2033 = vmatprep.subr.mxu0 0.0
    %2034 = vmatpush1.msra.mxu0 %v2002
    %2035 = vmatprep.subr.mxu0 0.0
    %2036 = vmatpush1.msra.mxu0 %v2003
    %2037 = vmatprep.subr.mxu0 0.0
    %2038 = vmatpush1.msra.mxu0 %v2004
    %2039 = vmatprep.subr.mxu0 0.0
    %2040 = vmatpush1.msra.mxu0 %v2005
    %2041 = vmatprep.subr.mxu0 0.0
    %2042 = vmatpush1.msra.mxu0 %v2006
    %2043 = vmatprep.subr.mxu0 0.0
    %2044 = vmatpush1.msra.mxu0 %v2007
    %2045 = vmatprep.subr.mxu0 0.0
    %2046 = vmatpush1.msra.mxu0 %v2008
    %2047 = vmatprep.subr.mxu0 0.0
    %2048 = vmatpush1.msra.mxu0 %v2009
    %2049 = vmatprep.subr.mxu0 0.0
    %2050 = vmatpush1.msra.mxu0 %v2010
    %2051 = vmatprep.subr.mxu0 0.0
    %2052 = vmatpush1.msra.mxu0 0.0
    %2053 = vmatprep.subr.mxu0 0.0
    %2054 = vmatpush1.msra.mxu0 0.0
    %2055 = vmatprep.subr.mxu0 0.0
    %2056 = vmatpush1.msra.mxu0 0.0
    %2057 = vmatprep.subr.mxu0 0.0
    %2058 = vmatpush1.msra.mxu0 0.0
    %2059 = vmatprep.subr.mxu0 0.0
    %2060 = vmatpush1.msra.mxu0 0.0
    %2061 = vmatprep.subr.mxu0 0.0
    %2062 = vmatpush1.msra.mxu0 0.0
    %2063 = vmatprep.subr.mxu0 0.0
    %2064 = vmatpush1.msra.mxu0 0.0
    %2065 = vmatprep.subr.mxu0 0.0
    %2066 = vmatpush1.msra.mxu0 0.0
    %2067 = vmatprep.subr.mxu0 0.0
    %2068 = vmatpush1.msra.mxu0 0.0
    %2069 = vmatprep.subr.mxu0 0.0
    %2070 = vmatpush1.msra.mxu0 0.0
    %2071 = vmatprep.subr.mxu0 0.0
    %2072 = vmatpush1.msra.mxu0 0.0
    %2073 = vmatprep.subr.mxu0 0.0
    %2074 = vmatpush1.msra.mxu0 0.0
    %2075 = vmatprep.subr.mxu0 0.0
    %2076 = vmatpush1.msra.mxu0 0.0
    %2077 = vmatprep.subr.mxu0 0.0
    %2078 = vmatpush1.msra.mxu0 0.0
    %2079 = vmatprep.subr.mxu0 0.0
    %2080 = vmatpush1.msra.mxu0 0.0
    %2081 = vmatprep.subr.mxu0 0.0
    %2082 = vmatpush1.msra.mxu0 0.0
    %2083 = vmatprep.mubr.f32.mxu0 0.0
    %2084 = vmatmul.mubr.f32.gmra.mrb[0].mxu0 %v1993
    %v2085 = vpop.f32.mrb[0].mxu0
    %v2086 = vadd.f32 %v2017, %v2085
    %v2087 = vpop.f32.mrb[0].mxu0
    %2088 = vdwg.mxu0
    %vm2089 = vcmp.ge.f32.partialorder %v2086, 0.0
    %v2090 = vmul.f32 %v2086, 0.01
    %v2091 = vsel %vm2089, %v2086, %v2090
    %v2092 = vrot.slane %v2091, 4
    %v2093 = vadd.f32 %v2091, %v2092
    %v2094 = vrot.slane %v2093, 2
    %v2095 = vadd.f32 %v2093, %v2094
    %v2096 = vrot.slane %v2095, 1
    %v2097 = vadd.f32 %v2095, %v2096
    %v2098 = vmul.f32 %v2097, %v277
    %v2099 = vsub.f32 %v2091, %v2098
    %v2100 = vmul.f32 %v2099, %v2099
    %v2101 = vrot.slane %v2100, 4
    %v2102 = vadd.f32 %v2100, %v2101
    %v2103 = vrot.slane %v2102, 2
    %v2104 = vadd.f32 %v2102, %v2103
    %v2105 = vrot.slane %v2104, 1
    %v2106 = vadd.f32 %v2104, %v2105
    %v2107 = vmul.f32 %v2106, %v277
    %v2108 = vadd.f32 %v2107, 1e-05
    %v2109 = vrsqrt.pop %v2108
    %v2110 = vmul.f32 %v2099, %v2109
    %s2111 = scalar_lea.vmem [#allocation7], 15
    %v2112 = vld [vmem:[%s2111] sm:$0x1]
    %v2114 = vlaneseq
    %v2115 = vshrl.u32 %v2114, 7
    %v2116 = vsub.s32 0, %v2115
    %v2117 = vrot.slane %v2112, %v2116
    %v2119 = vmul.f32 %v2110, %v2117
    %s2120 = scalar_lea.vmem [#allocation8], 15
    %v2121 = vld [vmem:[%s2120] sm:$0x1]
    %v2123 = vlaneseq
    %v2124 = vshrl.u32 %v2123, 7
    %v2125 = vsub.s32 0, %v2124
    %v2126 = vrot.slane %v2121, %v2125
    %v2128 = vadd.f32 %v2119, %v2126
    %s2129 = scalar_lea.vmem [#allocation2], 2048
    %v2130 = vld [vmem:[%s2129] sm:$0xff]
    %v2131 = vld [vmem:[%s2129 + $0x8] sm:$0xff]
    %v2132 = vld [vmem:[%s2129 + $0x10] sm:$0xff]
    %v2133 = vld [vmem:[%s2129 + $0x18] sm:$0xff]
    %v2134 = vld [vmem:[%s2129 + $0x20] sm:$0xff]
    %v2135 = vld [vmem:[%s2129 + $0x28] sm:$0xff]
    %v2136 = vld [vmem:[%s2129 + $0x30] sm:$0xff]
    %v2137 = vld [vmem:[%s2129 + $0x38] sm:$0xff]
    %v2138 = vld [vmem:[%s2129 + $0x40] sm:$0xff]
    %v2139 = vld [vmem:[%s2129 + $0x48] sm:$0xff]
    %v2140 = vld [vmem:[%s2129 + $0x50] sm:$0xff]
    %v2141 = vld [vmem:[%s2129 + $0x58] sm:$0xff]
    %v2142 = vld [vmem:[%s2129 + $0x60] sm:$0xff]
    %v2143 = vld [vmem:[%s2129 + $0x68] sm:$0xff]
    %v2144 = vld [vmem:[%s2129 + $0x70] sm:$0xff]
    %v2145 = vld [vmem:[%s2129 + $0x78] sm:$0xff]
    %s2146 = scalar_lea.vmem [#allocation5], 16
    %v2147 = vld [vmem:[%s2146] sm:$0x1]
    %v2149 = vlaneseq
    %v2150 = vshrl.u32 %v2149, 7
    %v2151 = vsub.s32 0, %v2150
    %v2152 = vrot.slane %v2147, %v2151
    %2154 = vmatprep.subr.mxu0 0.0
    %2155 = vmatpush1.msra.mxu0 %v2130
    %2156 = vmatprep.subr.mxu0 0.0
    %2157 = vmatpush1.msra.mxu0 %v2131
    %2158 = vmatprep.subr.mxu0 0.0
    %2159 = vmatpush1.msra.mxu0 %v2132
    %2160 = vmatprep.subr.mxu0 0.0
    %2161 = vmatpush1.msra.mxu0 %v2133
    %2162 = vmatprep.subr.mxu0 0.0
    %2163 = vmatpush1.msra.mxu0 %v2134
    %2164 = vmatprep.subr.mxu0 0.0
    %2165 = vmatpush1.msra.mxu0 %v2135
    %2166 = vmatprep.subr.mxu0 0.0
    %2167 = vmatpush1.msra.mxu0 %v2136
    %2168 = vmatprep.subr.mxu0 0.0
    %2169 = vmatpush1.msra.mxu0 %v2137
    %2170 = vmatprep.subr.mxu0 0.0
    %2171 = vmatpush1.msra.mxu0 %v2138
    %2172 = vmatprep.subr.mxu0 0.0
    %2173 = vmatpush1.msra.mxu0 %v2139
    %2174 = vmatprep.subr.mxu0 0.0
    %2175 = vmatpush1.msra.mxu0 %v2140
    %2176 = vmatprep.subr.mxu0 0.0
    %2177 = vmatpush1.msra.mxu0 %v2141
    %2178 = vmatprep.subr.mxu0 0.0
    %2179 = vmatpush1.msra.mxu0 %v2142
    %2180 = vmatprep.subr.mxu0 0.0
    %2181 = vmatpush1.msra.mxu0 %v2143
    %2182 = vmatprep.subr.mxu0 0.0
    %2183 = vmatpush1.msra.mxu0 %v2144
    %2184 = vmatprep.subr.mxu0 0.0
    %2185 = vmatpush1.msra.mxu0 %v2145
    %2186 = vmatprep.subr.mxu0 0.0
    %2187 = vmatpush1.msra.mxu0 0.0
    %2188 = vmatprep.subr.mxu0 0.0
    %2189 = vmatpush1.msra.mxu0 0.0
    %2190 = vmatprep.subr.mxu0 0.0
    %2191 = vmatpush1.msra.mxu0 0.0
    %2192 = vmatprep.subr.mxu0 0.0
    %2193 = vmatpush1.msra.mxu0 0.0
    %2194 = vmatprep.subr.mxu0 0.0
    %2195 = vmatpush1.msra.mxu0 0.0
    %2196 = vmatprep.subr.mxu0 0.0
    %2197 = vmatpush1.msra.mxu0 0.0
    %2198 = vmatprep.subr.mxu0 0.0
    %2199 = vmatpush1.msra.mxu0 0.0
    %2200 = vmatprep.subr.mxu0 0.0
    %2201 = vmatpush1.msra.mxu0 0.0
    %2202 = vmatprep.subr.mxu0 0.0
    %2203 = vmatpush1.msra.mxu0 0.0
    %2204 = vmatprep.subr.mxu0 0.0
    %2205 = vmatpush1.msra.mxu0 0.0
    %2206 = vmatprep.subr.mxu0 0.0
    %2207 = vmatpush1.msra.mxu0 0.0
    %2208 = vmatprep.subr.mxu0 0.0
    %2209 = vmatpush1.msra.mxu0 0.0
    %2210 = vmatprep.subr.mxu0 0.0
    %2211 = vmatpush1.msra.mxu0 0.0
    %2212 = vmatprep.subr.mxu0 0.0
    %2213 = vmatpush1.msra.mxu0 0.0
    %2214 = vmatprep.subr.mxu0 0.0
    %2215 = vmatpush1.msra.mxu0 0.0
    %2216 = vmatprep.subr.mxu0 0.0
    %2217 = vmatpush1.msra.mxu0 0.0
    %2218 = vmatprep.mubr.f32.mxu0 0.0
    %2219 = vmatmul.mubr.f32.gmra.mrb[0].mxu0 %v2128
    %v2220 = vpop.f32.mrb[0].mxu0
    %v2221 = vadd.f32 %v2152, %v2220
    %v2222 = vpop.f32.mrb[0].mxu0
    %2223 = vdwg.mxu0
    %vm2224 = vcmp.ge.f32.partialorder %v2221, 0.0
    %v2225 = vmul.f32 %v2221, 0.01
    %v2226 = vsel %vm2224, %v2221, %v2225
    %v2227 = vrot.slane %v2226, 4
    %v2228 = vadd.f32 %v2226, %v2227
    %v2229 = vrot.slane %v2228, 2
    %v2230 = vadd.f32 %v2228, %v2229
    %v2231 = vrot.slane %v2230, 1
    %v2232 = vadd.f32 %v2230, %v2231
    %v2233 = vmul.f32 %v2232, %v277
    %v2234 = vsub.f32 %v2226, %v2233
    %v2235 = vmul.f32 %v2234, %v2234
    %v2236 = vrot.slane %v2235, 4
    %v2237 = vadd.f32 %v2235, %v2236
    %v2238 = vrot.slane %v2237, 2
    %v2239 = vadd.f32 %v2237, %v2238
    %v2240 = vrot.slane %v2239, 1
    %v2241 = vadd.f32 %v2239, %v2240
    %v2242 = vmul.f32 %v2241, %v277
    %v2243 = vadd.f32 %v2242, 1e-05
    %v2244 = vrsqrt.pop %v2243
    %v2245 = vmul.f32 %v2234, %v2244
    %s2246 = scalar_lea.vmem [#allocation7], 16
    %v2247 = vld [vmem:[%s2246] sm:$0x1]
    %v2249 = vlaneseq
    %v2250 = vshrl.u32 %v2249, 7
    %v2251 = vsub.s32 0, %v2250
    %v2252 = vrot.slane %v2247, %v2251
    %v2254 = vmul.f32 %v2245, %v2252
    %s2255 = scalar_lea.vmem [#allocation8], 16
    %v2256 = vld [vmem:[%s2255] sm:$0x1]
    %v2258 = vlaneseq
    %v2259 = vshrl.u32 %v2258, 7
    %v2260 = vsub.s32 0, %v2259
    %v2261 = vrot.slane %v2256, %v2260
    %v2263 = vadd.f32 %v2254, %v2261
    %s2264 = scalar_lea.vmem [#allocation2], 2176
    %v2265 = vld [vmem:[%s2264] sm:$0xff]
    %v2266 = vld [vmem:[%s2264 + $0x8] sm:$0xff]
    %v2267 = vld [vmem:[%s2264 + $0x10] sm:$0xff]
    %v2268 = vld [vmem:[%s2264 + $0x18] sm:$0xff]
    %v2269 = vld [vmem:[%s2264 + $0x20] sm:$0xff]
    %v2270 = vld [vmem:[%s2264 + $0x28] sm:$0xff]
    %v2271 = vld [vmem:[%s2264 + $0x30] sm:$0xff]
    %v2272 = vld [vmem:[%s2264 + $0x38] sm:$0xff]
    %v2273 = vld [vmem:[%s2264 + $0x40] sm:$0xff]
    %v2274 = vld [vmem:[%s2264 + $0x48] sm:$0xff]
    %v2275 = vld [vmem:[%s2264 + $0x50] sm:$0xff]
    %v2276 = vld [vmem:[%s2264 + $0x58] sm:$0xff]
    %v2277 = vld [vmem:[%s2264 + $0x60] sm:$0xff]
    %v2278 = vld [vmem:[%s2264 + $0x68] sm:$0xff]
    %v2279 = vld [vmem:[%s2264 + $0x70] sm:$0xff]
    %v2280 = vld [vmem:[%s2264 + $0x78] sm:$0xff]
    %s2281 = scalar_lea.vmem [#allocation5], 17
    %v2282 = vld [vmem:[%s2281] sm:$0x1]
    %v2284 = vlaneseq
    %v2285 = vshrl.u32 %v2284, 7
    %v2286 = vsub.s32 0, %v2285
    %v2287 = vrot.slane %v2282, %v2286
    %2289 = vmatprep.subr.mxu0 0.0
    %2290 = vmatpush1.msra.mxu0 %v2265
    %2291 = vmatprep.subr.mxu0 0.0
    %2292 = vmatpush1.msra.mxu0 %v2266
    %2293 = vmatprep.subr.mxu0 0.0
    %2294 = vmatpush1.msra.mxu0 %v2267
    %2295 = vmatprep.subr.mxu0 0.0
    %2296 = vmatpush1.msra.mxu0 %v2268
    %2297 = vmatprep.subr.mxu0 0.0
    %2298 = vmatpush1.msra.mxu0 %v2269
    %2299 = vmatprep.subr.mxu0 0.0
    %2300 = vmatpush1.msra.mxu0 %v2270
    %2301 = vmatprep.subr.mxu0 0.0
    %2302 = vmatpush1.msra.mxu0 %v2271
    %2303 = vmatprep.subr.mxu0 0.0
    %2304 = vmatpush1.msra.mxu0 %v2272
    %2305 = vmatprep.subr.mxu0 0.0
    %2306 = vmatpush1.msra.mxu0 %v2273
    %2307 = vmatprep.subr.mxu0 0.0
    %2308 = vmatpush1.msra.mxu0 %v2274
    %2309 = vmatprep.subr.mxu0 0.0
    %2310 = vmatpush1.msra.mxu0 %v2275
    %2311 = vmatprep.subr.mxu0 0.0
    %2312 = vmatpush1.msra.mxu0 %v2276
    %2313 = vmatprep.subr.mxu0 0.0
    %2314 = vmatpush1.msra.mxu0 %v2277
    %2315 = vmatprep.subr.mxu0 0.0
    %2316 = vmatpush1.msra.mxu0 %v2278
    %2317 = vmatprep.subr.mxu0 0.0
    %2318 = vmatpush1.msra.mxu0 %v2279
    %2319 = vmatprep.subr.mxu0 0.0
    %2320 = vmatpush1.msra.mxu0 %v2280
    %2321 = vmatprep.subr.mxu0 0.0
    %2322 = vmatpush1.msra.mxu0 0.0
    %2323 = vmatprep.subr.mxu0 0.0
    %2324 = vmatpush1.msra.mxu0 0.0
    %2325 = vmatprep.subr.mxu0 0.0
    %2326 = vmatpush1.msra.mxu0 0.0
    %2327 = vmatprep.subr.mxu0 0.0
    %2328 = vmatpush1.msra.mxu0 0.0
    %2329 = vmatprep.subr.mxu0 0.0
    %2330 = vmatpush1.msra.mxu0 0.0
    %2331 = vmatprep.subr.mxu0 0.0
    %2332 = vmatpush1.msra.mxu0 0.0
    %2333 = vmatprep.subr.mxu0 0.0
    %2334 = vmatpush1.msra.mxu0 0.0
    %2335 = vmatprep.subr.mxu0 0.0
    %2336 = vmatpush1.msra.mxu0 0.0
    %2337 = vmatprep.subr.mxu0 0.0
    %2338 = vmatpush1.msra.mxu0 0.0
    %2339 = vmatprep.subr.mxu0 0.0
    %2340 = vmatpush1.msra.mxu0 0.0
    %2341 = vmatprep.subr.mxu0 0.0
    %2342 = vmatpush1.msra.mxu0 0.0
    %2343 = vmatprep.subr.mxu0 0.0
    %2344 = vmatpush1.msra.mxu0 0.0
    %2345 = vmatprep.subr.mxu0 0.0
    %2346 = vmatpush1.msra.mxu0 0.0
    %2347 = vmatprep.subr.mxu0 0.0
    %2348 = vmatpush1.msra.mxu0 0.0
    %2349 = vmatprep.subr.mxu0 0.0
    %2350 = vmatpush1.msra.mxu0 0.0
    %2351 = vmatprep.subr.mxu0 0.0
    %2352 = vmatpush1.msra.mxu0 0.0
    %2353 = vmatprep.mubr.f32.mxu0 0.0
    %2354 = vmatmul.mubr.f32.gmra.mrb[0].mxu0 %v2263
    %v2355 = vpop.f32.mrb[0].mxu0
    %v2356 = vadd.f32 %v2287, %v2355
    %v2357 = vpop.f32.mrb[0].mxu0
    %2358 = vdwg.mxu0
    %vm2359 = vcmp.ge.f32.partialorder %v2356, 0.0
    %v2360 = vmul.f32 %v2356, 0.01
    %v2361 = vsel %vm2359, %v2356, %v2360
    %v2362 = vrot.slane %v2361, 4
    %v2363 = vadd.f32 %v2361, %v2362
    %v2364 = vrot.slane %v2363, 2
    %v2365 = vadd.f32 %v2363, %v2364
    %v2366 = vrot.slane %v2365, 1
    %v2367 = vadd.f32 %v2365, %v2366
    %v2368 = vmul.f32 %v2367, %v277
    %v2369 = vsub.f32 %v2361, %v2368
    %v2370 = vmul.f32 %v2369, %v2369
    %v2371 = vrot.slane %v2370, 4
    %v2372 = vadd.f32 %v2370, %v2371
    %v2373 = vrot.slane %v2372, 2
    %v2374 = vadd.f32 %v2372, %v2373
    %v2375 = vrot.slane %v2374, 1
    %v2376 = vadd.f32 %v2374, %v2375
    %v2377 = vmul.f32 %v2376, %v277
    %v2378 = vadd.f32 %v2377, 1e-05
    %v2379 = vrsqrt.pop %v2378
    %v2380 = vmul.f32 %v2369, %v2379
    %s2381 = scalar_lea.vmem [#allocation7], 17
    %v2382 = vld [vmem:[%s2381] sm:$0x1]
    %v2384 = vlaneseq
    %v2385 = vshrl.u32 %v2384, 7
    %v2386 = vsub.s32 0, %v2385
    %v2387 = vrot.slane %v2382, %v2386
    %v2389 = vmul.f32 %v2380, %v2387
    %s2390 = scalar_lea.vmem [#allocation8], 17
    %v2391 = vld [vmem:[%s2390] sm:$0x1]
    %v2393 = vlaneseq
    %v2394 = vshrl.u32 %v2393, 7
    %v2395 = vsub.s32 0, %v2394
    %v2396 = vrot.slane %v2391, %v2395
    %v2398 = vadd.f32 %v2389, %v2396
    %v2399 = vadd.f32 %v2398, %v1993
    %s2400 = scalar_lea.vmem [#allocation2], 2304
    %v2401 = vld [vmem:[%s2400] sm:$0xff]
    %v2402 = vld [vmem:[%s2400 + $0x8] sm:$0xff]
    %v2403 = vld [vmem:[%s2400 + $0x10] sm:$0xff]
    %v2404 = vld [vmem:[%s2400 + $0x18] sm:$0xff]
    %v2405 = vld [vmem:[%s2400 + $0x20] sm:$0xff]
    %v2406 = vld [vmem:[%s2400 + $0x28] sm:$0xff]
    %v2407 = vld [vmem:[%s2400 + $0x30] sm:$0xff]
    %v2408 = vld [vmem:[%s2400 + $0x38] sm:$0xff]
    %v2409 = vld [vmem:[%s2400 + $0x40] sm:$0xff]
    %v2410 = vld [vmem:[%s2400 + $0x48] sm:$0xff]
    %v2411 = vld [vmem:[%s2400 + $0x50] sm:$0xff]
    %v2412 = vld [vmem:[%s2400 + $0x58] sm:$0xff]
    %v2413 = vld [vmem:[%s2400 + $0x60] sm:$0xff]
    %v2414 = vld [vmem:[%s2400 + $0x68] sm:$0xff]
    %v2415 = vld [vmem:[%s2400 + $0x70] sm:$0xff]
    %v2416 = vld [vmem:[%s2400 + $0x78] sm:$0xff]
    %s2417 = scalar_lea.vmem [#allocation5], 18
    %v2418 = vld [vmem:[%s2417] sm:$0x1]
    %v2420 = vlaneseq
    %v2421 = vshrl.u32 %v2420, 7
    %v2422 = vsub.s32 0, %v2421
    %v2423 = vrot.slane %v2418, %v2422
    %2425 = vmatprep.subr.mxu0 0.0
    %2426 = vmatpush1.msra.mxu0 %v2401
    %2427 = vmatprep.subr.mxu0 0.0
    %2428 = vmatpush1.msra.mxu0 %v2402
    %2429 = vmatprep.subr.mxu0 0.0
    %2430 = vmatpush1.msra.mxu0 %v2403
    %2431 = vmatprep.subr.mxu0 0.0
    %2432 = vmatpush1.msra.mxu0 %v2404
    %2433 = vmatprep.subr.mxu0 0.0
    %2434 = vmatpush1.msra.mxu0 %v2405
    %2435 = vmatprep.subr.mxu0 0.0
    %2436 = vmatpush1.msra.mxu0 %v2406
    %2437 = vmatprep.subr.mxu0 0.0
    %2438 = vmatpush1.msra.mxu0 %v2407
    %2439 = vmatprep.subr.mxu0 0.0
    %2440 = vmatpush1.msra.mxu0 %v2408
    %2441 = vmatprep.subr.mxu0 0.0
    %2442 = vmatpush1.msra.mxu0 %v2409
    %2443 = vmatprep.subr.mxu0 0.0
    %2444 = vmatpush1.msra.mxu0 %v2410
    %2445 = vmatprep.subr.mxu0 0.0
    %2446 = vmatpush1.msra.mxu0 %v2411
    %2447 = vmatprep.subr.mxu0 0.0
    %2448 = vmatpush1.msra.mxu0 %v2412
    %2449 = vmatprep.subr.mxu0 0.0
    %2450 = vmatpush1.msra.mxu0 %v2413
    %2451 = vmatprep.subr.mxu0 0.0
    %2452 = vmatpush1.msra.mxu0 %v2414
    %2453 = vmatprep.subr.mxu0 0.0
    %2454 = vmatpush1.msra.mxu0 %v2415
    %2455 = vmatprep.subr.mxu0 0.0
    %2456 = vmatpush1.msra.mxu0 %v2416
    %2457 = vmatprep.subr.mxu0 0.0
    %2458 = vmatpush1.msra.mxu0 0.0
    %2459 = vmatprep.subr.mxu0 0.0
    %2460 = vmatpush1.msra.mxu0 0.0
    %2461 = vmatprep.subr.mxu0 0.0
    %2462 = vmatpush1.msra.mxu0 0.0
    %2463 = vmatprep.subr.mxu0 0.0
    %2464 = vmatpush1.msra.mxu0 0.0
    %2465 = vmatprep.subr.mxu0 0.0
    %2466 = vmatpush1.msra.mxu0 0.0
    %2467 = vmatprep.subr.mxu0 0.0
    %2468 = vmatpush1.msra.mxu0 0.0
    %2469 = vmatprep.subr.mxu0 0.0
    %2470 = vmatpush1.msra.mxu0 0.0
    %2471 = vmatprep.subr.mxu0 0.0
    %2472 = vmatpush1.msra.mxu0 0.0
    %2473 = vmatprep.subr.mxu0 0.0
    %2474 = vmatpush1.msra.mxu0 0.0
    %2475 = vmatprep.subr.mxu0 0.0
    %2476 = vmatpush1.msra.mxu0 0.0
    %2477 = vmatprep.subr.mxu0 0.0
    %2478 = vmatpush1.msra.mxu0 0.0
    %2479 = vmatprep.subr.mxu0 0.0
    %2480 = vmatpush1.msra.mxu0 0.0
    %2481 = vmatprep.subr.mxu0 0.0
    %2482 = vmatpush1.msra.mxu0 0.0
    %2483 = vmatprep.subr.mxu0 0.0
    %2484 = vmatpush1.msra.mxu0 0.0
    %2485 = vmatprep.subr.mxu0 0.0
    %2486 = vmatpush1.msra.mxu0 0.0
    %2487 = vmatprep.subr.mxu0 0.0
    %2488 = vmatpush1.msra.mxu0 0.0
    %2489 = vmatprep.mubr.f32.mxu0 0.0
    %2490 = vmatmul.mubr.f32.gmra.mrb[0].mxu0 %v2399
    %v2491 = vpop.f32.mrb[0].mxu0
    %v2492 = vadd.f32 %v2423, %v2491
    %v2493 = vpop.f32.mrb[0].mxu0
    %2494 = vdwg.mxu0
    %vm2495 = vcmp.ge.f32.partialorder %v2492, 0.0
    %v2496 = vmul.f32 %v2492, 0.01
    %v2497 = vsel %vm2495, %v2492, %v2496
    %v2498 = vrot.slane %v2497, 4
    %v2499 = vadd.f32 %v2497, %v2498
    %v2500 = vrot.slane %v2499, 2
    %v2501 = vadd.f32 %v2499, %v2500
    %v2502 = vrot.slane %v2501, 1
    %v2503 = vadd.f32 %v2501, %v2502
    %v2504 = vmul.f32 %v2503, %v277
    %v2505 = vsub.f32 %v2497, %v2504
    %v2506 = vmul.f32 %v2505, %v2505
    %v2507 = vrot.slane %v2506, 4
    %v2508 = vadd.f32 %v2506, %v2507
    %v2509 = vrot.slane %v2508, 2
    %v2510 = vadd.f32 %v2508, %v2509
    %v2511 = vrot.slane %v2510, 1
    %v2512 = vadd.f32 %v2510, %v2511
    %v2513 = vmul.f32 %v2512, %v277
    %v2514 = vadd.f32 %v2513, 1e-05
    %v2515 = vrsqrt.pop %v2514
    %v2516 = vmul.f32 %v2505, %v2515
    %s2517 = scalar_lea.vmem [#allocation7], 18
    %v2518 = vld [vmem:[%s2517] sm:$0x1]
    %v2520 = vlaneseq
    %v2521 = vshrl.u32 %v2520, 7
    %v2522 = vsub.s32 0, %v2521
    %v2523 = vrot.slane %v2518, %v2522
    %v2525 = vmul.f32 %v2516, %v2523
    %s2526 = scalar_lea.vmem [#allocation8], 18
    %v2527 = vld [vmem:[%s2526] sm:$0x1]
    %v2529 = vlaneseq
    %v2530 = vshrl.u32 %v2529, 7
    %v2531 = vsub.s32 0, %v2530
    %v2532 = vrot.slane %v2527, %v2531
    %v2534 = vadd.f32 %v2525, %v2532
    %s2535 = scalar_lea.vmem [#allocation2], 2432
    %v2536 = vld [vmem:[%s2535] sm:$0xff]
    %v2537 = vld [vmem:[%s2535 + $0x8] sm:$0xff]
    %v2538 = vld [vmem:[%s2535 + $0x10] sm:$0xff]
    %v2539 = vld [vmem:[%s2535 + $0x18] sm:$0xff]
    %v2540 = vld [vmem:[%s2535 + $0x20] sm:$0xff]
    %v2541 = vld [vmem:[%s2535 + $0x28] sm:$0xff]
    %v2542 = vld [vmem:[%s2535 + $0x30] sm:$0xff]
    %v2543 = vld [vmem:[%s2535 + $0x38] sm:$0xff]
    %v2544 = vld [vmem:[%s2535 + $0x40] sm:$0xff]
    %v2545 = vld [vmem:[%s2535 + $0x48] sm:$0xff]
    %v2546 = vld [vmem:[%s2535 + $0x50] sm:$0xff]
    %v2547 = vld [vmem:[%s2535 + $0x58] sm:$0xff]
    %v2548 = vld [vmem:[%s2535 + $0x60] sm:$0xff]
    %v2549 = vld [vmem:[%s2535 + $0x68] sm:$0xff]
    %v2550 = vld [vmem:[%s2535 + $0x70] sm:$0xff]
    %v2551 = vld [vmem:[%s2535 + $0x78] sm:$0xff]
    %s2552 = scalar_lea.vmem [#allocation5], 19
    %v2553 = vld [vmem:[%s2552] sm:$0x1]
    %v2555 = vlaneseq
    %v2556 = vshrl.u32 %v2555, 7
    %v2557 = vsub.s32 0, %v2556
    %v2558 = vrot.slane %v2553, %v2557
    %2560 = vmatprep.subr.mxu0 0.0
    %2561 = vmatpush1.msra.mxu0 %v2536
    %2562 = vmatprep.subr.mxu0 0.0
    %2563 = vmatpush1.msra.mxu0 %v2537
    %2564 = vmatprep.subr.mxu0 0.0
    %2565 = vmatpush1.msra.mxu0 %v2538
    %2566 = vmatprep.subr.mxu0 0.0
    %2567 = vmatpush1.msra.mxu0 %v2539
    %2568 = vmatprep.subr.mxu0 0.0
    %2569 = vmatpush1.msra.mxu0 %v2540
    %2570 = vmatprep.subr.mxu0 0.0
    %2571 = vmatpush1.msra.mxu0 %v2541
    %2572 = vmatprep.subr.mxu0 0.0
    %2573 = vmatpush1.msra.mxu0 %v2542
    %2574 = vmatprep.subr.mxu0 0.0
    %2575 = vmatpush1.msra.mxu0 %v2543
    %2576 = vmatprep.subr.mxu0 0.0
    %2577 = vmatpush1.msra.mxu0 %v2544
    %2578 = vmatprep.subr.mxu0 0.0
    %2579 = vmatpush1.msra.mxu0 %v2545
    %2580 = vmatprep.subr.mxu0 0.0
    %2581 = vmatpush1.msra.mxu0 %v2546
    %2582 = vmatprep.subr.mxu0 0.0
    %2583 = vmatpush1.msra.mxu0 %v2547
    %2584 = vmatprep.subr.mxu0 0.0
    %2585 = vmatpush1.msra.mxu0 %v2548
    %2586 = vmatprep.subr.mxu0 0.0
    %2587 = vmatpush1.msra.mxu0 %v2549
    %2588 = vmatprep.subr.mxu0 0.0
    %2589 = vmatpush1.msra.mxu0 %v2550
    %2590 = vmatprep.subr.mxu0 0.0
    %2591 = vmatpush1.msra.mxu0 %v2551
    %2592 = vmatprep.subr.mxu0 0.0
    %2593 = vmatpush1.msra.mxu0 0.0
    %2594 = vmatprep.subr.mxu0 0.0
    %2595 = vmatpush1.msra.mxu0 0.0
    %2596 = vmatprep.subr.mxu0 0.0
    %2597 = vmatpush1.msra.mxu0 0.0
    %2598 = vmatprep.subr.mxu0 0.0
    %2599 = vmatpush1.msra.mxu0 0.0
    %2600 = vmatprep.subr.mxu0 0.0
    %2601 = vmatpush1.msra.mxu0 0.0
    %2602 = vmatprep.subr.mxu0 0.0
    %2603 = vmatpush1.msra.mxu0 0.0
    %2604 = vmatprep.subr.mxu0 0.0
    %2605 = vmatpush1.msra.mxu0 0.0
    %2606 = vmatprep.subr.mxu0 0.0
    %2607 = vmatpush1.msra.mxu0 0.0
    %2608 = vmatprep.subr.mxu0 0.0
    %2609 = vmatpush1.msra.mxu0 0.0
    %2610 = vmatprep.subr.mxu0 0.0
    %2611 = vmatpush1.msra.mxu0 0.0
    %2612 = vmatprep.subr.mxu0 0.0
    %2613 = vmatpush1.msra.mxu0 0.0
    %2614 = vmatprep.subr.mxu0 0.0
    %2615 = vmatpush1.msra.mxu0 0.0
    %2616 = vmatprep.subr.mxu0 0.0
    %2617 = vmatpush1.msra.mxu0 0.0
    %2618 = vmatprep.subr.mxu0 0.0
    %2619 = vmatpush1.msra.mxu0 0.0
    %2620 = vmatprep.subr.mxu0 0.0
    %2621 = vmatpush1.msra.mxu0 0.0
    %2622 = vmatprep.subr.mxu0 0.0
    %2623 = vmatpush1.msra.mxu0 0.0
    %2624 = vmatprep.mubr.f32.mxu0 0.0
    %2625 = vmatmul.mubr.f32.gmra.mrb[0].mxu0 %v2534
    %v2626 = vpop.f32.mrb[0].mxu0
    %v2627 = vadd.f32 %v2558, %v2626
    %v2628 = vpop.f32.mrb[0].mxu0
    %2629 = vdwg.mxu0
    %vm2630 = vcmp.ge.f32.partialorder %v2627, 0.0
    %v2631 = vmul.f32 %v2627, 0.01
    %v2632 = vsel %vm2630, %v2627, %v2631
    %v2633 = vrot.slane %v2632, 4
    %v2634 = vadd.f32 %v2632, %v2633
    %v2635 = vrot.slane %v2634, 2
    %v2636 = vadd.f32 %v2634, %v2635
    %v2637 = vrot.slane %v2636, 1
    %v2638 = vadd.f32 %v2636, %v2637
    %v2639 = vmul.f32 %v2638, %v277
    %v2640 = vsub.f32 %v2632, %v2639
    %v2641 = vmul.f32 %v2640, %v2640
    %v2642 = vrot.slane %v2641, 4
    %v2643 = vadd.f32 %v2641, %v2642
    %v2644 = vrot.slane %v2643, 2
    %v2645 = vadd.f32 %v2643, %v2644
    %v2646 = vrot.slane %v2645, 1
    %v2647 = vadd.f32 %v2645, %v2646
    %v2648 = vmul.f32 %v2647, %v277
    %v2649 = vadd.f32 %v2648, 1e-05
    %v2650 = vrsqrt.pop %v2649
    %v2651 = vmul.f32 %v2640, %v2650
    %s2652 = scalar_lea.vmem [#allocation7], 19
    %v2653 = vld [vmem:[%s2652] sm:$0x1]
    %v2655 = vlaneseq
    %v2656 = vshrl.u32 %v2655, 7
    %v2657 = vsub.s32 0, %v2656
    %v2658 = vrot.slane %v2653, %v2657
    %v2660 = vmul.f32 %v2651, %v2658
    %s2661 = scalar_lea.vmem [#allocation8], 19
    %v2662 = vld [vmem:[%s2661] sm:$0x1]
    %v2664 = vlaneseq
    %v2665 = vshrl.u32 %v2664, 7
    %v2666 = vsub.s32 0, %v2665
    %v2667 = vrot.slane %v2662, %v2666
    %v2669 = vadd.f32 %v2660, %v2667
    %s2670 = scalar_lea.vmem [#allocation2], 2560
    %v2671 = vld [vmem:[%s2670] sm:$0xff]
    %v2672 = vld [vmem:[%s2670 + $0x8] sm:$0xff]
    %v2673 = vld [vmem:[%s2670 + $0x10] sm:$0xff]
    %v2674 = vld [vmem:[%s2670 + $0x18] sm:$0xff]
    %v2675 = vld [vmem:[%s2670 + $0x20] sm:$0xff]
    %v2676 = vld [vmem:[%s2670 + $0x28] sm:$0xff]
    %v2677 = vld [vmem:[%s2670 + $0x30] sm:$0xff]
    %v2678 = vld [vmem:[%s2670 + $0x38] sm:$0xff]
    %v2679 = vld [vmem:[%s2670 + $0x40] sm:$0xff]
    %v2680 = vld [vmem:[%s2670 + $0x48] sm:$0xff]
    %v2681 = vld [vmem:[%s2670 + $0x50] sm:$0xff]
    %v2682 = vld [vmem:[%s2670 + $0x58] sm:$0xff]
    %v2683 = vld [vmem:[%s2670 + $0x60] sm:$0xff]
    %v2684 = vld [vmem:[%s2670 + $0x68] sm:$0xff]
    %v2685 = vld [vmem:[%s2670 + $0x70] sm:$0xff]
    %v2686 = vld [vmem:[%s2670 + $0x78] sm:$0xff]
    %s2687 = scalar_lea.vmem [#allocation5], 20
    %v2688 = vld [vmem:[%s2687] sm:$0x1]
    %v2690 = vlaneseq
    %v2691 = vshrl.u32 %v2690, 7
    %v2692 = vsub.s32 0, %v2691
    %v2693 = vrot.slane %v2688, %v2692
    %2695 = vmatprep.subr.mxu0 0.0
    %2696 = vmatpush1.msra.mxu0 %v2671
    %2697 = vmatprep.subr.mxu0 0.0
    %2698 = vmatpush1.msra.mxu0 %v2672
    %2699 = vmatprep.subr.mxu0 0.0
    %2700 = vmatpush1.msra.mxu0 %v2673
    %2701 = vmatprep.subr.mxu0 0.0
    %2702 = vmatpush1.msra.mxu0 %v2674
    %2703 = vmatprep.subr.mxu0 0.0
    %2704 = vmatpush1.msra.mxu0 %v2675
    %2705 = vmatprep.subr.mxu0 0.0
    %2706 = vmatpush1.msra.mxu0 %v2676
    %2707 = vmatprep.subr.mxu0 0.0
    %2708 = vmatpush1.msra.mxu0 %v2677
    %2709 = vmatprep.subr.mxu0 0.0
    %2710 = vmatpush1.msra.mxu0 %v2678
    %2711 = vmatprep.subr.mxu0 0.0
    %2712 = vmatpush1.msra.mxu0 %v2679
    %2713 = vmatprep.subr.mxu0 0.0
    %2714 = vmatpush1.msra.mxu0 %v2680
    %2715 = vmatprep.subr.mxu0 0.0
    %2716 = vmatpush1.msra.mxu0 %v2681
    %2717 = vmatprep.subr.mxu0 0.0
    %2718 = vmatpush1.msra.mxu0 %v2682
    %2719 = vmatprep.subr.mxu0 0.0
    %2720 = vmatpush1.msra.mxu0 %v2683
    %2721 = vmatprep.subr.mxu0 0.0
    %2722 = vmatpush1.msra.mxu0 %v2684
    %2723 = vmatprep.subr.mxu0 0.0
    %2724 = vmatpush1.msra.mxu0 %v2685
    %2725 = vmatprep.subr.mxu0 0.0
    %2726 = vmatpush1.msra.mxu0 %v2686
    %2727 = vmatprep.subr.mxu0 0.0
    %2728 = vmatpush1.msra.mxu0 0.0
    %2729 = vmatprep.subr.mxu0 0.0
    %2730 = vmatpush1.msra.mxu0 0.0
    %2731 = vmatprep.subr.mxu0 0.0
    %2732 = vmatpush1.msra.mxu0 0.0
    %2733 = vmatprep.subr.mxu0 0.0
    %2734 = vmatpush1.msra.mxu0 0.0
    %2735 = vmatprep.subr.mxu0 0.0
    %2736 = vmatpush1.msra.mxu0 0.0
    %2737 = vmatprep.subr.mxu0 0.0
    %2738 = vmatpush1.msra.mxu0 0.0
    %2739 = vmatprep.subr.mxu0 0.0
    %2740 = vmatpush1.msra.mxu0 0.0
    %2741 = vmatprep.subr.mxu0 0.0
    %2742 = vmatpush1.msra.mxu0 0.0
    %2743 = vmatprep.subr.mxu0 0.0
    %2744 = vmatpush1.msra.mxu0 0.0
    %2745 = vmatprep.subr.mxu0 0.0
    %2746 = vmatpush1.msra.mxu0 0.0
    %2747 = vmatprep.subr.mxu0 0.0
    %2748 = vmatpush1.msra.mxu0 0.0
    %2749 = vmatprep.subr.mxu0 0.0
    %2750 = vmatpush1.msra.mxu0 0.0
    %2751 = vmatprep.subr.mxu0 0.0
    %2752 = vmatpush1.msra.mxu0 0.0
    %2753 = vmatprep.subr.mxu0 0.0
    %2754 = vmatpush1.msra.mxu0 0.0
    %2755 = vmatprep.subr.mxu0 0.0
    %2756 = vmatpush1.msra.mxu0 0.0
    %2757 = vmatprep.subr.mxu0 0.0
    %2758 = vmatpush1.msra.mxu0 0.0
    %2759 = vmatprep.mubr.f32.mxu0 0.0
    %2760 = vmatmul.mubr.f32.gmra.mrb[0].mxu0 %v2669
    %v2761 = vpop.f32.mrb[0].mxu0
    %v2762 = vadd.f32 %v2693, %v2761
    %v2763 = vpop.f32.mrb[0].mxu0
    %2764 = vdwg.mxu0
    %vm2765 = vcmp.ge.f32.partialorder %v2762, 0.0
    %v2766 = vmul.f32 %v2762, 0.01
    %v2767 = vsel %vm2765, %v2762, %v2766
    %v2768 = vrot.slane %v2767, 4
    %v2769 = vadd.f32 %v2767, %v2768
    %v2770 = vrot.slane %v2769, 2
    %v2771 = vadd.f32 %v2769, %v2770
    %v2772 = vrot.slane %v2771, 1
    %v2773 = vadd.f32 %v2771, %v2772
    %v2774 = vmul.f32 %v2773, %v277
    %v2775 = vsub.f32 %v2767, %v2774
    %v2776 = vmul.f32 %v2775, %v2775
    %v2777 = vrot.slane %v2776, 4
    %v2778 = vadd.f32 %v2776, %v2777
    %v2779 = vrot.slane %v2778, 2
    %v2780 = vadd.f32 %v2778, %v2779
    %v2781 = vrot.slane %v2780, 1
    %v2782 = vadd.f32 %v2780, %v2781
    %v2783 = vmul.f32 %v2782, %v277
    %v2784 = vadd.f32 %v2783, 1e-05
    %v2785 = vrsqrt.pop %v2784
    %v2786 = vmul.f32 %v2775, %v2785
    %s2787 = scalar_lea.vmem [#allocation7], 20
    %v2788 = vld [vmem:[%s2787] sm:$0x1]
    %v2790 = vlaneseq
    %v2791 = vshrl.u32 %v2790, 7
    %v2792 = vsub.s32 0, %v2791
    %v2793 = vrot.slane %v2788, %v2792
    %v2795 = vmul.f32 %v2786, %v2793
    %s2796 = scalar_lea.vmem [#allocation8], 20
    %v2797 = vld [vmem:[%s2796] sm:$0x1]
    %v2799 = vlaneseq
    %v2800 = vshrl.u32 %v2799, 7
    %v2801 = vsub.s32 0, %v2800
    %v2802 = vrot.slane %v2797, %v2801
    %v2804 = vadd.f32 %v2795, %v2802
    %v2805 = vadd.f32 %v2804, %v2399
    %s2806 = scalar_lea.vmem [#allocation2], 2688
    %v2807 = vld [vmem:[%s2806] sm:$0xff]
    %v2808 = vld [vmem:[%s2806 + $0x8] sm:$0xff]
    %v2809 = vld [vmem:[%s2806 + $0x10] sm:$0xff]
    %v2810 = vld [vmem:[%s2806 + $0x18] sm:$0xff]
    %v2811 = vld [vmem:[%s2806 + $0x20] sm:$0xff]
    %v2812 = vld [vmem:[%s2806 + $0x28] sm:$0xff]
    %v2813 = vld [vmem:[%s2806 + $0x30] sm:$0xff]
    %v2814 = vld [vmem:[%s2806 + $0x38] sm:$0xff]
    %v2815 = vld [vmem:[%s2806 + $0x40] sm:$0xff]
    %v2816 = vld [vmem:[%s2806 + $0x48] sm:$0xff]
    %v2817 = vld [vmem:[%s2806 + $0x50] sm:$0xff]
    %v2818 = vld [vmem:[%s2806 + $0x58] sm:$0xff]
    %v2819 = vld [vmem:[%s2806 + $0x60] sm:$0xff]
    %v2820 = vld [vmem:[%s2806 + $0x68] sm:$0xff]
    %v2821 = vld [vmem:[%s2806 + $0x70] sm:$0xff]
    %v2822 = vld [vmem:[%s2806 + $0x78] sm:$0xff]
    %s2823 = scalar_lea.vmem [#allocation5], 21
    %v2824 = vld [vmem:[%s2823] sm:$0x1]
    %v2826 = vlaneseq
    %v2827 = vshrl.u32 %v2826, 7
    %v2828 = vsub.s32 0, %v2827
    %v2829 = vrot.slane %v2824, %v2828
    %2831 = vmatprep.subr.mxu0 0.0
    %2832 = vmatpush1.msra.mxu0 %v2807
    %2833 = vmatprep.subr.mxu0 0.0
    %2834 = vmatpush1.msra.mxu0 %v2808
    %2835 = vmatprep.subr.mxu0 0.0
    %2836 = vmatpush1.msra.mxu0 %v2809
    %2837 = vmatprep.subr.mxu0 0.0
    %2838 = vmatpush1.msra.mxu0 %v2810
    %2839 = vmatprep.subr.mxu0 0.0
    %2840 = vmatpush1.msra.mxu0 %v2811
    %2841 = vmatprep.subr.mxu0 0.0
    %2842 = vmatpush1.msra.mxu0 %v2812
    %2843 = vmatprep.subr.mxu0 0.0
    %2844 = vmatpush1.msra.mxu0 %v2813
    %2845 = vmatprep.subr.mxu0 0.0
    %2846 = vmatpush1.msra.mxu0 %v2814
    %2847 = vmatprep.subr.mxu0 0.0
    %2848 = vmatpush1.msra.mxu0 %v2815
    %2849 = vmatprep.subr.mxu0 0.0
    %2850 = vmatpush1.msra.mxu0 %v2816
    %2851 = vmatprep.subr.mxu0 0.0
    %2852 = vmatpush1.msra.mxu0 %v2817
    %2853 = vmatprep.subr.mxu0 0.0
    %2854 = vmatpush1.msra.mxu0 %v2818
    %2855 = vmatprep.subr.mxu0 0.0
    %2856 = vmatpush1.msra.mxu0 %v2819
    %2857 = vmatprep.subr.mxu0 0.0
    %2858 = vmatpush1.msra.mxu0 %v2820
    %2859 = vmatprep.subr.mxu0 0.0
    %2860 = vmatpush1.msra.mxu0 %v2821
    %2861 = vmatprep.subr.mxu0 0.0
    %2862 = vmatpush1.msra.mxu0 %v2822
    %2863 = vmatprep.subr.mxu0 0.0
    %2864 = vmatpush1.msra.mxu0 0.0
    %2865 = vmatprep.subr.mxu0 0.0
    %2866 = vmatpush1.msra.mxu0 0.0
    %2867 = vmatprep.subr.mxu0 0.0
    %2868 = vmatpush1.msra.mxu0 0.0
    %2869 = vmatprep.subr.mxu0 0.0
    %2870 = vmatpush1.msra.mxu0 0.0
    %2871 = vmatprep.subr.mxu0 0.0
    %2872 = vmatpush1.msra.mxu0 0.0
    %2873 = vmatprep.subr.mxu0 0.0
    %2874 = vmatpush1.msra.mxu0 0.0
    %2875 = vmatprep.subr.mxu0 0.0
    %2876 = vmatpush1.msra.mxu0 0.0
    %2877 = vmatprep.subr.mxu0 0.0
    %2878 = vmatpush1.msra.mxu0 0.0
    %2879 = vmatprep.subr.mxu0 0.0
    %2880 = vmatpush1.msra.mxu0 0.0
    %2881 = vmatprep.subr.mxu0 0.0
    %2882 = vmatpush1.msra.mxu0 0.0
    %2883 = vmatprep.subr.mxu0 0.0
    %2884 = vmatpush1.msra.mxu0 0.0
    %2885 = vmatprep.subr.mxu0 0.0
    %2886 = vmatpush1.msra.mxu0 0.0
    %2887 = vmatprep.subr.mxu0 0.0
    %2888 = vmatpush1.msra.mxu0 0.0
    %2889 = vmatprep.subr.mxu0 0.0
    %2890 = vmatpush1.msra.mxu0 0.0
    %2891 = vmatprep.subr.mxu0 0.0
    %2892 = vmatpush1.msra.mxu0 0.0
    %2893 = vmatprep.subr.mxu0 0.0
    %2894 = vmatpush1.msra.mxu0 0.0
    %2895 = vmatprep.mubr.f32.mxu0 0.0
    %2896 = vmatmul.mubr.f32.gmra.mrb[0].mxu0 %v2805
    %v2897 = vpop.f32.mrb[0].mxu0
    %v2898 = vadd.f32 %v2829, %v2897
    %v2899 = vpop.f32.mrb[0].mxu0
    %2900 = vdwg.mxu0
    %vm2901 = vcmp.ge.f32.partialorder %v2898, 0.0
    %v2902 = vmul.f32 %v2898, 0.01
    %v2903 = vsel %vm2901, %v2898, %v2902
    %s2904 = scalar_lea.vmem [#allocation2], 2816
    %v2905 = vld [vmem:[%s2904] sm:$0xff]
    %v2906 = vld [vmem:[%s2904 + $0x8] sm:$0xff]
    %v2907 = vld [vmem:[%s2904 + $0x10] sm:$0xff]
    %v2908 = vld [vmem:[%s2904 + $0x18] sm:$0xff]
    %v2909 = vld [vmem:[%s2904 + $0x20] sm:$0xff]
    %v2910 = vld [vmem:[%s2904 + $0x28] sm:$0xff]
    %v2911 = vld [vmem:[%s2904 + $0x30] sm:$0xff]
    %v2912 = vld [vmem:[%s2904 + $0x38] sm:$0xff]
    %v2913 = vld [vmem:[%s2904 + $0x40] sm:$0xff]
    %v2914 = vld [vmem:[%s2904 + $0x48] sm:$0xff]
    %v2915 = vld [vmem:[%s2904 + $0x50] sm:$0xff]
    %v2916 = vld [vmem:[%s2904 + $0x58] sm:$0xff]
    %v2917 = vld [vmem:[%s2904 + $0x60] sm:$0xff]
    %v2918 = vld [vmem:[%s2904 + $0x68] sm:$0xff]
    %v2919 = vld [vmem:[%s2904 + $0x70] sm:$0xff]
    %v2920 = vld [vmem:[%s2904 + $0x78] sm:$0xff]
    %s2921 = scalar_lea.vmem [#allocation5], 22
    %v2922 = vld [vmem:[%s2921] sm:$0x1]
    %v2924 = vlaneseq
    %v2925 = vshrl.u32 %v2924, 7
    %v2926 = vsub.s32 0, %v2925
    %v2927 = vrot.slane %v2922, %v2926
    %2929 = vmatprep.subr.mxu0 0.0
    %2930 = vmatpush1.msra.mxu0 %v2905
    %2931 = vmatprep.subr.mxu0 0.0
    %2932 = vmatpush1.msra.mxu0 %v2906
    %2933 = vmatprep.subr.mxu0 0.0
    %2934 = vmatpush1.msra.mxu0 %v2907
    %2935 = vmatprep.subr.mxu0 0.0
    %2936 = vmatpush1.msra.mxu0 %v2908
    %2937 = vmatprep.subr.mxu0 0.0
    %2938 = vmatpush1.msra.mxu0 %v2909
    %2939 = vmatprep.subr.mxu0 0.0
    %2940 = vmatpush1.msra.mxu0 %v2910
    %2941 = vmatprep.subr.mxu0 0.0
    %2942 = vmatpush1.msra.mxu0 %v2911
    %2943 = vmatprep.subr.mxu0 0.0
    %2944 = vmatpush1.msra.mxu0 %v2912
    %2945 = vmatprep.subr.mxu0 0.0
    %2946 = vmatpush1.msra.mxu0 %v2913
    %2947 = vmatprep.subr.mxu0 0.0
    %2948 = vmatpush1.msra.mxu0 %v2914
    %2949 = vmatprep.subr.mxu0 0.0
    %2950 = vmatpush1.msra.mxu0 %v2915
    %2951 = vmatprep.subr.mxu0 0.0
    %2952 = vmatpush1.msra.mxu0 %v2916
    %2953 = vmatprep.subr.mxu0 0.0
    %2954 = vmatpush1.msra.mxu0 %v2917
    %2955 = vmatprep.subr.mxu0 0.0
    %2956 = vmatpush1.msra.mxu0 %v2918
    %2957 = vmatprep.subr.mxu0 0.0
    %2958 = vmatpush1.msra.mxu0 %v2919
    %2959 = vmatprep.subr.mxu0 0.0
    %2960 = vmatpush1.msra.mxu0 %v2920
    %2961 = vmatprep.subr.mxu0 0.0
    %2962 = vmatpush1.msra.mxu0 0.0
    %2963 = vmatprep.subr.mxu0 0.0
    %2964 = vmatpush1.msra.mxu0 0.0
    %2965 = vmatprep.subr.mxu0 0.0
    %2966 = vmatpush1.msra.mxu0 0.0
    %2967 = vmatprep.subr.mxu0 0.0
    %2968 = vmatpush1.msra.mxu0 0.0
    %2969 = vmatprep.subr.mxu0 0.0
    %2970 = vmatpush1.msra.mxu0 0.0
    %2971 = vmatprep.subr.mxu0 0.0
    %2972 = vmatpush1.msra.mxu0 0.0
    %2973 = vmatprep.subr.mxu0 0.0
    %2974 = vmatpush1.msra.mxu0 0.0
    %2975 = vmatprep.subr.mxu0 0.0
    %2976 = vmatpush1.msra.mxu0 0.0
    %2977 = vmatprep.subr.mxu0 0.0
    %2978 = vmatpush1.msra.mxu0 0.0
    %2979 = vmatprep.subr.mxu0 0.0
    %2980 = vmatpush1.msra.mxu0 0.0
    %2981 = vmatprep.subr.mxu0 0.0
    %2982 = vmatpush1.msra.mxu0 0.0
    %2983 = vmatprep.subr.mxu0 0.0
    %2984 = vmatpush1.msra.mxu0 0.0
    %2985 = vmatprep.subr.mxu0 0.0
    %2986 = vmatpush1.msra.mxu0 0.0
    %2987 = vmatprep.subr.mxu0 0.0
    %2988 = vmatpush1.msra.mxu0 0.0
    %2989 = vmatprep.subr.mxu0 0.0
    %2990 = vmatpush1.msra.mxu0 0.0
    %2991 = vmatprep.subr.mxu0 0.0
    %2992 = vmatpush1.msra.mxu0 0.0
    %2993 = vmatprep.mubr.f32.mxu0 0.0
    %2994 = vmatmul.mubr.f32.gmra.mrb[0].mxu0 %v2903
    %v2995 = vpop.f32.mrb[0].mxu0
    %v2996 = vadd.f32 %v2927, %v2995
    %v2997 = vpop.f32.mrb[0].mxu0
    %2998 = vdwg.mxu0
    %vm2999 = vcmp.ge.f32.partialorder %v2996, 0.0
    %v3000 = vmul.f32 %v2996, 0.01
    %v3001 = vsel %vm2999, %v2996, %v3000
    %v3002 = vrot.slane %v3001, 4
    %v3003 = vadd.f32 %v3001, %v3002
    %v3004 = vrot.slane %v3003, 2
    %v3005 = vadd.f32 %v3003, %v3004
    %v3006 = vrot.slane %v3005, 1
    %v3007 = vadd.f32 %v3005, %v3006
    %v3008 = vmul.f32 %v3007, %v277
    %v3009 = vsub.f32 %v3001, %v3008
    %v3010 = vmul.f32 %v3009, %v3009
    %v3011 = vrot.slane %v3010, 4
    %v3012 = vadd.f32 %v3010, %v3011
    %v3013 = vrot.slane %v3012, 2
    %v3014 = vadd.f32 %v3012, %v3013
    %v3015 = vrot.slane %v3014, 1
    %v3016 = vadd.f32 %v3014, %v3015
    %v3017 = vmul.f32 %v3016, %v277
    %v3018 = vadd.f32 %v3017, 1e-05
    %v3019 = vrsqrt.pop %v3018
    %v3020 = vmul.f32 %v3009, %v3019
    %s3021 = scalar_lea.vmem [#allocation7], 22
    %v3022 = vld [vmem:[%s3021] sm:$0x1]
    %v3024 = vlaneseq
    %v3025 = vshrl.u32 %v3024, 7
    %v3026 = vsub.s32 0, %v3025
    %v3027 = vrot.slane %v3022, %v3026
    %v3029 = vmul.f32 %v3020, %v3027
    %s3030 = scalar_lea.vmem [#allocation8], 22
    %v3031 = vld [vmem:[%s3030] sm:$0x1]
    %v3033 = vlaneseq
    %v3034 = vshrl.u32 %v3033, 7
    %v3035 = vsub.s32 0, %v3034
    %v3036 = vrot.slane %v3031, %v3035
    %v3038 = vadd.f32 %v3029, %v3036
    %s3039 = scalar_lea.vmem [#allocation2], 2944
    %v3040 = vld [vmem:[%s3039] sm:$0xff]
    %v3041 = vld [vmem:[%s3039 + $0x8] sm:$0xff]
    %v3042 = vld [vmem:[%s3039 + $0x10] sm:$0xff]
    %v3043 = vld [vmem:[%s3039 + $0x18] sm:$0xff]
    %v3044 = vld [vmem:[%s3039 + $0x20] sm:$0xff]
    %v3045 = vld [vmem:[%s3039 + $0x28] sm:$0xff]
    %v3046 = vld [vmem:[%s3039 + $0x30] sm:$0xff]
    %v3047 = vld [vmem:[%s3039 + $0x38] sm:$0xff]
    %v3048 = vld [vmem:[%s3039 + $0x40] sm:$0xff]
    %v3049 = vld [vmem:[%s3039 + $0x48] sm:$0xff]
    %v3050 = vld [vmem:[%s3039 + $0x50] sm:$0xff]
    %v3051 = vld [vmem:[%s3039 + $0x58] sm:$0xff]
    %v3052 = vld [vmem:[%s3039 + $0x60] sm:$0xff]
    %v3053 = vld [vmem:[%s3039 + $0x68] sm:$0xff]
    %v3054 = vld [vmem:[%s3039 + $0x70] sm:$0xff]
    %v3055 = vld [vmem:[%s3039 + $0x78] sm:$0xff]
    %s3056 = scalar_lea.vmem [#allocation5], 23
    %v3057 = vld [vmem:[%s3056] sm:$0x1]
    %v3059 = vlaneseq
    %v3060 = vshrl.u32 %v3059, 7
    %v3061 = vsub.s32 0, %v3060
    %v3062 = vrot.slane %v3057, %v3061
    %3064 = vmatprep.subr.mxu0 0.0
    %3065 = vmatpush1.msra.mxu0 %v3040
    %3066 = vmatprep.subr.mxu0 0.0
    %3067 = vmatpush1.msra.mxu0 %v3041
    %3068 = vmatprep.subr.mxu0 0.0
    %3069 = vmatpush1.msra.mxu0 %v3042
    %3070 = vmatprep.subr.mxu0 0.0
    %3071 = vmatpush1.msra.mxu0 %v3043
    %3072 = vmatprep.subr.mxu0 0.0
    %3073 = vmatpush1.msra.mxu0 %v3044
    %3074 = vmatprep.subr.mxu0 0.0
    %3075 = vmatpush1.msra.mxu0 %v3045
    %3076 = vmatprep.subr.mxu0 0.0
    %3077 = vmatpush1.msra.mxu0 %v3046
    %3078 = vmatprep.subr.mxu0 0.0
    %3079 = vmatpush1.msra.mxu0 %v3047
    %3080 = vmatprep.subr.mxu0 0.0
    %3081 = vmatpush1.msra.mxu0 %v3048
    %3082 = vmatprep.subr.mxu0 0.0
    %3083 = vmatpush1.msra.mxu0 %v3049
    %3084 = vmatprep.subr.mxu0 0.0
    %3085 = vmatpush1.msra.mxu0 %v3050
    %3086 = vmatprep.subr.mxu0 0.0
    %3087 = vmatpush1.msra.mxu0 %v3051
    %3088 = vmatprep.subr.mxu0 0.0
    %3089 = vmatpush1.msra.mxu0 %v3052
    %3090 = vmatprep.subr.mxu0 0.0
    %3091 = vmatpush1.msra.mxu0 %v3053
    %3092 = vmatprep.subr.mxu0 0.0
    %3093 = vmatpush1.msra.mxu0 %v3054
    %3094 = vmatprep.subr.mxu0 0.0
    %3095 = vmatpush1.msra.mxu0 %v3055
    %3096 = vmatprep.subr.mxu0 0.0
    %3097 = vmatpush1.msra.mxu0 0.0
    %3098 = vmatprep.subr.mxu0 0.0
    %3099 = vmatpush1.msra.mxu0 0.0
    %3100 = vmatprep.subr.mxu0 0.0
    %3101 = vmatpush1.msra.mxu0 0.0
    %3102 = vmatprep.subr.mxu0 0.0
    %3103 = vmatpush1.msra.mxu0 0.0
    %3104 = vmatprep.subr.mxu0 0.0
    %3105 = vmatpush1.msra.mxu0 0.0
    %3106 = vmatprep.subr.mxu0 0.0
    %3107 = vmatpush1.msra.mxu0 0.0
    %3108 = vmatprep.subr.mxu0 0.0
    %3109 = vmatpush1.msra.mxu0 0.0
    %3110 = vmatprep.subr.mxu0 0.0
    %3111 = vmatpush1.msra.mxu0 0.0
    %3112 = vmatprep.subr.mxu0 0.0
    %3113 = vmatpush1.msra.mxu0 0.0
    %3114 = vmatprep.subr.mxu0 0.0
    %3115 = vmatpush1.msra.mxu0 0.0
    %3116 = vmatprep.subr.mxu0 0.0
    %3117 = vmatpush1.msra.mxu0 0.0
    %3118 = vmatprep.subr.mxu0 0.0
    %3119 = vmatpush1.msra.mxu0 0.0
    %3120 = vmatprep.subr.mxu0 0.0
    %3121 = vmatpush1.msra.mxu0 0.0
    %3122 = vmatprep.subr.mxu0 0.0
    %3123 = vmatpush1.msra.mxu0 0.0
    %3124 = vmatprep.subr.mxu0 0.0
    %3125 = vmatpush1.msra.mxu0 0.0
    %3126 = vmatprep.subr.mxu0 0.0
    %3127 = vmatpush1.msra.mxu0 0.0
    %3128 = vmatprep.mubr.f32.mxu0 0.0
    %3129 = vmatmul.mubr.f32.gmra.mrb[0].mxu0 %v3038
    %v3130 = vpop.f32.mrb[0].mxu0
    %v3131 = vadd.f32 %v3062, %v3130
    %v3132 = vpop.f32.mrb[0].mxu0
    %3133 = vdwg.mxu0
    %vm3134 = vcmp.ge.f32.partialorder %v3131, 0.0
    %v3135 = vmul.f32 %v3131, 0.01
    %v3136 = vsel %vm3134, %v3131, %v3135
    %v3137 = vrot.slane %v3136, 4
    %v3138 = vadd.f32 %v3136, %v3137
    %v3139 = vrot.slane %v3138, 2
    %v3140 = vadd.f32 %v3138, %v3139
    %v3141 = vrot.slane %v3140, 1
    %v3142 = vadd.f32 %v3140, %v3141
    %v3143 = vmul.f32 %v3142, %v277
    %v3144 = vsub.f32 %v3136, %v3143
    %v3145 = vmul.f32 %v3144, %v3144
    %v3146 = vrot.slane %v3145, 4
    %v3147 = vadd.f32 %v3145, %v3146
    %v3148 = vrot.slane %v3147, 2
    %v3149 = vadd.f32 %v3147, %v3148
    %v3150 = vrot.slane %v3149, 1
    %v3151 = vadd.f32 %v3149, %v3150
    %v3152 = vmul.f32 %v3151, %v277
    %v3153 = vadd.f32 %v3152, 1e-05
    %v3154 = vrsqrt.pop %v3153
    %v3155 = vmul.f32 %v3144, %v3154
    %s3156 = scalar_lea.vmem [#allocation7], 23
    %v3157 = vld [vmem:[%s3156] sm:$0x1]
    %v3159 = vlaneseq
    %v3160 = vshrl.u32 %v3159, 7
    %v3161 = vsub.s32 0, %v3160
    %v3162 = vrot.slane %v3157, %v3161
    %v3164 = vmul.f32 %v3155, %v3162
    %s3165 = scalar_lea.vmem [#allocation8], 23
    %v3166 = vld [vmem:[%s3165] sm:$0x1]
    %v3168 = vlaneseq
    %v3169 = vshrl.u32 %v3168, 7
    %v3170 = vsub.s32 0, %v3169
    %v3171 = vrot.slane %v3166, %v3170
    %v3173 = vadd.f32 %v3164, %v3171
    %s3174 = scalar_lea.vmem [#allocation2], 3072
    %v3175 = vld [vmem:[%s3174] sm:$0xff]
    %v3176 = vld [vmem:[%s3174 + $0x8] sm:$0xff]
    %v3177 = vld [vmem:[%s3174 + $0x10] sm:$0xff]
    %v3178 = vld [vmem:[%s3174 + $0x18] sm:$0xff]
    %v3179 = vld [vmem:[%s3174 + $0x20] sm:$0xff]
    %v3180 = vld [vmem:[%s3174 + $0x28] sm:$0xff]
    %v3181 = vld [vmem:[%s3174 + $0x30] sm:$0xff]
    %v3182 = vld [vmem:[%s3174 + $0x38] sm:$0xff]
    %v3183 = vld [vmem:[%s3174 + $0x40] sm:$0xff]
    %v3184 = vld [vmem:[%s3174 + $0x48] sm:$0xff]
    %v3185 = vld [vmem:[%s3174 + $0x50] sm:$0xff]
    %v3186 = vld [vmem:[%s3174 + $0x58] sm:$0xff]
    %v3187 = vld [vmem:[%s3174 + $0x60] sm:$0xff]
    %v3188 = vld [vmem:[%s3174 + $0x68] sm:$0xff]
    %v3189 = vld [vmem:[%s3174 + $0x70] sm:$0xff]
    %v3190 = vld [vmem:[%s3174 + $0x78] sm:$0xff]
    %s3191 = scalar_lea.vmem [#allocation5], 24
    %v3192 = vld [vmem:[%s3191] sm:$0x1]
    %v3194 = vlaneseq
    %v3195 = vshrl.u32 %v3194, 7
    %v3196 = vsub.s32 0, %v3195
    %v3197 = vrot.slane %v3192, %v3196
    %3199 = vmatprep.subr.mxu0 0.0
    %3200 = vmatpush1.msra.mxu0 %v3175
    %3201 = vmatprep.subr.mxu0 0.0
    %3202 = vmatpush1.msra.mxu0 %v3176
    %3203 = vmatprep.subr.mxu0 0.0
    %3204 = vmatpush1.msra.mxu0 %v3177
    %3205 = vmatprep.subr.mxu0 0.0
    %3206 = vmatpush1.msra.mxu0 %v3178
    %3207 = vmatprep.subr.mxu0 0.0
    %3208 = vmatpush1.msra.mxu0 %v3179
    %3209 = vmatprep.subr.mxu0 0.0
    %3210 = vmatpush1.msra.mxu0 %v3180
    %3211 = vmatprep.subr.mxu0 0.0
    %3212 = vmatpush1.msra.mxu0 %v3181
    %3213 = vmatprep.subr.mxu0 0.0
    %3214 = vmatpush1.msra.mxu0 %v3182
    %3215 = vmatprep.subr.mxu0 0.0
    %3216 = vmatpush1.msra.mxu0 %v3183
    %3217 = vmatprep.subr.mxu0 0.0
    %3218 = vmatpush1.msra.mxu0 %v3184
    %3219 = vmatprep.subr.mxu0 0.0
    %3220 = vmatpush1.msra.mxu0 %v3185
    %3221 = vmatprep.subr.mxu0 0.0
    %3222 = vmatpush1.msra.mxu0 %v3186
    %3223 = vmatprep.subr.mxu0 0.0
    %3224 = vmatpush1.msra.mxu0 %v3187
    %3225 = vmatprep.subr.mxu0 0.0
    %3226 = vmatpush1.msra.mxu0 %v3188
    %3227 = vmatprep.subr.mxu0 0.0
    %3228 = vmatpush1.msra.mxu0 %v3189
    %3229 = vmatprep.subr.mxu0 0.0
    %3230 = vmatpush1.msra.mxu0 %v3190
    %3231 = vmatprep.subr.mxu0 0.0
    %3232 = vmatpush1.msra.mxu0 0.0
    %3233 = vmatprep.subr.mxu0 0.0
    %3234 = vmatpush1.msra.mxu0 0.0
    %3235 = vmatprep.subr.mxu0 0.0
    %3236 = vmatpush1.msra.mxu0 0.0
    %3237 = vmatprep.subr.mxu0 0.0
    %3238 = vmatpush1.msra.mxu0 0.0
    %3239 = vmatprep.subr.mxu0 0.0
    %3240 = vmatpush1.msra.mxu0 0.0
    %3241 = vmatprep.subr.mxu0 0.0
    %3242 = vmatpush1.msra.mxu0 0.0
    %3243 = vmatprep.subr.mxu0 0.0
    %3244 = vmatpush1.msra.mxu0 0.0
    %3245 = vmatprep.subr.mxu0 0.0
    %3246 = vmatpush1.msra.mxu0 0.0
    %3247 = vmatprep.subr.mxu0 0.0
    %3248 = vmatpush1.msra.mxu0 0.0
    %3249 = vmatprep.subr.mxu0 0.0
    %3250 = vmatpush1.msra.mxu0 0.0
    %3251 = vmatprep.subr.mxu0 0.0
    %3252 = vmatpush1.msra.mxu0 0.0
    %3253 = vmatprep.subr.mxu0 0.0
    %3254 = vmatpush1.msra.mxu0 0.0
    %3255 = vmatprep.subr.mxu0 0.0
    %3256 = vmatpush1.msra.mxu0 0.0
    %3257 = vmatprep.subr.mxu0 0.0
    %3258 = vmatpush1.msra.mxu0 0.0
    %3259 = vmatprep.subr.mxu0 0.0
    %3260 = vmatpush1.msra.mxu0 0.0
    %3261 = vmatprep.subr.mxu0 0.0
    %3262 = vmatpush1.msra.mxu0 0.0
    %3263 = vmatprep.mubr.f32.mxu0 0.0
    %3264 = vmatmul.mubr.f32.gmra.mrb[0].mxu0 %v3173
    %v3265 = vpop.f32.mrb[0].mxu0
    %v3266 = vadd.f32 %v3197, %v3265
    %v3267 = vpop.f32.mrb[0].mxu0
    %3268 = vdwg.mxu0
    %vm3269 = vcmp.ge.f32.partialorder %v3266, 0.0
    %v3270 = vmul.f32 %v3266, 0.01
    %v3271 = vsel %vm3269, %v3266, %v3270
    %v3272 = vrot.slane %v3271, 4
    %v3273 = vadd.f32 %v3271, %v3272
    %v3274 = vrot.slane %v3273, 2
    %v3275 = vadd.f32 %v3273, %v3274
    %v3276 = vrot.slane %v3275, 1
    %v3277 = vadd.f32 %v3275, %v3276
    %v3278 = vmul.f32 %v3277, %v277
    %v3279 = vsub.f32 %v3271, %v3278
    %v3280 = vmul.f32 %v3279, %v3279
    %v3281 = vrot.slane %v3280, 4
    %v3282 = vadd.f32 %v3280, %v3281
    %v3283 = vrot.slane %v3282, 2
    %v3284 = vadd.f32 %v3282, %v3283
    %v3285 = vrot.slane %v3284, 1
    %v3286 = vadd.f32 %v3284, %v3285
    %v3287 = vmul.f32 %v3286, %v277
    %v3288 = vadd.f32 %v3287, 1e-05
    %v3289 = vrsqrt.pop %v3288
    %v3290 = vmul.f32 %v3279, %v3289
    %s3291 = scalar_lea.vmem [#allocation7], 24
    %v3292 = vld [vmem:[%s3291] sm:$0x1]
    %v3294 = vlaneseq
    %v3295 = vshrl.u32 %v3294, 7
    %v3296 = vsub.s32 0, %v3295
    %v3297 = vrot.slane %v3292, %v3296
    %v3299 = vmul.f32 %v3290, %v3297
    %s3300 = scalar_lea.vmem [#allocation8], 24
    %v3301 = vld [vmem:[%s3300] sm:$0x1]
    %v3303 = vlaneseq
    %v3304 = vshrl.u32 %v3303, 7
    %v3305 = vsub.s32 0, %v3304
    %v3306 = vrot.slane %v3301, %v3305
    %v3308 = vadd.f32 %v3299, %v3306
    %v3309 = vadd.f32 %v3308, %v2903
    %s3310 = scalar_lea.vmem [#allocation2], 3200
    %v3311 = vld [vmem:[%s3310] sm:$0xff]
    %v3312 = vld [vmem:[%s3310 + $0x8] sm:$0xff]
    %v3313 = vld [vmem:[%s3310 + $0x10] sm:$0xff]
    %v3314 = vld [vmem:[%s3310 + $0x18] sm:$0xff]
    %v3315 = vld [vmem:[%s3310 + $0x20] sm:$0xff]
    %v3316 = vld [vmem:[%s3310 + $0x28] sm:$0xff]
    %v3317 = vld [vmem:[%s3310 + $0x30] sm:$0xff]
    %v3318 = vld [vmem:[%s3310 + $0x38] sm:$0xff]
    %v3319 = vld [vmem:[%s3310 + $0x40] sm:$0xff]
    %v3320 = vld [vmem:[%s3310 + $0x48] sm:$0xff]
    %v3321 = vld [vmem:[%s3310 + $0x50] sm:$0xff]
    %v3322 = vld [vmem:[%s3310 + $0x58] sm:$0xff]
    %v3323 = vld [vmem:[%s3310 + $0x60] sm:$0xff]
    %v3324 = vld [vmem:[%s3310 + $0x68] sm:$0xff]
    %v3325 = vld [vmem:[%s3310 + $0x70] sm:$0xff]
    %v3326 = vld [vmem:[%s3310 + $0x78] sm:$0xff]
    %s3327 = scalar_lea.vmem [#allocation5], 25
    %v3328 = vld [vmem:[%s3327] sm:$0x1]
    %v3330 = vlaneseq
    %v3331 = vshrl.u32 %v3330, 7
    %v3332 = vsub.s32 0, %v3331
    %v3333 = vrot.slane %v3328, %v3332
    %3335 = vmatprep.subr.mxu0 0.0
    %3336 = vmatpush1.msra.mxu0 %v3311
    %3337 = vmatprep.subr.mxu0 0.0
    %3338 = vmatpush1.msra.mxu0 %v3312
    %3339 = vmatprep.subr.mxu0 0.0
    %3340 = vmatpush1.msra.mxu0 %v3313
    %3341 = vmatprep.subr.mxu0 0.0
    %3342 = vmatpush1.msra.mxu0 %v3314
    %3343 = vmatprep.subr.mxu0 0.0
    %3344 = vmatpush1.msra.mxu0 %v3315
    %3345 = vmatprep.subr.mxu0 0.0
    %3346 = vmatpush1.msra.mxu0 %v3316
    %3347 = vmatprep.subr.mxu0 0.0
    %3348 = vmatpush1.msra.mxu0 %v3317
    %3349 = vmatprep.subr.mxu0 0.0
    %3350 = vmatpush1.msra.mxu0 %v3318
    %3351 = vmatprep.subr.mxu0 0.0
    %3352 = vmatpush1.msra.mxu0 %v3319
    %3353 = vmatprep.subr.mxu0 0.0
    %3354 = vmatpush1.msra.mxu0 %v3320
    %3355 = vmatprep.subr.mxu0 0.0
    %3356 = vmatpush1.msra.mxu0 %v3321
    %3357 = vmatprep.subr.mxu0 0.0
    %3358 = vmatpush1.msra.mxu0 %v3322
    %3359 = vmatprep.subr.mxu0 0.0
    %3360 = vmatpush1.msra.mxu0 %v3323
    %3361 = vmatprep.subr.mxu0 0.0
    %3362 = vmatpush1.msra.mxu0 %v3324
    %3363 = vmatprep.subr.mxu0 0.0
    %3364 = vmatpush1.msra.mxu0 %v3325
    %3365 = vmatprep.subr.mxu0 0.0
    %3366 = vmatpush1.msra.mxu0 %v3326
    %3367 = vmatprep.subr.mxu0 0.0
    %3368 = vmatpush1.msra.mxu0 0.0
    %3369 = vmatprep.subr.mxu0 0.0
    %3370 = vmatpush1.msra.mxu0 0.0
    %3371 = vmatprep.subr.mxu0 0.0
    %3372 = vmatpush1.msra.mxu0 0.0
    %3373 = vmatprep.subr.mxu0 0.0
    %3374 = vmatpush1.msra.mxu0 0.0
    %3375 = vmatprep.subr.mxu0 0.0
    %3376 = vmatpush1.msra.mxu0 0.0
    %3377 = vmatprep.subr.mxu0 0.0
    %3378 = vmatpush1.msra.mxu0 0.0
    %3379 = vmatprep.subr.mxu0 0.0
    %3380 = vmatpush1.msra.mxu0 0.0
    %3381 = vmatprep.subr.mxu0 0.0
    %3382 = vmatpush1.msra.mxu0 0.0
    %3383 = vmatprep.subr.mxu0 0.0
    %3384 = vmatpush1.msra.mxu0 0.0
    %3385 = vmatprep.subr.mxu0 0.0
    %3386 = vmatpush1.msra.mxu0 0.0
    %3387 = vmatprep.subr.mxu0 0.0
    %3388 = vmatpush1.msra.mxu0 0.0
    %3389 = vmatprep.subr.mxu0 0.0
    %3390 = vmatpush1.msra.mxu0 0.0
    %3391 = vmatprep.subr.mxu0 0.0
    %3392 = vmatpush1.msra.mxu0 0.0
    %3393 = vmatprep.subr.mxu0 0.0
    %3394 = vmatpush1.msra.mxu0 0.0
    %3395 = vmatprep.subr.mxu0 0.0
    %3396 = vmatpush1.msra.mxu0 0.0
    %3397 = vmatprep.subr.mxu0 0.0
    %3398 = vmatpush1.msra.mxu0 0.0
    %3399 = vmatprep.mubr.f32.mxu0 0.0
    %3400 = vmatmul.mubr.f32.gmra.mrb[0].mxu0 %v3309
    %v3401 = vpop.f32.mrb[0].mxu0
    %v3402 = vadd.f32 %v3333, %v3401
    %v3403 = vpop.f32.mrb[0].mxu0
    %3404 = vdwg.mxu0
    %vm3405 = vcmp.ge.f32.partialorder %v3402, 0.0
    %v3406 = vmul.f32 %v3402, 0.01
    %v3407 = vsel %vm3405, %v3402, %v3406
    %v3408 = vrot.slane %v3407, 4
    %v3409 = vadd.f32 %v3407, %v3408
    %v3410 = vrot.slane %v3409, 2
    %v3411 = vadd.f32 %v3409, %v3410
    %v3412 = vrot.slane %v3411, 1
    %v3413 = vadd.f32 %v3411, %v3412
    %v3414 = vmul.f32 %v3413, %v277
    %v3415 = vsub.f32 %v3407, %v3414
    %v3416 = vmul.f32 %v3415, %v3415
    %v3417 = vrot.slane %v3416, 4
    %v3418 = vadd.f32 %v3416, %v3417
    %v3419 = vrot.slane %v3418, 2
    %v3420 = vadd.f32 %v3418, %v3419
    %v3421 = vrot.slane %v3420, 1
    %v3422 = vadd.f32 %v3420, %v3421
    %v3423 = vmul.f32 %v3422, %v277
    %v3424 = vadd.f32 %v3423, 1e-05
    %v3425 = vrsqrt.pop %v3424
    %v3426 = vmul.f32 %v3415, %v3425
    %s3427 = scalar_lea.vmem [#allocation7], 25
    %v3428 = vld [vmem:[%s3427] sm:$0x1]
    %v3430 = vlaneseq
    %v3431 = vshrl.u32 %v3430, 7
    %v3432 = vsub.s32 0, %v3431
    %v3433 = vrot.slane %v3428, %v3432
    %v3435 = vmul.f32 %v3426, %v3433
    %s3436 = scalar_lea.vmem [#allocation8], 25
    %v3437 = vld [vmem:[%s3436] sm:$0x1]
    %v3439 = vlaneseq
    %v3440 = vshrl.u32 %v3439, 7
    %v3441 = vsub.s32 0, %v3440
    %v3442 = vrot.slane %v3437, %v3441
    %v3444 = vadd.f32 %v3435, %v3442
    %s3445 = scalar_lea.vmem [#allocation2], 3328
    %v3446 = vld [vmem:[%s3445] sm:$0xff]
    %v3447 = vld [vmem:[%s3445 + $0x8] sm:$0xff]
    %v3448 = vld [vmem:[%s3445 + $0x10] sm:$0xff]
    %v3449 = vld [vmem:[%s3445 + $0x18] sm:$0xff]
    %v3450 = vld [vmem:[%s3445 + $0x20] sm:$0xff]
    %v3451 = vld [vmem:[%s3445 + $0x28] sm:$0xff]
    %v3452 = vld [vmem:[%s3445 + $0x30] sm:$0xff]
    %v3453 = vld [vmem:[%s3445 + $0x38] sm:$0xff]
    %v3454 = vld [vmem:[%s3445 + $0x40] sm:$0xff]
    %v3455 = vld [vmem:[%s3445 + $0x48] sm:$0xff]
    %v3456 = vld [vmem:[%s3445 + $0x50] sm:$0xff]
    %v3457 = vld [vmem:[%s3445 + $0x58] sm:$0xff]
    %v3458 = vld [vmem:[%s3445 + $0x60] sm:$0xff]
    %v3459 = vld [vmem:[%s3445 + $0x68] sm:$0xff]
    %v3460 = vld [vmem:[%s3445 + $0x70] sm:$0xff]
    %v3461 = vld [vmem:[%s3445 + $0x78] sm:$0xff]
    %s3462 = scalar_lea.vmem [#allocation5], 26
    %v3463 = vld [vmem:[%s3462] sm:$0x1]
    %v3465 = vlaneseq
    %v3466 = vshrl.u32 %v3465, 7
    %v3467 = vsub.s32 0, %v3466
    %v3468 = vrot.slane %v3463, %v3467
    %3470 = vmatprep.subr.mxu0 0.0
    %3471 = vmatpush1.msra.mxu0 %v3446
    %3472 = vmatprep.subr.mxu0 0.0
    %3473 = vmatpush1.msra.mxu0 %v3447
    %3474 = vmatprep.subr.mxu0 0.0
    %3475 = vmatpush1.msra.mxu0 %v3448
    %3476 = vmatprep.subr.mxu0 0.0
    %3477 = vmatpush1.msra.mxu0 %v3449
    %3478 = vmatprep.subr.mxu0 0.0
    %3479 = vmatpush1.msra.mxu0 %v3450
    %3480 = vmatprep.subr.mxu0 0.0
    %3481 = vmatpush1.msra.mxu0 %v3451
    %3482 = vmatprep.subr.mxu0 0.0
    %3483 = vmatpush1.msra.mxu0 %v3452
    %3484 = vmatprep.subr.mxu0 0.0
    %3485 = vmatpush1.msra.mxu0 %v3453
    %3486 = vmatprep.subr.mxu0 0.0
    %3487 = vmatpush1.msra.mxu0 %v3454
    %3488 = vmatprep.subr.mxu0 0.0
    %3489 = vmatpush1.msra.mxu0 %v3455
    %3490 = vmatprep.subr.mxu0 0.0
    %3491 = vmatpush1.msra.mxu0 %v3456
    %3492 = vmatprep.subr.mxu0 0.0
    %3493 = vmatpush1.msra.mxu0 %v3457
    %3494 = vmatprep.subr.mxu0 0.0
    %3495 = vmatpush1.msra.mxu0 %v3458
    %3496 = vmatprep.subr.mxu0 0.0
    %3497 = vmatpush1.msra.mxu0 %v3459
    %3498 = vmatprep.subr.mxu0 0.0
    %3499 = vmatpush1.msra.mxu0 %v3460
    %3500 = vmatprep.subr.mxu0 0.0
    %3501 = vmatpush1.msra.mxu0 %v3461
    %3502 = vmatprep.subr.mxu0 0.0
    %3503 = vmatpush1.msra.mxu0 0.0
    %3504 = vmatprep.subr.mxu0 0.0
    %3505 = vmatpush1.msra.mxu0 0.0
    %3506 = vmatprep.subr.mxu0 0.0
    %3507 = vmatpush1.msra.mxu0 0.0
    %3508 = vmatprep.subr.mxu0 0.0
    %3509 = vmatpush1.msra.mxu0 0.0
    %3510 = vmatprep.subr.mxu0 0.0
    %3511 = vmatpush1.msra.mxu0 0.0
    %3512 = vmatprep.subr.mxu0 0.0
    %3513 = vmatpush1.msra.mxu0 0.0
    %3514 = vmatprep.subr.mxu0 0.0
    %3515 = vmatpush1.msra.mxu0 0.0
    %3516 = vmatprep.subr.mxu0 0.0
    %3517 = vmatpush1.msra.mxu0 0.0
    %3518 = vmatprep.subr.mxu0 0.0
    %3519 = vmatpush1.msra.mxu0 0.0
    %3520 = vmatprep.subr.mxu0 0.0
    %3521 = vmatpush1.msra.mxu0 0.0
    %3522 = vmatprep.subr.mxu0 0.0
    %3523 = vmatpush1.msra.mxu0 0.0
    %3524 = vmatprep.subr.mxu0 0.0
    %3525 = vmatpush1.msra.mxu0 0.0
    %3526 = vmatprep.subr.mxu0 0.0
    %3527 = vmatpush1.msra.mxu0 0.0
    %3528 = vmatprep.subr.mxu0 0.0
    %3529 = vmatpush1.msra.mxu0 0.0
    %3530 = vmatprep.subr.mxu0 0.0
    %3531 = vmatpush1.msra.mxu0 0.0
    %3532 = vmatprep.subr.mxu0 0.0
    %3533 = vmatpush1.msra.mxu0 0.0
    %3534 = vmatprep.mubr.f32.mxu0 0.0
    %3535 = vmatmul.mubr.f32.gmra.mrb[0].mxu0 %v3444
    %v3536 = vpop.f32.mrb[0].mxu0
    %v3537 = vadd.f32 %v3468, %v3536
    %v3538 = vpop.f32.mrb[0].mxu0
    %3539 = vdwg.mxu0
    %vm3540 = vcmp.ge.f32.partialorder %v3537, 0.0
    %v3541 = vmul.f32 %v3537, 0.01
    %v3542 = vsel %vm3540, %v3537, %v3541
    %v3543 = vrot.slane %v3542, 4
    %v3544 = vadd.f32 %v3542, %v3543
    %v3545 = vrot.slane %v3544, 2
    %v3546 = vadd.f32 %v3544, %v3545
    %v3547 = vrot.slane %v3546, 1
    %v3548 = vadd.f32 %v3546, %v3547
    %v3549 = vmul.f32 %v3548, %v277
    %v3550 = vsub.f32 %v3542, %v3549
    %v3551 = vmul.f32 %v3550, %v3550
    %v3552 = vrot.slane %v3551, 4
    %v3553 = vadd.f32 %v3551, %v3552
    %v3554 = vrot.slane %v3553, 2
    %v3555 = vadd.f32 %v3553, %v3554
    %v3556 = vrot.slane %v3555, 1
    %v3557 = vadd.f32 %v3555, %v3556
    %v3558 = vmul.f32 %v3557, %v277
    %v3559 = vadd.f32 %v3558, 1e-05
    %v3560 = vrsqrt.pop %v3559
    %v3561 = vmul.f32 %v3550, %v3560
    %s3562 = scalar_lea.vmem [#allocation7], 26
    %v3563 = vld [vmem:[%s3562] sm:$0x1]
    %v3565 = vlaneseq
    %v3566 = vshrl.u32 %v3565, 7
    %v3567 = vsub.s32 0, %v3566
    %v3568 = vrot.slane %v3563, %v3567
    %v3570 = vmul.f32 %v3561, %v3568
    %s3571 = scalar_lea.vmem [#allocation8], 26
    %v3572 = vld [vmem:[%s3571] sm:$0x1]
    %v3574 = vlaneseq
    %v3575 = vshrl.u32 %v3574, 7
    %v3576 = vsub.s32 0, %v3575
    %v3577 = vrot.slane %v3572, %v3576
    %v3579 = vadd.f32 %v3570, %v3577
    %s3580 = scalar_lea.vmem [#allocation2], 3456
    %v3581 = vld [vmem:[%s3580] sm:$0xff]
    %v3582 = vld [vmem:[%s3580 + $0x8] sm:$0xff]
    %v3583 = vld [vmem:[%s3580 + $0x10] sm:$0xff]
    %v3584 = vld [vmem:[%s3580 + $0x18] sm:$0xff]
    %v3585 = vld [vmem:[%s3580 + $0x20] sm:$0xff]
    %v3586 = vld [vmem:[%s3580 + $0x28] sm:$0xff]
    %v3587 = vld [vmem:[%s3580 + $0x30] sm:$0xff]
    %v3588 = vld [vmem:[%s3580 + $0x38] sm:$0xff]
    %v3589 = vld [vmem:[%s3580 + $0x40] sm:$0xff]
    %v3590 = vld [vmem:[%s3580 + $0x48] sm:$0xff]
    %v3591 = vld [vmem:[%s3580 + $0x50] sm:$0xff]
    %v3592 = vld [vmem:[%s3580 + $0x58] sm:$0xff]
    %v3593 = vld [vmem:[%s3580 + $0x60] sm:$0xff]
    %v3594 = vld [vmem:[%s3580 + $0x68] sm:$0xff]
    %v3595 = vld [vmem:[%s3580 + $0x70] sm:$0xff]
    %v3596 = vld [vmem:[%s3580 + $0x78] sm:$0xff]
    %s3597 = scalar_lea.vmem [#allocation5], 27
    %v3598 = vld [vmem:[%s3597] sm:$0x1]
    %v3600 = vlaneseq
    %v3601 = vshrl.u32 %v3600, 7
    %v3602 = vsub.s32 0, %v3601
    %v3603 = vrot.slane %v3598, %v3602
    %3605 = vmatprep.subr.mxu0 0.0
    %3606 = vmatpush1.msra.mxu0 %v3581
    %3607 = vmatprep.subr.mxu0 0.0
    %3608 = vmatpush1.msra.mxu0 %v3582
    %3609 = vmatprep.subr.mxu0 0.0
    %3610 = vmatpush1.msra.mxu0 %v3583
    %3611 = vmatprep.subr.mxu0 0.0
    %3612 = vmatpush1.msra.mxu0 %v3584
    %3613 = vmatprep.subr.mxu0 0.0
    %3614 = vmatpush1.msra.mxu0 %v3585
    %3615 = vmatprep.subr.mxu0 0.0
    %3616 = vmatpush1.msra.mxu0 %v3586
    %3617 = vmatprep.subr.mxu0 0.0
    %3618 = vmatpush1.msra.mxu0 %v3587
    %3619 = vmatprep.subr.mxu0 0.0
    %3620 = vmatpush1.msra.mxu0 %v3588
    %3621 = vmatprep.subr.mxu0 0.0
    %3622 = vmatpush1.msra.mxu0 %v3589
    %3623 = vmatprep.subr.mxu0 0.0
    %3624 = vmatpush1.msra.mxu0 %v3590
    %3625 = vmatprep.subr.mxu0 0.0
    %3626 = vmatpush1.msra.mxu0 %v3591
    %3627 = vmatprep.subr.mxu0 0.0
    %3628 = vmatpush1.msra.mxu0 %v3592
    %3629 = vmatprep.subr.mxu0 0.0
    %3630 = vmatpush1.msra.mxu0 %v3593
    %3631 = vmatprep.subr.mxu0 0.0
    %3632 = vmatpush1.msra.mxu0 %v3594
    %3633 = vmatprep.subr.mxu0 0.0
    %3634 = vmatpush1.msra.mxu0 %v3595
    %3635 = vmatprep.subr.mxu0 0.0
    %3636 = vmatpush1.msra.mxu0 %v3596
    %3637 = vmatprep.subr.mxu0 0.0
    %3638 = vmatpush1.msra.mxu0 0.0
    %3639 = vmatprep.subr.mxu0 0.0
    %3640 = vmatpush1.msra.mxu0 0.0
    %3641 = vmatprep.subr.mxu0 0.0
    %3642 = vmatpush1.msra.mxu0 0.0
    %3643 = vmatprep.subr.mxu0 0.0
    %3644 = vmatpush1.msra.mxu0 0.0
    %3645 = vmatprep.subr.mxu0 0.0
    %3646 = vmatpush1.msra.mxu0 0.0
    %3647 = vmatprep.subr.mxu0 0.0
    %3648 = vmatpush1.msra.mxu0 0.0
    %3649 = vmatprep.subr.mxu0 0.0
    %3650 = vmatpush1.msra.mxu0 0.0
    %3651 = vmatprep.subr.mxu0 0.0
    %3652 = vmatpush1.msra.mxu0 0.0
    %3653 = vmatprep.subr.mxu0 0.0
    %3654 = vmatpush1.msra.mxu0 0.0
    %3655 = vmatprep.subr.mxu0 0.0
    %3656 = vmatpush1.msra.mxu0 0.0
    %3657 = vmatprep.subr.mxu0 0.0
    %3658 = vmatpush1.msra.mxu0 0.0
    %3659 = vmatprep.subr.mxu0 0.0
    %3660 = vmatpush1.msra.mxu0 0.0
    %3661 = vmatprep.subr.mxu0 0.0
    %3662 = vmatpush1.msra.mxu0 0.0
    %3663 = vmatprep.subr.mxu0 0.0
    %3664 = vmatpush1.msra.mxu0 0.0
    %3665 = vmatprep.subr.mxu0 0.0
    %3666 = vmatpush1.msra.mxu0 0.0
    %3667 = vmatprep.subr.mxu0 0.0
    %3668 = vmatpush1.msra.mxu0 0.0
    %3669 = vmatprep.mubr.f32.mxu0 0.0
    %3670 = vmatmul.mubr.f32.gmra.mrb[0].mxu0 %v3579
    %v3671 = vpop.f32.mrb[0].mxu0
    %v3672 = vadd.f32 %v3603, %v3671
    %v3673 = vpop.f32.mrb[0].mxu0
    %3674 = vdwg.mxu0
    %vm3675 = vcmp.ge.f32.partialorder %v3672, 0.0
    %v3676 = vmul.f32 %v3672, 0.01
    %v3677 = vsel %vm3675, %v3672, %v3676
    %v3678 = vrot.slane %v3677, 4
    %v3679 = vadd.f32 %v3677, %v3678
    %v3680 = vrot.slane %v3679, 2
    %v3681 = vadd.f32 %v3679, %v3680
    %v3682 = vrot.slane %v3681, 1
    %v3683 = vadd.f32 %v3681, %v3682
    %v3684 = vmul.f32 %v3683, %v277
    %v3685 = vsub.f32 %v3677, %v3684
    %v3686 = vmul.f32 %v3685, %v3685
    %v3687 = vrot.slane %v3686, 4
    %v3688 = vadd.f32 %v3686, %v3687
    %v3689 = vrot.slane %v3688, 2
    %v3690 = vadd.f32 %v3688, %v3689
    %v3691 = vrot.slane %v3690, 1
    %v3692 = vadd.f32 %v3690, %v3691
    %v3693 = vmul.f32 %v3692, %v277
    %v3694 = vadd.f32 %v3693, 1e-05
    %v3695 = vrsqrt.pop %v3694
    %v3696 = vmul.f32 %v3685, %v3695
    %s3697 = scalar_lea.vmem [#allocation7], 27
    %v3698 = vld [vmem:[%s3697] sm:$0x1]
    %v3700 = vlaneseq
    %v3701 = vshrl.u32 %v3700, 7
    %v3702 = vsub.s32 0, %v3701
    %v3703 = vrot.slane %v3698, %v3702
    %v3705 = vmul.f32 %v3696, %v3703
    %s3706 = scalar_lea.vmem [#allocation8], 27
    %v3707 = vld [vmem:[%s3706] sm:$0x1]
    %v3709 = vlaneseq
    %v3710 = vshrl.u32 %v3709, 7
    %v3711 = vsub.s32 0, %v3710
    %v3712 = vrot.slane %v3707, %v3711
    %v3714 = vadd.f32 %v3705, %v3712
    %v3715 = vadd.f32 %v3714, %v3309
    %v3716 = vlaneseq
    %v3717 = vshrl.u32 %v3716, 7
    %v3718 = vadd.s32 %v3717, 8
    %v3719 = vadd.s32 %v3717, 16
    %v3720 = vadd.s32 %v3717, 24
    %v3721 = vadd.s32 %v3717, 32
    %v3722 = vadd.s32 %v3717, 40
    %v3723 = vadd.s32 %v3717, 48
    %v3724 = vadd.s32 %v3717, 56
    %v3725 = vadd.s32 %v3717, 64
    %v3726 = vadd.s32 %v3717, 72
    %v3727 = vadd.s32 %v3717, 80
    %v3728 = vadd.s32 %v3717, 88
    %v3729 = vadd.s32 %v3717, 96
    %v3730 = vadd.s32 %v3717, 104
    %v3731 = vadd.s32 %v3717, 112
    %v3732 = vadd.s32 %v3717, 120
    %v3733 = vlaneseq
    %v3734 = vand.u32 %v3733, 127
    %v3735 = vadd.s32 %v3718, 16
    %v3736 = vadd.s32 %v3719, 16
    %v3737 = vadd.s32 %v3720, 16
    %v3738 = vadd.s32 %v3721, 16
    %v3739 = vadd.s32 %v3722, 16
    %v3740 = vadd.s32 %v3723, 16
    %v3741 = vadd.s32 %v3724, 16
    %v3742 = vadd.s32 %v3725, 16
    %v3743 = vadd.s32 %v3726, 16
    %v3744 = vadd.s32 %v3727, 16
    %v3745 = vadd.s32 %v3728, 16
    %v3746 = vadd.s32 %v3729, 16
    %v3747 = vadd.s32 %v3730, 16
    %v3748 = vadd.s32 %v3731, 16
    %v3749 = vadd.s32 %v3732, 16
    %vm3750 = vcmp.eq.s32.totalorder %v3734, %v3719
    %vm3751 = vcmp.eq.s32.totalorder %v3734, %v3735
    %vm3752 = vcmp.eq.s32.totalorder %v3734, %v3736
    %vm3753 = vcmp.eq.s32.totalorder %v3734, %v3737
    %vm3754 = vcmp.eq.s32.totalorder %v3734, %v3738
    %vm3755 = vcmp.eq.s32.totalorder %v3734, %v3739
    %vm3756 = vcmp.eq.s32.totalorder %v3734, %v3740
    %vm3757 = vcmp.eq.s32.totalorder %v3734, %v3741
    %vm3758 = vcmp.eq.s32.totalorder %v3734, %v3742
    %vm3759 = vcmp.eq.s32.totalorder %v3734, %v3743
    %vm3760 = vcmp.eq.s32.totalorder %v3734, %v3744
    %vm3761 = vcmp.eq.s32.totalorder %v3734, %v3745
    %vm3762 = vcmp.eq.s32.totalorder %v3734, %v3746
    %vm3763 = vcmp.eq.s32.totalorder %v3734, %v3747
    %vm3764 = vcmp.eq.s32.totalorder %v3734, %v3748
    %vm3765 = vcmp.eq.s32.totalorder %v3734, %v3749
    %vm3766 = vcmp.lt.s32.totalorder %v3717, 16
    %vm3767 = vcmp.lt.s32.totalorder %v3718, 16
    %vm3768 = vcmp.lt.s32.totalorder %v3719, 16
    %vm3769 = vcmp.lt.s32.totalorder %v3720, 16
    %vm3770 = vcmp.lt.s32.totalorder %v3721, 16
    %vm3771 = vcmp.lt.s32.totalorder %v3722, 16
    %vm3772 = vcmp.lt.s32.totalorder %v3723, 16
    %vm3773 = vcmp.lt.s32.totalorder %v3724, 16
    %vm3774 = vcmp.lt.s32.totalorder %v3725, 16
    %vm3775 = vcmp.lt.s32.totalorder %v3726, 16
    %vm3776 = vcmp.lt.s32.totalorder %v3727, 16
    %vm3777 = vcmp.lt.s32.totalorder %v3728, 16
    %vm3778 = vcmp.lt.s32.totalorder %v3729, 16
    %vm3779 = vcmp.lt.s32.totalorder %v3730, 16
    %vm3780 = vcmp.lt.s32.totalorder %v3731, 16
    %vm3781 = vcmp.lt.s32.totalorder %v3732, 16
    %vm3782 = vmand %vm3750, %vm3766
    %vm3783 = vmand %vm3751, %vm3767
    %vm3784 = vmand %vm3752, %vm3768
    %vm3785 = vmand %vm3753, %vm3769
    %vm3786 = vmand %vm3754, %vm3770
    %vm3787 = vmand %vm3755, %vm3771
    %vm3788 = vmand %vm3756, %vm3772
    %vm3789 = vmand %vm3757, %vm3773
    %vm3790 = vmand %vm3758, %vm3774
    %vm3791 = vmand %vm3759, %vm3775
    %vm3792 = vmand %vm3760, %vm3776
    %vm3793 = vmand %vm3761, %vm3777
    %vm3794 = vmand %vm3762, %vm3778
    %vm3795 = vmand %vm3763, %vm3779
    %vm3796 = vmand %vm3764, %vm3780
    %vm3797 = vmand %vm3765, %vm3781
    %v3798 = vsel %vm3782, 1.0, 0.0
    %v3799 = vsel %vm3783, 1.0, 0.0
    %v3800 = vsel %vm3784, 1.0, 0.0
    %v3801 = vsel %vm3785, 1.0, 0.0
    %v3802 = vsel %vm3786, 1.0, 0.0
    %v3803 = vsel %vm3787, 1.0, 0.0
    %v3804 = vsel %vm3788, 1.0, 0.0
    %v3805 = vsel %vm3789, 1.0, 0.0
    %v3806 = vsel %vm3790, 1.0, 0.0
    %v3807 = vsel %vm3791, 1.0, 0.0
    %v3808 = vsel %vm3792, 1.0, 0.0
    %v3809 = vsel %vm3793, 1.0, 0.0
    %v3810 = vsel %vm3794, 1.0, 0.0
    %v3811 = vsel %vm3795, 1.0, 0.0
    %v3812 = vsel %vm3796, 1.0, 0.0
    %v3813 = vsel %vm3797, 1.0, 0.0
    %3814 = vmatprep.subr.mxu0 0.0
    %3815 = vmatpush1.msra.mxu0 %v3798
    %3816 = vmatprep.subr.mxu0 0.0
    %3817 = vmatpush1.msra.mxu0 %v3799
    %3818 = vmatprep.subr.mxu0 0.0
    %3819 = vmatpush1.msra.mxu0 %v3800
    %3820 = vmatprep.subr.mxu0 0.0
    %3821 = vmatpush1.msra.mxu0 %v3801
    %3822 = vmatprep.subr.mxu0 0.0
    %3823 = vmatpush1.msra.mxu0 %v3802
    %3824 = vmatprep.subr.mxu0 0.0
    %3825 = vmatpush1.msra.mxu0 %v3803
    %3826 = vmatprep.subr.mxu0 0.0
    %3827 = vmatpush1.msra.mxu0 %v3804
    %3828 = vmatprep.subr.mxu0 0.0
    %3829 = vmatpush1.msra.mxu0 %v3805
    %3830 = vmatprep.subr.mxu0 0.0
    %3831 = vmatpush1.msra.mxu0 %v3806
    %3832 = vmatprep.subr.mxu0 0.0
    %3833 = vmatpush1.msra.mxu0 %v3807
    %3834 = vmatprep.subr.mxu0 0.0
    %3835 = vmatpush1.msra.mxu0 %v3808
    %3836 = vmatprep.subr.mxu0 0.0
    %3837 = vmatpush1.msra.mxu0 %v3809
    %3838 = vmatprep.subr.mxu0 0.0
    %3839 = vmatpush1.msra.mxu0 %v3810
    %3840 = vmatprep.subr.mxu0 0.0
    %3841 = vmatpush1.msra.mxu0 %v3811
    %3842 = vmatprep.subr.mxu0 0.0
    %3843 = vmatpush1.msra.mxu0 %v3812
    %3844 = vmatprep.subr.mxu0 0.0
    %3845 = vmatpush1.msra.mxu0 %v3813
    %3846 = vmatprep.subr.mxu0 0.0
    %3847 = vmatpush1.msra.mxu0 0.0
    %3848 = vmatprep.subr.mxu0 0.0
    %3849 = vmatpush1.msra.mxu0 0.0
    %3850 = vmatprep.subr.mxu0 0.0
    %3851 = vmatpush1.msra.mxu0 0.0
    %3852 = vmatprep.subr.mxu0 0.0
    %3853 = vmatpush1.msra.mxu0 0.0
    %3854 = vmatprep.subr.mxu0 0.0
    %3855 = vmatpush1.msra.mxu0 0.0
    %3856 = vmatprep.subr.mxu0 0.0
    %3857 = vmatpush1.msra.mxu0 0.0
    %3858 = vmatprep.subr.mxu0 0.0
    %3859 = vmatpush1.msra.mxu0 0.0
    %3860 = vmatprep.subr.mxu0 0.0
    %3861 = vmatpush1.msra.mxu0 0.0
    %3862 = vmatprep.subr.mxu0 0.0
    %3863 = vmatpush1.msra.mxu0 0.0
    %3864 = vmatprep.subr.mxu0 0.0
    %3865 = vmatpush1.msra.mxu0 0.0
    %3866 = vmatprep.subr.mxu0 0.0
    %3867 = vmatpush1.msra.mxu0 0.0
    %3868 = vmatprep.subr.mxu0 0.0
    %3869 = vmatpush1.msra.mxu0 0.0
    %3870 = vmatprep.subr.mxu0 0.0
    %3871 = vmatpush1.msra.mxu0 0.0
    %3872 = vmatprep.subr.mxu0 0.0
    %3873 = vmatpush1.msra.mxu0 0.0
    %3874 = vmatprep.subr.mxu0 0.0
    %3875 = vmatpush1.msra.mxu0 0.0
    %3876 = vmatprep.subr.mxu0 0.0
    %3877 = vmatpush1.msra.mxu0 0.0
    %3878 = vmatprep.mubr.f32.mxu0 0.0
    %3879 = vmatmul.mubr.f32.gmra.mrb[0].mxu0 %v1895
    %v3880 = vpop.f32.mrb[0].mxu0
    %v3881 = vadd.f32 0.0, %v3880
    %v3882 = vpop.f32.mrb[0].mxu0
    %3883 = vdwg.mxu0
    %v3884 = vadd.f32 %v3715, %v3881
    %s3885 = scalar_lea.vmem [#allocation2], 3584
    %v3886 = vld [vmem:[%s3885] sm:$0xff]
    %v3887 = vld [vmem:[%s3885 + $0x8] sm:$0xff]
    %v3888 = vld [vmem:[%s3885 + $0x10] sm:$0xff]
    %v3889 = vld [vmem:[%s3885 + $0x18] sm:$0xff]
    %v3890 = vld [vmem:[%s3885 + $0x20] sm:$0xff]
    %v3891 = vld [vmem:[%s3885 + $0x28] sm:$0xff]
    %v3892 = vld [vmem:[%s3885 + $0x30] sm:$0xff]
    %v3893 = vld [vmem:[%s3885 + $0x38] sm:$0xff]
    %v3894 = vld [vmem:[%s3885 + $0x40] sm:$0xff]
    %v3895 = vld [vmem:[%s3885 + $0x48] sm:$0xff]
    %v3896 = vld [vmem:[%s3885 + $0x50] sm:$0xff]
    %v3897 = vld [vmem:[%s3885 + $0x58] sm:$0xff]
    %v3898 = vld [vmem:[%s3885 + $0x60] sm:$0xff]
    %v3899 = vld [vmem:[%s3885 + $0x68] sm:$0xff]
    %v3900 = vld [vmem:[%s3885 + $0x70] sm:$0xff]
    %v3901 = vld [vmem:[%s3885 + $0x78] sm:$0xff]
    %s3902 = scalar_lea.vmem [#allocation5], 28
    %v3903 = vld [vmem:[%s3902] sm:$0x1]
    %v3905 = vlaneseq
    %v3906 = vshrl.u32 %v3905, 7
    %v3907 = vsub.s32 0, %v3906
    %v3908 = vrot.slane %v3903, %v3907
    %3910 = vmatprep.subr.mxu0 0.0
    %3911 = vmatpush1.msra.mxu0 %v3886
    %3912 = vmatprep.subr.mxu0 0.0
    %3913 = vmatpush1.msra.mxu0 %v3887
    %3914 = vmatprep.subr.mxu0 0.0
    %3915 = vmatpush1.msra.mxu0 %v3888
    %3916 = vmatprep.subr.mxu0 0.0
    %3917 = vmatpush1.msra.mxu0 %v3889
    %3918 = vmatprep.subr.mxu0 0.0
    %3919 = vmatpush1.msra.mxu0 %v3890
    %3920 = vmatprep.subr.mxu0 0.0
    %3921 = vmatpush1.msra.mxu0 %v3891
    %3922 = vmatprep.subr.mxu0 0.0
    %3923 = vmatpush1.msra.mxu0 %v3892
    %3924 = vmatprep.subr.mxu0 0.0
    %3925 = vmatpush1.msra.mxu0 %v3893
    %3926 = vmatprep.subr.mxu0 0.0
    %3927 = vmatpush1.msra.mxu0 %v3894
    %3928 = vmatprep.subr.mxu0 0.0
    %3929 = vmatpush1.msra.mxu0 %v3895
    %3930 = vmatprep.subr.mxu0 0.0
    %3931 = vmatpush1.msra.mxu0 %v3896
    %3932 = vmatprep.subr.mxu0 0.0
    %3933 = vmatpush1.msra.mxu0 %v3897
    %3934 = vmatprep.subr.mxu0 0.0
    %3935 = vmatpush1.msra.mxu0 %v3898
    %3936 = vmatprep.subr.mxu0 0.0
    %3937 = vmatpush1.msra.mxu0 %v3899
    %3938 = vmatprep.subr.mxu0 0.0
    %3939 = vmatpush1.msra.mxu0 %v3900
    %3940 = vmatprep.subr.mxu0 0.0
    %3941 = vmatpush1.msra.mxu0 %v3901
    %3942 = vmatprep.subr.mxu0 0.0
    %3943 = vmatpush1.msra.mxu0 0.0
    %3944 = vmatprep.subr.mxu0 0.0
    %3945 = vmatpush1.msra.mxu0 0.0
    %3946 = vmatprep.subr.mxu0 0.0
    %3947 = vmatpush1.msra.mxu0 0.0
    %3948 = vmatprep.subr.mxu0 0.0
    %3949 = vmatpush1.msra.mxu0 0.0
    %3950 = vmatprep.subr.mxu0 0.0
    %3951 = vmatpush1.msra.mxu0 0.0
    %3952 = vmatprep.subr.mxu0 0.0
    %3953 = vmatpush1.msra.mxu0 0.0
    %3954 = vmatprep.subr.mxu0 0.0
    %3955 = vmatpush1.msra.mxu0 0.0
    %3956 = vmatprep.subr.mxu0 0.0
    %3957 = vmatpush1.msra.mxu0 0.0
    %3958 = vmatprep.subr.mxu0 0.0
    %3959 = vmatpush1.msra.mxu0 0.0
    %3960 = vmatprep.subr.mxu0 0.0
    %3961 = vmatpush1.msra.mxu0 0.0
    %3962 = vmatprep.subr.mxu0 0.0
    %3963 = vmatpush1.msra.mxu0 0.0
    %3964 = vmatprep.subr.mxu0 0.0
    %3965 = vmatpush1.msra.mxu0 0.0
    %3966 = vmatprep.subr.mxu0 0.0
    %3967 = vmatpush1.msra.mxu0 0.0
    %3968 = vmatprep.subr.mxu0 0.0
    %3969 = vmatpush1.msra.mxu0 0.0
    %3970 = vmatprep.subr.mxu0 0.0
    %3971 = vmatpush1.msra.mxu0 0.0
    %3972 = vmatprep.subr.mxu0 0.0
    %3973 = vmatpush1.msra.mxu0 0.0
    %3974 = vmatprep.mubr.f32.mxu0 0.0
    %3975 = vmatmul.mubr.f32.gmra.mrb[0].mxu0 %v3884
    %v3976 = vpop.f32.mrb[0].mxu0
    %v3977 = vadd.f32 %v3908, %v3976
    %v3978 = vpop.f32.mrb[0].mxu0
    %3979 = vdwg.mxu0
    %vm3980 = vcmp.ge.f32.partialorder %v3977, 0.0
    %v3981 = vmul.f32 %v3977, 0.01
    %v3982 = vsel %vm3980, %v3977, %v3981
    %s3983 = scalar_lea.vmem [#allocation2], 3712
    %v3984 = vld [vmem:[%s3983] sm:$0xff]
    %v3985 = vld [vmem:[%s3983 + $0x8] sm:$0xff]
    %v3986 = vld [vmem:[%s3983 + $0x10] sm:$0xff]
    %v3987 = vld [vmem:[%s3983 + $0x18] sm:$0xff]
    %v3988 = vld [vmem:[%s3983 + $0x20] sm:$0xff]
    %v3989 = vld [vmem:[%s3983 + $0x28] sm:$0xff]
    %v3990 = vld [vmem:[%s3983 + $0x30] sm:$0xff]
    %v3991 = vld [vmem:[%s3983 + $0x38] sm:$0xff]
    %v3992 = vld [vmem:[%s3983 + $0x40] sm:$0xff]
    %v3993 = vld [vmem:[%s3983 + $0x48] sm:$0xff]
    %v3994 = vld [vmem:[%s3983 + $0x50] sm:$0xff]
    %v3995 = vld [vmem:[%s3983 + $0x58] sm:$0xff]
    %v3996 = vld [vmem:[%s3983 + $0x60] sm:$0xff]
    %v3997 = vld [vmem:[%s3983 + $0x68] sm:$0xff]
    %v3998 = vld [vmem:[%s3983 + $0x70] sm:$0xff]
    %v3999 = vld [vmem:[%s3983 + $0x78] sm:$0xff]
    %s4000 = scalar_lea.vmem [#allocation5], 29
    %v4001 = vld [vmem:[%s4000] sm:$0x1]
    %v4003 = vlaneseq
    %v4004 = vshrl.u32 %v4003, 7
    %v4005 = vsub.s32 0, %v4004
    %v4006 = vrot.slane %v4001, %v4005
    %4008 = vmatprep.subr.mxu0 0.0
    %4009 = vmatpush1.msra.mxu0 %v3984
    %4010 = vmatprep.subr.mxu0 0.0
    %4011 = vmatpush1.msra.mxu0 %v3985
    %4012 = vmatprep.subr.mxu0 0.0
    %4013 = vmatpush1.msra.mxu0 %v3986
    %4014 = vmatprep.subr.mxu0 0.0
    %4015 = vmatpush1.msra.mxu0 %v3987
    %4016 = vmatprep.subr.mxu0 0.0
    %4017 = vmatpush1.msra.mxu0 %v3988
    %4018 = vmatprep.subr.mxu0 0.0
    %4019 = vmatpush1.msra.mxu0 %v3989
    %4020 = vmatprep.subr.mxu0 0.0
    %4021 = vmatpush1.msra.mxu0 %v3990
    %4022 = vmatprep.subr.mxu0 0.0
    %4023 = vmatpush1.msra.mxu0 %v3991
    %4024 = vmatprep.subr.mxu0 0.0
    %4025 = vmatpush1.msra.mxu0 %v3992
    %4026 = vmatprep.subr.mxu0 0.0
    %4027 = vmatpush1.msra.mxu0 %v3993
    %4028 = vmatprep.subr.mxu0 0.0
    %4029 = vmatpush1.msra.mxu0 %v3994
    %4030 = vmatprep.subr.mxu0 0.0
    %4031 = vmatpush1.msra.mxu0 %v3995
    %4032 = vmatprep.subr.mxu0 0.0
    %4033 = vmatpush1.msra.mxu0 %v3996
    %4034 = vmatprep.subr.mxu0 0.0
    %4035 = vmatpush1.msra.mxu0 %v3997
    %4036 = vmatprep.subr.mxu0 0.0
    %4037 = vmatpush1.msra.mxu0 %v3998
    %4038 = vmatprep.subr.mxu0 0.0
    %4039 = vmatpush1.msra.mxu0 %v3999
    %4040 = vmatprep.subr.mxu0 0.0
    %4041 = vmatpush1.msra.mxu0 0.0
    %4042 = vmatprep.subr.mxu0 0.0
    %4043 = vmatpush1.msra.mxu0 0.0
    %4044 = vmatprep.subr.mxu0 0.0
    %4045 = vmatpush1.msra.mxu0 0.0
    %4046 = vmatprep.subr.mxu0 0.0
    %4047 = vmatpush1.msra.mxu0 0.0
    %4048 = vmatprep.subr.mxu0 0.0
    %4049 = vmatpush1.msra.mxu0 0.0
    %4050 = vmatprep.subr.mxu0 0.0
    %4051 = vmatpush1.msra.mxu0 0.0
    %4052 = vmatprep.subr.mxu0 0.0
    %4053 = vmatpush1.msra.mxu0 0.0
    %4054 = vmatprep.subr.mxu0 0.0
    %4055 = vmatpush1.msra.mxu0 0.0
    %4056 = vmatprep.subr.mxu0 0.0
    %4057 = vmatpush1.msra.mxu0 0.0
    %4058 = vmatprep.subr.mxu0 0.0
    %4059 = vmatpush1.msra.mxu0 0.0
    %4060 = vmatprep.subr.mxu0 0.0
    %4061 = vmatpush1.msra.mxu0 0.0
    %4062 = vmatprep.subr.mxu0 0.0
    %4063 = vmatpush1.msra.mxu0 0.0
    %4064 = vmatprep.subr.mxu0 0.0
    %4065 = vmatpush1.msra.mxu0 0.0
    %4066 = vmatprep.subr.mxu0 0.0
    %4067 = vmatpush1.msra.mxu0 0.0
    %4068 = vmatprep.subr.mxu0 0.0
    %4069 = vmatpush1.msra.mxu0 0.0
    %4070 = vmatprep.subr.mxu0 0.0
    %4071 = vmatpush1.msra.mxu0 0.0
    %4072 = vmatprep.mubr.f32.mxu0 0.0
    %4073 = vmatmul.mubr.f32.gmra.mrb[0].mxu0 %v3982
    %v4074 = vpop.f32.mrb[0].mxu0
    %v4075 = vadd.f32 %v4006, %v4074
    %v4076 = vpop.f32.mrb[0].mxu0
    %4077 = vdwg.mxu0
    %vm4078 = vcmp.ge.f32.partialorder %v4075, 0.0
    %v4079 = vmul.f32 %v4075, 0.01
    %v4080 = vsel %vm4078, %v4075, %v4079
    %v4081 = vrot.slane %v4080, 4
    %v4082 = vadd.f32 %v4080, %v4081
    %v4083 = vrot.slane %v4082, 2
    %v4084 = vadd.f32 %v4082, %v4083
    %v4085 = vrot.slane %v4084, 1
    %v4086 = vadd.f32 %v4084, %v4085
    %v4087 = vmul.f32 %v4086, %v277
    %v4088 = vsub.f32 %v4080, %v4087
    %v4089 = vmul.f32 %v4088, %v4088
    %v4090 = vrot.slane %v4089, 4
    %v4091 = vadd.f32 %v4089, %v4090
    %v4092 = vrot.slane %v4091, 2
    %v4093 = vadd.f32 %v4091, %v4092
    %v4094 = vrot.slane %v4093, 1
    %v4095 = vadd.f32 %v4093, %v4094
    %v4096 = vmul.f32 %v4095, %v277
    %v4097 = vadd.f32 %v4096, 1e-05
    %v4098 = vrsqrt.pop %v4097
    %v4099 = vmul.f32 %v4088, %v4098
    %s4100 = scalar_lea.vmem [#allocation7], 29
    %v4101 = vld [vmem:[%s4100] sm:$0x1]
    %v4103 = vlaneseq
    %v4104 = vshrl.u32 %v4103, 7
    %v4105 = vsub.s32 0, %v4104
    %v4106 = vrot.slane %v4101, %v4105
    %v4108 = vmul.f32 %v4099, %v4106
    %s4109 = scalar_lea.vmem [#allocation8], 29
    %v4110 = vld [vmem:[%s4109] sm:$0x1]
    %v4112 = vlaneseq
    %v4113 = vshrl.u32 %v4112, 7
    %v4114 = vsub.s32 0, %v4113
    %v4115 = vrot.slane %v4110, %v4114
    %v4117 = vadd.f32 %v4108, %v4115
    %s4118 = scalar_lea.vmem [#allocation2], 3840
    %v4119 = vld [vmem:[%s4118] sm:$0xff]
    %v4120 = vld [vmem:[%s4118 + $0x8] sm:$0xff]
    %v4121 = vld [vmem:[%s4118 + $0x10] sm:$0xff]
    %v4122 = vld [vmem:[%s4118 + $0x18] sm:$0xff]
    %v4123 = vld [vmem:[%s4118 + $0x20] sm:$0xff]
    %v4124 = vld [vmem:[%s4118 + $0x28] sm:$0xff]
    %v4125 = vld [vmem:[%s4118 + $0x30] sm:$0xff]
    %v4126 = vld [vmem:[%s4118 + $0x38] sm:$0xff]
    %v4127 = vld [vmem:[%s4118 + $0x40] sm:$0xff]
    %v4128 = vld [vmem:[%s4118 + $0x48] sm:$0xff]
    %v4129 = vld [vmem:[%s4118 + $0x50] sm:$0xff]
    %v4130 = vld [vmem:[%s4118 + $0x58] sm:$0xff]
    %v4131 = vld [vmem:[%s4118 + $0x60] sm:$0xff]
    %v4132 = vld [vmem:[%s4118 + $0x68] sm:$0xff]
    %v4133 = vld [vmem:[%s4118 + $0x70] sm:$0xff]
    %v4134 = vld [vmem:[%s4118 + $0x78] sm:$0xff]
    %s4135 = scalar_lea.vmem [#allocation5], 30
    %v4136 = vld [vmem:[%s4135] sm:$0x1]
    %v4138 = vlaneseq
    %v4139 = vshrl.u32 %v4138, 7
    %v4140 = vsub.s32 0, %v4139
    %v4141 = vrot.slane %v4136, %v4140
    %4143 = vmatprep.subr.mxu0 0.0
    %4144 = vmatpush1.msra.mxu0 %v4119
    %4145 = vmatprep.subr.mxu0 0.0
    %4146 = vmatpush1.msra.mxu0 %v4120
    %4147 = vmatprep.subr.mxu0 0.0
    %4148 = vmatpush1.msra.mxu0 %v4121
    %4149 = vmatprep.subr.mxu0 0.0
    %4150 = vmatpush1.msra.mxu0 %v4122
    %4151 = vmatprep.subr.mxu0 0.0
    %4152 = vmatpush1.msra.mxu0 %v4123
    %4153 = vmatprep.subr.mxu0 0.0
    %4154 = vmatpush1.msra.mxu0 %v4124
    %4155 = vmatprep.subr.mxu0 0.0
    %4156 = vmatpush1.msra.mxu0 %v4125
    %4157 = vmatprep.subr.mxu0 0.0
    %4158 = vmatpush1.msra.mxu0 %v4126
    %4159 = vmatprep.subr.mxu0 0.0
    %4160 = vmatpush1.msra.mxu0 %v4127
    %4161 = vmatprep.subr.mxu0 0.0
    %4162 = vmatpush1.msra.mxu0 %v4128
    %4163 = vmatprep.subr.mxu0 0.0
    %4164 = vmatpush1.msra.mxu0 %v4129
    %4165 = vmatprep.subr.mxu0 0.0
    %4166 = vmatpush1.msra.mxu0 %v4130
    %4167 = vmatprep.subr.mxu0 0.0
    %4168 = vmatpush1.msra.mxu0 %v4131
    %4169 = vmatprep.subr.mxu0 0.0
    %4170 = vmatpush1.msra.mxu0 %v4132
    %4171 = vmatprep.subr.mxu0 0.0
    %4172 = vmatpush1.msra.mxu0 %v4133
    %4173 = vmatprep.subr.mxu0 0.0
    %4174 = vmatpush1.msra.mxu0 %v4134
    %4175 = vmatprep.subr.mxu0 0.0
    %4176 = vmatpush1.msra.mxu0 0.0
    %4177 = vmatprep.subr.mxu0 0.0
    %4178 = vmatpush1.msra.mxu0 0.0
    %4179 = vmatprep.subr.mxu0 0.0
    %4180 = vmatpush1.msra.mxu0 0.0
    %4181 = vmatprep.subr.mxu0 0.0
    %4182 = vmatpush1.msra.mxu0 0.0
    %4183 = vmatprep.subr.mxu0 0.0
    %4184 = vmatpush1.msra.mxu0 0.0
    %4185 = vmatprep.subr.mxu0 0.0
    %4186 = vmatpush1.msra.mxu0 0.0
    %4187 = vmatprep.subr.mxu0 0.0
    %4188 = vmatpush1.msra.mxu0 0.0
    %4189 = vmatprep.subr.mxu0 0.0
    %4190 = vmatpush1.msra.mxu0 0.0
    %4191 = vmatprep.subr.mxu0 0.0
    %4192 = vmatpush1.msra.mxu0 0.0
    %4193 = vmatprep.subr.mxu0 0.0
    %4194 = vmatpush1.msra.mxu0 0.0
    %4195 = vmatprep.subr.mxu0 0.0
    %4196 = vmatpush1.msra.mxu0 0.0
    %4197 = vmatprep.subr.mxu0 0.0
    %4198 = vmatpush1.msra.mxu0 0.0
    %4199 = vmatprep.subr.mxu0 0.0
    %4200 = vmatpush1.msra.mxu0 0.0
    %4201 = vmatprep.subr.mxu0 0.0
    %4202 = vmatpush1.msra.mxu0 0.0
    %4203 = vmatprep.subr.mxu0 0.0
    %4204 = vmatpush1.msra.mxu0 0.0
    %4205 = vmatprep.subr.mxu0 0.0
    %4206 = vmatpush1.msra.mxu0 0.0
    %4207 = vmatprep.mubr.f32.mxu0 0.0
    %4208 = vmatmul.mubr.f32.gmra.mrb[0].mxu0 %v4117
    %v4209 = vpop.f32.mrb[0].mxu0
    %v4210 = vadd.f32 %v4141, %v4209
    %v4211 = vpop.f32.mrb[0].mxu0
    %4212 = vdwg.mxu0
    %vm4213 = vcmp.ge.f32.partialorder %v4210, 0.0
    %v4214 = vmul.f32 %v4210, 0.01
    %v4215 = vsel %vm4213, %v4210, %v4214
    %v4216 = vrot.slane %v4215, 4
    %v4217 = vadd.f32 %v4215, %v4216
    %v4218 = vrot.slane %v4217, 2
    %v4219 = vadd.f32 %v4217, %v4218
    %v4220 = vrot.slane %v4219, 1
    %v4221 = vadd.f32 %v4219, %v4220
    %v4222 = vmul.f32 %v4221, %v277
    %v4223 = vsub.f32 %v4215, %v4222
    %v4224 = vmul.f32 %v4223, %v4223
    %v4225 = vrot.slane %v4224, 4
    %v4226 = vadd.f32 %v4224, %v4225
    %v4227 = vrot.slane %v4226, 2
    %v4228 = vadd.f32 %v4226, %v4227
    %v4229 = vrot.slane %v4228, 1
    %v4230 = vadd.f32 %v4228, %v4229
    %v4231 = vmul.f32 %v4230, %v277
    %v4232 = vadd.f32 %v4231, 1e-05
    %v4233 = vrsqrt.pop %v4232
    %v4234 = vmul.f32 %v4223, %v4233
    %s4235 = scalar_lea.vmem [#allocation7], 30
    %v4236 = vld [vmem:[%s4235] sm:$0x1]
    %v4238 = vlaneseq
    %v4239 = vshrl.u32 %v4238, 7
    %v4240 = vsub.s32 0, %v4239
    %v4241 = vrot.slane %v4236, %v4240
    %v4243 = vmul.f32 %v4234, %v4241
    %s4244 = scalar_lea.vmem [#allocation8], 30
    %v4245 = vld [vmem:[%s4244] sm:$0x1]
    %v4247 = vlaneseq
    %v4248 = vshrl.u32 %v4247, 7
    %v4249 = vsub.s32 0, %v4248
    %v4250 = vrot.slane %v4245, %v4249
    %v4252 = vadd.f32 %v4243, %v4250
    %s4253 = scalar_lea.vmem [#allocation2], 3968
    %v4254 = vld [vmem:[%s4253] sm:$0xff]
    %v4255 = vld [vmem:[%s4253 + $0x8] sm:$0xff]
    %v4256 = vld [vmem:[%s4253 + $0x10] sm:$0xff]
    %v4257 = vld [vmem:[%s4253 + $0x18] sm:$0xff]
    %v4258 = vld [vmem:[%s4253 + $0x20] sm:$0xff]
    %v4259 = vld [vmem:[%s4253 + $0x28] sm:$0xff]
    %v4260 = vld [vmem:[%s4253 + $0x30] sm:$0xff]
    %v4261 = vld [vmem:[%s4253 + $0x38] sm:$0xff]
    %v4262 = vld [vmem:[%s4253 + $0x40] sm:$0xff]
    %v4263 = vld [vmem:[%s4253 + $0x48] sm:$0xff]
    %v4264 = vld [vmem:[%s4253 + $0x50] sm:$0xff]
    %v4265 = vld [vmem:[%s4253 + $0x58] sm:$0xff]
    %v4266 = vld [vmem:[%s4253 + $0x60] sm:$0xff]
    %v4267 = vld [vmem:[%s4253 + $0x68] sm:$0xff]
    %v4268 = vld [vmem:[%s4253 + $0x70] sm:$0xff]
    %v4269 = vld [vmem:[%s4253 + $0x78] sm:$0xff]
    %s4270 = scalar_lea.vmem [#allocation5], 31
    %v4271 = vld [vmem:[%s4270] sm:$0x1]
    %v4273 = vlaneseq
    %v4274 = vshrl.u32 %v4273, 7
    %v4275 = vsub.s32 0, %v4274
    %v4276 = vrot.slane %v4271, %v4275
    %4278 = vmatprep.subr.mxu0 0.0
    %4279 = vmatpush1.msra.mxu0 %v4254
    %4280 = vmatprep.subr.mxu0 0.0
    %4281 = vmatpush1.msra.mxu0 %v4255
    %4282 = vmatprep.subr.mxu0 0.0
    %4283 = vmatpush1.msra.mxu0 %v4256
    %4284 = vmatprep.subr.mxu0 0.0
    %4285 = vmatpush1.msra.mxu0 %v4257
    %4286 = vmatprep.subr.mxu0 0.0
    %4287 = vmatpush1.msra.mxu0 %v4258
    %4288 = vmatprep.subr.mxu0 0.0
    %4289 = vmatpush1.msra.mxu0 %v4259
    %4290 = vmatprep.subr.mxu0 0.0
    %4291 = vmatpush1.msra.mxu0 %v4260
    %4292 = vmatprep.subr.mxu0 0.0
    %4293 = vmatpush1.msra.mxu0 %v4261
    %4294 = vmatprep.subr.mxu0 0.0
    %4295 = vmatpush1.msra.mxu0 %v4262
    %4296 = vmatprep.subr.mxu0 0.0
    %4297 = vmatpush1.msra.mxu0 %v4263
    %4298 = vmatprep.subr.mxu0 0.0
    %4299 = vmatpush1.msra.mxu0 %v4264
    %4300 = vmatprep.subr.mxu0 0.0
    %4301 = vmatpush1.msra.mxu0 %v4265
    %4302 = vmatprep.subr.mxu0 0.0
    %4303 = vmatpush1.msra.mxu0 %v4266
    %4304 = vmatprep.subr.mxu0 0.0
    %4305 = vmatpush1.msra.mxu0 %v4267
    %4306 = vmatprep.subr.mxu0 0.0
    %4307 = vmatpush1.msra.mxu0 %v4268
    %4308 = vmatprep.subr.mxu0 0.0
    %4309 = vmatpush1.msra.mxu0 %v4269
    %4310 = vmatprep.subr.mxu0 0.0
    %4311 = vmatpush1.msra.mxu0 0.0
    %4312 = vmatprep.subr.mxu0 0.0
    %4313 = vmatpush1.msra.mxu0 0.0
    %4314 = vmatprep.subr.mxu0 0.0
    %4315 = vmatpush1.msra.mxu0 0.0
    %4316 = vmatprep.subr.mxu0 0.0
    %4317 = vmatpush1.msra.mxu0 0.0
    %4318 = vmatprep.subr.mxu0 0.0
    %4319 = vmatpush1.msra.mxu0 0.0
    %4320 = vmatprep.subr.mxu0 0.0
    %4321 = vmatpush1.msra.mxu0 0.0
    %4322 = vmatprep.subr.mxu0 0.0
    %4323 = vmatpush1.msra.mxu0 0.0
    %4324 = vmatprep.subr.mxu0 0.0
    %4325 = vmatpush1.msra.mxu0 0.0
    %4326 = vmatprep.subr.mxu0 0.0
    %4327 = vmatpush1.msra.mxu0 0.0
    %4328 = vmatprep.subr.mxu0 0.0
    %4329 = vmatpush1.msra.mxu0 0.0
    %4330 = vmatprep.subr.mxu0 0.0
    %4331 = vmatpush1.msra.mxu0 0.0
    %4332 = vmatprep.subr.mxu0 0.0
    %4333 = vmatpush1.msra.mxu0 0.0
    %4334 = vmatprep.subr.mxu0 0.0
    %4335 = vmatpush1.msra.mxu0 0.0
    %4336 = vmatprep.subr.mxu0 0.0
    %4337 = vmatpush1.msra.mxu0 0.0
    %4338 = vmatprep.subr.mxu0 0.0
    %4339 = vmatpush1.msra.mxu0 0.0
    %4340 = vmatprep.subr.mxu0 0.0
    %4341 = vmatpush1.msra.mxu0 0.0
    %4342 = vmatprep.mubr.f32.mxu0 0.0
    %4343 = vmatmul.mubr.f32.gmra.mrb[0].mxu0 %v4252
    %v4344 = vpop.f32.mrb[0].mxu0
    %v4345 = vadd.f32 %v4276, %v4344
    %v4346 = vpop.f32.mrb[0].mxu0
    %4347 = vdwg.mxu0
    %vm4348 = vcmp.ge.f32.partialorder %v4345, 0.0
    %v4349 = vmul.f32 %v4345, 0.01
    %v4350 = vsel %vm4348, %v4345, %v4349
    %v4351 = vrot.slane %v4350, 4
    %v4352 = vadd.f32 %v4350, %v4351
    %v4353 = vrot.slane %v4352, 2
    %v4354 = vadd.f32 %v4352, %v4353
    %v4355 = vrot.slane %v4354, 1
    %v4356 = vadd.f32 %v4354, %v4355
    %v4357 = vmul.f32 %v4356, %v277
    %v4358 = vsub.f32 %v4350, %v4357
    %v4359 = vmul.f32 %v4358, %v4358
    %v4360 = vrot.slane %v4359, 4
    %v4361 = vadd.f32 %v4359, %v4360
    %v4362 = vrot.slane %v4361, 2
    %v4363 = vadd.f32 %v4361, %v4362
    %v4364 = vrot.slane %v4363, 1
    %v4365 = vadd.f32 %v4363, %v4364
    %v4366 = vmul.f32 %v4365, %v277
    %v4367 = vadd.f32 %v4366, 1e-05
    %v4368 = vrsqrt.pop %v4367
    %v4369 = vmul.f32 %v4358, %v4368
    %s4370 = scalar_lea.vmem [#allocation7], 31
    %v4371 = vld [vmem:[%s4370] sm:$0x1]
    %v4373 = vlaneseq
    %v4374 = vshrl.u32 %v4373, 7
    %v4375 = vsub.s32 0, %v4374
    %v4376 = vrot.slane %v4371, %v4375
    %v4378 = vmul.f32 %v4369, %v4376
    %s4379 = scalar_lea.vmem [#allocation8], 31
    %v4380 = vld [vmem:[%s4379] sm:$0x1]
    %v4382 = vlaneseq
    %v4383 = vshrl.u32 %v4382, 7
    %v4384 = vsub.s32 0, %v4383
    %v4385 = vrot.slane %v4380, %v4384
    %v4387 = vadd.f32 %v4378, %v4385
    %v4388 = vadd.f32 %v4387, %v3982
    %s4389 = scalar_lea.vmem [#allocation2], 4096
    %v4390 = vld [vmem:[%s4389] sm:$0xff]
    %v4391 = vld [vmem:[%s4389 + $0x8] sm:$0xff]
    %v4392 = vld [vmem:[%s4389 + $0x10] sm:$0xff]
    %v4393 = vld [vmem:[%s4389 + $0x18] sm:$0xff]
    %v4394 = vld [vmem:[%s4389 + $0x20] sm:$0xff]
    %v4395 = vld [vmem:[%s4389 + $0x28] sm:$0xff]
    %v4396 = vld [vmem:[%s4389 + $0x30] sm:$0xff]
    %v4397 = vld [vmem:[%s4389 + $0x38] sm:$0xff]
    %v4398 = vld [vmem:[%s4389 + $0x40] sm:$0xff]
    %v4399 = vld [vmem:[%s4389 + $0x48] sm:$0xff]
    %v4400 = vld [vmem:[%s4389 + $0x50] sm:$0xff]
    %v4401 = vld [vmem:[%s4389 + $0x58] sm:$0xff]
    %v4402 = vld [vmem:[%s4389 + $0x60] sm:$0xff]
    %v4403 = vld [vmem:[%s4389 + $0x68] sm:$0xff]
    %v4404 = vld [vmem:[%s4389 + $0x70] sm:$0xff]
    %v4405 = vld [vmem:[%s4389 + $0x78] sm:$0xff]
    %s4406 = scalar_lea.vmem [#allocation5], 32
    %v4407 = vld [vmem:[%s4406] sm:$0x1]
    %v4409 = vlaneseq
    %v4410 = vshrl.u32 %v4409, 7
    %v4411 = vsub.s32 0, %v4410
    %v4412 = vrot.slane %v4407, %v4411
    %4414 = vmatprep.subr.mxu0 0.0
    %4415 = vmatpush1.msra.mxu0 %v4390
    %4416 = vmatprep.subr.mxu0 0.0
    %4417 = vmatpush1.msra.mxu0 %v4391
    %4418 = vmatprep.subr.mxu0 0.0
    %4419 = vmatpush1.msra.mxu0 %v4392
    %4420 = vmatprep.subr.mxu0 0.0
    %4421 = vmatpush1.msra.mxu0 %v4393
    %4422 = vmatprep.subr.mxu0 0.0
    %4423 = vmatpush1.msra.mxu0 %v4394
    %4424 = vmatprep.subr.mxu0 0.0
    %4425 = vmatpush1.msra.mxu0 %v4395
    %4426 = vmatprep.subr.mxu0 0.0
    %4427 = vmatpush1.msra.mxu0 %v4396
    %4428 = vmatprep.subr.mxu0 0.0
    %4429 = vmatpush1.msra.mxu0 %v4397
    %4430 = vmatprep.subr.mxu0 0.0
    %4431 = vmatpush1.msra.mxu0 %v4398
    %4432 = vmatprep.subr.mxu0 0.0
    %4433 = vmatpush1.msra.mxu0 %v4399
    %4434 = vmatprep.subr.mxu0 0.0
    %4435 = vmatpush1.msra.mxu0 %v4400
    %4436 = vmatprep.subr.mxu0 0.0
    %4437 = vmatpush1.msra.mxu0 %v4401
    %4438 = vmatprep.subr.mxu0 0.0
    %4439 = vmatpush1.msra.mxu0 %v4402
    %4440 = vmatprep.subr.mxu0 0.0
    %4441 = vmatpush1.msra.mxu0 %v4403
    %4442 = vmatprep.subr.mxu0 0.0
    %4443 = vmatpush1.msra.mxu0 %v4404
    %4444 = vmatprep.subr.mxu0 0.0
    %4445 = vmatpush1.msra.mxu0 %v4405
    %4446 = vmatprep.subr.mxu0 0.0
    %4447 = vmatpush1.msra.mxu0 0.0
    %4448 = vmatprep.subr.mxu0 0.0
    %4449 = vmatpush1.msra.mxu0 0.0
    %4450 = vmatprep.subr.mxu0 0.0
    %4451 = vmatpush1.msra.mxu0 0.0
    %4452 = vmatprep.subr.mxu0 0.0
    %4453 = vmatpush1.msra.mxu0 0.0
    %4454 = vmatprep.subr.mxu0 0.0
    %4455 = vmatpush1.msra.mxu0 0.0
    %4456 = vmatprep.subr.mxu0 0.0
    %4457 = vmatpush1.msra.mxu0 0.0
    %4458 = vmatprep.subr.mxu0 0.0
    %4459 = vmatpush1.msra.mxu0 0.0
    %4460 = vmatprep.subr.mxu0 0.0
    %4461 = vmatpush1.msra.mxu0 0.0
    %4462 = vmatprep.subr.mxu0 0.0
    %4463 = vmatpush1.msra.mxu0 0.0
    %4464 = vmatprep.subr.mxu0 0.0
    %4465 = vmatpush1.msra.mxu0 0.0
    %4466 = vmatprep.subr.mxu0 0.0
    %4467 = vmatpush1.msra.mxu0 0.0
    %4468 = vmatprep.subr.mxu0 0.0
    %4469 = vmatpush1.msra.mxu0 0.0
    %4470 = vmatprep.subr.mxu0 0.0
    %4471 = vmatpush1.msra.mxu0 0.0
    %4472 = vmatprep.subr.mxu0 0.0
    %4473 = vmatpush1.msra.mxu0 0.0
    %4474 = vmatprep.subr.mxu0 0.0
    %4475 = vmatpush1.msra.mxu0 0.0
    %4476 = vmatprep.subr.mxu0 0.0
    %4477 = vmatpush1.msra.mxu0 0.0
    %4478 = vmatprep.mubr.f32.mxu0 0.0
    %4479 = vmatmul.mubr.f32.gmra.mrb[0].mxu0 %v4388
    %v4480 = vpop.f32.mrb[0].mxu0
    %v4481 = vadd.f32 %v4412, %v4480
    %v4482 = vpop.f32.mrb[0].mxu0
    %4483 = vdwg.mxu0
    %vm4484 = vcmp.ge.f32.partialorder %v4481, 0.0
    %v4485 = vmul.f32 %v4481, 0.01
    %v4486 = vsel %vm4484, %v4481, %v4485
    %v4487 = vrot.slane %v4486, 4
    %v4488 = vadd.f32 %v4486, %v4487
    %v4489 = vrot.slane %v4488, 2
    %v4490 = vadd.f32 %v4488, %v4489
    %v4491 = vrot.slane %v4490, 1
    %v4492 = vadd.f32 %v4490, %v4491
    %v4493 = vmul.f32 %v4492, %v277
    %v4494 = vsub.f32 %v4486, %v4493
    %v4495 = vmul.f32 %v4494, %v4494
    %v4496 = vrot.slane %v4495, 4
    %v4497 = vadd.f32 %v4495, %v4496
    %v4498 = vrot.slane %v4497, 2
    %v4499 = vadd.f32 %v4497, %v4498
    %v4500 = vrot.slane %v4499, 1
    %v4501 = vadd.f32 %v4499, %v4500
    %v4502 = vmul.f32 %v4501, %v277
    %v4503 = vadd.f32 %v4502, 1e-05
    %v4504 = vrsqrt.pop %v4503
    %v4505 = vmul.f32 %v4494, %v4504
    %s4506 = scalar_lea.vmem [#allocation7], 32
    %v4507 = vld [vmem:[%s4506] sm:$0x1]
    %v4509 = vlaneseq
    %v4510 = vshrl.u32 %v4509, 7
    %v4511 = vsub.s32 0, %v4510
    %v4512 = vrot.slane %v4507, %v4511
    %v4514 = vmul.f32 %v4505, %v4512
    %s4515 = scalar_lea.vmem [#allocation8], 32
    %v4516 = vld [vmem:[%s4515] sm:$0x1]
    %v4518 = vlaneseq
    %v4519 = vshrl.u32 %v4518, 7
    %v4520 = vsub.s32 0, %v4519
    %v4521 = vrot.slane %v4516, %v4520
    %v4523 = vadd.f32 %v4514, %v4521
    %s4524 = scalar_lea.vmem [#allocation2], 4224
    %v4525 = vld [vmem:[%s4524] sm:$0xff]
    %v4526 = vld [vmem:[%s4524 + $0x8] sm:$0xff]
    %v4527 = vld [vmem:[%s4524 + $0x10] sm:$0xff]
    %v4528 = vld [vmem:[%s4524 + $0x18] sm:$0xff]
    %v4529 = vld [vmem:[%s4524 + $0x20] sm:$0xff]
    %v4530 = vld [vmem:[%s4524 + $0x28] sm:$0xff]
    %v4531 = vld [vmem:[%s4524 + $0x30] sm:$0xff]
    %v4532 = vld [vmem:[%s4524 + $0x38] sm:$0xff]
    %v4533 = vld [vmem:[%s4524 + $0x40] sm:$0xff]
    %v4534 = vld [vmem:[%s4524 + $0x48] sm:$0xff]
    %v4535 = vld [vmem:[%s4524 + $0x50] sm:$0xff]
    %v4536 = vld [vmem:[%s4524 + $0x58] sm:$0xff]
    %v4537 = vld [vmem:[%s4524 + $0x60] sm:$0xff]
    %v4538 = vld [vmem:[%s4524 + $0x68] sm:$0xff]
    %v4539 = vld [vmem:[%s4524 + $0x70] sm:$0xff]
    %v4540 = vld [vmem:[%s4524 + $0x78] sm:$0xff]
    %s4541 = scalar_lea.vmem [#allocation5], 33
    %v4542 = vld [vmem:[%s4541] sm:$0x1]
    %v4544 = vlaneseq
    %v4545 = vshrl.u32 %v4544, 7
    %v4546 = vsub.s32 0, %v4545
    %v4547 = vrot.slane %v4542, %v4546
    %4549 = vmatprep.subr.mxu0 0.0
    %4550 = vmatpush1.msra.mxu0 %v4525
    %4551 = vmatprep.subr.mxu0 0.0
    %4552 = vmatpush1.msra.mxu0 %v4526
    %4553 = vmatprep.subr.mxu0 0.0
    %4554 = vmatpush1.msra.mxu0 %v4527
    %4555 = vmatprep.subr.mxu0 0.0
    %4556 = vmatpush1.msra.mxu0 %v4528
    %4557 = vmatprep.subr.mxu0 0.0
    %4558 = vmatpush1.msra.mxu0 %v4529
    %4559 = vmatprep.subr.mxu0 0.0
    %4560 = vmatpush1.msra.mxu0 %v4530
    %4561 = vmatprep.subr.mxu0 0.0
    %4562 = vmatpush1.msra.mxu0 %v4531
    %4563 = vmatprep.subr.mxu0 0.0
    %4564 = vmatpush1.msra.mxu0 %v4532
    %4565 = vmatprep.subr.mxu0 0.0
    %4566 = vmatpush1.msra.mxu0 %v4533
    %4567 = vmatprep.subr.mxu0 0.0
    %4568 = vmatpush1.msra.mxu0 %v4534
    %4569 = vmatprep.subr.mxu0 0.0
    %4570 = vmatpush1.msra.mxu0 %v4535
    %4571 = vmatprep.subr.mxu0 0.0
    %4572 = vmatpush1.msra.mxu0 %v4536
    %4573 = vmatprep.subr.mxu0 0.0
    %4574 = vmatpush1.msra.mxu0 %v4537
    %4575 = vmatprep.subr.mxu0 0.0
    %4576 = vmatpush1.msra.mxu0 %v4538
    %4577 = vmatprep.subr.mxu0 0.0
    %4578 = vmatpush1.msra.mxu0 %v4539
    %4579 = vmatprep.subr.mxu0 0.0
    %4580 = vmatpush1.msra.mxu0 %v4540
    %4581 = vmatprep.subr.mxu0 0.0
    %4582 = vmatpush1.msra.mxu0 0.0
    %4583 = vmatprep.subr.mxu0 0.0
    %4584 = vmatpush1.msra.mxu0 0.0
    %4585 = vmatprep.subr.mxu0 0.0
    %4586 = vmatpush1.msra.mxu0 0.0
    %4587 = vmatprep.subr.mxu0 0.0
    %4588 = vmatpush1.msra.mxu0 0.0
    %4589 = vmatprep.subr.mxu0 0.0
    %4590 = vmatpush1.msra.mxu0 0.0
    %4591 = vmatprep.subr.mxu0 0.0
    %4592 = vmatpush1.msra.mxu0 0.0
    %4593 = vmatprep.subr.mxu0 0.0
    %4594 = vmatpush1.msra.mxu0 0.0
    %4595 = vmatprep.subr.mxu0 0.0
    %4596 = vmatpush1.msra.mxu0 0.0
    %4597 = vmatprep.subr.mxu0 0.0
    %4598 = vmatpush1.msra.mxu0 0.0
    %4599 = vmatprep.subr.mxu0 0.0
    %4600 = vmatpush1.msra.mxu0 0.0
    %4601 = vmatprep.subr.mxu0 0.0
    %4602 = vmatpush1.msra.mxu0 0.0
    %4603 = vmatprep.subr.mxu0 0.0
    %4604 = vmatpush1.msra.mxu0 0.0
    %4605 = vmatprep.subr.mxu0 0.0
    %4606 = vmatpush1.msra.mxu0 0.0
    %4607 = vmatprep.subr.mxu0 0.0
    %4608 = vmatpush1.msra.mxu0 0.0
    %4609 = vmatprep.subr.mxu0 0.0
    %4610 = vmatpush1.msra.mxu0 0.0
    %4611 = vmatprep.subr.mxu0 0.0
    %4612 = vmatpush1.msra.mxu0 0.0
    %4613 = vmatprep.mubr.f32.mxu0 0.0
    %4614 = vmatmul.mubr.f32.gmra.mrb[0].mxu0 %v4523
    %v4615 = vpop.f32.mrb[0].mxu0
    %v4616 = vadd.f32 %v4547, %v4615
    %v4617 = vpop.f32.mrb[0].mxu0
    %4618 = vdwg.mxu0
    %vm4619 = vcmp.ge.f32.partialorder %v4616, 0.0
    %v4620 = vmul.f32 %v4616, 0.01
    %v4621 = vsel %vm4619, %v4616, %v4620
    %v4622 = vrot.slane %v4621, 4
    %v4623 = vadd.f32 %v4621, %v4622
    %v4624 = vrot.slane %v4623, 2
    %v4625 = vadd.f32 %v4623, %v4624
    %v4626 = vrot.slane %v4625, 1
    %v4627 = vadd.f32 %v4625, %v4626
    %v4628 = vmul.f32 %v4627, %v277
    %v4629 = vsub.f32 %v4621, %v4628
    %v4630 = vmul.f32 %v4629, %v4629
    %v4631 = vrot.slane %v4630, 4
    %v4632 = vadd.f32 %v4630, %v4631
    %v4633 = vrot.slane %v4632, 2
    %v4634 = vadd.f32 %v4632, %v4633
    %v4635 = vrot.slane %v4634, 1
    %v4636 = vadd.f32 %v4634, %v4635
    %v4637 = vmul.f32 %v4636, %v277
    %v4638 = vadd.f32 %v4637, 1e-05
    %v4639 = vrsqrt.pop %v4638
    %v4640 = vmul.f32 %v4629, %v4639
    %s4641 = scalar_lea.vmem [#allocation7], 33
    %v4642 = vld [vmem:[%s4641] sm:$0x1]
    %v4644 = vlaneseq
    %v4645 = vshrl.u32 %v4644, 7
    %v4646 = vsub.s32 0, %v4645
    %v4647 = vrot.slane %v4642, %v4646
    %v4649 = vmul.f32 %v4640, %v4647
    %s4650 = scalar_lea.vmem [#allocation8], 33
    %v4651 = vld [vmem:[%s4650] sm:$0x1]
    %v4653 = vlaneseq
    %v4654 = vshrl.u32 %v4653, 7
    %v4655 = vsub.s32 0, %v4654
    %v4656 = vrot.slane %v4651, %v4655
    %v4658 = vadd.f32 %v4649, %v4656
    %s4659 = scalar_lea.vmem [#allocation2], 4352
    %v4660 = vld [vmem:[%s4659] sm:$0xff]
    %v4661 = vld [vmem:[%s4659 + $0x8] sm:$0xff]
    %v4662 = vld [vmem:[%s4659 + $0x10] sm:$0xff]
    %v4663 = vld [vmem:[%s4659 + $0x18] sm:$0xff]
    %v4664 = vld [vmem:[%s4659 + $0x20] sm:$0xff]
    %v4665 = vld [vmem:[%s4659 + $0x28] sm:$0xff]
    %v4666 = vld [vmem:[%s4659 + $0x30] sm:$0xff]
    %v4667 = vld [vmem:[%s4659 + $0x38] sm:$0xff]
    %v4668 = vld [vmem:[%s4659 + $0x40] sm:$0xff]
    %v4669 = vld [vmem:[%s4659 + $0x48] sm:$0xff]
    %v4670 = vld [vmem:[%s4659 + $0x50] sm:$0xff]
    %v4671 = vld [vmem:[%s4659 + $0x58] sm:$0xff]
    %v4672 = vld [vmem:[%s4659 + $0x60] sm:$0xff]
    %v4673 = vld [vmem:[%s4659 + $0x68] sm:$0xff]
    %v4674 = vld [vmem:[%s4659 + $0x70] sm:$0xff]
    %v4675 = vld [vmem:[%s4659 + $0x78] sm:$0xff]
    %s4676 = scalar_lea.vmem [#allocation5], 34
    %v4677 = vld [vmem:[%s4676] sm:$0x1]
    %v4679 = vlaneseq
    %v4680 = vshrl.u32 %v4679, 7
    %v4681 = vsub.s32 0, %v4680
    %v4682 = vrot.slane %v4677, %v4681
    %4684 = vmatprep.subr.mxu0 0.0
    %4685 = vmatpush1.msra.mxu0 %v4660
    %4686 = vmatprep.subr.mxu0 0.0
    %4687 = vmatpush1.msra.mxu0 %v4661
    %4688 = vmatprep.subr.mxu0 0.0
    %4689 = vmatpush1.msra.mxu0 %v4662
    %4690 = vmatprep.subr.mxu0 0.0
    %4691 = vmatpush1.msra.mxu0 %v4663
    %4692 = vmatprep.subr.mxu0 0.0
    %4693 = vmatpush1.msra.mxu0 %v4664
    %4694 = vmatprep.subr.mxu0 0.0
    %4695 = vmatpush1.msra.mxu0 %v4665
    %4696 = vmatprep.subr.mxu0 0.0
    %4697 = vmatpush1.msra.mxu0 %v4666
    %4698 = vmatprep.subr.mxu0 0.0
    %4699 = vmatpush1.msra.mxu0 %v4667
    %4700 = vmatprep.subr.mxu0 0.0
    %4701 = vmatpush1.msra.mxu0 %v4668
    %4702 = vmatprep.subr.mxu0 0.0
    %4703 = vmatpush1.msra.mxu0 %v4669
    %4704 = vmatprep.subr.mxu0 0.0
    %4705 = vmatpush1.msra.mxu0 %v4670
    %4706 = vmatprep.subr.mxu0 0.0
    %4707 = vmatpush1.msra.mxu0 %v4671
    %4708 = vmatprep.subr.mxu0 0.0
    %4709 = vmatpush1.msra.mxu0 %v4672
    %4710 = vmatprep.subr.mxu0 0.0
    %4711 = vmatpush1.msra.mxu0 %v4673
    %4712 = vmatprep.subr.mxu0 0.0
    %4713 = vmatpush1.msra.mxu0 %v4674
    %4714 = vmatprep.subr.mxu0 0.0
    %4715 = vmatpush1.msra.mxu0 %v4675
    %4716 = vmatprep.subr.mxu0 0.0
    %4717 = vmatpush1.msra.mxu0 0.0
    %4718 = vmatprep.subr.mxu0 0.0
    %4719 = vmatpush1.msra.mxu0 0.0
    %4720 = vmatprep.subr.mxu0 0.0
    %4721 = vmatpush1.msra.mxu0 0.0
    %4722 = vmatprep.subr.mxu0 0.0
    %4723 = vmatpush1.msra.mxu0 0.0
    %4724 = vmatprep.subr.mxu0 0.0
    %4725 = vmatpush1.msra.mxu0 0.0
    %4726 = vmatprep.subr.mxu0 0.0
    %4727 = vmatpush1.msra.mxu0 0.0
    %4728 = vmatprep.subr.mxu0 0.0
    %4729 = vmatpush1.msra.mxu0 0.0
    %4730 = vmatprep.subr.mxu0 0.0
    %4731 = vmatpush1.msra.mxu0 0.0
    %4732 = vmatprep.subr.mxu0 0.0
    %4733 = vmatpush1.msra.mxu0 0.0
    %4734 = vmatprep.subr.mxu0 0.0
    %4735 = vmatpush1.msra.mxu0 0.0
    %4736 = vmatprep.subr.mxu0 0.0
    %4737 = vmatpush1.msra.mxu0 0.0
    %4738 = vmatprep.subr.mxu0 0.0
    %4739 = vmatpush1.msra.mxu0 0.0
    %4740 = vmatprep.subr.mxu0 0.0
    %4741 = vmatpush1.msra.mxu0 0.0
    %4742 = vmatprep.subr.mxu0 0.0
    %4743 = vmatpush1.msra.mxu0 0.0
    %4744 = vmatprep.subr.mxu0 0.0
    %4745 = vmatpush1.msra.mxu0 0.0
    %4746 = vmatprep.subr.mxu0 0.0
    %4747 = vmatpush1.msra.mxu0 0.0
    %4748 = vmatprep.mubr.f32.mxu0 0.0
    %4749 = vmatmul.mubr.f32.gmra.mrb[0].mxu0 %v4658
    %v4750 = vpop.f32.mrb[0].mxu0
    %v4751 = vadd.f32 %v4682, %v4750
    %v4752 = vpop.f32.mrb[0].mxu0
    %4753 = vdwg.mxu0
    %vm4754 = vcmp.ge.f32.partialorder %v4751, 0.0
    %v4755 = vmul.f32 %v4751, 0.01
    %v4756 = vsel %vm4754, %v4751, %v4755
    %v4757 = vrot.slane %v4756, 4
    %v4758 = vadd.f32 %v4756, %v4757
    %v4759 = vrot.slane %v4758, 2
    %v4760 = vadd.f32 %v4758, %v4759
    %v4761 = vrot.slane %v4760, 1
    %v4762 = vadd.f32 %v4760, %v4761
    %v4763 = vmul.f32 %v4762, %v277
    %v4764 = vsub.f32 %v4756, %v4763
    %v4765 = vmul.f32 %v4764, %v4764
    %v4766 = vrot.slane %v4765, 4
    %v4767 = vadd.f32 %v4765, %v4766
    %v4768 = vrot.slane %v4767, 2
    %v4769 = vadd.f32 %v4767, %v4768
    %v4770 = vrot.slane %v4769, 1
    %v4771 = vadd.f32 %v4769, %v4770
    %v4772 = vmul.f32 %v4771, %v277
    %v4773 = vadd.f32 %v4772, 1e-05
    %v4774 = vrsqrt.pop %v4773
    %v4775 = vmul.f32 %v4764, %v4774
    %s4776 = scalar_lea.vmem [#allocation7], 34
    %v4777 = vld [vmem:[%s4776] sm:$0x1]
    %v4779 = vlaneseq
    %v4780 = vshrl.u32 %v4779, 7
    %v4781 = vsub.s32 0, %v4780
    %v4782 = vrot.slane %v4777, %v4781
    %v4784 = vmul.f32 %v4775, %v4782
    %s4785 = scalar_lea.vmem [#allocation8], 34
    %v4786 = vld [vmem:[%s4785] sm:$0x1]
    %v4788 = vlaneseq
    %v4789 = vshrl.u32 %v4788, 7
    %v4790 = vsub.s32 0, %v4789
    %v4791 = vrot.slane %v4786, %v4790
    %v4793 = vadd.f32 %v4784, %v4791
    %v4794 = vadd.f32 %v4793, %v4388
    %s4795 = scalar_lea.vmem [#allocation2], 4480
    %v4796 = vld [vmem:[%s4795] sm:$0xff]
    %v4797 = vld [vmem:[%s4795 + $0x8] sm:$0xff]
    %v4798 = vld [vmem:[%s4795 + $0x10] sm:$0xff]
    %v4799 = vld [vmem:[%s4795 + $0x18] sm:$0xff]
    %v4800 = vld [vmem:[%s4795 + $0x20] sm:$0xff]
    %v4801 = vld [vmem:[%s4795 + $0x28] sm:$0xff]
    %v4802 = vld [vmem:[%s4795 + $0x30] sm:$0xff]
    %v4803 = vld [vmem:[%s4795 + $0x38] sm:$0xff]
    %v4804 = vld [vmem:[%s4795 + $0x40] sm:$0xff]
    %v4805 = vld [vmem:[%s4795 + $0x48] sm:$0xff]
    %v4806 = vld [vmem:[%s4795 + $0x50] sm:$0xff]
    %v4807 = vld [vmem:[%s4795 + $0x58] sm:$0xff]
    %v4808 = vld [vmem:[%s4795 + $0x60] sm:$0xff]
    %v4809 = vld [vmem:[%s4795 + $0x68] sm:$0xff]
    %v4810 = vld [vmem:[%s4795 + $0x70] sm:$0xff]
    %v4811 = vld [vmem:[%s4795 + $0x78] sm:$0xff]
    %s4812 = scalar_lea.vmem [#allocation5], 35
    %v4813 = vld [vmem:[%s4812] sm:$0x1]
    %v4815 = vlaneseq
    %v4816 = vshrl.u32 %v4815, 7
    %v4817 = vsub.s32 0, %v4816
    %v4818 = vrot.slane %v4813, %v4817
    %4820 = vmatprep.subr.mxu0 0.0
    %4821 = vmatpush1.msra.mxu0 %v4796
    %4822 = vmatprep.subr.mxu0 0.0
    %4823 = vmatpush1.msra.mxu0 %v4797
    %4824 = vmatprep.subr.mxu0 0.0
    %4825 = vmatpush1.msra.mxu0 %v4798
    %4826 = vmatprep.subr.mxu0 0.0
    %4827 = vmatpush1.msra.mxu0 %v4799
    %4828 = vmatprep.subr.mxu0 0.0
    %4829 = vmatpush1.msra.mxu0 %v4800
    %4830 = vmatprep.subr.mxu0 0.0
    %4831 = vmatpush1.msra.mxu0 %v4801
    %4832 = vmatprep.subr.mxu0 0.0
    %4833 = vmatpush1.msra.mxu0 %v4802
    %4834 = vmatprep.subr.mxu0 0.0
    %4835 = vmatpush1.msra.mxu0 %v4803
    %4836 = vmatprep.subr.mxu0 0.0
    %4837 = vmatpush1.msra.mxu0 %v4804
    %4838 = vmatprep.subr.mxu0 0.0
    %4839 = vmatpush1.msra.mxu0 %v4805
    %4840 = vmatprep.subr.mxu0 0.0
    %4841 = vmatpush1.msra.mxu0 %v4806
    %4842 = vmatprep.subr.mxu0 0.0
    %4843 = vmatpush1.msra.mxu0 %v4807
    %4844 = vmatprep.subr.mxu0 0.0
    %4845 = vmatpush1.msra.mxu0 %v4808
    %4846 = vmatprep.subr.mxu0 0.0
    %4847 = vmatpush1.msra.mxu0 %v4809
    %4848 = vmatprep.subr.mxu0 0.0
    %4849 = vmatpush1.msra.mxu0 %v4810
    %4850 = vmatprep.subr.mxu0 0.0
    %4851 = vmatpush1.msra.mxu0 %v4811
    %4852 = vmatprep.subr.mxu0 0.0
    %4853 = vmatpush1.msra.mxu0 0.0
    %4854 = vmatprep.subr.mxu0 0.0
    %4855 = vmatpush1.msra.mxu0 0.0
    %4856 = vmatprep.subr.mxu0 0.0
    %4857 = vmatpush1.msra.mxu0 0.0
    %4858 = vmatprep.subr.mxu0 0.0
    %4859 = vmatpush1.msra.mxu0 0.0
    %4860 = vmatprep.subr.mxu0 0.0
    %4861 = vmatpush1.msra.mxu0 0.0
    %4862 = vmatprep.subr.mxu0 0.0
    %4863 = vmatpush1.msra.mxu0 0.0
    %4864 = vmatprep.subr.mxu0 0.0
    %4865 = vmatpush1.msra.mxu0 0.0
    %4866 = vmatprep.subr.mxu0 0.0
    %4867 = vmatpush1.msra.mxu0 0.0
    %4868 = vmatprep.subr.mxu0 0.0
    %4869 = vmatpush1.msra.mxu0 0.0
    %4870 = vmatprep.subr.mxu0 0.0
    %4871 = vmatpush1.msra.mxu0 0.0
    %4872 = vmatprep.subr.mxu0 0.0
    %4873 = vmatpush1.msra.mxu0 0.0
    %4874 = vmatprep.subr.mxu0 0.0
    %4875 = vmatpush1.msra.mxu0 0.0
    %4876 = vmatprep.subr.mxu0 0.0
    %4877 = vmatpush1.msra.mxu0 0.0
    %4878 = vmatprep.subr.mxu0 0.0
    %4879 = vmatpush1.msra.mxu0 0.0
    %4880 = vmatprep.subr.mxu0 0.0
    %4881 = vmatpush1.msra.mxu0 0.0
    %4882 = vmatprep.subr.mxu0 0.0
    %4883 = vmatpush1.msra.mxu0 0.0
    %4884 = vmatprep.mubr.f32.mxu0 0.0
    %4885 = vmatmul.mubr.f32.gmra.mrb[0].mxu0 %v4794
    %v4886 = vpop.f32.mrb[0].mxu0
    %v4887 = vadd.f32 %v4818, %v4886
    %v4888 = vpop.f32.mrb[0].mxu0
    %4889 = vdwg.mxu0
    %s4890 = scalar_lea.vmem [#allocation2], 4608
    %v4891 = vld [vmem:[%s4890] sm:$0xff]
    %v4892 = vld [vmem:[%s4890 + $0x8] sm:$0xff]
    %v4893 = vld [vmem:[%s4890 + $0x10] sm:$0xff]
    %v4894 = vld [vmem:[%s4890 + $0x18] sm:$0xff]
    %v4895 = vld [vmem:[%s4890 + $0x20] sm:$0xff]
    %v4896 = vld [vmem:[%s4890 + $0x28] sm:$0xff]
    %v4897 = vld [vmem:[%s4890 + $0x30] sm:$0xff]
    %v4898 = vld [vmem:[%s4890 + $0x38] sm:$0xff]
    %v4899 = vld [vmem:[%s4890 + $0x40] sm:$0xff]
    %v4900 = vld [vmem:[%s4890 + $0x48] sm:$0xff]
    %v4901 = vld [vmem:[%s4890 + $0x50] sm:$0xff]
    %v4902 = vld [vmem:[%s4890 + $0x58] sm:$0xff]
    %v4903 = vld [vmem:[%s4890 + $0x60] sm:$0xff]
    %v4904 = vld [vmem:[%s4890 + $0x68] sm:$0xff]
    %v4905 = vld [vmem:[%s4890 + $0x70] sm:$0xff]
    %v4906 = vld [vmem:[%s4890 + $0x78] sm:$0xff]
    %s4907 = scalar_lea.vmem [#allocation5], 36
    %v4908 = vld [vmem:[%s4907] sm:$0x1]
    %v4910 = vlaneseq
    %v4911 = vshrl.u32 %v4910, 7
    %v4912 = vsub.s32 0, %v4911
    %v4913 = vrot.slane %v4908, %v4912
    %4915 = vmatprep.subr.mxu0 0.0
    %4916 = vmatpush1.msra.mxu0 %v4891
    %4917 = vmatprep.subr.mxu0 0.0
    %4918 = vmatpush1.msra.mxu0 %v4892
    %4919 = vmatprep.subr.mxu0 0.0
    %4920 = vmatpush1.msra.mxu0 %v4893
    %4921 = vmatprep.subr.mxu0 0.0
    %4922 = vmatpush1.msra.mxu0 %v4894
    %4923 = vmatprep.subr.mxu0 0.0
    %4924 = vmatpush1.msra.mxu0 %v4895
    %4925 = vmatprep.subr.mxu0 0.0
    %4926 = vmatpush1.msra.mxu0 %v4896
    %4927 = vmatprep.subr.mxu0 0.0
    %4928 = vmatpush1.msra.mxu0 %v4897
    %4929 = vmatprep.subr.mxu0 0.0
    %4930 = vmatpush1.msra.mxu0 %v4898
    %4931 = vmatprep.subr.mxu0 0.0
    %4932 = vmatpush1.msra.mxu0 %v4899
    %4933 = vmatprep.subr.mxu0 0.0
    %4934 = vmatpush1.msra.mxu0 %v4900
    %4935 = vmatprep.subr.mxu0 0.0
    %4936 = vmatpush1.msra.mxu0 %v4901
    %4937 = vmatprep.subr.mxu0 0.0
    %4938 = vmatpush1.msra.mxu0 %v4902
    %4939 = vmatprep.subr.mxu0 0.0
    %4940 = vmatpush1.msra.mxu0 %v4903
    %4941 = vmatprep.subr.mxu0 0.0
    %4942 = vmatpush1.msra.mxu0 %v4904
    %4943 = vmatprep.subr.mxu0 0.0
    %4944 = vmatpush1.msra.mxu0 %v4905
    %4945 = vmatprep.subr.mxu0 0.0
    %4946 = vmatpush1.msra.mxu0 %v4906
    %4947 = vmatprep.subr.mxu0 0.0
    %4948 = vmatpush1.msra.mxu0 0.0
    %4949 = vmatprep.subr.mxu0 0.0
    %4950 = vmatpush1.msra.mxu0 0.0
    %4951 = vmatprep.subr.mxu0 0.0
    %4952 = vmatpush1.msra.mxu0 0.0
    %4953 = vmatprep.subr.mxu0 0.0
    %4954 = vmatpush1.msra.mxu0 0.0
    %4955 = vmatprep.subr.mxu0 0.0
    %4956 = vmatpush1.msra.mxu0 0.0
    %4957 = vmatprep.subr.mxu0 0.0
    %4958 = vmatpush1.msra.mxu0 0.0
    %4959 = vmatprep.subr.mxu0 0.0
    %4960 = vmatpush1.msra.mxu0 0.0
    %4961 = vmatprep.subr.mxu0 0.0
    %4962 = vmatpush1.msra.mxu0 0.0
    %4963 = vmatprep.subr.mxu0 0.0
    %4964 = vmatpush1.msra.mxu0 0.0
    %4965 = vmatprep.subr.mxu0 0.0
    %4966 = vmatpush1.msra.mxu0 0.0
    %4967 = vmatprep.subr.mxu0 0.0
    %4968 = vmatpush1.msra.mxu0 0.0
    %4969 = vmatprep.subr.mxu0 0.0
    %4970 = vmatpush1.msra.mxu0 0.0
    %4971 = vmatprep.subr.mxu0 0.0
    %4972 = vmatpush1.msra.mxu0 0.0
    %4973 = vmatprep.subr.mxu0 0.0
    %4974 = vmatpush1.msra.mxu0 0.0
    %4975 = vmatprep.subr.mxu0 0.0
    %4976 = vmatpush1.msra.mxu0 0.0
    %4977 = vmatprep.subr.mxu0 0.0
    %4978 = vmatpush1.msra.mxu0 0.0
    %4979 = vmatprep.mubr.f32.mxu0 0.0
    %4980 = vmatmul.mubr.f32.gmra.mrb[0].mxu0 %v4887
    %v4981 = vpop.f32.mrb[0].mxu0
    %v4982 = vadd.f32 %v4913, %v4981
    %v4983 = vpop.f32.mrb[0].mxu0
    %4984 = vdwg.mxu0
    %vm4985 = vcmp.ge.f32.partialorder %v4982, 0.0
    %v4986 = vmul.f32 %v4982, 0.01
    %v4987 = vsel %vm4985, %v4982, %v4986
    %v4988 = vrot.slane %v4987, 4
    %v4989 = vadd.f32 %v4987, %v4988
    %v4990 = vrot.slane %v4989, 2
    %v4991 = vadd.f32 %v4989, %v4990
    %v4992 = vrot.slane %v4991, 1
    %v4993 = vadd.f32 %v4991, %v4992
    %v4994 = vmul.f32 %v4993, %v277
    %v4995 = vsub.f32 %v4987, %v4994
    %v4996 = vmul.f32 %v4995, %v4995
    %v4997 = vrot.slane %v4996, 4
    %v4998 = vadd.f32 %v4996, %v4997
    %v4999 = vrot.slane %v4998, 2
    %v5000 = vadd.f32 %v4998, %v4999
    %v5001 = vrot.slane %v5000, 1
    %v5002 = vadd.f32 %v5000, %v5001
    %v5003 = vmul.f32 %v5002, %v277
    %v5004 = vadd.f32 %v5003, 1e-05
    %v5005 = vrsqrt.pop %v5004
    %v5006 = vmul.f32 %v4995, %v5005
    %s5007 = scalar_lea.vmem [#allocation7], 36
    %v5008 = vld [vmem:[%s5007] sm:$0x1]
    %v5010 = vlaneseq
    %v5011 = vshrl.u32 %v5010, 7
    %v5012 = vsub.s32 0, %v5011
    %v5013 = vrot.slane %v5008, %v5012
    %v5015 = vmul.f32 %v5006, %v5013
    %s5016 = scalar_lea.vmem [#allocation8], 36
    %v5017 = vld [vmem:[%s5016] sm:$0x1]
    %v5019 = vlaneseq
    %v5020 = vshrl.u32 %v5019, 7
    %v5021 = vsub.s32 0, %v5020
    %v5022 = vrot.slane %v5017, %v5021
    %v5024 = vadd.f32 %v5015, %v5022
    %s5025 = scalar_lea.vmem [#allocation2], 4736
    %v5026 = vld [vmem:[%s5025] sm:$0xff]
    %v5027 = vld [vmem:[%s5025 + $0x8] sm:$0xff]
    %v5028 = vld [vmem:[%s5025 + $0x10] sm:$0xff]
    %v5029 = vld [vmem:[%s5025 + $0x18] sm:$0xff]
    %v5030 = vld [vmem:[%s5025 + $0x20] sm:$0xff]
    %v5031 = vld [vmem:[%s5025 + $0x28] sm:$0xff]
    %v5032 = vld [vmem:[%s5025 + $0x30] sm:$0xff]
    %v5033 = vld [vmem:[%s5025 + $0x38] sm:$0xff]
    %v5034 = vld [vmem:[%s5025 + $0x40] sm:$0xff]
    %v5035 = vld [vmem:[%s5025 + $0x48] sm:$0xff]
    %v5036 = vld [vmem:[%s5025 + $0x50] sm:$0xff]
    %v5037 = vld [vmem:[%s5025 + $0x58] sm:$0xff]
    %v5038 = vld [vmem:[%s5025 + $0x60] sm:$0xff]
    %v5039 = vld [vmem:[%s5025 + $0x68] sm:$0xff]
    %v5040 = vld [vmem:[%s5025 + $0x70] sm:$0xff]
    %v5041 = vld [vmem:[%s5025 + $0x78] sm:$0xff]
    %s5042 = scalar_lea.vmem [#allocation5], 37
    %v5043 = vld [vmem:[%s5042] sm:$0x1]
    %v5045 = vlaneseq
    %v5046 = vshrl.u32 %v5045, 7
    %v5047 = vsub.s32 0, %v5046
    %v5048 = vrot.slane %v5043, %v5047
    %5050 = vmatprep.subr.mxu0 0.0
    %5051 = vmatpush1.msra.mxu0 %v5026
    %5052 = vmatprep.subr.mxu0 0.0
    %5053 = vmatpush1.msra.mxu0 %v5027
    %5054 = vmatprep.subr.mxu0 0.0
    %5055 = vmatpush1.msra.mxu0 %v5028
    %5056 = vmatprep.subr.mxu0 0.0
    %5057 = vmatpush1.msra.mxu0 %v5029
    %5058 = vmatprep.subr.mxu0 0.0
    %5059 = vmatpush1.msra.mxu0 %v5030
    %5060 = vmatprep.subr.mxu0 0.0
    %5061 = vmatpush1.msra.mxu0 %v5031
    %5062 = vmatprep.subr.mxu0 0.0
    %5063 = vmatpush1.msra.mxu0 %v5032
    %5064 = vmatprep.subr.mxu0 0.0
    %5065 = vmatpush1.msra.mxu0 %v5033
    %5066 = vmatprep.subr.mxu0 0.0
    %5067 = vmatpush1.msra.mxu0 %v5034
    %5068 = vmatprep.subr.mxu0 0.0
    %5069 = vmatpush1.msra.mxu0 %v5035
    %5070 = vmatprep.subr.mxu0 0.0
    %5071 = vmatpush1.msra.mxu0 %v5036
    %5072 = vmatprep.subr.mxu0 0.0
    %5073 = vmatpush1.msra.mxu0 %v5037
    %5074 = vmatprep.subr.mxu0 0.0
    %5075 = vmatpush1.msra.mxu0 %v5038
    %5076 = vmatprep.subr.mxu0 0.0
    %5077 = vmatpush1.msra.mxu0 %v5039
    %5078 = vmatprep.subr.mxu0 0.0
    %5079 = vmatpush1.msra.mxu0 %v5040
    %5080 = vmatprep.subr.mxu0 0.0
    %5081 = vmatpush1.msra.mxu0 %v5041
    %5082 = vmatprep.subr.mxu0 0.0
    %5083 = vmatpush1.msra.mxu0 0.0
    %5084 = vmatprep.subr.mxu0 0.0
    %5085 = vmatpush1.msra.mxu0 0.0
    %5086 = vmatprep.subr.mxu0 0.0
    %5087 = vmatpush1.msra.mxu0 0.0
    %5088 = vmatprep.subr.mxu0 0.0
    %5089 = vmatpush1.msra.mxu0 0.0
    %5090 = vmatprep.subr.mxu0 0.0
    %5091 = vmatpush1.msra.mxu0 0.0
    %5092 = vmatprep.subr.mxu0 0.0
    %5093 = vmatpush1.msra.mxu0 0.0
    %5094 = vmatprep.subr.mxu0 0.0
    %5095 = vmatpush1.msra.mxu0 0.0
    %5096 = vmatprep.subr.mxu0 0.0
    %5097 = vmatpush1.msra.mxu0 0.0
    %5098 = vmatprep.subr.mxu0 0.0
    %5099 = vmatpush1.msra.mxu0 0.0
    %5100 = vmatprep.subr.mxu0 0.0
    %5101 = vmatpush1.msra.mxu0 0.0
    %5102 = vmatprep.subr.mxu0 0.0
    %5103 = vmatpush1.msra.mxu0 0.0
    %5104 = vmatprep.subr.mxu0 0.0
    %5105 = vmatpush1.msra.mxu0 0.0
    %5106 = vmatprep.subr.mxu0 0.0
    %5107 = vmatpush1.msra.mxu0 0.0
    %5108 = vmatprep.subr.mxu0 0.0
    %5109 = vmatpush1.msra.mxu0 0.0
    %5110 = vmatprep.subr.mxu0 0.0
    %5111 = vmatpush1.msra.mxu0 0.0
    %5112 = vmatprep.subr.mxu0 0.0
    %5113 = vmatpush1.msra.mxu0 0.0
    %5114 = vmatprep.mubr.f32.mxu0 0.0
    %5115 = vmatmul.mubr.f32.gmra.mrb[0].mxu0 %v5024
    %v5116 = vpop.f32.mrb[0].mxu0
    %v5117 = vadd.f32 %v5048, %v5116
    %v5118 = vpop.f32.mrb[0].mxu0
    %5119 = vdwg.mxu0
    %vm5120 = vcmp.ge.f32.partialorder %v5117, 0.0
    %v5121 = vmul.f32 %v5117, 0.01
    %v5122 = vsel %vm5120, %v5117, %v5121
    %v5123 = vrot.slane %v5122, 4
    %v5124 = vadd.f32 %v5122, %v5123
    %v5125 = vrot.slane %v5124, 2
    %v5126 = vadd.f32 %v5124, %v5125
    %v5127 = vrot.slane %v5126, 1
    %v5128 = vadd.f32 %v5126, %v5127
    %v5129 = vmul.f32 %v5128, %v277
    %v5130 = vsub.f32 %v5122, %v5129
    %v5131 = vmul.f32 %v5130, %v5130
    %v5132 = vrot.slane %v5131, 4
    %v5133 = vadd.f32 %v5131, %v5132
    %v5134 = vrot.slane %v5133, 2
    %v5135 = vadd.f32 %v5133, %v5134
    %v5136 = vrot.slane %v5135, 1
    %v5137 = vadd.f32 %v5135, %v5136
    %v5138 = vmul.f32 %v5137, %v277
    %v5139 = vadd.f32 %v5138, 1e-05
    %v5140 = vrsqrt.pop %v5139
    %v5141 = vmul.f32 %v5130, %v5140
    %s5142 = scalar_lea.vmem [#allocation7], 37
    %v5143 = vld [vmem:[%s5142] sm:$0x1]
    %v5145 = vlaneseq
    %v5146 = vshrl.u32 %v5145, 7
    %v5147 = vsub.s32 0, %v5146
    %v5148 = vrot.slane %v5143, %v5147
    %v5150 = vmul.f32 %v5141, %v5148
    %s5151 = scalar_lea.vmem [#allocation8], 37
    %v5152 = vld [vmem:[%s5151] sm:$0x1]
    %v5154 = vlaneseq
    %v5155 = vshrl.u32 %v5154, 7
    %v5156 = vsub.s32 0, %v5155
    %v5157 = vrot.slane %v5152, %v5156
    %v5159 = vadd.f32 %v5150, %v5157
    %s5160 = scalar_lea.vmem [#allocation2], 4864
    %v5161 = vld [vmem:[%s5160] sm:$0xff]
    %v5162 = vld [vmem:[%s5160 + $0x8] sm:$0xff]
    %v5163 = vld [vmem:[%s5160 + $0x10] sm:$0xff]
    %v5164 = vld [vmem:[%s5160 + $0x18] sm:$0xff]
    %v5165 = vld [vmem:[%s5160 + $0x20] sm:$0xff]
    %v5166 = vld [vmem:[%s5160 + $0x28] sm:$0xff]
    %v5167 = vld [vmem:[%s5160 + $0x30] sm:$0xff]
    %v5168 = vld [vmem:[%s5160 + $0x38] sm:$0xff]
    %v5169 = vld [vmem:[%s5160 + $0x40] sm:$0xff]
    %v5170 = vld [vmem:[%s5160 + $0x48] sm:$0xff]
    %v5171 = vld [vmem:[%s5160 + $0x50] sm:$0xff]
    %v5172 = vld [vmem:[%s5160 + $0x58] sm:$0xff]
    %v5173 = vld [vmem:[%s5160 + $0x60] sm:$0xff]
    %v5174 = vld [vmem:[%s5160 + $0x68] sm:$0xff]
    %v5175 = vld [vmem:[%s5160 + $0x70] sm:$0xff]
    %v5176 = vld [vmem:[%s5160 + $0x78] sm:$0xff]
    %s5177 = scalar_lea.vmem [#allocation5], 38
    %v5178 = vld [vmem:[%s5177] sm:$0x1]
    %v5180 = vlaneseq
    %v5181 = vshrl.u32 %v5180, 7
    %v5182 = vsub.s32 0, %v5181
    %v5183 = vrot.slane %v5178, %v5182
    %5185 = vmatprep.subr.mxu0 0.0
    %5186 = vmatpush1.msra.mxu0 %v5161
    %5187 = vmatprep.subr.mxu0 0.0
    %5188 = vmatpush1.msra.mxu0 %v5162
    %5189 = vmatprep.subr.mxu0 0.0
    %5190 = vmatpush1.msra.mxu0 %v5163
    %5191 = vmatprep.subr.mxu0 0.0
    %5192 = vmatpush1.msra.mxu0 %v5164
    %5193 = vmatprep.subr.mxu0 0.0
    %5194 = vmatpush1.msra.mxu0 %v5165
    %5195 = vmatprep.subr.mxu0 0.0
    %5196 = vmatpush1.msra.mxu0 %v5166
    %5197 = vmatprep.subr.mxu0 0.0
    %5198 = vmatpush1.msra.mxu0 %v5167
    %5199 = vmatprep.subr.mxu0 0.0
    %5200 = vmatpush1.msra.mxu0 %v5168
    %5201 = vmatprep.subr.mxu0 0.0
    %5202 = vmatpush1.msra.mxu0 %v5169
    %5203 = vmatprep.subr.mxu0 0.0
    %5204 = vmatpush1.msra.mxu0 %v5170
    %5205 = vmatprep.subr.mxu0 0.0
    %5206 = vmatpush1.msra.mxu0 %v5171
    %5207 = vmatprep.subr.mxu0 0.0
    %5208 = vmatpush1.msra.mxu0 %v5172
    %5209 = vmatprep.subr.mxu0 0.0
    %5210 = vmatpush1.msra.mxu0 %v5173
    %5211 = vmatprep.subr.mxu0 0.0
    %5212 = vmatpush1.msra.mxu0 %v5174
    %5213 = vmatprep.subr.mxu0 0.0
    %5214 = vmatpush1.msra.mxu0 %v5175
    %5215 = vmatprep.subr.mxu0 0.0
    %5216 = vmatpush1.msra.mxu0 %v5176
    %5217 = vmatprep.subr.mxu0 0.0
    %5218 = vmatpush1.msra.mxu0 0.0
    %5219 = vmatprep.subr.mxu0 0.0
    %5220 = vmatpush1.msra.mxu0 0.0
    %5221 = vmatprep.subr.mxu0 0.0
    %5222 = vmatpush1.msra.mxu0 0.0
    %5223 = vmatprep.subr.mxu0 0.0
    %5224 = vmatpush1.msra.mxu0 0.0
    %5225 = vmatprep.subr.mxu0 0.0
    %5226 = vmatpush1.msra.mxu0 0.0
    %5227 = vmatprep.subr.mxu0 0.0
    %5228 = vmatpush1.msra.mxu0 0.0
    %5229 = vmatprep.subr.mxu0 0.0
    %5230 = vmatpush1.msra.mxu0 0.0
    %5231 = vmatprep.subr.mxu0 0.0
    %5232 = vmatpush1.msra.mxu0 0.0
    %5233 = vmatprep.subr.mxu0 0.0
    %5234 = vmatpush1.msra.mxu0 0.0
    %5235 = vmatprep.subr.mxu0 0.0
    %5236 = vmatpush1.msra.mxu0 0.0
    %5237 = vmatprep.subr.mxu0 0.0
    %5238 = vmatpush1.msra.mxu0 0.0
    %5239 = vmatprep.subr.mxu0 0.0
    %5240 = vmatpush1.msra.mxu0 0.0
    %5241 = vmatprep.subr.mxu0 0.0
    %5242 = vmatpush1.msra.mxu0 0.0
    %5243 = vmatprep.subr.mxu0 0.0
    %5244 = vmatpush1.msra.mxu0 0.0
    %5245 = vmatprep.subr.mxu0 0.0
    %5246 = vmatpush1.msra.mxu0 0.0
    %5247 = vmatprep.subr.mxu0 0.0
    %5248 = vmatpush1.msra.mxu0 0.0
    %5249 = vmatprep.mubr.f32.mxu0 0.0
    %5250 = vmatmul.mubr.f32.gmra.mrb[0].mxu0 %v5159
    %v5251 = vpop.f32.mrb[0].mxu0
    %v5252 = vadd.f32 %v5183, %v5251
    %v5253 = vpop.f32.mrb[0].mxu0
    %5254 = vdwg.mxu0
    %vm5255 = vcmp.ge.f32.partialorder %v5252, 0.0
    %v5256 = vmul.f32 %v5252, 0.01
    %v5257 = vsel %vm5255, %v5252, %v5256
    %v5258 = vrot.slane %v5257, 4
    %v5259 = vadd.f32 %v5257, %v5258
    %v5260 = vrot.slane %v5259, 2
    %v5261 = vadd.f32 %v5259, %v5260
    %v5262 = vrot.slane %v5261, 1
    %v5263 = vadd.f32 %v5261, %v5262
    %v5264 = vmul.f32 %v5263, %v277
    %v5265 = vsub.f32 %v5257, %v5264
    %v5266 = vmul.f32 %v5265, %v5265
    %v5267 = vrot.slane %v5266, 4
    %v5268 = vadd.f32 %v5266, %v5267
    %v5269 = vrot.slane %v5268, 2
    %v5270 = vadd.f32 %v5268, %v5269
    %v5271 = vrot.slane %v5270, 1
    %v5272 = vadd.f32 %v5270, %v5271
    %v5273 = vmul.f32 %v5272, %v277
    %v5274 = vadd.f32 %v5273, 1e-05
    %v5275 = vrsqrt.pop %v5274
    %v5276 = vmul.f32 %v5265, %v5275
    %s5277 = scalar_lea.vmem [#allocation7], 38
    %v5278 = vld [vmem:[%s5277] sm:$0x1]
    %v5280 = vlaneseq
    %v5281 = vshrl.u32 %v5280, 7
    %v5282 = vsub.s32 0, %v5281
    %v5283 = vrot.slane %v5278, %v5282
    %v5285 = vmul.f32 %v5276, %v5283
    %s5286 = scalar_lea.vmem [#allocation8], 38
    %v5287 = vld [vmem:[%s5286] sm:$0x1]
    %v5289 = vlaneseq
    %v5290 = vshrl.u32 %v5289, 7
    %v5291 = vsub.s32 0, %v5290
    %v5292 = vrot.slane %v5287, %v5291
    %v5294 = vadd.f32 %v5285, %v5292
    %v5295 = vadd.f32 %v5294, %v4887
    %s5296 = scalar_lea.vmem [#allocation2], 4992
    %v5297 = vld [vmem:[%s5296] sm:$0xff]
    %v5298 = vld [vmem:[%s5296 + $0x8] sm:$0xff]
    %v5299 = vld [vmem:[%s5296 + $0x10] sm:$0xff]
    %v5300 = vld [vmem:[%s5296 + $0x18] sm:$0xff]
    %v5301 = vld [vmem:[%s5296 + $0x20] sm:$0xff]
    %v5302 = vld [vmem:[%s5296 + $0x28] sm:$0xff]
    %v5303 = vld [vmem:[%s5296 + $0x30] sm:$0xff]
    %v5304 = vld [vmem:[%s5296 + $0x38] sm:$0xff]
    %v5305 = vld [vmem:[%s5296 + $0x40] sm:$0xff]
    %v5306 = vld [vmem:[%s5296 + $0x48] sm:$0xff]
    %v5307 = vld [vmem:[%s5296 + $0x50] sm:$0xff]
    %v5308 = vld [vmem:[%s5296 + $0x58] sm:$0xff]
    %v5309 = vld [vmem:[%s5296 + $0x60] sm:$0xff]
    %v5310 = vld [vmem:[%s5296 + $0x68] sm:$0xff]
    %v5311 = vld [vmem:[%s5296 + $0x70] sm:$0xff]
    %v5312 = vld [vmem:[%s5296 + $0x78] sm:$0xff]
    %s5313 = scalar_lea.vmem [#allocation5], 39
    %v5314 = vld [vmem:[%s5313] sm:$0x1]
    %v5316 = vlaneseq
    %v5317 = vshrl.u32 %v5316, 7
    %v5318 = vsub.s32 0, %v5317
    %v5319 = vrot.slane %v5314, %v5318
    %5321 = vmatprep.subr.mxu0 0.0
    %5322 = vmatpush1.msra.mxu0 %v5297
    %5323 = vmatprep.subr.mxu0 0.0
    %5324 = vmatpush1.msra.mxu0 %v5298
    %5325 = vmatprep.subr.mxu0 0.0
    %5326 = vmatpush1.msra.mxu0 %v5299
    %5327 = vmatprep.subr.mxu0 0.0
    %5328 = vmatpush1.msra.mxu0 %v5300
    %5329 = vmatprep.subr.mxu0 0.0
    %5330 = vmatpush1.msra.mxu0 %v5301
    %5331 = vmatprep.subr.mxu0 0.0
    %5332 = vmatpush1.msra.mxu0 %v5302
    %5333 = vmatprep.subr.mxu0 0.0
    %5334 = vmatpush1.msra.mxu0 %v5303
    %5335 = vmatprep.subr.mxu0 0.0
    %5336 = vmatpush1.msra.mxu0 %v5304
    %5337 = vmatprep.subr.mxu0 0.0
    %5338 = vmatpush1.msra.mxu0 %v5305
    %5339 = vmatprep.subr.mxu0 0.0
    %5340 = vmatpush1.msra.mxu0 %v5306
    %5341 = vmatprep.subr.mxu0 0.0
    %5342 = vmatpush1.msra.mxu0 %v5307
    %5343 = vmatprep.subr.mxu0 0.0
    %5344 = vmatpush1.msra.mxu0 %v5308
    %5345 = vmatprep.subr.mxu0 0.0
    %5346 = vmatpush1.msra.mxu0 %v5309
    %5347 = vmatprep.subr.mxu0 0.0
    %5348 = vmatpush1.msra.mxu0 %v5310
    %5349 = vmatprep.subr.mxu0 0.0
    %5350 = vmatpush1.msra.mxu0 %v5311
    %5351 = vmatprep.subr.mxu0 0.0
    %5352 = vmatpush1.msra.mxu0 %v5312
    %5353 = vmatprep.subr.mxu0 0.0
    %5354 = vmatpush1.msra.mxu0 0.0
    %5355 = vmatprep.subr.mxu0 0.0
    %5356 = vmatpush1.msra.mxu0 0.0
    %5357 = vmatprep.subr.mxu0 0.0
    %5358 = vmatpush1.msra.mxu0 0.0
    %5359 = vmatprep.subr.mxu0 0.0
    %5360 = vmatpush1.msra.mxu0 0.0
    %5361 = vmatprep.subr.mxu0 0.0
    %5362 = vmatpush1.msra.mxu0 0.0
    %5363 = vmatprep.subr.mxu0 0.0
    %5364 = vmatpush1.msra.mxu0 0.0
    %5365 = vmatprep.subr.mxu0 0.0
    %5366 = vmatpush1.msra.mxu0 0.0
    %5367 = vmatprep.subr.mxu0 0.0
    %5368 = vmatpush1.msra.mxu0 0.0
    %5369 = vmatprep.subr.mxu0 0.0
    %5370 = vmatpush1.msra.mxu0 0.0
    %5371 = vmatprep.subr.mxu0 0.0
    %5372 = vmatpush1.msra.mxu0 0.0
    %5373 = vmatprep.subr.mxu0 0.0
    %5374 = vmatpush1.msra.mxu0 0.0
    %5375 = vmatprep.subr.mxu0 0.0
    %5376 = vmatpush1.msra.mxu0 0.0
    %5377 = vmatprep.subr.mxu0 0.0
    %5378 = vmatpush1.msra.mxu0 0.0
    %5379 = vmatprep.subr.mxu0 0.0
    %5380 = vmatpush1.msra.mxu0 0.0
    %5381 = vmatprep.subr.mxu0 0.0
    %5382 = vmatpush1.msra.mxu0 0.0
    %5383 = vmatprep.subr.mxu0 0.0
    %5384 = vmatpush1.msra.mxu0 0.0
    %5385 = vmatprep.mubr.f32.mxu0 0.0
    %5386 = vmatmul.mubr.f32.gmra.mrb[0].mxu0 %v5295
    %v5387 = vpop.f32.mrb[0].mxu0
    %v5388 = vadd.f32 %v5319, %v5387
    %v5389 = vpop.f32.mrb[0].mxu0
    %5390 = vdwg.mxu0
    %vm5391 = vcmp.ge.f32.partialorder %v5388, 0.0
    %v5392 = vmul.f32 %v5388, 0.01
    %v5393 = vsel %vm5391, %v5388, %v5392
    %v5394 = vrot.slane %v5393, 4
    %v5395 = vadd.f32 %v5393, %v5394
    %v5396 = vrot.slane %v5395, 2
    %v5397 = vadd.f32 %v5395, %v5396
    %v5398 = vrot.slane %v5397, 1
    %v5399 = vadd.f32 %v5397, %v5398
    %v5400 = vmul.f32 %v5399, %v277
    %v5401 = vsub.f32 %v5393, %v5400
    %v5402 = vmul.f32 %v5401, %v5401
    %v5403 = vrot.slane %v5402, 4
    %v5404 = vadd.f32 %v5402, %v5403
    %v5405 = vrot.slane %v5404, 2
    %v5406 = vadd.f32 %v5404, %v5405
    %v5407 = vrot.slane %v5406, 1
    %v5408 = vadd.f32 %v5406, %v5407
    %v5409 = vmul.f32 %v5408, %v277
    %v5410 = vadd.f32 %v5409, 1e-05
    %v5411 = vrsqrt.pop %v5410
    %v5412 = vmul.f32 %v5401, %v5411
    %s5413 = scalar_lea.vmem [#allocation7], 39
    %v5414 = vld [vmem:[%s5413] sm:$0x1]
    %v5416 = vlaneseq
    %v5417 = vshrl.u32 %v5416, 7
    %v5418 = vsub.s32 0, %v5417
    %v5419 = vrot.slane %v5414, %v5418
    %v5421 = vmul.f32 %v5412, %v5419
    %s5422 = scalar_lea.vmem [#allocation8], 39
    %v5423 = vld [vmem:[%s5422] sm:$0x1]
    %v5425 = vlaneseq
    %v5426 = vshrl.u32 %v5425, 7
    %v5427 = vsub.s32 0, %v5426
    %v5428 = vrot.slane %v5423, %v5427
    %v5430 = vadd.f32 %v5421, %v5428
    %s5431 = scalar_lea.vmem [#allocation2], 5120
    %v5432 = vld [vmem:[%s5431] sm:$0xff]
    %v5433 = vld [vmem:[%s5431 + $0x8] sm:$0xff]
    %v5434 = vld [vmem:[%s5431 + $0x10] sm:$0xff]
    %v5435 = vld [vmem:[%s5431 + $0x18] sm:$0xff]
    %v5436 = vld [vmem:[%s5431 + $0x20] sm:$0xff]
    %v5437 = vld [vmem:[%s5431 + $0x28] sm:$0xff]
    %v5438 = vld [vmem:[%s5431 + $0x30] sm:$0xff]
    %v5439 = vld [vmem:[%s5431 + $0x38] sm:$0xff]
    %v5440 = vld [vmem:[%s5431 + $0x40] sm:$0xff]
    %v5441 = vld [vmem:[%s5431 + $0x48] sm:$0xff]
    %v5442 = vld [vmem:[%s5431 + $0x50] sm:$0xff]
    %v5443 = vld [vmem:[%s5431 + $0x58] sm:$0xff]
    %v5444 = vld [vmem:[%s5431 + $0x60] sm:$0xff]
    %v5445 = vld [vmem:[%s5431 + $0x68] sm:$0xff]
    %v5446 = vld [vmem:[%s5431 + $0x70] sm:$0xff]
    %v5447 = vld [vmem:[%s5431 + $0x78] sm:$0xff]
    %s5448 = scalar_lea.vmem [#allocation5], 40
    %v5449 = vld [vmem:[%s5448] sm:$0x1]
    %v5451 = vlaneseq
    %v5452 = vshrl.u32 %v5451, 7
    %v5453 = vsub.s32 0, %v5452
    %v5454 = vrot.slane %v5449, %v5453
    %5456 = vmatprep.subr.mxu0 0.0
    %5457 = vmatpush1.msra.mxu0 %v5432
    %5458 = vmatprep.subr.mxu0 0.0
    %5459 = vmatpush1.msra.mxu0 %v5433
    %5460 = vmatprep.subr.mxu0 0.0
    %5461 = vmatpush1.msra.mxu0 %v5434
    %5462 = vmatprep.subr.mxu0 0.0
    %5463 = vmatpush1.msra.mxu0 %v5435
    %5464 = vmatprep.subr.mxu0 0.0
    %5465 = vmatpush1.msra.mxu0 %v5436
    %5466 = vmatprep.subr.mxu0 0.0
    %5467 = vmatpush1.msra.mxu0 %v5437
    %5468 = vmatprep.subr.mxu0 0.0
    %5469 = vmatpush1.msra.mxu0 %v5438
    %5470 = vmatprep.subr.mxu0 0.0
    %5471 = vmatpush1.msra.mxu0 %v5439
    %5472 = vmatprep.subr.mxu0 0.0
    %5473 = vmatpush1.msra.mxu0 %v5440
    %5474 = vmatprep.subr.mxu0 0.0
    %5475 = vmatpush1.msra.mxu0 %v5441
    %5476 = vmatprep.subr.mxu0 0.0
    %5477 = vmatpush1.msra.mxu0 %v5442
    %5478 = vmatprep.subr.mxu0 0.0
    %5479 = vmatpush1.msra.mxu0 %v5443
    %5480 = vmatprep.subr.mxu0 0.0
    %5481 = vmatpush1.msra.mxu0 %v5444
    %5482 = vmatprep.subr.mxu0 0.0
    %5483 = vmatpush1.msra.mxu0 %v5445
    %5484 = vmatprep.subr.mxu0 0.0
    %5485 = vmatpush1.msra.mxu0 %v5446
    %5486 = vmatprep.subr.mxu0 0.0
    %5487 = vmatpush1.msra.mxu0 %v5447
    %5488 = vmatprep.subr.mxu0 0.0
    %5489 = vmatpush1.msra.mxu0 0.0
    %5490 = vmatprep.subr.mxu0 0.0
    %5491 = vmatpush1.msra.mxu0 0.0
    %5492 = vmatprep.subr.mxu0 0.0
    %5493 = vmatpush1.msra.mxu0 0.0
    %5494 = vmatprep.subr.mxu0 0.0
    %5495 = vmatpush1.msra.mxu0 0.0
    %5496 = vmatprep.subr.mxu0 0.0
    %5497 = vmatpush1.msra.mxu0 0.0
    %5498 = vmatprep.subr.mxu0 0.0
    %5499 = vmatpush1.msra.mxu0 0.0
    %5500 = vmatprep.subr.mxu0 0.0
    %5501 = vmatpush1.msra.mxu0 0.0
    %5502 = vmatprep.subr.mxu0 0.0
    %5503 = vmatpush1.msra.mxu0 0.0
    %5504 = vmatprep.subr.mxu0 0.0
    %5505 = vmatpush1.msra.mxu0 0.0
    %5506 = vmatprep.subr.mxu0 0.0
    %5507 = vmatpush1.msra.mxu0 0.0
    %5508 = vmatprep.subr.mxu0 0.0
    %5509 = vmatpush1.msra.mxu0 0.0
    %5510 = vmatprep.subr.mxu0 0.0
    %5511 = vmatpush1.msra.mxu0 0.0
    %5512 = vmatprep.subr.mxu0 0.0
    %5513 = vmatpush1.msra.mxu0 0.0
    %5514 = vmatprep.subr.mxu0 0.0
    %5515 = vmatpush1.msra.mxu0 0.0
    %5516 = vmatprep.subr.mxu0 0.0
    %5517 = vmatpush1.msra.mxu0 0.0
    %5518 = vmatprep.subr.mxu0 0.0
    %5519 = vmatpush1.msra.mxu0 0.0
    %5520 = vmatprep.mubr.f32.mxu0 0.0
    %5521 = vmatmul.mubr.f32.gmra.mrb[0].mxu0 %v5430
    %v5522 = vpop.f32.mrb[0].mxu0
    %v5523 = vadd.f32 %v5454, %v5522
    %v5524 = vpop.f32.mrb[0].mxu0
    %5525 = vdwg.mxu0
    %vm5526 = vcmp.ge.f32.partialorder %v5523, 0.0
    %v5527 = vmul.f32 %v5523, 0.01
    %v5528 = vsel %vm5526, %v5523, %v5527
    %v5529 = vrot.slane %v5528, 4
    %v5530 = vadd.f32 %v5528, %v5529
    %v5531 = vrot.slane %v5530, 2
    %v5532 = vadd.f32 %v5530, %v5531
    %v5533 = vrot.slane %v5532, 1
    %v5534 = vadd.f32 %v5532, %v5533
    %v5535 = vmul.f32 %v5534, %v277
    %v5536 = vsub.f32 %v5528, %v5535
    %v5537 = vmul.f32 %v5536, %v5536
    %v5538 = vrot.slane %v5537, 4
    %v5539 = vadd.f32 %v5537, %v5538
    %v5540 = vrot.slane %v5539, 2
    %v5541 = vadd.f32 %v5539, %v5540
    %v5542 = vrot.slane %v5541, 1
    %v5543 = vadd.f32 %v5541, %v5542
    %v5544 = vmul.f32 %v5543, %v277
    %v5545 = vadd.f32 %v5544, 1e-05
    %v5546 = vrsqrt.pop %v5545
    %v5547 = vmul.f32 %v5536, %v5546
    %s5548 = scalar_lea.vmem [#allocation7], 40
    %v5549 = vld [vmem:[%s5548] sm:$0x1]
    %v5551 = vlaneseq
    %v5552 = vshrl.u32 %v5551, 7
    %v5553 = vsub.s32 0, %v5552
    %v5554 = vrot.slane %v5549, %v5553
    %v5556 = vmul.f32 %v5547, %v5554
    %s5557 = scalar_lea.vmem [#allocation8], 40
    %v5558 = vld [vmem:[%s5557] sm:$0x1]
    %v5560 = vlaneseq
    %v5561 = vshrl.u32 %v5560, 7
    %v5562 = vsub.s32 0, %v5561
    %v5563 = vrot.slane %v5558, %v5562
    %v5565 = vadd.f32 %v5556, %v5563
    %s5566 = scalar_lea.vmem [#allocation2], 5248
    %v5567 = vld [vmem:[%s5566] sm:$0xff]
    %v5568 = vld [vmem:[%s5566 + $0x8] sm:$0xff]
    %v5569 = vld [vmem:[%s5566 + $0x10] sm:$0xff]
    %v5570 = vld [vmem:[%s5566 + $0x18] sm:$0xff]
    %v5571 = vld [vmem:[%s5566 + $0x20] sm:$0xff]
    %v5572 = vld [vmem:[%s5566 + $0x28] sm:$0xff]
    %v5573 = vld [vmem:[%s5566 + $0x30] sm:$0xff]
    %v5574 = vld [vmem:[%s5566 + $0x38] sm:$0xff]
    %v5575 = vld [vmem:[%s5566 + $0x40] sm:$0xff]
    %v5576 = vld [vmem:[%s5566 + $0x48] sm:$0xff]
    %v5577 = vld [vmem:[%s5566 + $0x50] sm:$0xff]
    %v5578 = vld [vmem:[%s5566 + $0x58] sm:$0xff]
    %v5579 = vld [vmem:[%s5566 + $0x60] sm:$0xff]
    %v5580 = vld [vmem:[%s5566 + $0x68] sm:$0xff]
    %v5581 = vld [vmem:[%s5566 + $0x70] sm:$0xff]
    %v5582 = vld [vmem:[%s5566 + $0x78] sm:$0xff]
    %s5583 = scalar_lea.vmem [#allocation5], 41
    %v5584 = vld [vmem:[%s5583] sm:$0x1]
    %v5586 = vlaneseq
    %v5587 = vshrl.u32 %v5586, 7
    %v5588 = vsub.s32 0, %v5587
    %v5589 = vrot.slane %v5584, %v5588
    %5591 = vmatprep.subr.mxu0 0.0
    %5592 = vmatpush1.msra.mxu0 %v5567
    %5593 = vmatprep.subr.mxu0 0.0
    %5594 = vmatpush1.msra.mxu0 %v5568
    %5595 = vmatprep.subr.mxu0 0.0
    %5596 = vmatpush1.msra.mxu0 %v5569
    %5597 = vmatprep.subr.mxu0 0.0
    %5598 = vmatpush1.msra.mxu0 %v5570
    %5599 = vmatprep.subr.mxu0 0.0
    %5600 = vmatpush1.msra.mxu0 %v5571
    %5601 = vmatprep.subr.mxu0 0.0
    %5602 = vmatpush1.msra.mxu0 %v5572
    %5603 = vmatprep.subr.mxu0 0.0
    %5604 = vmatpush1.msra.mxu0 %v5573
    %5605 = vmatprep.subr.mxu0 0.0
    %5606 = vmatpush1.msra.mxu0 %v5574
    %5607 = vmatprep.subr.mxu0 0.0
    %5608 = vmatpush1.msra.mxu0 %v5575
    %5609 = vmatprep.subr.mxu0 0.0
    %5610 = vmatpush1.msra.mxu0 %v5576
    %5611 = vmatprep.subr.mxu0 0.0
    %5612 = vmatpush1.msra.mxu0 %v5577
    %5613 = vmatprep.subr.mxu0 0.0
    %5614 = vmatpush1.msra.mxu0 %v5578
    %5615 = vmatprep.subr.mxu0 0.0
    %5616 = vmatpush1.msra.mxu0 %v5579
    %5617 = vmatprep.subr.mxu0 0.0
    %5618 = vmatpush1.msra.mxu0 %v5580
    %5619 = vmatprep.subr.mxu0 0.0
    %5620 = vmatpush1.msra.mxu0 %v5581
    %5621 = vmatprep.subr.mxu0 0.0
    %5622 = vmatpush1.msra.mxu0 %v5582
    %5623 = vmatprep.subr.mxu0 0.0
    %5624 = vmatpush1.msra.mxu0 0.0
    %5625 = vmatprep.subr.mxu0 0.0
    %5626 = vmatpush1.msra.mxu0 0.0
    %5627 = vmatprep.subr.mxu0 0.0
    %5628 = vmatpush1.msra.mxu0 0.0
    %5629 = vmatprep.subr.mxu0 0.0
    %5630 = vmatpush1.msra.mxu0 0.0
    %5631 = vmatprep.subr.mxu0 0.0
    %5632 = vmatpush1.msra.mxu0 0.0
    %5633 = vmatprep.subr.mxu0 0.0
    %5634 = vmatpush1.msra.mxu0 0.0
    %5635 = vmatprep.subr.mxu0 0.0
    %5636 = vmatpush1.msra.mxu0 0.0
    %5637 = vmatprep.subr.mxu0 0.0
    %5638 = vmatpush1.msra.mxu0 0.0
    %5639 = vmatprep.subr.mxu0 0.0
    %5640 = vmatpush1.msra.mxu0 0.0
    %5641 = vmatprep.subr.mxu0 0.0
    %5642 = vmatpush1.msra.mxu0 0.0
    %5643 = vmatprep.subr.mxu0 0.0
    %5644 = vmatpush1.msra.mxu0 0.0
    %5645 = vmatprep.subr.mxu0 0.0
    %5646 = vmatpush1.msra.mxu0 0.0
    %5647 = vmatprep.subr.mxu0 0.0
    %5648 = vmatpush1.msra.mxu0 0.0
    %5649 = vmatprep.subr.mxu0 0.0
    %5650 = vmatpush1.msra.mxu0 0.0
    %5651 = vmatprep.subr.mxu0 0.0
    %5652 = vmatpush1.msra.mxu0 0.0
    %5653 = vmatprep.subr.mxu0 0.0
    %5654 = vmatpush1.msra.mxu0 0.0
    %5655 = vmatprep.mubr.f32.mxu0 0.0
    %5656 = vmatmul.mubr.f32.gmra.mrb[0].mxu0 %v5565
    %v5657 = vpop.f32.mrb[0].mxu0
    %v5658 = vadd.f32 %v5589, %v5657
    %v5659 = vpop.f32.mrb[0].mxu0
    %5660 = vdwg.mxu0
    %vm5661 = vcmp.ge.f32.partialorder %v5658, 0.0
    %v5662 = vmul.f32 %v5658, 0.01
    %v5663 = vsel %vm5661, %v5658, %v5662
    %v5664 = vrot.slane %v5663, 4
    %v5665 = vadd.f32 %v5663, %v5664
    %v5666 = vrot.slane %v5665, 2
    %v5667 = vadd.f32 %v5665, %v5666
    %v5668 = vrot.slane %v5667, 1
    %v5669 = vadd.f32 %v5667, %v5668
    %v5670 = vmul.f32 %v5669, %v277
    %v5671 = vsub.f32 %v5663, %v5670
    %v5672 = vmul.f32 %v5671, %v5671
    %v5673 = vrot.slane %v5672, 4
    %v5674 = vadd.f32 %v5672, %v5673
    %v5675 = vrot.slane %v5674, 2
    %v5676 = vadd.f32 %v5674, %v5675
    %v5677 = vrot.slane %v5676, 1
    %v5678 = vadd.f32 %v5676, %v5677
    %v5679 = vmul.f32 %v5678, %v277
    %v5680 = vadd.f32 %v5679, 1e-05
    %v5681 = vrsqrt.pop %v5680
    %v5682 = vmul.f32 %v5671, %v5681
    %s5683 = scalar_lea.vmem [#allocation7], 41
    %v5684 = vld [vmem:[%s5683] sm:$0x1]
    %v5686 = vlaneseq
    %v5687 = vshrl.u32 %v5686, 7
    %v5688 = vsub.s32 0, %v5687
    %v5689 = vrot.slane %v5684, %v5688
    %v5691 = vmul.f32 %v5682, %v5689
    %s5692 = scalar_lea.vmem [#allocation8], 41
    %v5693 = vld [vmem:[%s5692] sm:$0x1]
    %v5695 = vlaneseq
    %v5696 = vshrl.u32 %v5695, 7
    %v5697 = vsub.s32 0, %v5696
    %v5698 = vrot.slane %v5693, %v5697
    %v5700 = vadd.f32 %v5691, %v5698
    %v5701 = vadd.f32 %v5700, %v5295
    %s5702 = scalar_lea.vmem [#allocation2], 5376
    %v5703 = vld [vmem:[%s5702] sm:$0xff]
    %v5704 = vld [vmem:[%s5702 + $0x8] sm:$0xff]
    %v5705 = vld [vmem:[%s5702 + $0x10] sm:$0xff]
    %v5706 = vld [vmem:[%s5702 + $0x18] sm:$0xff]
    %v5707 = vld [vmem:[%s5702 + $0x20] sm:$0xff]
    %v5708 = vld [vmem:[%s5702 + $0x28] sm:$0xff]
    %v5709 = vld [vmem:[%s5702 + $0x30] sm:$0xff]
    %v5710 = vld [vmem:[%s5702 + $0x38] sm:$0xff]
    %v5711 = vld [vmem:[%s5702 + $0x40] sm:$0xff]
    %v5712 = vld [vmem:[%s5702 + $0x48] sm:$0xff]
    %v5713 = vld [vmem:[%s5702 + $0x50] sm:$0xff]
    %v5714 = vld [vmem:[%s5702 + $0x58] sm:$0xff]
    %v5715 = vld [vmem:[%s5702 + $0x60] sm:$0xff]
    %v5716 = vld [vmem:[%s5702 + $0x68] sm:$0xff]
    %v5717 = vld [vmem:[%s5702 + $0x70] sm:$0xff]
    %v5718 = vld [vmem:[%s5702 + $0x78] sm:$0xff]
    %s5719 = scalar_lea.vmem [#allocation5], 42
    %v5720 = vld [vmem:[%s5719] sm:$0x1]
    %v5722 = vlaneseq
    %v5723 = vshrl.u32 %v5722, 7
    %v5724 = vsub.s32 0, %v5723
    %v5725 = vrot.slane %v5720, %v5724
    %5727 = vmatprep.subr.mxu0 0.0
    %5728 = vmatpush1.msra.mxu0 %v5703
    %5729 = vmatprep.subr.mxu0 0.0
    %5730 = vmatpush1.msra.mxu0 %v5704
    %5731 = vmatprep.subr.mxu0 0.0
    %5732 = vmatpush1.msra.mxu0 %v5705
    %5733 = vmatprep.subr.mxu0 0.0
    %5734 = vmatpush1.msra.mxu0 %v5706
    %5735 = vmatprep.subr.mxu0 0.0
    %5736 = vmatpush1.msra.mxu0 %v5707
    %5737 = vmatprep.subr.mxu0 0.0
    %5738 = vmatpush1.msra.mxu0 %v5708
    %5739 = vmatprep.subr.mxu0 0.0
    %5740 = vmatpush1.msra.mxu0 %v5709
    %5741 = vmatprep.subr.mxu0 0.0
    %5742 = vmatpush1.msra.mxu0 %v5710
    %5743 = vmatprep.subr.mxu0 0.0
    %5744 = vmatpush1.msra.mxu0 %v5711
    %5745 = vmatprep.subr.mxu0 0.0
    %5746 = vmatpush1.msra.mxu0 %v5712
    %5747 = vmatprep.subr.mxu0 0.0
    %5748 = vmatpush1.msra.mxu0 %v5713
    %5749 = vmatprep.subr.mxu0 0.0
    %5750 = vmatpush1.msra.mxu0 %v5714
    %5751 = vmatprep.subr.mxu0 0.0
    %5752 = vmatpush1.msra.mxu0 %v5715
    %5753 = vmatprep.subr.mxu0 0.0
    %5754 = vmatpush1.msra.mxu0 %v5716
    %5755 = vmatprep.subr.mxu0 0.0
    %5756 = vmatpush1.msra.mxu0 %v5717
    %5757 = vmatprep.subr.mxu0 0.0
    %5758 = vmatpush1.msra.mxu0 %v5718
    %5759 = vmatprep.subr.mxu0 0.0
    %5760 = vmatpush1.msra.mxu0 0.0
    %5761 = vmatprep.subr.mxu0 0.0
    %5762 = vmatpush1.msra.mxu0 0.0
    %5763 = vmatprep.subr.mxu0 0.0
    %5764 = vmatpush1.msra.mxu0 0.0
    %5765 = vmatprep.subr.mxu0 0.0
    %5766 = vmatpush1.msra.mxu0 0.0
    %5767 = vmatprep.subr.mxu0 0.0
    %5768 = vmatpush1.msra.mxu0 0.0
    %5769 = vmatprep.subr.mxu0 0.0
    %5770 = vmatpush1.msra.mxu0 0.0
    %5771 = vmatprep.subr.mxu0 0.0
    %5772 = vmatpush1.msra.mxu0 0.0
    %5773 = vmatprep.subr.mxu0 0.0
    %5774 = vmatpush1.msra.mxu0 0.0
    %5775 = vmatprep.subr.mxu0 0.0
    %5776 = vmatpush1.msra.mxu0 0.0
    %5777 = vmatprep.subr.mxu0 0.0
    %5778 = vmatpush1.msra.mxu0 0.0
    %5779 = vmatprep.subr.mxu0 0.0
    %5780 = vmatpush1.msra.mxu0 0.0
    %5781 = vmatprep.subr.mxu0 0.0
    %5782 = vmatpush1.msra.mxu0 0.0
    %5783 = vmatprep.subr.mxu0 0.0
    %5784 = vmatpush1.msra.mxu0 0.0
    %5785 = vmatprep.subr.mxu0 0.0
    %5786 = vmatpush1.msra.mxu0 0.0
    %5787 = vmatprep.subr.mxu0 0.0
    %5788 = vmatpush1.msra.mxu0 0.0
    %5789 = vmatprep.subr.mxu0 0.0
    %5790 = vmatpush1.msra.mxu0 0.0
    %5791 = vmatprep.mubr.f32.mxu0 0.0
    %5792 = vmatmul.mubr.f32.gmra.mrb[0].mxu0 %v5701
    %v5793 = vpop.f32.mrb[0].mxu0
    %v5794 = vadd.f32 %v5725, %v5793
    %v5795 = vpop.f32.mrb[0].mxu0
    %5796 = vdwg.mxu0
    %5797 = vst [vmem:[#allocation10] sm:$0xff] %v5794
    // Predicated region
    $region38: #{unet_forward.1} parent=1 // pred_check
      _
    $region39: #{unet_forward.1} parent=1 // pred_check_branch
      %5799 = sbr.rel (0) target = $region41
    $region40: #{unet_forward.1} parent=1 // pred_region
      %s5801 = ssub.s32 128, 128
      %5802 = vsyncadd [#allocation4], %s5801
      %s5804 = sshll.u32 [#allocation10], 4
      %s5805 = int_to_ptr.vmem [resolvable:$true] %s5804
      %5807 = dma.vmem_to_hbm [thread:$0]  %s5805, 128, %s5, [#allocation4]
    $region41: #{unet_forward.1} parent=1 // pred_fallthru
      _
    // Predicated region
    $region42: #{unet_forward.1} parent=1 // pred_check
      _
    $region43: #{unet_forward.1} parent=1 // pred_check_branch
      %5809 = sbr.rel (0) target = $region45
    $region44: #{unet_forward.1} parent=1 // pred_region
      %5810 = dma.done [#allocation4], 128
    $region45: #{unet_forward.1} parent=1 // pred_fallthru
      _
    %5811 = vsyncpa [#allocation3], 1
    %5812 = vsyncpa [#allocation6], 1
    %5813 = vsyncpa [#allocation9], 1
    %5814 = vsyncpa [#allocation4], 1

</llo_original>
